<compile_context>
chip_gen: v7x
topology: tpu7x:2x2x1
jax: 0.10.0
libtpu: 0.0.40
codegen_flags: <defaults>
</compile_context>

<pallas_src>
import functools

import jax
import jax.numpy as jnp
from jax import lax
from jax.experimental import pallas as pl
from jax.experimental.pallas import tpu as pltpu


# ---------------------------------------------------------------------------
# Fused ResidualGroup kernel
# ---------------------------------------------------------------------------

def _residual_group_kernel(n_resblocks, bn, H, W, C,
                           x_ref,
                           cw1_ref, cb1_ref, cw2_ref, cb2_ref,
                           caw1_ref, cab1_ref, caw2_ref, cab2_ref,
                           tw_ref, tb_ref, mask_ref,
                           out_ref,
                           xpad_ref, patch_ref, res_ref):
    """Full ResidualGroup forward for `bn` images per grid step.

    Layout: one image activation = (C, Lp) with Lp = (H+2)*(W+2); rows are
    channels, lanes are zero-padded canvas pixels (ring kept exactly zero).

    x_ref   : (bn, C, Lp) f32   padded-canvas input images
    cw*_ref : (B, C, 9C) bf16   3x3 conv weights, columns ordered (dy, dx, cin)
    cb*_ref : (B, C, 1)  f32    conv biases
    caw1/2  : (B, C//r, C) / (B, C, C//r) f32   channel-attention 1x1 weights
    cab1/2  : (B, C//r, 1) / (B, C, 1)    f32   channel-attention biases
    tw/tb   : (C, 9C) bf16 / (C, 1) f32         tail conv of the group
    mask_ref: (1, Lp) f32       1 at interior canvas pixels, 0 on the pad ring
    out_ref : (bn, C, Lp) f32
    xpad_ref: (C, LG) bf16      canvas staged in bf16 + guard lanes for tap shifts
    patch_ref: (9C, Lp) bf16    im2col matrix (fully rewritten every conv)
    res_ref : (C, Lp) f32       running RCAB residual (one image at a time)
    """
    W2 = W + 2
    Lp = (H + 2) * W2
    GUARD = W2 + 1                      # max |tap lane offset|
    inv_hw = 1.0 / float(H * W)

    # Guard lanes feed ring columns of the patch (masked out later) but must be
    # finite -> zero them once; the canvas region is fully rewritten every conv.
    xpad_ref[...] = jnp.zeros_like(xpad_ref)

    taps = [(dy, dx) for dy in range(3) for dx in range(3)]

    def conv3x3(src_f32, w_bf16, b_f32):
        # src_f32: (C, Lp) activation canvas (zero ring).  Returns (C, Lp) f32
        # with the pad ring forced back to exact zero (keeps the halo valid).
        xpad_ref[:, pl.ds(GUARD, Lp)] = src_f32.astype(jnp.bfloat16)
        for t, (dy, dx) in enumerate(taps):
            off = (dy - 1) * W2 + (dx - 1)
            # Pure lane-shifted slice of the canvas -> aligned 32-row band store.
            patch_ref[pl.ds(t * C, C), :] = xpad_ref[:, pl.ds(GUARD + off, Lp)]
        acc = jnp.dot(w_bf16, patch_ref[...],
                      preferred_element_type=jnp.float32)          # (C, Lp)
        return (acc + b_f32) * mask_ref[...]

    for n in range(bn):
        res_ref[...] = x_ref[n]                                    # (C, Lp)

        for i in range(n_resblocks):
            # RCAB body: conv -> ReLU -> conv
            y = conv3x3(res_ref[...], cw1_ref[i], cb1_ref[i])
            y = jnp.maximum(y, 0.0)
            y = conv3x3(y, cw2_ref[i], cb2_ref[i])

            # Channel attention (f32 throughout): ring lanes are zero, so a plain
            # lane-sum / (H*W) is the exact global average pool.
            pooled = jnp.sum(y, axis=1, keepdims=True) * inv_hw            # (C, 1)
            h = jnp.dot(caw1_ref[i], pooled,
                        preferred_element_type=jnp.float32) + cab1_ref[i]  # (Cr, 1)
            h = jnp.maximum(h, 0.0)
            s = jnp.dot(caw2_ref[i], h,
                        preferred_element_type=jnp.float32) + cab2_ref[i]  # (C, 1)
            s = jax.nn.sigmoid(s)

            # RCAB residual (per-channel scale broadcasts along lanes).
            res_ref[...] = res_ref[...] + y * s

        # Tail conv of the group + group residual (re-read x from VMEM block).
        out = conv3x3(res_ref[...], tw_ref[...], tb_ref[...]) + x_ref[n]
        out_ref[n] = out.astype(out_ref.dtype)


# ---------------------------------------------------------------------------
# Wrapper: weight packing, canvas layout, BlockSpecs, per-generation grid
# ---------------------------------------------------------------------------

def _images_per_step(batch):
    """Fold the whole (small) batch into one grid step on single-TensorCore chips;
    keep a 'parallel' batch grid on dual-core parts (v4/v5p megacore, v7x)."""
    try:
        kind = jax.devices()[0].device_kind.lower()
    except Exception:
        kind = ""
    dual_core = any(tag in kind for tag in ("v7", "v5p", "v4"))
    if dual_core and batch > 1:
        return 1
    for d in (4, 2, 1):
        if batch % d == 0:
            return d
    return 1


@jax.jit
def residual_group_pallas(x_nchw, params):
    """ResidualGroup forward. Input/output in NCHW like the PyTorch module."""
    N, C, H, W = x_nchw.shape
    blocks = params["blocks"]
    B = len(blocks)
    W2, H2 = W + 2, H + 2
    Lp = H2 * W2
    LG = ((2 * (W2 + 1) + Lp + 127) // 128) * 128      # canvas + tap-shift guards

    bn = _images_per_step(N)

    def pack_conv(w):  # HWIO (3,3,Cin,Cout) -> (Cout, 9*Cin) bf16, cols (dy,dx,cin)
        return jnp.transpose(w, (3, 0, 1, 2)).reshape(C, 9 * C).astype(jnp.bfloat16)

    cw1 = jnp.stack([pack_conv(b_["cw1"]) for b_ in blocks])           # (B, C, 9C)
    cb1 = jnp.stack([b_["cb1"].reshape(C, 1) for b_ in blocks])        # (B, C, 1)
    cw2 = jnp.stack([pack_conv(b_["cw2"]) for b_ in blocks])
    cb2 = jnp.stack([b_["cb2"].reshape(C, 1) for b_ in blocks])
    caw1 = jnp.stack([b_["caw1"].T for b_ in blocks])                  # (B, Cr, C)
    cab1 = jnp.stack([b_["cab1"].reshape(-1, 1) for b_ in blocks])     # (B, Cr, 1)
    caw2 = jnp.stack([b_["caw2"].T for b_ in blocks])                  # (B, C, Cr)
    cab2 = jnp.stack([b_["cab2"].reshape(C, 1) for b_ in blocks])      # (B, C, 1)
    tw = pack_conv(params["tw"])                                       # (C, 9C)
    tb = params["tb"].reshape(C, 1)                                    # (C, 1)

    # Zero-padded canvas: channels-major, padded pixels flattened onto lanes.
    x_canvas = jnp.pad(x_nchw.astype(jnp.float32),
                       ((0, 0), (0, 0), (1, 1), (1, 1))).reshape(N, C, Lp)
    mask = jnp.pad(jnp.ones((H, W), jnp.float32),
                   ((1, 1), (1, 1))).reshape(1, Lp)

    def resident(a):
        zeros = (0,) * a.ndim
        return pl.BlockSpec(a.shape, lambda g, _z=zeros: _z)

    kernel = functools.partial(_residual_group_kernel, B, bn, H, W, C)

    out_canvas = pl.pallas_call(
        kernel,
        out_shape=jax.ShapeDtypeStruct((N, C, Lp), jnp.float32),
        grid_spec=pltpu.PrefetchScalarGridSpec(
            num_scalar_prefetch=0,
            grid=(N // bn,),
            in_specs=[
                pl.BlockSpec((bn, C, Lp), lambda g: (g, 0, 0)),
                resident(cw1), resident(cb1), resident(cw2), resident(cb2),
                resident(caw1), resident(cab1), resident(caw2), resident(cab2),
                resident(tw), resident(tb), resident(mask),
            ],
            out_specs=pl.BlockSpec((bn, C, Lp), lambda g: (g, 0, 0)),
            scratch_shapes=[
                pltpu.VMEM((C, LG), jnp.bfloat16),      # bf16 canvas + guard lanes
                pltpu.VMEM((9 * C, Lp), jnp.bfloat16),  # im2col matrix
                pltpu.VMEM((C, Lp), jnp.float32),       # running RCAB residual
            ],
        ),
        compiler_params=pltpu.CompilerParams(
            dimension_semantics=("parallel",),
            vmem_limit_bytes=32 * 1024 * 1024,
        ),
    )(x_canvas, cw1, cb1, cw2, cb2, caw1, cab1, caw2, cab2, tw, tb, mask)

    out = out_canvas.reshape(N, C, H2, W2)[:, :, 1:H + 1, 1:W + 1]
    return out.astype(x_nchw.dtype)


# ---------------------------------------------------------------------------
# Pure-JAX reference (same bf16-operand / f32-accumulate conv precision)
# ---------------------------------------------------------------------------

def _conv3x3_ref(x_nhwc, w_hwio, b, relu=False):
    y = lax.conv_general_dilated(
        x_nhwc.astype(jnp.bfloat16), w_hwio.astype(jnp.bfloat16),
        window_strides=(1, 1), padding="SAME",
        dimension_numbers=("NHWC", "HWIO", "NHWC"),
        preferred_element_type=jnp.float32)
    y = y + b[None, None, None, :]
    return jnp.maximum(y, 0.0) if relu else y


def residual_group_ref(x_nchw, params):
    x = jnp.transpose(x_nchw, (0, 2, 3, 1)).astype(jnp.float32)
    res = x
    for blk in params["blocks"]:
        y = _conv3x3_ref(res, blk["cw1"], blk["cb1"], relu=True)
        y = _conv3x3_ref(y, blk["cw2"], blk["cb2"], relu=False)
        pooled = jnp.mean(y, axis=(1, 2))
        h = jnp.maximum(pooled @ blk["caw1"] + blk["cab1"], 0.0)
        s = jax.nn.sigmoid(h @ blk["caw2"] + blk["cab2"])
        res = res + y * s[:, None, None, :]
    out = _conv3x3_ref(res, params["tw"], params["tb"]) + x
    return jnp.transpose(out, (0, 3, 1, 2)).astype(x_nchw.dtype)


# ---------------------------------------------------------------------------
# Deterministic synthetic parameters (shapes match the PyTorch module)
# ---------------------------------------------------------------------------

def init_params(key, n_feat, reduction, n_resblocks):
    cr = n_feat // reduction
    blocks = []
    for i in range(n_resblocks):
        k = jax.random.fold_in(key, i)
        ks = jax.random.split(k, 8)
        blocks.append(dict(
            cw1=0.05 * jax.random.normal(ks[0], (3, 3, n_feat, n_feat), jnp.float32),
            cb1=0.01 * jax.random.normal(ks[1], (n_feat,), jnp.float32),
            cw2=0.05 * jax.random.normal(ks[2], (3, 3, n_feat, n_feat), jnp.float32),
            cb2=0.01 * jax.random.normal(ks[3], (n_feat,), jnp.float32),
            caw1=0.1 * jax.random.normal(ks[4], (n_feat, cr), jnp.float32),
            cab1=0.01 * jax.random.normal(ks[5], (cr,), jnp.float32),
            caw2=0.1 * jax.random.normal(ks[6], (cr, n_feat), jnp.float32),
            cab2=0.01 * jax.random.normal(ks[7], (n_feat,), jnp.float32),
        ))
    kt = jax.random.fold_in(key, 1000)
    kt1, kt2 = jax.random.split(kt)
    return dict(
        blocks=blocks,
        tw=0.05 * jax.random.normal(kt1, (3, 3, n_feat, n_feat), jnp.float32),
        tb=0.01 * jax.random.normal(kt2, (n_feat,), jnp.float32),
    )


# ---------------------------------------------------------------------------

if __name__ == "__main__":
    key = jax.random.PRNGKey(0)
    N, C, H, W = 2, 32, 16, 16          # NCHW, n_feat = 32
    n_resblocks, reduction = 2, 4       # channel // reduction = 8

    kx, kp = jax.random.split(key)
    x = jax.random.normal(kx, (N, C, H, W), jnp.float32)
    params = init_params(kp, C, reduction, n_resblocks)

    out = jax.block_until_ready(residual_group_pallas(x, params))
    ref = residual_group_ref(x, params)

    assert out.shape == x.shape and out.dtype == x.dtype
    max_err = float(jnp.max(jnp.abs(out - ref)))
    assert jnp.allclose(out, ref, atol=5e-3, rtol=5e-3), max_err
    print("KERNEL_OK")
</pallas_src>

<mosaic_0001>
module attributes {stable_mosaic.version = 11 : i64} {
  func.func @_residual_group_kernel(%arg0: i32, %arg1: memref<2x32x324xf32, #tpu.memory_space<vmem>>, %arg2: memref<2x32x288xbf16, #tpu.memory_space<vmem>>, %arg3: memref<2x32x1xf32, #tpu.memory_space<vmem>>, %arg4: memref<2x32x288xbf16, #tpu.memory_space<vmem>>, %arg5: memref<2x32x1xf32, #tpu.memory_space<vmem>>, %arg6: memref<2x8x32xf32, #tpu.memory_space<vmem>>, %arg7: memref<2x8x1xf32, #tpu.memory_space<vmem>>, %arg8: memref<2x32x8xf32, #tpu.memory_space<vmem>>, %arg9: memref<2x32x1xf32, #tpu.memory_space<vmem>>, %arg10: memref<32x288xbf16, #tpu.memory_space<vmem>>, %arg11: memref<32x1xf32, #tpu.memory_space<vmem>>, %arg12: memref<1x324xf32, #tpu.memory_space<vmem>>, %arg13: memref<2x32x324xf32, #tpu.memory_space<vmem>>, %arg14: memref<32x384xbf16, #tpu.memory_space<vmem>>, %arg15: memref<288x324xbf16, #tpu.memory_space<vmem>>, %arg16: memref<32x324xf32, #tpu.memory_space<vmem>>) attributes {dimension_semantics = [#tpu.dimension_semantics<parallel>], iteration_bounds = array<i64: 1>, scalar_prefetch = 0 : i64, scratch_operands = 3 : i64, tpu.core_type = #tpu.core_type<tc>, window_params = [{transform_indices = @transform_0, window_bounds = array<i64: 2, 32, 324>}, {pipeline_mode = #tpu.pipeline_mode<synchronous>, transform_indices = @transform_1, window_bounds = array<i64: 2, 32, 288>}, {pipeline_mode = #tpu.pipeline_mode<synchronous>, transform_indices = @transform_2, window_bounds = array<i64: 2, 32, 1>}, {pipeline_mode = #tpu.pipeline_mode<synchronous>, transform_indices = @transform_3, window_bounds = array<i64: 2, 32, 288>}, {pipeline_mode = #tpu.pipeline_mode<synchronous>, transform_indices = @transform_4, window_bounds = array<i64: 2, 32, 1>}, {pipeline_mode = #tpu.pipeline_mode<synchronous>, transform_indices = @transform_5, window_bounds = array<i64: 2, 8, 32>}, {pipeline_mode = #tpu.pipeline_mode<synchronous>, transform_indices = @transform_6, window_bounds = array<i64: 2, 8, 1>}, {pipeline_mode = #tpu.pipeline_mode<synchronous>, transform_indices = @transform_7, window_bounds = array<i64: 2, 32, 8>}, {pipeline_mode = #tpu.pipeline_mode<synchronous>, transform_indices = @transform_8, window_bounds = array<i64: 2, 32, 1>}, {pipeline_mode = #tpu.pipeline_mode<synchronous>, transform_indices = @transform_9, window_bounds = array<i64: 32, 288>}, {pipeline_mode = #tpu.pipeline_mode<synchronous>, transform_indices = @transform_10, window_bounds = array<i64: 32, 1>}, {pipeline_mode = #tpu.pipeline_mode<synchronous>, transform_indices = @transform_11, window_bounds = array<i64: 1, 324>}, {transform_indices = @transform_12, window_bounds = array<i64: 2, 32, 324>}]} {
    %cst = arith.constant 0.000000e+00 : bf16
    %0 = vector.broadcast %cst : bf16 to vector<32x384xbf16>
    %c0 = arith.constant 0 : index
    %c0_0 = arith.constant 0 : index
    %1 = vector.load %arg14[%c0, %c0_0] : memref<32x384xbf16, #tpu.memory_space<vmem>>, vector<32x384xbf16>
    tpu.vector_store %arg14[%c0, %c0_0], %0 {strides = array<i32>} : memref<32x384xbf16, #tpu.memory_space<vmem>>, vector<32x384xbf16>,
    %c0_1 = arith.constant 0 : index
    %c0_2 = arith.constant 0 : index
    %c0_3 = arith.constant 0 : index
    %2 = vector.load %arg1[%c0_1, %c0_2, %c0_3] : memref<2x32x324xf32, #tpu.memory_space<vmem>>, vector<1x32x324xf32>
    %3 = vector.shape_cast %2 : vector<1x32x324xf32> to vector<32x324xf32>
    %c0_4 = arith.constant 0 : index
    %c0_5 = arith.constant 0 : index
    %4 = vector.load %arg16[%c0_4, %c0_5] : memref<32x324xf32, #tpu.memory_space<vmem>>, vector<32x324xf32>
    tpu.vector_store %arg16[%c0_4, %c0_5], %3 {strides = array<i32>} : memref<32x324xf32, #tpu.memory_space<vmem>>, vector<32x324xf32>,
    %c0_6 = arith.constant 0 : index
    %c0_7 = arith.constant 0 : index
    %5 = vector.load %arg16[%c0_6, %c0_7] : memref<32x324xf32, #tpu.memory_space<vmem>>, vector<32x324xf32>
    %c0_8 = arith.constant 0 : index
    %c0_9 = arith.constant 0 : index
    %c0_10 = arith.constant 0 : index
    %6 = vector.load %arg2[%c0_8, %c0_9, %c0_10] : memref<2x32x288xbf16, #tpu.memory_space<vmem>>, vector<1x32x288xbf16>
    %7 = vector.shape_cast %6 : vector<1x32x288xbf16> to vector<32x288xbf16>
    %c0_11 = arith.constant 0 : index
    %c0_12 = arith.constant 0 : index
    %c0_13 = arith.constant 0 : index
    %8 = vector.load %arg3[%c0_11, %c0_12, %c0_13] : memref<2x32x1xf32, #tpu.memory_space<vmem>>, vector<1x32x1xf32>
    %9 = vector.shape_cast %8 : vector<1x32x1xf32> to vector<32x1xf32>
    %10 = arith.truncf %5 : vector<32x324xf32> to vector<32x324xbf16>
    %c0_14 = arith.constant 0 : index
    %c19 = arith.constant 19 : index
    %11 = vector.load %arg14[%c0_14, %c19] : memref<32x384xbf16, #tpu.memory_space<vmem>>, vector<32x324xbf16>
    tpu.vector_store %arg14[%c0_14, %c19], %10 {strides = array<i32>} : memref<32x384xbf16, #tpu.memory_space<vmem>>, vector<32x324xbf16>,
    %c0_15 = arith.constant 0 : index
    %c0_16 = arith.constant 0 : index
    %12 = vector.load %arg14[%c0_15, %c0_16] : memref<32x384xbf16, #tpu.memory_space<vmem>>, vector<32x324xbf16>
    %c0_17 = arith.constant 0 : index
    %c0_18 = arith.constant 0 : index
    %13 = vector.load %arg15[%c0_17, %c0_18] : memref<288x324xbf16, #tpu.memory_space<vmem>>, vector<32x324xbf16>
    tpu.vector_store %arg15[%c0_17, %c0_18], %12 {strides = array<i32>} : memref<288x324xbf16, #tpu.memory_space<vmem>>, vector<32x324xbf16>,
    %c0_19 = arith.constant 0 : index
    %c1 = arith.constant 1 : index
    %14 = vector.load %arg14[%c0_19, %c1] : memref<32x384xbf16, #tpu.memory_space<vmem>>, vector<32x324xbf16>
    %c32 = arith.constant 32 : index
    %c0_20 = arith.constant 0 : index
    %15 = vector.load %arg15[%c32, %c0_20] : memref<288x324xbf16, #tpu.memory_space<vmem>>, vector<32x324xbf16>
    tpu.vector_store %arg15[%c32, %c0_20], %14 {strides = array<i32>} : memref<288x324xbf16, #tpu.memory_space<vmem>>, vector<32x324xbf16>,
    %c0_21 = arith.constant 0 : index
    %c2 = arith.constant 2 : index
    %16 = vector.load %arg14[%c0_21, %c2] : memref<32x384xbf16, #tpu.memory_space<vmem>>, vector<32x324xbf16>
    %c64 = arith.constant 64 : index
    %c0_22 = arith.constant 0 : index
    %17 = vector.load %arg15[%c64, %c0_22] : memref<288x324xbf16, #tpu.memory_space<vmem>>, vector<32x324xbf16>
    tpu.vector_store %arg15[%c64, %c0_22], %16 {strides = array<i32>} : memref<288x324xbf16, #tpu.memory_space<vmem>>, vector<32x324xbf16>,
    %c0_23 = arith.constant 0 : index
    %c18 = arith.constant 18 : index
    %18 = vector.load %arg14[%c0_23, %c18] : memref<32x384xbf16, #tpu.memory_space<vmem>>, vector<32x324xbf16>
    %c96 = arith.constant 96 : index
    %c0_24 = arith.constant 0 : index
    %19 = vector.load %arg15[%c96, %c0_24] : memref<288x324xbf16, #tpu.memory_space<vmem>>, vector<32x324xbf16>
    tpu.vector_store %arg15[%c96, %c0_24], %18 {strides = array<i32>} : memref<288x324xbf16, #tpu.memory_space<vmem>>, vector<32x324xbf16>,
    %c0_25 = arith.constant 0 : index
    %c19_26 = arith.constant 19 : index
    %20 = vector.load %arg14[%c0_25, %c19_26] : memref<32x384xbf16, #tpu.memory_space<vmem>>, vector<32x324xbf16>
    %c128 = arith.constant 128 : index
    %c0_27 = arith.constant 0 : index
    %21 = vector.load %arg15[%c128, %c0_27] : memref<288x324xbf16, #tpu.memory_space<vmem>>, vector<32x324xbf16>
    tpu.vector_store %arg15[%c128, %c0_27], %20 {strides = array<i32>} : memref<288x324xbf16, #tpu.memory_space<vmem>>, vector<32x324xbf16>,
    %c0_28 = arith.constant 0 : index
    %c20 = arith.constant 20 : index
    %22 = vector.load %arg14[%c0_28, %c20] : memref<32x384xbf16, #tpu.memory_space<vmem>>, vector<32x324xbf16>
    %c160 = arith.constant 160 : index
    %c0_29 = arith.constant 0 : index
    %23 = vector.load %arg15[%c160, %c0_29] : memref<288x324xbf16, #tpu.memory_space<vmem>>, vector<32x324xbf16>
    tpu.vector_store %arg15[%c160, %c0_29], %22 {strides = array<i32>} : memref<288x324xbf16, #tpu.memory_space<vmem>>, vector<32x324xbf16>,
    %c0_30 = arith.constant 0 : index
    %c36 = arith.constant 36 : index
    %24 = vector.load %arg14[%c0_30, %c36] : memref<32x384xbf16, #tpu.memory_space<vmem>>, vector<32x324xbf16>
    %c192 = arith.constant 192 : index
    %c0_31 = arith.constant 0 : index
    %25 = vector.load %arg15[%c192, %c0_31] : memref<288x324xbf16, #tpu.memory_space<vmem>>, vector<32x324xbf16>
    tpu.vector_store %arg15[%c192, %c0_31], %24 {strides = array<i32>} : memref<288x324xbf16, #tpu.memory_space<vmem>>, vector<32x324xbf16>,
    %c0_32 = arith.constant 0 : index
    %c37 = arith.constant 37 : index
    %26 = vector.load %arg14[%c0_32, %c37] : memref<32x384xbf16, #tpu.memory_space<vmem>>, vector<32x324xbf16>
    %c224 = arith.constant 224 : index
    %c0_33 = arith.constant 0 : index
    %27 = vector.load %arg15[%c224, %c0_33] : memref<288x324xbf16, #tpu.memory_space<vmem>>, vector<32x324xbf16>
    tpu.vector_store %arg15[%c224, %c0_33], %26 {strides = array<i32>} : memref<288x324xbf16, #tpu.memory_space<vmem>>, vector<32x324xbf16>,
    %c0_34 = arith.constant 0 : index
    %c38 = arith.constant 38 : index
    %28 = vector.load %arg14[%c0_34, %c38] : memref<32x384xbf16, #tpu.memory_space<vmem>>, vector<32x324xbf16>
    %c256 = arith.constant 256 : index
    %c0_35 = arith.constant 0 : index
    %29 = vector.load %arg15[%c256, %c0_35] : memref<288x324xbf16, #tpu.memory_space<vmem>>, vector<32x324xbf16>
    tpu.vector_store %arg15[%c256, %c0_35], %28 {strides = array<i32>} : memref<288x324xbf16, #tpu.memory_space<vmem>>, vector<32x324xbf16>,
    %c0_36 = arith.constant 0 : index
    %c0_37 = arith.constant 0 : index
    %30 = vector.load %arg15[%c0_36, %c0_37] : memref<288x324xbf16, #tpu.memory_space<vmem>>, vector<288x324xbf16>
    %cst_38 = arith.constant dense<0.000000e+00> : vector<32x324xf32>
    %31 = tpu.matmul %7, %30, %cst_38 {dimension_numbers = #tpu.dot_dimension_numbers<[1], [0], [0], [1], [0, 0, 1, 1], [], []>} : vector<32x288xbf16>, vector<288x324xbf16>, vector<32x324xf32> -> vector<32x324xf32>
    %32 = vector.broadcast %9 : vector<32x1xf32> to vector<32x324xf32>
    %33 = arith.addf %31, %32 : vector<32x324xf32>
    %c0_39 = arith.constant 0 : index
    %c0_40 = arith.constant 0 : index
    %34 = vector.load %arg12[%c0_39, %c0_40] : memref<1x324xf32, #tpu.memory_space<vmem>>, vector<1x324xf32>
    %35 = vector.broadcast %34 : vector<1x324xf32> to vector<32x324xf32>
    %36 = arith.mulf %33, %35 : vector<32x324xf32>
    %cst_41 = arith.constant 0.000000e+00 : f32
    %37 = vector.broadcast %cst_41 : f32 to vector<32x324xf32>
    %38 = arith.maximumf %36, %37 : vector<32x324xf32>
    %c0_42 = arith.constant 0 : index
    %c0_43 = arith.constant 0 : index
    %c0_44 = arith.constant 0 : index
    %39 = vector.load %arg4[%c0_42, %c0_43, %c0_44] : memref<2x32x288xbf16, #tpu.memory_space<vmem>>, vector<1x32x288xbf16>
    %40 = vector.shape_cast %39 : vector<1x32x288xbf16> to vector<32x288xbf16>
    %c0_45 = arith.constant 0 : index
    %c0_46 = arith.constant 0 : index
    %c0_47 = arith.constant 0 : index
    %41 = vector.load %arg5[%c0_45, %c0_46, %c0_47] : memref<2x32x1xf32, #tpu.memory_space<vmem>>, vector<1x32x1xf32>
    %42 = vector.shape_cast %41 : vector<1x32x1xf32> to vector<32x1xf32>
    %43 = arith.truncf %38 : vector<32x324xf32> to vector<32x324xbf16>
    %c0_48 = arith.constant 0 : index
    %c19_49 = arith.constant 19 : index
    %44 = vector.load %arg14[%c0_48, %c19_49] : memref<32x384xbf16, #tpu.memory_space<vmem>>, vector<32x324xbf16>
    tpu.vector_store %arg14[%c0_48, %c19_49], %43 {strides = array<i32>} : memref<32x384xbf16, #tpu.memory_space<vmem>>, vector<32x324xbf16>,
    %c0_50 = arith.constant 0 : index
    %c0_51 = arith.constant 0 : index
    %45 = vector.load %arg14[%c0_50, %c0_51] : memref<32x384xbf16, #tpu.memory_space<vmem>>, vector<32x324xbf16>
    %c0_52 = arith.constant 0 : index
    %c0_53 = arith.constant 0 : index
    %46 = vector.load %arg15[%c0_52, %c0_53] : memref<288x324xbf16, #tpu.memory_space<vmem>>, vector<32x324xbf16>
    tpu.vector_store %arg15[%c0_52, %c0_53], %45 {strides = array<i32>} : memref<288x324xbf16, #tpu.memory_space<vmem>>, vector<32x324xbf16>,
    %c0_54 = arith.constant 0 : index
    %c1_55 = arith.constant 1 : index
    %47 = vector.load %arg14[%c0_54, %c1_55] : memref<32x384xbf16, #tpu.memory_space<vmem>>, vector<32x324xbf16>
    %c32_56 = arith.constant 32 : index
    %c0_57 = arith.constant 0 : index
    %48 = vector.load %arg15[%c32_56, %c0_57] : memref<288x324xbf16, #tpu.memory_space<vmem>>, vector<32x324xbf16>
    tpu.vector_store %arg15[%c32_56, %c0_57], %47 {strides = array<i32>} : memref<288x324xbf16, #tpu.memory_space<vmem>>, vector<32x324xbf16>,
    %c0_58 = arith.constant 0 : index
    %c2_59 = arith.constant 2 : index
    %49 = vector.load %arg14[%c0_58, %c2_59] : memref<32x384xbf16, #tpu.memory_space<vmem>>, vector<32x324xbf16>
    %c64_60 = arith.constant 64 : index
    %c0_61 = arith.constant 0 : index
    %50 = vector.load %arg15[%c64_60, %c0_61] : memref<288x324xbf16, #tpu.memory_space<vmem>>, vector<32x324xbf16>
    tpu.vector_store %arg15[%c64_60, %c0_61], %49 {strides = array<i32>} : memref<288x324xbf16, #tpu.memory_space<vmem>>, vector<32x324xbf16>,
    %c0_62 = arith.constant 0 : index
    %c18_63 = arith.constant 18 : index
    %51 = vector.load %arg14[%c0_62, %c18_63] : memref<32x384xbf16, #tpu.memory_space<vmem>>, vector<32x324xbf16>
    %c96_64 = arith.constant 96 : index
    %c0_65 = arith.constant 0 : index
    %52 = vector.load %arg15[%c96_64, %c0_65] : memref<288x324xbf16, #tpu.memory_space<vmem>>, vector<32x324xbf16>
    tpu.vector_store %arg15[%c96_64, %c0_65], %51 {strides = array<i32>} : memref<288x324xbf16, #tpu.memory_space<vmem>>, vector<32x324xbf16>,
    %c0_66 = arith.constant 0 : index
    %c19_67 = arith.constant 19 : index
    %53 = vector.load %arg14[%c0_66, %c19_67] : memref<32x384xbf16, #tpu.memory_space<vmem>>, vector<32x324xbf16>
    %c128_68 = arith.constant 128 : index
    %c0_69 = arith.constant 0 : index
    %54 = vector.load %arg15[%c128_68, %c0_69] : memref<288x324xbf16, #tpu.memory_space<vmem>>, vector<32x324xbf16>
    tpu.vector_store %arg15[%c128_68, %c0_69], %53 {strides = array<i32>} : memref<288x324xbf16, #tpu.memory_space<vmem>>, vector<32x324xbf16>,
    %c0_70 = arith.constant 0 : index
    %c20_71 = arith.constant 20 : index
    %55 = vector.load %arg14[%c0_70, %c20_71] : memref<32x384xbf16, #tpu.memory_space<vmem>>, vector<32x324xbf16>
    %c160_72 = arith.constant 160 : index
    %c0_73 = arith.constant 0 : index
    %56 = vector.load %arg15[%c160_72, %c0_73] : memref<288x324xbf16, #tpu.memory_space<vmem>>, vector<32x324xbf16>
    tpu.vector_store %arg15[%c160_72, %c0_73], %55 {strides = array<i32>} : memref<288x324xbf16, #tpu.memory_space<vmem>>, vector<32x324xbf16>,
    %c0_74 = arith.constant 0 : index
    %c36_75 = arith.constant 36 : index
    %57 = vector.load %arg14[%c0_74, %c36_75] : memref<32x384xbf16, #tpu.memory_space<vmem>>, vector<32x324xbf16>
    %c192_76 = arith.constant 192 : index
    %c0_77 = arith.constant 0 : index
    %58 = vector.load %arg15[%c192_76, %c0_77] : memref<288x324xbf16, #tpu.memory_space<vmem>>, vector<32x324xbf16>
    tpu.vector_store %arg15[%c192_76, %c0_77], %57 {strides = array<i32>} : memref<288x324xbf16, #tpu.memory_space<vmem>>, vector<32x324xbf16>,
    %c0_78 = arith.constant 0 : index
    %c37_79 = arith.constant 37 : index
    %59 = vector.load %arg14[%c0_78, %c37_79] : memref<32x384xbf16, #tpu.memory_space<vmem>>, vector<32x324xbf16>
    %c224_80 = arith.constant 224 : index
    %c0_81 = arith.constant 0 : index
    %60 = vector.load %arg15[%c224_80, %c0_81] : memref<288x324xbf16, #tpu.memory_space<vmem>>, vector<32x324xbf16>
    tpu.vector_store %arg15[%c224_80, %c0_81], %59 {strides = array<i32>} : memref<288x324xbf16, #tpu.memory_space<vmem>>, vector<32x324xbf16>,
    %c0_82 = arith.constant 0 : index
    %c38_83 = arith.constant 38 : index
    %61 = vector.load %arg14[%c0_82, %c38_83] : memref<32x384xbf16, #tpu.memory_space<vmem>>, vector<32x324xbf16>
    %c256_84 = arith.constant 256 : index
    %c0_85 = arith.constant 0 : index
    %62 = vector.load %arg15[%c256_84, %c0_85] : memref<288x324xbf16, #tpu.memory_space<vmem>>, vector<32x324xbf16>
    tpu.vector_store %arg15[%c256_84, %c0_85], %61 {strides = array<i32>} : memref<288x324xbf16, #tpu.memory_space<vmem>>, vector<32x324xbf16>,
    %c0_86 = arith.constant 0 : index
    %c0_87 = arith.constant 0 : index
    %63 = vector.load %arg15[%c0_86, %c0_87] : memref<288x324xbf16, #tpu.memory_space<vmem>>, vector<288x324xbf16>
    %cst_88 = arith.constant dense<0.000000e+00> : vector<32x324xf32>
    %64 = tpu.matmul %40, %63, %cst_88 {dimension_numbers = #tpu.dot_dimension_numbers<[1], [0], [0], [1], [0, 0, 1, 1], [], []>} : vector<32x288xbf16>, vector<288x324xbf16>, vector<32x324xf32> -> vector<32x324xf32>
    %65 = vector.broadcast %42 : vector<32x1xf32> to vector<32x324xf32>
    %66 = arith.addf %64, %65 : vector<32x324xf32>
    %c0_89 = arith.constant 0 : index
    %c0_90 = arith.constant 0 : index
    %67 = vector.load %arg12[%c0_89, %c0_90] : memref<1x324xf32, #tpu.memory_space<vmem>>, vector<1x324xf32>
    %68 = vector.broadcast %67 : vector<1x324xf32> to vector<32x324xf32>
    %69 = arith.mulf %66, %68 : vector<32x324xf32>
    %cst_91 = arith.constant dense<0.000000e+00> : vector<32xf32>
    %70 = vector.multi_reduction <add>, %69, %cst_91 [1] : vector<32x324xf32> to vector<32xf32>
    %71 = vector.shape_cast %70 : vector<32xf32> to vector<32x1xf32>
    %cst_92 = arith.constant 3.906250e-03 : f32
    %72 = vector.broadcast %cst_92 : f32 to vector<32x1xf32>
    %73 = arith.mulf %71, %72 : vector<32x1xf32>
    %c0_93 = arith.constant 0 : index
    %c0_94 = arith.constant 0 : index
    %c0_95 = arith.constant 0 : index
    %74 = vector.load %arg6[%c0_93, %c0_94, %c0_95] : memref<2x8x32xf32, #tpu.memory_space<vmem>>, vector<1x8x32xf32>
    %75 = vector.shape_cast %74 : vector<1x8x32xf32> to vector<8x32xf32>
    %cst_96 = arith.constant dense<0.000000e+00> : vector<8x1xf32>
    %76 = tpu.matmul %75, %73, %cst_96 {dimension_numbers = #tpu.dot_dimension_numbers<[1], [0], [0], [1], [0, 0, 1, 1], [], []>} : vector<8x32xf32>, vector<32x1xf32>, vector<8x1xf32> -> vector<8x1xf32>
    %c0_97 = arith.constant 0 : index
    %c0_98 = arith.constant 0 : index
    %c0_99 = arith.constant 0 : index
    %77 = vector.load %arg7[%c0_97, %c0_98, %c0_99] : memref<2x8x1xf32, #tpu.memory_space<vmem>>, vector<1x8x1xf32>
    %78 = vector.shape_cast %77 : vector<1x8x1xf32> to vector<8x1xf32>
    %79 = arith.addf %76, %78 : vector<8x1xf32>
    %cst_100 = arith.constant 0.000000e+00 : f32
    %80 = vector.broadcast %cst_100 : f32 to vector<8x1xf32>
    %81 = arith.maximumf %79, %80 : vector<8x1xf32>
    %c0_101 = arith.constant 0 : index
    %c0_102 = arith.constant 0 : index
    %c0_103 = arith.constant 0 : index
    %82 = vector.load %arg8[%c0_101, %c0_102, %c0_103] : memref<2x32x8xf32, #tpu.memory_space<vmem>>, vector<1x32x8xf32>
    %83 = vector.shape_cast %82 : vector<1x32x8xf32> to vector<32x8xf32>
    %cst_104 = arith.constant dense<0.000000e+00> : vector<32x1xf32>
    %84 = tpu.matmul %83, %81, %cst_104 {dimension_numbers = #tpu.dot_dimension_numbers<[1], [0], [0], [1], [0, 0, 1, 1], [], []>} : vector<32x8xf32>, vector<8x1xf32>, vector<32x1xf32> -> vector<32x1xf32>
    %c0_105 = arith.constant 0 : index
    %c0_106 = arith.constant 0 : index
    %c0_107 = arith.constant 0 : index
    %85 = vector.load %arg9[%c0_105, %c0_106, %c0_107] : memref<2x32x1xf32, #tpu.memory_space<vmem>>, vector<1x32x1xf32>
    %86 = vector.shape_cast %85 : vector<1x32x1xf32> to vector<32x1xf32>
    %87 = arith.addf %84, %86 : vector<32x1xf32>
    %88 = arith.negf %87 : vector<32x1xf32>
    %89 = math.exp %88 : vector<32x1xf32>
    %cst_108 = arith.constant 1.000000e+00 : f32
    %90 = vector.broadcast %cst_108 : f32 to vector<32x1xf32>
    %91 = arith.addf %90, %89 : vector<32x1xf32>
    %92 = arith.divf %90, %91 : vector<32x1xf32>
    %c0_109 = arith.constant 0 : index
    %c0_110 = arith.constant 0 : index
    %93 = vector.load %arg16[%c0_109, %c0_110] : memref<32x324xf32, #tpu.memory_space<vmem>>, vector<32x324xf32>
    %94 = vector.broadcast %92 : vector<32x1xf32> to vector<32x324xf32>
    %95 = arith.mulf %69, %94 : vector<32x324xf32>
    %96 = arith.addf %93, %95 : vector<32x324xf32>
    %c0_111 = arith.constant 0 : index
    %c0_112 = arith.constant 0 : index
    %97 = vector.load %arg16[%c0_111, %c0_112] : memref<32x324xf32, #tpu.memory_space<vmem>>, vector<32x324xf32>
    tpu.vector_store %arg16[%c0_111, %c0_112], %96 {strides = array<i32>} : memref<32x324xf32, #tpu.memory_space<vmem>>, vector<32x324xf32>,
    %c0_113 = arith.constant 0 : index
    %c0_114 = arith.constant 0 : index
    %98 = vector.load %arg16[%c0_113, %c0_114] : memref<32x324xf32, #tpu.memory_space<vmem>>, vector<32x324xf32>
    %c1_115 = arith.constant 1 : index
    %c0_116 = arith.constant 0 : index
    %c0_117 = arith.constant 0 : index
    %99 = vector.load %arg2[%c1_115, %c0_116, %c0_117] : memref<2x32x288xbf16, #tpu.memory_space<vmem>>, vector<1x32x288xbf16>
    %100 = vector.shape_cast %99 : vector<1x32x288xbf16> to vector<32x288xbf16>
    %c1_118 = arith.constant 1 : index
    %c0_119 = arith.constant 0 : index
    %c0_120 = arith.constant 0 : index
    %101 = vector.load %arg3[%c1_118, %c0_119, %c0_120] : memref<2x32x1xf32, #tpu.memory_space<vmem>>, vector<1x32x1xf32>
    %102 = vector.shape_cast %101 : vector<1x32x1xf32> to vector<32x1xf32>
    %103 = arith.truncf %98 : vector<32x324xf32> to vector<32x324xbf16>
    %c0_121 = arith.constant 0 : index
    %c19_122 = arith.constant 19 : index
    %104 = vector.load %arg14[%c0_121, %c19_122] : memref<32x384xbf16, #tpu.memory_space<vmem>>, vector<32x324xbf16>
    tpu.vector_store %arg14[%c0_121, %c19_122], %103 {strides = array<i32>} : memref<32x384xbf16, #tpu.memory_space<vmem>>, vector<32x324xbf16>,
    %c0_123 = arith.constant 0 : index
    %c0_124 = arith.constant 0 : index
    %105 = vector.load %arg14[%c0_123, %c0_124] : memref<32x384xbf16, #tpu.memory_space<vmem>>, vector<32x324xbf16>
    %c0_125 = arith.constant 0 : index
    %c0_126 = arith.constant 0 : index
    %106 = vector.load %arg15[%c0_125, %c0_126] : memref<288x324xbf16, #tpu.memory_space<vmem>>, vector<32x324xbf16>
    tpu.vector_store %arg15[%c0_125, %c0_126], %105 {strides = array<i32>} : memref<288x324xbf16, #tpu.memory_space<vmem>>, vector<32x324xbf16>,
    %c0_127 = arith.constant 0 : index
    %c1_128 = arith.constant 1 : index
    %107 = vector.load %arg14[%c0_127, %c1_128] : memref<32x384xbf16, #tpu.memory_space<vmem>>, vector<32x324xbf16>
    %c32_129 = arith.constant 32 : index
    %c0_130 = arith.constant 0 : index
    %108 = vector.load %arg15[%c32_129, %c0_130] : memref<288x324xbf16, #tpu.memory_space<vmem>>, vector<32x324xbf16>
    tpu.vector_store %arg15[%c32_129, %c0_130], %107 {strides = array<i32>} : memref<288x324xbf16, #tpu.memory_space<vmem>>, vector<32x324xbf16>,
    %c0_131 = arith.constant 0 : index
    %c2_132 = arith.constant 2 : index
    %109 = vector.load %arg14[%c0_131, %c2_132] : memref<32x384xbf16, #tpu.memory_space<vmem>>, vector<32x324xbf16>
    %c64_133 = arith.constant 64 : index
    %c0_134 = arith.constant 0 : index
    %110 = vector.load %arg15[%c64_133, %c0_134] : memref<288x324xbf16, #tpu.memory_space<vmem>>, vector<32x324xbf16>
    tpu.vector_store %arg15[%c64_133, %c0_134], %109 {strides = array<i32>} : memref<288x324xbf16, #tpu.memory_space<vmem>>, vector<32x324xbf16>,
    %c0_135 = arith.constant 0 : index
    %c18_136 = arith.constant 18 : index
    %111 = vector.load %arg14[%c0_135, %c18_136] : memref<32x384xbf16, #tpu.memory_space<vmem>>, vector<32x324xbf16>
    %c96_137 = arith.constant 96 : index
    %c0_138 = arith.constant 0 : index
    %112 = vector.load %arg15[%c96_137, %c0_138] : memref<288x324xbf16, #tpu.memory_space<vmem>>, vector<32x324xbf16>
    tpu.vector_store %arg15[%c96_137, %c0_138], %111 {strides = array<i32>} : memref<288x324xbf16, #tpu.memory_space<vmem>>, vector<32x324xbf16>,
    %c0_139 = arith.constant 0 : index
    %c19_140 = arith.constant 19 : index
    %113 = vector.load %arg14[%c0_139, %c19_140] : memref<32x384xbf16, #tpu.memory_space<vmem>>, vector<32x324xbf16>
    %c128_141 = arith.constant 128 : index
    %c0_142 = arith.constant 0 : index
    %114 = vector.load %arg15[%c128_141, %c0_142] : memref<288x324xbf16, #tpu.memory_space<vmem>>, vector<32x324xbf16>
    tpu.vector_store %arg15[%c128_141, %c0_142], %113 {strides = array<i32>} : memref<288x324xbf16, #tpu.memory_space<vmem>>, vector<32x324xbf16>,
    %c0_143 = arith.constant 0 : index
    %c20_144 = arith.constant 20 : index
    %115 = vector.load %arg14[%c0_143, %c20_144] : memref<32x384xbf16, #tpu.memory_space<vmem>>, vector<32x324xbf16>
    %c160_145 = arith.constant 160 : index
    %c0_146 = arith.constant 0 : index
    %116 = vector.load %arg15[%c160_145, %c0_146] : memref<288x324xbf16, #tpu.memory_space<vmem>>, vector<32x324xbf16>
    tpu.vector_store %arg15[%c160_145, %c0_146], %115 {strides = array<i32>} : memref<288x324xbf16, #tpu.memory_space<vmem>>, vector<32x324xbf16>,
    %c0_147 = arith.constant 0 : index
    %c36_148 = arith.constant 36 : index
    %117 = vector.load %arg14[%c0_147, %c36_148] : memref<32x384xbf16, #tpu.memory_space<vmem>>, vector<32x324xbf16>
    %c192_149 = arith.constant 192 : index
    %c0_150 = arith.constant 0 : index
    %118 = vector.load %arg15[%c192_149, %c0_150] : memref<288x324xbf16, #tpu.memory_space<vmem>>, vector<32x324xbf16>
    tpu.vector_store %arg15[%c192_149, %c0_150], %117 {strides = array<i32>} : memref<288x324xbf16, #tpu.memory_space<vmem>>, vector<32x324xbf16>,
    %c0_151 = arith.constant 0 : index
    %c37_152 = arith.constant 37 : index
    %119 = vector.load %arg14[%c0_151, %c37_152] : memref<32x384xbf16, #tpu.memory_space<vmem>>, vector<32x324xbf16>
    %c224_153 = arith.constant 224 : index
    %c0_154 = arith.constant 0 : index
    %120 = vector.load %arg15[%c224_153, %c0_154] : memref<288x324xbf16, #tpu.memory_space<vmem>>, vector<32x324xbf16>
    tpu.vector_store %arg15[%c224_153, %c0_154], %119 {strides = array<i32>} : memref<288x324xbf16, #tpu.memory_space<vmem>>, vector<32x324xbf16>,
    %c0_155 = arith.constant 0 : index
    %c38_156 = arith.constant 38 : index
    %121 = vector.load %arg14[%c0_155, %c38_156] : memref<32x384xbf16, #tpu.memory_space<vmem>>, vector<32x324xbf16>
    %c256_157 = arith.constant 256 : index
    %c0_158 = arith.constant 0 : index
    %122 = vector.load %arg15[%c256_157, %c0_158] : memref<288x324xbf16, #tpu.memory_space<vmem>>, vector<32x324xbf16>
    tpu.vector_store %arg15[%c256_157, %c0_158], %121 {strides = array<i32>} : memref<288x324xbf16, #tpu.memory_space<vmem>>, vector<32x324xbf16>,
    %c0_159 = arith.constant 0 : index
    %c0_160 = arith.constant 0 : index
    %123 = vector.load %arg15[%c0_159, %c0_160] : memref<288x324xbf16, #tpu.memory_space<vmem>>, vector<288x324xbf16>
    %cst_161 = arith.constant dense<0.000000e+00> : vector<32x324xf32>
    %124 = tpu.matmul %100, %123, %cst_161 {dimension_numbers = #tpu.dot_dimension_numbers<[1], [0], [0], [1], [0, 0, 1, 1], [], []>} : vector<32x288xbf16>, vector<288x324xbf16>, vector<32x324xf32> -> vector<32x324xf32>
    %125 = vector.broadcast %102 : vector<32x1xf32> to vector<32x324xf32>
    %126 = arith.addf %124, %125 : vector<32x324xf32>
    %c0_162 = arith.constant 0 : index
    %c0_163 = arith.constant 0 : index
    %127 = vector.load %arg12[%c0_162, %c0_163] : memref<1x324xf32, #tpu.memory_space<vmem>>, vector<1x324xf32>
    %128 = vector.broadcast %127 : vector<1x324xf32> to vector<32x324xf32>
    %129 = arith.mulf %126, %128 : vector<32x324xf32>
    %cst_164 = arith.constant 0.000000e+00 : f32
    %130 = vector.broadcast %cst_164 : f32 to vector<32x324xf32>
    %131 = arith.maximumf %129, %130 : vector<32x324xf32>
    %c1_165 = arith.constant 1 : index
    %c0_166 = arith.constant 0 : index
    %c0_167 = arith.constant 0 : index
    %132 = vector.load %arg4[%c1_165, %c0_166, %c0_167] : memref<2x32x288xbf16, #tpu.memory_space<vmem>>, vector<1x32x288xbf16>
    %133 = vector.shape_cast %132 : vector<1x32x288xbf16> to vector<32x288xbf16>
    %c1_168 = arith.constant 1 : index
    %c0_169 = arith.constant 0 : index
    %c0_170 = arith.constant 0 : index
    %134 = vector.load %arg5[%c1_168, %c0_169, %c0_170] : memref<2x32x1xf32, #tpu.memory_space<vmem>>, vector<1x32x1xf32>
    %135 = vector.shape_cast %134 : vector<1x32x1xf32> to vector<32x1xf32>
    %136 = arith.truncf %131 : vector<32x324xf32> to vector<32x324xbf16>
    %c0_171 = arith.constant 0 : index
    %c19_172 = arith.constant 19 : index
    %137 = vector.load %arg14[%c0_171, %c19_172] : memref<32x384xbf16, #tpu.memory_space<vmem>>, vector<32x324xbf16>
    tpu.vector_store %arg14[%c0_171, %c19_172], %136 {strides = array<i32>} : memref<32x384xbf16, #tpu.memory_space<vmem>>, vector<32x324xbf16>,
    %c0_173 = arith.constant 0 : index
    %c0_174 = arith.constant 0 : index
    %138 = vector.load %arg14[%c0_173, %c0_174] : memref<32x384xbf16, #tpu.memory_space<vmem>>, vector<32x324xbf16>
    %c0_175 = arith.constant 0 : index
    %c0_176 = arith.constant 0 : index
    %139 = vector.load %arg15[%c0_175, %c0_176] : memref<288x324xbf16, #tpu.memory_space<vmem>>, vector<32x324xbf16>
    tpu.vector_store %arg15[%c0_175, %c0_176], %138 {strides = array<i32>} : memref<288x324xbf16, #tpu.memory_space<vmem>>, vector<32x324xbf16>,
    %c0_177 = arith.constant 0 : index
    %c1_178 = arith.constant 1 : index
    %140 = vector.load %arg14[%c0_177, %c1_178] : memref<32x384xbf16, #tpu.memory_space<vmem>>, vector<32x324xbf16>
    %c32_179 = arith.constant 32 : index
    %c0_180 = arith.constant 0 : index
    %141 = vector.load %arg15[%c32_179, %c0_180] : memref<288x324xbf16, #tpu.memory_space<vmem>>, vector<32x324xbf16>
    tpu.vector_store %arg15[%c32_179, %c0_180], %140 {strides = array<i32>} : memref<288x324xbf16, #tpu.memory_space<vmem>>, vector<32x324xbf16>,
    %c0_181 = arith.constant 0 : index
    %c2_182 = arith.constant 2 : index
    %142 = vector.load %arg14[%c0_181, %c2_182] : memref<32x384xbf16, #tpu.memory_space<vmem>>, vector<32x324xbf16>
    %c64_183 = arith.constant 64 : index
    %c0_184 = arith.constant 0 : index
    %143 = vector.load %arg15[%c64_183, %c0_184] : memref<288x324xbf16, #tpu.memory_space<vmem>>, vector<32x324xbf16>
    tpu.vector_store %arg15[%c64_183, %c0_184], %142 {strides = array<i32>} : memref<288x324xbf16, #tpu.memory_space<vmem>>, vector<32x324xbf16>,
    %c0_185 = arith.constant 0 : index
    %c18_186 = arith.constant 18 : index
    %144 = vector.load %arg14[%c0_185, %c18_186] : memref<32x384xbf16, #tpu.memory_space<vmem>>, vector<32x324xbf16>
    %c96_187 = arith.constant 96 : index
    %c0_188 = arith.constant 0 : index
    %145 = vector.load %arg15[%c96_187, %c0_188] : memref<288x324xbf16, #tpu.memory_space<vmem>>, vector<32x324xbf16>
    tpu.vector_store %arg15[%c96_187, %c0_188], %144 {strides = array<i32>} : memref<288x324xbf16, #tpu.memory_space<vmem>>, vector<32x324xbf16>,
    %c0_189 = arith.constant 0 : index
    %c19_190 = arith.constant 19 : index
    %146 = vector.load %arg14[%c0_189, %c19_190] : memref<32x384xbf16, #tpu.memory_space<vmem>>, vector<32x324xbf16>
    %c128_191 = arith.constant 128 : index
    %c0_192 = arith.constant 0 : index
    %147 = vector.load %arg15[%c128_191, %c0_192] : memref<288x324xbf16, #tpu.memory_space<vmem>>, vector<32x324xbf16>
    tpu.vector_store %arg15[%c128_191, %c0_192], %146 {strides = array<i32>} : memref<288x324xbf16, #tpu.memory_space<vmem>>, vector<32x324xbf16>,
    %c0_193 = arith.constant 0 : index
    %c20_194 = arith.constant 20 : index
    %148 = vector.load %arg14[%c0_193, %c20_194] : memref<32x384xbf16, #tpu.memory_space<vmem>>, vector<32x324xbf16>
    %c160_195 = arith.constant 160 : index
    %c0_196 = arith.constant 0 : index
    %149 = vector.load %arg15[%c160_195, %c0_196] : memref<288x324xbf16, #tpu.memory_space<vmem>>, vector<32x324xbf16>
    tpu.vector_store %arg15[%c160_195, %c0_196], %148 {strides = array<i32>} : memref<288x324xbf16, #tpu.memory_space<vmem>>, vector<32x324xbf16>,
    %c0_197 = arith.constant 0 : index
    %c36_198 = arith.constant 36 : index
    %150 = vector.load %arg14[%c0_197, %c36_198] : memref<32x384xbf16, #tpu.memory_space<vmem>>, vector<32x324xbf16>
    %c192_199 = arith.constant 192 : index
    %c0_200 = arith.constant 0 : index
    %151 = vector.load %arg15[%c192_199, %c0_200] : memref<288x324xbf16, #tpu.memory_space<vmem>>, vector<32x324xbf16>
    tpu.vector_store %arg15[%c192_199, %c0_200], %150 {strides = array<i32>} : memref<288x324xbf16, #tpu.memory_space<vmem>>, vector<32x324xbf16>,
    %c0_201 = arith.constant 0 : index
    %c37_202 = arith.constant 37 : index
    %152 = vector.load %arg14[%c0_201, %c37_202] : memref<32x384xbf16, #tpu.memory_space<vmem>>, vector<32x324xbf16>
    %c224_203 = arith.constant 224 : index
    %c0_204 = arith.constant 0 : index
    %153 = vector.load %arg15[%c224_203, %c0_204] : memref<288x324xbf16, #tpu.memory_space<vmem>>, vector<32x324xbf16>
    tpu.vector_store %arg15[%c224_203, %c0_204], %152 {strides = array<i32>} : memref<288x324xbf16, #tpu.memory_space<vmem>>, vector<32x324xbf16>,
    %c0_205 = arith.constant 0 : index
    %c38_206 = arith.constant 38 : index
    %154 = vector.load %arg14[%c0_205, %c38_206] : memref<32x384xbf16, #tpu.memory_space<vmem>>, vector<32x324xbf16>
    %c256_207 = arith.constant 256 : index
    %c0_208 = arith.constant 0 : index
    %155 = vector.load %arg15[%c256_207, %c0_208] : memref<288x324xbf16, #tpu.memory_space<vmem>>, vector<32x324xbf16>
    tpu.vector_store %arg15[%c256_207, %c0_208], %154 {strides = array<i32>} : memref<288x324xbf16, #tpu.memory_space<vmem>>, vector<32x324xbf16>,
    %c0_209 = arith.constant 0 : index
    %c0_210 = arith.constant 0 : index
    %156 = vector.load %arg15[%c0_209, %c0_210] : memref<288x324xbf16, #tpu.memory_space<vmem>>, vector<288x324xbf16>
    %cst_211 = arith.constant dense<0.000000e+00> : vector<32x324xf32>
    %157 = tpu.matmul %133, %156, %cst_211 {dimension_numbers = #tpu.dot_dimension_numbers<[1], [0], [0], [1], [0, 0, 1, 1], [], []>} : vector<32x288xbf16>, vector<288x324xbf16>, vector<32x324xf32> -> vector<32x324xf32>
    %158 = vector.broadcast %135 : vector<32x1xf32> to vector<32x324xf32>
    %159 = arith.addf %157, %158 : vector<32x324xf32>
    %c0_212 = arith.constant 0 : index
    %c0_213 = arith.constant 0 : index
    %160 = vector.load %arg12[%c0_212, %c0_213] : memref<1x324xf32, #tpu.memory_space<vmem>>, vector<1x324xf32>
    %161 = vector.broadcast %160 : vector<1x324xf32> to vector<32x324xf32>
    %162 = arith.mulf %159, %161 : vector<32x324xf32>
    %cst_214 = arith.constant dense<0.000000e+00> : vector<32xf32>
    %163 = vector.multi_reduction <add>, %162, %cst_214 [1] : vector<32x324xf32> to vector<32xf32>
    %164 = vector.shape_cast %163 : vector<32xf32> to vector<32x1xf32>
    %cst_215 = arith.constant 3.906250e-03 : f32
    %165 = vector.broadcast %cst_215 : f32 to vector<32x1xf32>
    %166 = arith.mulf %164, %165 : vector<32x1xf32>
    %c1_216 = arith.constant 1 : index
    %c0_217 = arith.constant 0 : index
    %c0_218 = arith.constant 0 : index
    %167 = vector.load %arg6[%c1_216, %c0_217, %c0_218] : memref<2x8x32xf32, #tpu.memory_space<vmem>>, vector<1x8x32xf32>
    %168 = vector.shape_cast %167 : vector<1x8x32xf32> to vector<8x32xf32>
    %cst_219 = arith.constant dense<0.000000e+00> : vector<8x1xf32>
    %169 = tpu.matmul %168, %166, %cst_219 {dimension_numbers = #tpu.dot_dimension_numbers<[1], [0], [0], [1], [0, 0, 1, 1], [], []>} : vector<8x32xf32>, vector<32x1xf32>, vector<8x1xf32> -> vector<8x1xf32>
    %c1_220 = arith.constant 1 : index
    %c0_221 = arith.constant 0 : index
    %c0_222 = arith.constant 0 : index
    %170 = vector.load %arg7[%c1_220, %c0_221, %c0_222] : memref<2x8x1xf32, #tpu.memory_space<vmem>>, vector<1x8x1xf32>
    %171 = vector.shape_cast %170 : vector<1x8x1xf32> to vector<8x1xf32>
    %172 = arith.addf %169, %171 : vector<8x1xf32>
    %cst_223 = arith.constant 0.000000e+00 : f32
    %173 = vector.broadcast %cst_223 : f32 to vector<8x1xf32>
    %174 = arith.maximumf %172, %173 : vector<8x1xf32>
    %c1_224 = arith.constant 1 : index
    %c0_225 = arith.constant 0 : index
    %c0_226 = arith.constant 0 : index
    %175 = vector.load %arg8[%c1_224, %c0_225, %c0_226] : memref<2x32x8xf32, #tpu.memory_space<vmem>>, vector<1x32x8xf32>
    %176 = vector.shape_cast %175 : vector<1x32x8xf32> to vector<32x8xf32>
    %cst_227 = arith.constant dense<0.000000e+00> : vector<32x1xf32>
    %177 = tpu.matmul %176, %174, %cst_227 {dimension_numbers = #tpu.dot_dimension_numbers<[1], [0], [0], [1], [0, 0, 1, 1], [], []>} : vector<32x8xf32>, vector<8x1xf32>, vector<32x1xf32> -> vector<32x1xf32>
    %c1_228 = arith.constant 1 : index
    %c0_229 = arith.constant 0 : index
    %c0_230 = arith.constant 0 : index
    %178 = vector.load %arg9[%c1_228, %c0_229, %c0_230] : memref<2x32x1xf32, #tpu.memory_space<vmem>>, vector<1x32x1xf32>
    %179 = vector.shape_cast %178 : vector<1x32x1xf32> to vector<32x1xf32>
    %180 = arith.addf %177, %179 : vector<32x1xf32>
    %181 = arith.negf %180 : vector<32x1xf32>
    %182 = math.exp %181 : vector<32x1xf32>
    %cst_231 = arith.constant 1.000000e+00 : f32
    %183 = vector.broadcast %cst_231 : f32 to vector<32x1xf32>
    %184 = arith.addf %183, %182 : vector<32x1xf32>
    %185 = arith.divf %183, %184 : vector<32x1xf32>
    %c0_232 = arith.constant 0 : index
    %c0_233 = arith.constant 0 : index
    %186 = vector.load %arg16[%c0_232, %c0_233] : memref<32x324xf32, #tpu.memory_space<vmem>>, vector<32x324xf32>
    %187 = vector.broadcast %185 : vector<32x1xf32> to vector<32x324xf32>
    %188 = arith.mulf %162, %187 : vector<32x324xf32>
    %189 = arith.addf %186, %188 : vector<32x324xf32>
    %c0_234 = arith.constant 0 : index
    %c0_235 = arith.constant 0 : index
    %190 = vector.load %arg16[%c0_234, %c0_235] : memref<32x324xf32, #tpu.memory_space<vmem>>, vector<32x324xf32>
    tpu.vector_store %arg16[%c0_234, %c0_235], %189 {strides = array<i32>} : memref<32x324xf32, #tpu.memory_space<vmem>>, vector<32x324xf32>,
    %c0_236 = arith.constant 0 : index
    %c0_237 = arith.constant 0 : index
    %191 = vector.load %arg16[%c0_236, %c0_237] : memref<32x324xf32, #tpu.memory_space<vmem>>, vector<32x324xf32>
    %c0_238 = arith.constant 0 : index
    %c0_239 = arith.constant 0 : index
    %192 = vector.load %arg10[%c0_238, %c0_239] : memref<32x288xbf16, #tpu.memory_space<vmem>>, vector<32x288xbf16>
    %c0_240 = arith.constant 0 : index
    %c0_241 = arith.constant 0 : index
    %193 = vector.load %arg11[%c0_240, %c0_241] : memref<32x1xf32, #tpu.memory_space<vmem>>, vector<32x1xf32>
    %194 = arith.truncf %191 : vector<32x324xf32> to vector<32x324xbf16>
    %c0_242 = arith.constant 0 : index
    %c19_243 = arith.constant 19 : index
    %195 = vector.load %arg14[%c0_242, %c19_243] : memref<32x384xbf16, #tpu.memory_space<vmem>>, vector<32x324xbf16>
    tpu.vector_store %arg14[%c0_242, %c19_243], %194 {strides = array<i32>} : memref<32x384xbf16, #tpu.memory_space<vmem>>, vector<32x324xbf16>,
    %c0_244 = arith.constant 0 : index
    %c0_245 = arith.constant 0 : index
    %196 = vector.load %arg14[%c0_244, %c0_245] : memref<32x384xbf16, #tpu.memory_space<vmem>>, vector<32x324xbf16>
    %c0_246 = arith.constant 0 : index
    %c0_247 = arith.constant 0 : index
    %197 = vector.load %arg15[%c0_246, %c0_247] : memref<288x324xbf16, #tpu.memory_space<vmem>>, vector<32x324xbf16>
    tpu.vector_store %arg15[%c0_246, %c0_247], %196 {strides = array<i32>} : memref<288x324xbf16, #tpu.memory_space<vmem>>, vector<32x324xbf16>,
    %c0_248 = arith.constant 0 : index
    %c1_249 = arith.constant 1 : index
    %198 = vector.load %arg14[%c0_248, %c1_249] : memref<32x384xbf16, #tpu.memory_space<vmem>>, vector<32x324xbf16>
    %c32_250 = arith.constant 32 : index
    %c0_251 = arith.constant 0 : index
    %199 = vector.load %arg15[%c32_250, %c0_251] : memref<288x324xbf16, #tpu.memory_space<vmem>>, vector<32x324xbf16>
    tpu.vector_store %arg15[%c32_250, %c0_251], %198 {strides = array<i32>} : memref<288x324xbf16, #tpu.memory_space<vmem>>, vector<32x324xbf16>,
    %c0_252 = arith.constant 0 : index
    %c2_253 = arith.constant 2 : index
    %200 = vector.load %arg14[%c0_252, %c2_253] : memref<32x384xbf16, #tpu.memory_space<vmem>>, vector<32x324xbf16>
    %c64_254 = arith.constant 64 : index
    %c0_255 = arith.constant 0 : index
    %201 = vector.load %arg15[%c64_254, %c0_255] : memref<288x324xbf16, #tpu.memory_space<vmem>>, vector<32x324xbf16>
    tpu.vector_store %arg15[%c64_254, %c0_255], %200 {strides = array<i32>} : memref<288x324xbf16, #tpu.memory_space<vmem>>, vector<32x324xbf16>,
    %c0_256 = arith.constant 0 : index
    %c18_257 = arith.constant 18 : index
    %202 = vector.load %arg14[%c0_256, %c18_257] : memref<32x384xbf16, #tpu.memory_space<vmem>>, vector<32x324xbf16>
    %c96_258 = arith.constant 96 : index
    %c0_259 = arith.constant 0 : index
    %203 = vector.load %arg15[%c96_258, %c0_259] : memref<288x324xbf16, #tpu.memory_space<vmem>>, vector<32x324xbf16>
    tpu.vector_store %arg15[%c96_258, %c0_259], %202 {strides = array<i32>} : memref<288x324xbf16, #tpu.memory_space<vmem>>, vector<32x324xbf16>,
    %c0_260 = arith.constant 0 : index
    %c19_261 = arith.constant 19 : index
    %204 = vector.load %arg14[%c0_260, %c19_261] : memref<32x384xbf16, #tpu.memory_space<vmem>>, vector<32x324xbf16>
    %c128_262 = arith.constant 128 : index
    %c0_263 = arith.constant 0 : index
    %205 = vector.load %arg15[%c128_262, %c0_263] : memref<288x324xbf16, #tpu.memory_space<vmem>>, vector<32x324xbf16>
    tpu.vector_store %arg15[%c128_262, %c0_263], %204 {strides = array<i32>} : memref<288x324xbf16, #tpu.memory_space<vmem>>, vector<32x324xbf16>,
    %c0_264 = arith.constant 0 : index
    %c20_265 = arith.constant 20 : index
    %206 = vector.load %arg14[%c0_264, %c20_265] : memref<32x384xbf16, #tpu.memory_space<vmem>>, vector<32x324xbf16>
    %c160_266 = arith.constant 160 : index
    %c0_267 = arith.constant 0 : index
    %207 = vector.load %arg15[%c160_266, %c0_267] : memref<288x324xbf16, #tpu.memory_space<vmem>>, vector<32x324xbf16>
    tpu.vector_store %arg15[%c160_266, %c0_267], %206 {strides = array<i32>} : memref<288x324xbf16, #tpu.memory_space<vmem>>, vector<32x324xbf16>,
    %c0_268 = arith.constant 0 : index
    %c36_269 = arith.constant 36 : index
    %208 = vector.load %arg14[%c0_268, %c36_269] : memref<32x384xbf16, #tpu.memory_space<vmem>>, vector<32x324xbf16>
    %c192_270 = arith.constant 192 : index
    %c0_271 = arith.constant 0 : index
    %209 = vector.load %arg15[%c192_270, %c0_271] : memref<288x324xbf16, #tpu.memory_space<vmem>>, vector<32x324xbf16>
    tpu.vector_store %arg15[%c192_270, %c0_271], %208 {strides = array<i32>} : memref<288x324xbf16, #tpu.memory_space<vmem>>, vector<32x324xbf16>,
    %c0_272 = arith.constant 0 : index
    %c37_273 = arith.constant 37 : index
    %210 = vector.load %arg14[%c0_272, %c37_273] : memref<32x384xbf16, #tpu.memory_space<vmem>>, vector<32x324xbf16>
    %c224_274 = arith.constant 224 : index
    %c0_275 = arith.constant 0 : index
    %211 = vector.load %arg15[%c224_274, %c0_275] : memref<288x324xbf16, #tpu.memory_space<vmem>>, vector<32x324xbf16>
    tpu.vector_store %arg15[%c224_274, %c0_275], %210 {strides = array<i32>} : memref<288x324xbf16, #tpu.memory_space<vmem>>, vector<32x324xbf16>,
    %c0_276 = arith.constant 0 : index
    %c38_277 = arith.constant 38 : index
    %212 = vector.load %arg14[%c0_276, %c38_277] : memref<32x384xbf16, #tpu.memory_space<vmem>>, vector<32x324xbf16>
    %c256_278 = arith.constant 256 : index
    %c0_279 = arith.constant 0 : index
    %213 = vector.load %arg15[%c256_278, %c0_279] : memref<288x324xbf16, #tpu.memory_space<vmem>>, vector<32x324xbf16>
    tpu.vector_store %arg15[%c256_278, %c0_279], %212 {strides = array<i32>} : memref<288x324xbf16, #tpu.memory_space<vmem>>, vector<32x324xbf16>,
    %c0_280 = arith.constant 0 : index
    %c0_281 = arith.constant 0 : index
    %214 = vector.load %arg15[%c0_280, %c0_281] : memref<288x324xbf16, #tpu.memory_space<vmem>>, vector<288x324xbf16>
    %cst_282 = arith.constant dense<0.000000e+00> : vector<32x324xf32>
    %215 = tpu.matmul %192, %214, %cst_282 {dimension_numbers = #tpu.dot_dimension_numbers<[1], [0], [0], [1], [0, 0, 1, 1], [], []>} : vector<32x288xbf16>, vector<288x324xbf16>, vector<32x324xf32> -> vector<32x324xf32>
    %216 = vector.broadcast %193 : vector<32x1xf32> to vector<32x324xf32>
    %217 = arith.addf %215, %216 : vector<32x324xf32>
    %c0_283 = arith.constant 0 : index
    %c0_284 = arith.constant 0 : index
    %218 = vector.load %arg12[%c0_283, %c0_284] : memref<1x324xf32, #tpu.memory_space<vmem>>, vector<1x324xf32>
    %219 = vector.broadcast %218 : vector<1x324xf32> to vector<32x324xf32>
    %220 = arith.mulf %217, %219 : vector<32x324xf32>
    %c0_285 = arith.constant 0 : index
    %c0_286 = arith.constant 0 : index
    %c0_287 = arith.constant 0 : index
    %221 = vector.load %arg1[%c0_285, %c0_286, %c0_287] : memref<2x32x324xf32, #tpu.memory_space<vmem>>, vector<1x32x324xf32>
    %222 = vector.shape_cast %221 : vector<1x32x324xf32> to vector<32x324xf32>
    %223 = arith.addf %220, %222 : vector<32x324xf32>
    %c0_288 = arith.constant 0 : index
    %c0_289 = arith.constant 0 : index
    %c0_290 = arith.constant 0 : index
    %224 = vector.load %arg13[%c0_288, %c0_289, %c0_290] : memref<2x32x324xf32, #tpu.memory_space<vmem>>, vector<1x32x324xf32>
    %225 = vector.shape_cast %224 : vector<1x32x324xf32> to vector<32x324xf32>
    %226 = vector.shape_cast %223 : vector<32x324xf32> to vector<1x32x324xf32>
    tpu.vector_store %arg13[%c0_288, %c0_289, %c0_290], %226 {strides = array<i32>} : memref<2x32x324xf32, #tpu.memory_space<vmem>>, vector<1x32x324xf32>,
    %c1_291 = arith.constant 1 : index
    %c0_292 = arith.constant 0 : index
    %c0_293 = arith.constant 0 : index
    %227 = vector.load %arg1[%c1_291, %c0_292, %c0_293] : memref<2x32x324xf32, #tpu.memory_space<vmem>>, vector<1x32x324xf32>
    %228 = vector.shape_cast %227 : vector<1x32x324xf32> to vector<32x324xf32>
    %c0_294 = arith.constant 0 : index
    %c0_295 = arith.constant 0 : index
    %229 = vector.load %arg16[%c0_294, %c0_295] : memref<32x324xf32, #tpu.memory_space<vmem>>, vector<32x324xf32>
    tpu.vector_store %arg16[%c0_294, %c0_295], %228 {strides = array<i32>} : memref<32x324xf32, #tpu.memory_space<vmem>>, vector<32x324xf32>,
    %c0_296 = arith.constant 0 : index
    %c0_297 = arith.constant 0 : index
    %230 = vector.load %arg16[%c0_296, %c0_297] : memref<32x324xf32, #tpu.memory_space<vmem>>, vector<32x324xf32>
    %c0_298 = arith.constant 0 : index
    %c0_299 = arith.constant 0 : index
    %c0_300 = arith.constant 0 : index
    %231 = vector.load %arg2[%c0_298, %c0_299, %c0_300] : memref<2x32x288xbf16, #tpu.memory_space<vmem>>, vector<1x32x288xbf16>
    %232 = vector.shape_cast %231 : vector<1x32x288xbf16> to vector<32x288xbf16>
    %c0_301 = arith.constant 0 : index
    %c0_302 = arith.constant 0 : index
    %c0_303 = arith.constant 0 : index
    %233 = vector.load %arg3[%c0_301, %c0_302, %c0_303] : memref<2x32x1xf32, #tpu.memory_space<vmem>>, vector<1x32x1xf32>
    %234 = vector.shape_cast %233 : vector<1x32x1xf32> to vector<32x1xf32>
    %235 = arith.truncf %230 : vector<32x324xf32> to vector<32x324xbf16>
    %c0_304 = arith.constant 0 : index
    %c19_305 = arith.constant 19 : index
    %236 = vector.load %arg14[%c0_304, %c19_305] : memref<32x384xbf16, #tpu.memory_space<vmem>>, vector<32x324xbf16>
    tpu.vector_store %arg14[%c0_304, %c19_305], %235 {strides = array<i32>} : memref<32x384xbf16, #tpu.memory_space<vmem>>, vector<32x324xbf16>,
    %c0_306 = arith.constant 0 : index
    %c0_307 = arith.constant 0 : index
    %237 = vector.load %arg14[%c0_306, %c0_307] : memref<32x384xbf16, #tpu.memory_space<vmem>>, vector<32x324xbf16>
    %c0_308 = arith.constant 0 : index
    %c0_309 = arith.constant 0 : index
    %238 = vector.load %arg15[%c0_308, %c0_309] : memref<288x324xbf16, #tpu.memory_space<vmem>>, vector<32x324xbf16>
    tpu.vector_store %arg15[%c0_308, %c0_309], %237 {strides = array<i32>} : memref<288x324xbf16, #tpu.memory_space<vmem>>, vector<32x324xbf16>,
    %c0_310 = arith.constant 0 : index
    %c1_311 = arith.constant 1 : index
    %239 = vector.load %arg14[%c0_310, %c1_311] : memref<32x384xbf16, #tpu.memory_space<vmem>>, vector<32x324xbf16>
    %c32_312 = arith.constant 32 : index
    %c0_313 = arith.constant 0 : index
    %240 = vector.load %arg15[%c32_312, %c0_313] : memref<288x324xbf16, #tpu.memory_space<vmem>>, vector<32x324xbf16>
    tpu.vector_store %arg15[%c32_312, %c0_313], %239 {strides = array<i32>} : memref<288x324xbf16, #tpu.memory_space<vmem>>, vector<32x324xbf16>,
    %c0_314 = arith.constant 0 : index
    %c2_315 = arith.constant 2 : index
    %241 = vector.load %arg14[%c0_314, %c2_315] : memref<32x384xbf16, #tpu.memory_space<vmem>>, vector<32x324xbf16>
    %c64_316 = arith.constant 64 : index
    %c0_317 = arith.constant 0 : index
    %242 = vector.load %arg15[%c64_316, %c0_317] : memref<288x324xbf16, #tpu.memory_space<vmem>>, vector<32x324xbf16>
    tpu.vector_store %arg15[%c64_316, %c0_317], %241 {strides = array<i32>} : memref<288x324xbf16, #tpu.memory_space<vmem>>, vector<32x324xbf16>,
    %c0_318 = arith.constant 0 : index
    %c18_319 = arith.constant 18 : index
    %243 = vector.load %arg14[%c0_318, %c18_319] : memref<32x384xbf16, #tpu.memory_space<vmem>>, vector<32x324xbf16>
    %c96_320 = arith.constant 96 : index
    %c0_321 = arith.constant 0 : index
    %244 = vector.load %arg15[%c96_320, %c0_321] : memref<288x324xbf16, #tpu.memory_space<vmem>>, vector<32x324xbf16>
    tpu.vector_store %arg15[%c96_320, %c0_321], %243 {strides = array<i32>} : memref<288x324xbf16, #tpu.memory_space<vmem>>, vector<32x324xbf16>,
    %c0_322 = arith.constant 0 : index
    %c19_323 = arith.constant 19 : index
    %245 = vector.load %arg14[%c0_322, %c19_323] : memref<32x384xbf16, #tpu.memory_space<vmem>>, vector<32x324xbf16>
    %c128_324 = arith.constant 128 : index
    %c0_325 = arith.constant 0 : index
    %246 = vector.load %arg15[%c128_324, %c0_325] : memref<288x324xbf16, #tpu.memory_space<vmem>>, vector<32x324xbf16>
    tpu.vector_store %arg15[%c128_324, %c0_325], %245 {strides = array<i32>} : memref<288x324xbf16, #tpu.memory_space<vmem>>, vector<32x324xbf16>,
    %c0_326 = arith.constant 0 : index
    %c20_327 = arith.constant 20 : index
    %247 = vector.load %arg14[%c0_326, %c20_327] : memref<32x384xbf16, #tpu.memory_space<vmem>>, vector<32x324xbf16>
    %c160_328 = arith.constant 160 : index
    %c0_329 = arith.constant 0 : index
    %248 = vector.load %arg15[%c160_328, %c0_329] : memref<288x324xbf16, #tpu.memory_space<vmem>>, vector<32x324xbf16>
    tpu.vector_store %arg15[%c160_328, %c0_329], %247 {strides = array<i32>} : memref<288x324xbf16, #tpu.memory_space<vmem>>, vector<32x324xbf16>,
    %c0_330 = arith.constant 0 : index
    %c36_331 = arith.constant 36 : index
    %249 = vector.load %arg14[%c0_330, %c36_331] : memref<32x384xbf16, #tpu.memory_space<vmem>>, vector<32x324xbf16>
    %c192_332 = arith.constant 192 : index
    %c0_333 = arith.constant 0 : index
    %250 = vector.load %arg15[%c192_332, %c0_333] : memref<288x324xbf16, #tpu.memory_space<vmem>>, vector<32x324xbf16>
    tpu.vector_store %arg15[%c192_332, %c0_333], %249 {strides = array<i32>} : memref<288x324xbf16, #tpu.memory_space<vmem>>, vector<32x324xbf16>,
    %c0_334 = arith.constant 0 : index
    %c37_335 = arith.constant 37 : index
    %251 = vector.load %arg14[%c0_334, %c37_335] : memref<32x384xbf16, #tpu.memory_space<vmem>>, vector<32x324xbf16>
    %c224_336 = arith.constant 224 : index
    %c0_337 = arith.constant 0 : index
    %252 = vector.load %arg15[%c224_336, %c0_337] : memref<288x324xbf16, #tpu.memory_space<vmem>>, vector<32x324xbf16>
    tpu.vector_store %arg15[%c224_336, %c0_337], %251 {strides = array<i32>} : memref<288x324xbf16, #tpu.memory_space<vmem>>, vector<32x324xbf16>,
    %c0_338 = arith.constant 0 : index
    %c38_339 = arith.constant 38 : index
    %253 = vector.load %arg14[%c0_338, %c38_339] : memref<32x384xbf16, #tpu.memory_space<vmem>>, vector<32x324xbf16>
    %c256_340 = arith.constant 256 : index
    %c0_341 = arith.constant 0 : index
    %254 = vector.load %arg15[%c256_340, %c0_341] : memref<288x324xbf16, #tpu.memory_space<vmem>>, vector<32x324xbf16>
    tpu.vector_store %arg15[%c256_340, %c0_341], %253 {strides = array<i32>} : memref<288x324xbf16, #tpu.memory_space<vmem>>, vector<32x324xbf16>,
    %c0_342 = arith.constant 0 : index
    %c0_343 = arith.constant 0 : index
    %255 = vector.load %arg15[%c0_342, %c0_343] : memref<288x324xbf16, #tpu.memory_space<vmem>>, vector<288x324xbf16>
    %cst_344 = arith.constant dense<0.000000e+00> : vector<32x324xf32>
    %256 = tpu.matmul %232, %255, %cst_344 {dimension_numbers = #tpu.dot_dimension_numbers<[1], [0], [0], [1], [0, 0, 1, 1], [], []>} : vector<32x288xbf16>, vector<288x324xbf16>, vector<32x324xf32> -> vector<32x324xf32>
    %257 = vector.broadcast %234 : vector<32x1xf32> to vector<32x324xf32>
    %258 = arith.addf %256, %257 : vector<32x324xf32>
    %c0_345 = arith.constant 0 : index
    %c0_346 = arith.constant 0 : index
    %259 = vector.load %arg12[%c0_345, %c0_346] : memref<1x324xf32, #tpu.memory_space<vmem>>, vector<1x324xf32>
    %260 = vector.broadcast %259 : vector<1x324xf32> to vector<32x324xf32>
    %261 = arith.mulf %258, %260 : vector<32x324xf32>
    %cst_347 = arith.constant 0.000000e+00 : f32
    %262 = vector.broadcast %cst_347 : f32 to vector<32x324xf32>
    %263 = arith.maximumf %261, %262 : vector<32x324xf32>
    %c0_348 = arith.constant 0 : index
    %c0_349 = arith.constant 0 : index
    %c0_350 = arith.constant 0 : index
    %264 = vector.load %arg4[%c0_348, %c0_349, %c0_350] : memref<2x32x288xbf16, #tpu.memory_space<vmem>>, vector<1x32x288xbf16>
    %265 = vector.shape_cast %264 : vector<1x32x288xbf16> to vector<32x288xbf16>
    %c0_351 = arith.constant 0 : index
    %c0_352 = arith.constant 0 : index
    %c0_353 = arith.constant 0 : index
    %266 = vector.load %arg5[%c0_351, %c0_352, %c0_353] : memref<2x32x1xf32, #tpu.memory_space<vmem>>, vector<1x32x1xf32>
    %267 = vector.shape_cast %266 : vector<1x32x1xf32> to vector<32x1xf32>
    %268 = arith.truncf %263 : vector<32x324xf32> to vector<32x324xbf16>
    %c0_354 = arith.constant 0 : index
    %c19_355 = arith.constant 19 : index
    %269 = vector.load %arg14[%c0_354, %c19_355] : memref<32x384xbf16, #tpu.memory_space<vmem>>, vector<32x324xbf16>
    tpu.vector_store %arg14[%c0_354, %c19_355], %268 {strides = array<i32>} : memref<32x384xbf16, #tpu.memory_space<vmem>>, vector<32x324xbf16>,
    %c0_356 = arith.constant 0 : index
    %c0_357 = arith.constant 0 : index
    %270 = vector.load %arg14[%c0_356, %c0_357] : memref<32x384xbf16, #tpu.memory_space<vmem>>, vector<32x324xbf16>
    %c0_358 = arith.constant 0 : index
    %c0_359 = arith.constant 0 : index
    %271 = vector.load %arg15[%c0_358, %c0_359] : memref<288x324xbf16, #tpu.memory_space<vmem>>, vector<32x324xbf16>
    tpu.vector_store %arg15[%c0_358, %c0_359], %270 {strides = array<i32>} : memref<288x324xbf16, #tpu.memory_space<vmem>>, vector<32x324xbf16>,
    %c0_360 = arith.constant 0 : index
    %c1_361 = arith.constant 1 : index
    %272 = vector.load %arg14[%c0_360, %c1_361] : memref<32x384xbf16, #tpu.memory_space<vmem>>, vector<32x324xbf16>
    %c32_362 = arith.constant 32 : index
    %c0_363 = arith.constant 0 : index
    %273 = vector.load %arg15[%c32_362, %c0_363] : memref<288x324xbf16, #tpu.memory_space<vmem>>, vector<32x324xbf16>
    tpu.vector_store %arg15[%c32_362, %c0_363], %272 {strides = array<i32>} : memref<288x324xbf16, #tpu.memory_space<vmem>>, vector<32x324xbf16>,
    %c0_364 = arith.constant 0 : index
    %c2_365 = arith.constant 2 : index
    %274 = vector.load %arg14[%c0_364, %c2_365] : memref<32x384xbf16, #tpu.memory_space<vmem>>, vector<32x324xbf16>
    %c64_366 = arith.constant 64 : index
    %c0_367 = arith.constant 0 : index
    %275 = vector.load %arg15[%c64_366, %c0_367] : memref<288x324xbf16, #tpu.memory_space<vmem>>, vector<32x324xbf16>
    tpu.vector_store %arg15[%c64_366, %c0_367], %274 {strides = array<i32>} : memref<288x324xbf16, #tpu.memory_space<vmem>>, vector<32x324xbf16>,
    %c0_368 = arith.constant 0 : index
    %c18_369 = arith.constant 18 : index
    %276 = vector.load %arg14[%c0_368, %c18_369] : memref<32x384xbf16, #tpu.memory_space<vmem>>, vector<32x324xbf16>
    %c96_370 = arith.constant 96 : index
    %c0_371 = arith.constant 0 : index
    %277 = vector.load %arg15[%c96_370, %c0_371] : memref<288x324xbf16, #tpu.memory_space<vmem>>, vector<32x324xbf16>
    tpu.vector_store %arg15[%c96_370, %c0_371], %276 {strides = array<i32>} : memref<288x324xbf16, #tpu.memory_space<vmem>>, vector<32x324xbf16>,
    %c0_372 = arith.constant 0 : index
    %c19_373 = arith.constant 19 : index
    %278 = vector.load %arg14[%c0_372, %c19_373] : memref<32x384xbf16, #tpu.memory_space<vmem>>, vector<32x324xbf16>
    %c128_374 = arith.constant 128 : index
    %c0_375 = arith.constant 0 : index
    %279 = vector.load %arg15[%c128_374, %c0_375] : memref<288x324xbf16, #tpu.memory_space<vmem>>, vector<32x324xbf16>
    tpu.vector_store %arg15[%c128_374, %c0_375], %278 {strides = array<i32>} : memref<288x324xbf16, #tpu.memory_space<vmem>>, vector<32x324xbf16>,
    %c0_376 = arith.constant 0 : index
    %c20_377 = arith.constant 20 : index
    %280 = vector.load %arg14[%c0_376, %c20_377] : memref<32x384xbf16, #tpu.memory_space<vmem>>, vector<32x324xbf16>
    %c160_378 = arith.constant 160 : index
    %c0_379 = arith.constant 0 : index
    %281 = vector.load %arg15[%c160_378, %c0_379] : memref<288x324xbf16, #tpu.memory_space<vmem>>, vector<32x324xbf16>
    tpu.vector_store %arg15[%c160_378, %c0_379], %280 {strides = array<i32>} : memref<288x324xbf16, #tpu.memory_space<vmem>>, vector<32x324xbf16>,
    %c0_380 = arith.constant 0 : index
    %c36_381 = arith.constant 36 : index
    %282 = vector.load %arg14[%c0_380, %c36_381] : memref<32x384xbf16, #tpu.memory_space<vmem>>, vector<32x324xbf16>
    %c192_382 = arith.constant 192 : index
    %c0_383 = arith.constant 0 : index
    %283 = vector.load %arg15[%c192_382, %c0_383] : memref<288x324xbf16, #tpu.memory_space<vmem>>, vector<32x324xbf16>
    tpu.vector_store %arg15[%c192_382, %c0_383], %282 {strides = array<i32>} : memref<288x324xbf16, #tpu.memory_space<vmem>>, vector<32x324xbf16>,
    %c0_384 = arith.constant 0 : index
    %c37_385 = arith.constant 37 : index
    %284 = vector.load %arg14[%c0_384, %c37_385] : memref<32x384xbf16, #tpu.memory_space<vmem>>, vector<32x324xbf16>
    %c224_386 = arith.constant 224 : index
    %c0_387 = arith.constant 0 : index
    %285 = vector.load %arg15[%c224_386, %c0_387] : memref<288x324xbf16, #tpu.memory_space<vmem>>, vector<32x324xbf16>
    tpu.vector_store %arg15[%c224_386, %c0_387], %284 {strides = array<i32>} : memref<288x324xbf16, #tpu.memory_space<vmem>>, vector<32x324xbf16>,
    %c0_388 = arith.constant 0 : index
    %c38_389 = arith.constant 38 : index
    %286 = vector.load %arg14[%c0_388, %c38_389] : memref<32x384xbf16, #tpu.memory_space<vmem>>, vector<32x324xbf16>
    %c256_390 = arith.constant 256 : index
    %c0_391 = arith.constant 0 : index
    %287 = vector.load %arg15[%c256_390, %c0_391] : memref<288x324xbf16, #tpu.memory_space<vmem>>, vector<32x324xbf16>
    tpu.vector_store %arg15[%c256_390, %c0_391], %286 {strides = array<i32>} : memref<288x324xbf16, #tpu.memory_space<vmem>>, vector<32x324xbf16>,
    %c0_392 = arith.constant 0 : index
    %c0_393 = arith.constant 0 : index
    %288 = vector.load %arg15[%c0_392, %c0_393] : memref<288x324xbf16, #tpu.memory_space<vmem>>, vector<288x324xbf16>
    %cst_394 = arith.constant dense<0.000000e+00> : vector<32x324xf32>
    %289 = tpu.matmul %265, %288, %cst_394 {dimension_numbers = #tpu.dot_dimension_numbers<[1], [0], [0], [1], [0, 0, 1, 1], [], []>} : vector<32x288xbf16>, vector<288x324xbf16>, vector<32x324xf32> -> vector<32x324xf32>
    %290 = vector.broadcast %267 : vector<32x1xf32> to vector<32x324xf32>
    %291 = arith.addf %289, %290 : vector<32x324xf32>
    %c0_395 = arith.constant 0 : index
    %c0_396 = arith.constant 0 : index
    %292 = vector.load %arg12[%c0_395, %c0_396] : memref<1x324xf32, #tpu.memory_space<vmem>>, vector<1x324xf32>
    %293 = vector.broadcast %292 : vector<1x324xf32> to vector<32x324xf32>
    %294 = arith.mulf %291, %293 : vector<32x324xf32>
    %cst_397 = arith.constant dense<0.000000e+00> : vector<32xf32>
    %295 = vector.multi_reduction <add>, %294, %cst_397 [1] : vector<32x324xf32> to vector<32xf32>
    %296 = vector.shape_cast %295 : vector<32xf32> to vector<32x1xf32>
    %cst_398 = arith.constant 3.906250e-03 : f32
    %297 = vector.broadcast %cst_398 : f32 to vector<32x1xf32>
    %298 = arith.mulf %296, %297 : vector<32x1xf32>
    %c0_399 = arith.constant 0 : index
    %c0_400 = arith.constant 0 : index
    %c0_401 = arith.constant 0 : index
    %299 = vector.load %arg6[%c0_399, %c0_400, %c0_401] : memref<2x8x32xf32, #tpu.memory_space<vmem>>, vector<1x8x32xf32>
    %300 = vector.shape_cast %299 : vector<1x8x32xf32> to vector<8x32xf32>
    %cst_402 = arith.constant dense<0.000000e+00> : vector<8x1xf32>
    %301 = tpu.matmul %300, %298, %cst_402 {dimension_numbers = #tpu.dot_dimension_numbers<[1], [0], [0], [1], [0, 0, 1, 1], [], []>} : vector<8x32xf32>, vector<32x1xf32>, vector<8x1xf32> -> vector<8x1xf32>
    %c0_403 = arith.constant 0 : index
    %c0_404 = arith.constant 0 : index
    %c0_405 = arith.constant 0 : index
    %302 = vector.load %arg7[%c0_403, %c0_404, %c0_405] : memref<2x8x1xf32, #tpu.memory_space<vmem>>, vector<1x8x1xf32>
    %303 = vector.shape_cast %302 : vector<1x8x1xf32> to vector<8x1xf32>
    %304 = arith.addf %301, %303 : vector<8x1xf32>
    %cst_406 = arith.constant 0.000000e+00 : f32
    %305 = vector.broadcast %cst_406 : f32 to vector<8x1xf32>
    %306 = arith.maximumf %304, %305 : vector<8x1xf32>
    %c0_407 = arith.constant 0 : index
    %c0_408 = arith.constant 0 : index
    %c0_409 = arith.constant 0 : index
    %307 = vector.load %arg8[%c0_407, %c0_408, %c0_409] : memref<2x32x8xf32, #tpu.memory_space<vmem>>, vector<1x32x8xf32>
    %308 = vector.shape_cast %307 : vector<1x32x8xf32> to vector<32x8xf32>
    %cst_410 = arith.constant dense<0.000000e+00> : vector<32x1xf32>
    %309 = tpu.matmul %308, %306, %cst_410 {dimension_numbers = #tpu.dot_dimension_numbers<[1], [0], [0], [1], [0, 0, 1, 1], [], []>} : vector<32x8xf32>, vector<8x1xf32>, vector<32x1xf32> -> vector<32x1xf32>
    %c0_411 = arith.constant 0 : index
    %c0_412 = arith.constant 0 : index
    %c0_413 = arith.constant 0 : index
    %310 = vector.load %arg9[%c0_411, %c0_412, %c0_413] : memref<2x32x1xf32, #tpu.memory_space<vmem>>, vector<1x32x1xf32>
    %311 = vector.shape_cast %310 : vector<1x32x1xf32> to vector<32x1xf32>
    %312 = arith.addf %309, %311 : vector<32x1xf32>
    %313 = arith.negf %312 : vector<32x1xf32>
    %314 = math.exp %313 : vector<32x1xf32>
    %cst_414 = arith.constant 1.000000e+00 : f32
    %315 = vector.broadcast %cst_414 : f32 to vector<32x1xf32>
    %316 = arith.addf %315, %314 : vector<32x1xf32>
    %317 = arith.divf %315, %316 : vector<32x1xf32>
    %c0_415 = arith.constant 0 : index
    %c0_416 = arith.constant 0 : index
    %318 = vector.load %arg16[%c0_415, %c0_416] : memref<32x324xf32, #tpu.memory_space<vmem>>, vector<32x324xf32>
    %319 = vector.broadcast %317 : vector<32x1xf32> to vector<32x324xf32>
    %320 = arith.mulf %294, %319 : vector<32x324xf32>
    %321 = arith.addf %318, %320 : vector<32x324xf32>
    %c0_417 = arith.constant 0 : index
    %c0_418 = arith.constant 0 : index
    %322 = vector.load %arg16[%c0_417, %c0_418] : memref<32x324xf32, #tpu.memory_space<vmem>>, vector<32x324xf32>
    tpu.vector_store %arg16[%c0_417, %c0_418], %321 {strides = array<i32>} : memref<32x324xf32, #tpu.memory_space<vmem>>, vector<32x324xf32>,
    %c0_419 = arith.constant 0 : index
    %c0_420 = arith.constant 0 : index
    %323 = vector.load %arg16[%c0_419, %c0_420] : memref<32x324xf32, #tpu.memory_space<vmem>>, vector<32x324xf32>
    %c1_421 = arith.constant 1 : index
    %c0_422 = arith.constant 0 : index
    %c0_423 = arith.constant 0 : index
    %324 = vector.load %arg2[%c1_421, %c0_422, %c0_423] : memref<2x32x288xbf16, #tpu.memory_space<vmem>>, vector<1x32x288xbf16>
    %325 = vector.shape_cast %324 : vector<1x32x288xbf16> to vector<32x288xbf16>
    %c1_424 = arith.constant 1 : index
    %c0_425 = arith.constant 0 : index
    %c0_426 = arith.constant 0 : index
    %326 = vector.load %arg3[%c1_424, %c0_425, %c0_426] : memref<2x32x1xf32, #tpu.memory_space<vmem>>, vector<1x32x1xf32>
    %327 = vector.shape_cast %326 : vector<1x32x1xf32> to vector<32x1xf32>
    %328 = arith.truncf %323 : vector<32x324xf32> to vector<32x324xbf16>
    %c0_427 = arith.constant 0 : index
    %c19_428 = arith.constant 19 : index
    %329 = vector.load %arg14[%c0_427, %c19_428] : memref<32x384xbf16, #tpu.memory_space<vmem>>, vector<32x324xbf16>
    tpu.vector_store %arg14[%c0_427, %c19_428], %328 {strides = array<i32>} : memref<32x384xbf16, #tpu.memory_space<vmem>>, vector<32x324xbf16>,
    %c0_429 = arith.constant 0 : index
    %c0_430 = arith.constant 0 : index
    %330 = vector.load %arg14[%c0_429, %c0_430] : memref<32x384xbf16, #tpu.memory_space<vmem>>, vector<32x324xbf16>
    %c0_431 = arith.constant 0 : index
    %c0_432 = arith.constant 0 : index
    %331 = vector.load %arg15[%c0_431, %c0_432] : memref<288x324xbf16, #tpu.memory_space<vmem>>, vector<32x324xbf16>
    tpu.vector_store %arg15[%c0_431, %c0_432], %330 {strides = array<i32>} : memref<288x324xbf16, #tpu.memory_space<vmem>>, vector<32x324xbf16>,
    %c0_433 = arith.constant 0 : index
    %c1_434 = arith.constant 1 : index
    %332 = vector.load %arg14[%c0_433, %c1_434] : memref<32x384xbf16, #tpu.memory_space<vmem>>, vector<32x324xbf16>
    %c32_435 = arith.constant 32 : index
    %c0_436 = arith.constant 0 : index
    %333 = vector.load %arg15[%c32_435, %c0_436] : memref<288x324xbf16, #tpu.memory_space<vmem>>, vector<32x324xbf16>
    tpu.vector_store %arg15[%c32_435, %c0_436], %332 {strides = array<i32>} : memref<288x324xbf16, #tpu.memory_space<vmem>>, vector<32x324xbf16>,
    %c0_437 = arith.constant 0 : index
    %c2_438 = arith.constant 2 : index
    %334 = vector.load %arg14[%c0_437, %c2_438] : memref<32x384xbf16, #tpu.memory_space<vmem>>, vector<32x324xbf16>
    %c64_439 = arith.constant 64 : index
    %c0_440 = arith.constant 0 : index
    %335 = vector.load %arg15[%c64_439, %c0_440] : memref<288x324xbf16, #tpu.memory_space<vmem>>, vector<32x324xbf16>
    tpu.vector_store %arg15[%c64_439, %c0_440], %334 {strides = array<i32>} : memref<288x324xbf16, #tpu.memory_space<vmem>>, vector<32x324xbf16>,
    %c0_441 = arith.constant 0 : index
    %c18_442 = arith.constant 18 : index
    %336 = vector.load %arg14[%c0_441, %c18_442] : memref<32x384xbf16, #tpu.memory_space<vmem>>, vector<32x324xbf16>
    %c96_443 = arith.constant 96 : index
    %c0_444 = arith.constant 0 : index
    %337 = vector.load %arg15[%c96_443, %c0_444] : memref<288x324xbf16, #tpu.memory_space<vmem>>, vector<32x324xbf16>
    tpu.vector_store %arg15[%c96_443, %c0_444], %336 {strides = array<i32>} : memref<288x324xbf16, #tpu.memory_space<vmem>>, vector<32x324xbf16>,
    %c0_445 = arith.constant 0 : index
    %c19_446 = arith.constant 19 : index
    %338 = vector.load %arg14[%c0_445, %c19_446] : memref<32x384xbf16, #tpu.memory_space<vmem>>, vector<32x324xbf16>
    %c128_447 = arith.constant 128 : index
    %c0_448 = arith.constant 0 : index
    %339 = vector.load %arg15[%c128_447, %c0_448] : memref<288x324xbf16, #tpu.memory_space<vmem>>, vector<32x324xbf16>
    tpu.vector_store %arg15[%c128_447, %c0_448], %338 {strides = array<i32>} : memref<288x324xbf16, #tpu.memory_space<vmem>>, vector<32x324xbf16>,
    %c0_449 = arith.constant 0 : index
    %c20_450 = arith.constant 20 : index
    %340 = vector.load %arg14[%c0_449, %c20_450] : memref<32x384xbf16, #tpu.memory_space<vmem>>, vector<32x324xbf16>
    %c160_451 = arith.constant 160 : index
    %c0_452 = arith.constant 0 : index
    %341 = vector.load %arg15[%c160_451, %c0_452] : memref<288x324xbf16, #tpu.memory_space<vmem>>, vector<32x324xbf16>
    tpu.vector_store %arg15[%c160_451, %c0_452], %340 {strides = array<i32>} : memref<288x324xbf16, #tpu.memory_space<vmem>>, vector<32x324xbf16>,
    %c0_453 = arith.constant 0 : index
    %c36_454 = arith.constant 36 : index
    %342 = vector.load %arg14[%c0_453, %c36_454] : memref<32x384xbf16, #tpu.memory_space<vmem>>, vector<32x324xbf16>
    %c192_455 = arith.constant 192 : index
    %c0_456 = arith.constant 0 : index
    %343 = vector.load %arg15[%c192_455, %c0_456] : memref<288x324xbf16, #tpu.memory_space<vmem>>, vector<32x324xbf16>
    tpu.vector_store %arg15[%c192_455, %c0_456], %342 {strides = array<i32>} : memref<288x324xbf16, #tpu.memory_space<vmem>>, vector<32x324xbf16>,
    %c0_457 = arith.constant 0 : index
    %c37_458 = arith.constant 37 : index
    %344 = vector.load %arg14[%c0_457, %c37_458] : memref<32x384xbf16, #tpu.memory_space<vmem>>, vector<32x324xbf16>
    %c224_459 = arith.constant 224 : index
    %c0_460 = arith.constant 0 : index
    %345 = vector.load %arg15[%c224_459, %c0_460] : memref<288x324xbf16, #tpu.memory_space<vmem>>, vector<32x324xbf16>
    tpu.vector_store %arg15[%c224_459, %c0_460], %344 {strides = array<i32>} : memref<288x324xbf16, #tpu.memory_space<vmem>>, vector<32x324xbf16>,
    %c0_461 = arith.constant 0 : index
    %c38_462 = arith.constant 38 : index
    %346 = vector.load %arg14[%c0_461, %c38_462] : memref<32x384xbf16, #tpu.memory_space<vmem>>, vector<32x324xbf16>
    %c256_463 = arith.constant 256 : index
    %c0_464 = arith.constant 0 : index
    %347 = vector.load %arg15[%c256_463, %c0_464] : memref<288x324xbf16, #tpu.memory_space<vmem>>, vector<32x324xbf16>
    tpu.vector_store %arg15[%c256_463, %c0_464], %346 {strides = array<i32>} : memref<288x324xbf16, #tpu.memory_space<vmem>>, vector<32x324xbf16>,
    %c0_465 = arith.constant 0 : index
    %c0_466 = arith.constant 0 : index
    %348 = vector.load %arg15[%c0_465, %c0_466] : memref<288x324xbf16, #tpu.memory_space<vmem>>, vector<288x324xbf16>
    %cst_467 = arith.constant dense<0.000000e+00> : vector<32x324xf32>
    %349 = tpu.matmul %325, %348, %cst_467 {dimension_numbers = #tpu.dot_dimension_numbers<[1], [0], [0], [1], [0, 0, 1, 1], [], []>} : vector<32x288xbf16>, vector<288x324xbf16>, vector<32x324xf32> -> vector<32x324xf32>
    %350 = vector.broadcast %327 : vector<32x1xf32> to vector<32x324xf32>
    %351 = arith.addf %349, %350 : vector<32x324xf32>
    %c0_468 = arith.constant 0 : index
    %c0_469 = arith.constant 0 : index
    %352 = vector.load %arg12[%c0_468, %c0_469] : memref<1x324xf32, #tpu.memory_space<vmem>>, vector<1x324xf32>
    %353 = vector.broadcast %352 : vector<1x324xf32> to vector<32x324xf32>
    %354 = arith.mulf %351, %353 : vector<32x324xf32>
    %cst_470 = arith.constant 0.000000e+00 : f32
    %355 = vector.broadcast %cst_470 : f32 to vector<32x324xf32>
    %356 = arith.maximumf %354, %355 : vector<32x324xf32>
    %c1_471 = arith.constant 1 : index
    %c0_472 = arith.constant 0 : index
    %c0_473 = arith.constant 0 : index
    %357 = vector.load %arg4[%c1_471, %c0_472, %c0_473] : memref<2x32x288xbf16, #tpu.memory_space<vmem>>, vector<1x32x288xbf16>
    %358 = vector.shape_cast %357 : vector<1x32x288xbf16> to vector<32x288xbf16>
    %c1_474 = arith.constant 1 : index
    %c0_475 = arith.constant 0 : index
    %c0_476 = arith.constant 0 : index
    %359 = vector.load %arg5[%c1_474, %c0_475, %c0_476] : memref<2x32x1xf32, #tpu.memory_space<vmem>>, vector<1x32x1xf32>
    %360 = vector.shape_cast %359 : vector<1x32x1xf32> to vector<32x1xf32>
    %361 = arith.truncf %356 : vector<32x324xf32> to vector<32x324xbf16>
    %c0_477 = arith.constant 0 : index
    %c19_478 = arith.constant 19 : index
    %362 = vector.load %arg14[%c0_477, %c19_478] : memref<32x384xbf16, #tpu.memory_space<vmem>>, vector<32x324xbf16>
    tpu.vector_store %arg14[%c0_477, %c19_478], %361 {strides = array<i32>} : memref<32x384xbf16, #tpu.memory_space<vmem>>, vector<32x324xbf16>,
    %c0_479 = arith.constant 0 : index
    %c0_480 = arith.constant 0 : index
    %363 = vector.load %arg14[%c0_479, %c0_480] : memref<32x384xbf16, #tpu.memory_space<vmem>>, vector<32x324xbf16>
    %c0_481 = arith.constant 0 : index
    %c0_482 = arith.constant 0 : index
    %364 = vector.load %arg15[%c0_481, %c0_482] : memref<288x324xbf16, #tpu.memory_space<vmem>>, vector<32x324xbf16>
    tpu.vector_store %arg15[%c0_481, %c0_482], %363 {strides = array<i32>} : memref<288x324xbf16, #tpu.memory_space<vmem>>, vector<32x324xbf16>,
    %c0_483 = arith.constant 0 : index
    %c1_484 = arith.constant 1 : index
    %365 = vector.load %arg14[%c0_483, %c1_484] : memref<32x384xbf16, #tpu.memory_space<vmem>>, vector<32x324xbf16>
    %c32_485 = arith.constant 32 : index
    %c0_486 = arith.constant 0 : index
    %366 = vector.load %arg15[%c32_485, %c0_486] : memref<288x324xbf16, #tpu.memory_space<vmem>>, vector<32x324xbf16>
    tpu.vector_store %arg15[%c32_485, %c0_486], %365 {strides = array<i32>} : memref<288x324xbf16, #tpu.memory_space<vmem>>, vector<32x324xbf16>,
    %c0_487 = arith.constant 0 : index
    %c2_488 = arith.constant 2 : index
    %367 = vector.load %arg14[%c0_487, %c2_488] : memref<32x384xbf16, #tpu.memory_space<vmem>>, vector<32x324xbf16>
    %c64_489 = arith.constant 64 : index
    %c0_490 = arith.constant 0 : index
    %368 = vector.load %arg15[%c64_489, %c0_490] : memref<288x324xbf16, #tpu.memory_space<vmem>>, vector<32x324xbf16>
    tpu.vector_store %arg15[%c64_489, %c0_490], %367 {strides = array<i32>} : memref<288x324xbf16, #tpu.memory_space<vmem>>, vector<32x324xbf16>,
    %c0_491 = arith.constant 0 : index
    %c18_492 = arith.constant 18 : index
    %369 = vector.load %arg14[%c0_491, %c18_492] : memref<32x384xbf16, #tpu.memory_space<vmem>>, vector<32x324xbf16>
    %c96_493 = arith.constant 96 : index
    %c0_494 = arith.constant 0 : index
    %370 = vector.load %arg15[%c96_493, %c0_494] : memref<288x324xbf16, #tpu.memory_space<vmem>>, vector<32x324xbf16>
    tpu.vector_store %arg15[%c96_493, %c0_494], %369 {strides = array<i32>} : memref<288x324xbf16, #tpu.memory_space<vmem>>, vector<32x324xbf16>,
    %c0_495 = arith.constant 0 : index
    %c19_496 = arith.constant 19 : index
    %371 = vector.load %arg14[%c0_495, %c19_496] : memref<32x384xbf16, #tpu.memory_space<vmem>>, vector<32x324xbf16>
    %c128_497 = arith.constant 128 : index
    %c0_498 = arith.constant 0 : index
    %372 = vector.load %arg15[%c128_497, %c0_498] : memref<288x324xbf16, #tpu.memory_space<vmem>>, vector<32x324xbf16>
    tpu.vector_store %arg15[%c128_497, %c0_498], %371 {strides = array<i32>} : memref<288x324xbf16, #tpu.memory_space<vmem>>, vector<32x324xbf16>,
    %c0_499 = arith.constant 0 : index
    %c20_500 = arith.constant 20 : index
    %373 = vector.load %arg14[%c0_499, %c20_500] : memref<32x384xbf16, #tpu.memory_space<vmem>>, vector<32x324xbf16>
    %c160_501 = arith.constant 160 : index
    %c0_502 = arith.constant 0 : index
    %374 = vector.load %arg15[%c160_501, %c0_502] : memref<288x324xbf16, #tpu.memory_space<vmem>>, vector<32x324xbf16>
    tpu.vector_store %arg15[%c160_501, %c0_502], %373 {strides = array<i32>} : memref<288x324xbf16, #tpu.memory_space<vmem>>, vector<32x324xbf16>,
    %c0_503 = arith.constant 0 : index
    %c36_504 = arith.constant 36 : index
    %375 = vector.load %arg14[%c0_503, %c36_504] : memref<32x384xbf16, #tpu.memory_space<vmem>>, vector<32x324xbf16>
    %c192_505 = arith.constant 192 : index
    %c0_506 = arith.constant 0 : index
    %376 = vector.load %arg15[%c192_505, %c0_506] : memref<288x324xbf16, #tpu.memory_space<vmem>>, vector<32x324xbf16>
    tpu.vector_store %arg15[%c192_505, %c0_506], %375 {strides = array<i32>} : memref<288x324xbf16, #tpu.memory_space<vmem>>, vector<32x324xbf16>,
    %c0_507 = arith.constant 0 : index
    %c37_508 = arith.constant 37 : index
    %377 = vector.load %arg14[%c0_507, %c37_508] : memref<32x384xbf16, #tpu.memory_space<vmem>>, vector<32x324xbf16>
    %c224_509 = arith.constant 224 : index
    %c0_510 = arith.constant 0 : index
    %378 = vector.load %arg15[%c224_509, %c0_510] : memref<288x324xbf16, #tpu.memory_space<vmem>>, vector<32x324xbf16>
    tpu.vector_store %arg15[%c224_509, %c0_510], %377 {strides = array<i32>} : memref<288x324xbf16, #tpu.memory_space<vmem>>, vector<32x324xbf16>,
    %c0_511 = arith.constant 0 : index
    %c38_512 = arith.constant 38 : index
    %379 = vector.load %arg14[%c0_511, %c38_512] : memref<32x384xbf16, #tpu.memory_space<vmem>>, vector<32x324xbf16>
    %c256_513 = arith.constant 256 : index
    %c0_514 = arith.constant 0 : index
    %380 = vector.load %arg15[%c256_513, %c0_514] : memref<288x324xbf16, #tpu.memory_space<vmem>>, vector<32x324xbf16>
    tpu.vector_store %arg15[%c256_513, %c0_514], %379 {strides = array<i32>} : memref<288x324xbf16, #tpu.memory_space<vmem>>, vector<32x324xbf16>,
    %c0_515 = arith.constant 0 : index
    %c0_516 = arith.constant 0 : index
    %381 = vector.load %arg15[%c0_515, %c0_516] : memref<288x324xbf16, #tpu.memory_space<vmem>>, vector<288x324xbf16>
    %cst_517 = arith.constant dense<0.000000e+00> : vector<32x324xf32>
    %382 = tpu.matmul %358, %381, %cst_517 {dimension_numbers = #tpu.dot_dimension_numbers<[1], [0], [0], [1], [0, 0, 1, 1], [], []>} : vector<32x288xbf16>, vector<288x324xbf16>, vector<32x324xf32> -> vector<32x324xf32>
    %383 = vector.broadcast %360 : vector<32x1xf32> to vector<32x324xf32>
    %384 = arith.addf %382, %383 : vector<32x324xf32>
    %c0_518 = arith.constant 0 : index
    %c0_519 = arith.constant 0 : index
    %385 = vector.load %arg12[%c0_518, %c0_519] : memref<1x324xf32, #tpu.memory_space<vmem>>, vector<1x324xf32>
    %386 = vector.broadcast %385 : vector<1x324xf32> to vector<32x324xf32>
    %387 = arith.mulf %384, %386 : vector<32x324xf32>
    %cst_520 = arith.constant dense<0.000000e+00> : vector<32xf32>
    %388 = vector.multi_reduction <add>, %387, %cst_520 [1] : vector<32x324xf32> to vector<32xf32>
    %389 = vector.shape_cast %388 : vector<32xf32> to vector<32x1xf32>
    %cst_521 = arith.constant 3.906250e-03 : f32
    %390 = vector.broadcast %cst_521 : f32 to vector<32x1xf32>
    %391 = arith.mulf %389, %390 : vector<32x1xf32>
    %c1_522 = arith.constant 1 : index
    %c0_523 = arith.constant 0 : index
    %c0_524 = arith.constant 0 : index
    %392 = vector.load %arg6[%c1_522, %c0_523, %c0_524] : memref<2x8x32xf32, #tpu.memory_space<vmem>>, vector<1x8x32xf32>
    %393 = vector.shape_cast %392 : vector<1x8x32xf32> to vector<8x32xf32>
    %cst_525 = arith.constant dense<0.000000e+00> : vector<8x1xf32>
    %394 = tpu.matmul %393, %391, %cst_525 {dimension_numbers = #tpu.dot_dimension_numbers<[1], [0], [0], [1], [0, 0, 1, 1], [], []>} : vector<8x32xf32>, vector<32x1xf32>, vector<8x1xf32> -> vector<8x1xf32>
    %c1_526 = arith.constant 1 : index
    %c0_527 = arith.constant 0 : index
    %c0_528 = arith.constant 0 : index
    %395 = vector.load %arg7[%c1_526, %c0_527, %c0_528] : memref<2x8x1xf32, #tpu.memory_space<vmem>>, vector<1x8x1xf32>
    %396 = vector.shape_cast %395 : vector<1x8x1xf32> to vector<8x1xf32>
    %397 = arith.addf %394, %396 : vector<8x1xf32>
    %cst_529 = arith.constant 0.000000e+00 : f32
    %398 = vector.broadcast %cst_529 : f32 to vector<8x1xf32>
    %399 = arith.maximumf %397, %398 : vector<8x1xf32>
    %c1_530 = arith.constant 1 : index
    %c0_531 = arith.constant 0 : index
    %c0_532 = arith.constant 0 : index
    %400 = vector.load %arg8[%c1_530, %c0_531, %c0_532] : memref<2x32x8xf32, #tpu.memory_space<vmem>>, vector<1x32x8xf32>
    %401 = vector.shape_cast %400 : vector<1x32x8xf32> to vector<32x8xf32>
    %cst_533 = arith.constant dense<0.000000e+00> : vector<32x1xf32>
    %402 = tpu.matmul %401, %399, %cst_533 {dimension_numbers = #tpu.dot_dimension_numbers<[1], [0], [0], [1], [0, 0, 1, 1], [], []>} : vector<32x8xf32>, vector<8x1xf32>, vector<32x1xf32> -> vector<32x1xf32>
    %c1_534 = arith.constant 1 : index
    %c0_535 = arith.constant 0 : index
    %c0_536 = arith.constant 0 : index
    %403 = vector.load %arg9[%c1_534, %c0_535, %c0_536] : memref<2x32x1xf32, #tpu.memory_space<vmem>>, vector<1x32x1xf32>
    %404 = vector.shape_cast %403 : vector<1x32x1xf32> to vector<32x1xf32>
    %405 = arith.addf %402, %404 : vector<32x1xf32>
    %406 = arith.negf %405 : vector<32x1xf32>
    %407 = math.exp %406 : vector<32x1xf32>
    %cst_537 = arith.constant 1.000000e+00 : f32
    %408 = vector.broadcast %cst_537 : f32 to vector<32x1xf32>
    %409 = arith.addf %408, %407 : vector<32x1xf32>
    %410 = arith.divf %408, %409 : vector<32x1xf32>
    %c0_538 = arith.constant 0 : index
    %c0_539 = arith.constant 0 : index
    %411 = vector.load %arg16[%c0_538, %c0_539] : memref<32x324xf32, #tpu.memory_space<vmem>>, vector<32x324xf32>
    %412 = vector.broadcast %410 : vector<32x1xf32> to vector<32x324xf32>
    %413 = arith.mulf %387, %412 : vector<32x324xf32>
    %414 = arith.addf %411, %413 : vector<32x324xf32>
    %c0_540 = arith.constant 0 : index
    %c0_541 = arith.constant 0 : index
    %415 = vector.load %arg16[%c0_540, %c0_541] : memref<32x324xf32, #tpu.memory_space<vmem>>, vector<32x324xf32>
    tpu.vector_store %arg16[%c0_540, %c0_541], %414 {strides = array<i32>} : memref<32x324xf32, #tpu.memory_space<vmem>>, vector<32x324xf32>,
    %c0_542 = arith.constant 0 : index
    %c0_543 = arith.constant 0 : index
    %416 = vector.load %arg16[%c0_542, %c0_543] : memref<32x324xf32, #tpu.memory_space<vmem>>, vector<32x324xf32>
    %c0_544 = arith.constant 0 : index
    %c0_545 = arith.constant 0 : index
    %417 = vector.load %arg10[%c0_544, %c0_545] : memref<32x288xbf16, #tpu.memory_space<vmem>>, vector<32x288xbf16>
    %c0_546 = arith.constant 0 : index
    %c0_547 = arith.constant 0 : index
    %418 = vector.load %arg11[%c0_546, %c0_547] : memref<32x1xf32, #tpu.memory_space<vmem>>, vector<32x1xf32>
    %419 = arith.truncf %416 : vector<32x324xf32> to vector<32x324xbf16>
    %c0_548 = arith.constant 0 : index
    %c19_549 = arith.constant 19 : index
    %420 = vector.load %arg14[%c0_548, %c19_549] : memref<32x384xbf16, #tpu.memory_space<vmem>>, vector<32x324xbf16>
    tpu.vector_store %arg14[%c0_548, %c19_549], %419 {strides = array<i32>} : memref<32x384xbf16, #tpu.memory_space<vmem>>, vector<32x324xbf16>,
    %c0_550 = arith.constant 0 : index
    %c0_551 = arith.constant 0 : index
    %421 = vector.load %arg14[%c0_550, %c0_551] : memref<32x384xbf16, #tpu.memory_space<vmem>>, vector<32x324xbf16>
    %c0_552 = arith.constant 0 : index
    %c0_553 = arith.constant 0 : index
    %422 = vector.load %arg15[%c0_552, %c0_553] : memref<288x324xbf16, #tpu.memory_space<vmem>>, vector<32x324xbf16>
    tpu.vector_store %arg15[%c0_552, %c0_553], %421 {strides = array<i32>} : memref<288x324xbf16, #tpu.memory_space<vmem>>, vector<32x324xbf16>,
    %c0_554 = arith.constant 0 : index
    %c1_555 = arith.constant 1 : index
    %423 = vector.load %arg14[%c0_554, %c1_555] : memref<32x384xbf16, #tpu.memory_space<vmem>>, vector<32x324xbf16>
    %c32_556 = arith.constant 32 : index
    %c0_557 = arith.constant 0 : index
    %424 = vector.load %arg15[%c32_556, %c0_557] : memref<288x324xbf16, #tpu.memory_space<vmem>>, vector<32x324xbf16>
    tpu.vector_store %arg15[%c32_556, %c0_557], %423 {strides = array<i32>} : memref<288x324xbf16, #tpu.memory_space<vmem>>, vector<32x324xbf16>,
    %c0_558 = arith.constant 0 : index
    %c2_559 = arith.constant 2 : index
    %425 = vector.load %arg14[%c0_558, %c2_559] : memref<32x384xbf16, #tpu.memory_space<vmem>>, vector<32x324xbf16>
    %c64_560 = arith.constant 64 : index
    %c0_561 = arith.constant 0 : index
    %426 = vector.load %arg15[%c64_560, %c0_561] : memref<288x324xbf16, #tpu.memory_space<vmem>>, vector<32x324xbf16>
    tpu.vector_store %arg15[%c64_560, %c0_561], %425 {strides = array<i32>} : memref<288x324xbf16, #tpu.memory_space<vmem>>, vector<32x324xbf16>,
    %c0_562 = arith.constant 0 : index
    %c18_563 = arith.constant 18 : index
    %427 = vector.load %arg14[%c0_562, %c18_563] : memref<32x384xbf16, #tpu.memory_space<vmem>>, vector<32x324xbf16>
    %c96_564 = arith.constant 96 : index
    %c0_565 = arith.constant 0 : index
    %428 = vector.load %arg15[%c96_564, %c0_565] : memref<288x324xbf16, #tpu.memory_space<vmem>>, vector<32x324xbf16>
    tpu.vector_store %arg15[%c96_564, %c0_565], %427 {strides = array<i32>} : memref<288x324xbf16, #tpu.memory_space<vmem>>, vector<32x324xbf16>,
    %c0_566 = arith.constant 0 : index
    %c19_567 = arith.constant 19 : index
    %429 = vector.load %arg14[%c0_566, %c19_567] : memref<32x384xbf16, #tpu.memory_space<vmem>>, vector<32x324xbf16>
    %c128_568 = arith.constant 128 : index
    %c0_569 = arith.constant 0 : index
    %430 = vector.load %arg15[%c128_568, %c0_569] : memref<288x324xbf16, #tpu.memory_space<vmem>>, vector<32x324xbf16>
    tpu.vector_store %arg15[%c128_568, %c0_569], %429 {strides = array<i32>} : memref<288x324xbf16, #tpu.memory_space<vmem>>, vector<32x324xbf16>,
    %c0_570 = arith.constant 0 : index
    %c20_571 = arith.constant 20 : index
    %431 = vector.load %arg14[%c0_570, %c20_571] : memref<32x384xbf16, #tpu.memory_space<vmem>>, vector<32x324xbf16>
    %c160_572 = arith.constant 160 : index
    %c0_573 = arith.constant 0 : index
    %432 = vector.load %arg15[%c160_572, %c0_573] : memref<288x324xbf16, #tpu.memory_space<vmem>>, vector<32x324xbf16>
    tpu.vector_store %arg15[%c160_572, %c0_573], %431 {strides = array<i32>} : memref<288x324xbf16, #tpu.memory_space<vmem>>, vector<32x324xbf16>,
    %c0_574 = arith.constant 0 : index
    %c36_575 = arith.constant 36 : index
    %433 = vector.load %arg14[%c0_574, %c36_575] : memref<32x384xbf16, #tpu.memory_space<vmem>>, vector<32x324xbf16>
    %c192_576 = arith.constant 192 : index
    %c0_577 = arith.constant 0 : index
    %434 = vector.load %arg15[%c192_576, %c0_577] : memref<288x324xbf16, #tpu.memory_space<vmem>>, vector<32x324xbf16>
    tpu.vector_store %arg15[%c192_576, %c0_577], %433 {strides = array<i32>} : memref<288x324xbf16, #tpu.memory_space<vmem>>, vector<32x324xbf16>,
    %c0_578 = arith.constant 0 : index
    %c37_579 = arith.constant 37 : index
    %435 = vector.load %arg14[%c0_578, %c37_579] : memref<32x384xbf16, #tpu.memory_space<vmem>>, vector<32x324xbf16>
    %c224_580 = arith.constant 224 : index
    %c0_581 = arith.constant 0 : index
    %436 = vector.load %arg15[%c224_580, %c0_581] : memref<288x324xbf16, #tpu.memory_space<vmem>>, vector<32x324xbf16>
    tpu.vector_store %arg15[%c224_580, %c0_581], %435 {strides = array<i32>} : memref<288x324xbf16, #tpu.memory_space<vmem>>, vector<32x324xbf16>,
    %c0_582 = arith.constant 0 : index
    %c38_583 = arith.constant 38 : index
    %437 = vector.load %arg14[%c0_582, %c38_583] : memref<32x384xbf16, #tpu.memory_space<vmem>>, vector<32x324xbf16>
    %c256_584 = arith.constant 256 : index
    %c0_585 = arith.constant 0 : index
    %438 = vector.load %arg15[%c256_584, %c0_585] : memref<288x324xbf16, #tpu.memory_space<vmem>>, vector<32x324xbf16>
    tpu.vector_store %arg15[%c256_584, %c0_585], %437 {strides = array<i32>} : memref<288x324xbf16, #tpu.memory_space<vmem>>, vector<32x324xbf16>,
    %c0_586 = arith.constant 0 : index
    %c0_587 = arith.constant 0 : index
    %439 = vector.load %arg15[%c0_586, %c0_587] : memref<288x324xbf16, #tpu.memory_space<vmem>>, vector<288x324xbf16>
    %cst_588 = arith.constant dense<0.000000e+00> : vector<32x324xf32>
    %440 = tpu.matmul %417, %439, %cst_588 {dimension_numbers = #tpu.dot_dimension_numbers<[1], [0], [0], [1], [0, 0, 1, 1], [], []>} : vector<32x288xbf16>, vector<288x324xbf16>, vector<32x324xf32> -> vector<32x324xf32>
    %441 = vector.broadcast %418 : vector<32x1xf32> to vector<32x324xf32>
    %442 = arith.addf %440, %441 : vector<32x324xf32>
    %c0_589 = arith.constant 0 : index
    %c0_590 = arith.constant 0 : index
    %443 = vector.load %arg12[%c0_589, %c0_590] : memref<1x324xf32, #tpu.memory_space<vmem>>, vector<1x324xf32>
    %444 = vector.broadcast %443 : vector<1x324xf32> to vector<32x324xf32>
    %445 = arith.mulf %442, %444 : vector<32x324xf32>
    %c1_591 = arith.constant 1 : index
    %c0_592 = arith.constant 0 : index
    %c0_593 = arith.constant 0 : index
    %446 = vector.load %arg1[%c1_591, %c0_592, %c0_593] : memref<2x32x324xf32, #tpu.memory_space<vmem>>, vector<1x32x324xf32>
    %447 = vector.shape_cast %446 : vector<1x32x324xf32> to vector<32x324xf32>
    %448 = arith.addf %445, %447 : vector<32x324xf32>
    %c1_594 = arith.constant 1 : index
    %c0_595 = arith.constant 0 : index
    %c0_596 = arith.constant 0 : index
    %449 = vector.load %arg13[%c1_594, %c0_595, %c0_596] : memref<2x32x324xf32, #tpu.memory_space<vmem>>, vector<1x32x324xf32>
    %450 = vector.shape_cast %449 : vector<1x32x324xf32> to vector<32x324xf32>
    %451 = vector.shape_cast %448 : vector<32x324xf32> to vector<1x32x324xf32>
    tpu.vector_store %arg13[%c1_594, %c0_595, %c0_596], %451 {strides = array<i32>} : memref<2x32x324xf32, #tpu.memory_space<vmem>>, vector<1x32x324xf32>,
    return
  }
  func.func @transform_0(%arg0: i32) -> (i32, i32, i32) {
    %c0_i32 = arith.constant 0 : i32
    %c0_i32_0 = arith.constant 0 : i32
    %c0_i32_1 = arith.constant 0 : i32
    return %arg0, %c0_i32, %c0_i32_0 : i32, i32, i32
  }
  func.func @transform_1(%arg0: i32) -> (i32, i32, i32) {
    %c0_i32 = arith.constant 0 : i32
    %c0_i32_0 = arith.constant 0 : i32
    %c0_i32_1 = arith.constant 0 : i32
    %c0_i32_2 = arith.constant 0 : i32
    return %c0_i32, %c0_i32_0, %c0_i32_1 : i32, i32, i32
  }
  func.func @transform_2(%arg0: i32) -> (i32, i32, i32) {
    %c0_i32 = arith.constant 0 : i32
    %c0_i32_0 = arith.constant 0 : i32
    %c0_i32_1 = arith.constant 0 : i32
    %c0_i32_2 = arith.constant 0 : i32
    return %c0_i32, %c0_i32_0, %c0_i32_1 : i32, i32, i32
  }
  func.func @transform_3(%arg0: i32) -> (i32, i32, i32) {
    %c0_i32 = arith.constant 0 : i32
    %c0_i32_0 = arith.constant 0 : i32
    %c0_i32_1 = arith.constant 0 : i32
    %c0_i32_2 = arith.constant 0 : i32
    return %c0_i32, %c0_i32_0, %c0_i32_1 : i32, i32, i32
  }
  func.func @transform_4(%arg0: i32) -> (i32, i32, i32) {
    %c0_i32 = arith.constant 0 : i32
    %c0_i32_0 = arith.constant 0 : i32
    %c0_i32_1 = arith.constant 0 : i32
    %c0_i32_2 = arith.constant 0 : i32
    return %c0_i32, %c0_i32_0, %c0_i32_1 : i32, i32, i32
  }
  func.func @transform_5(%arg0: i32) -> (i32, i32, i32) {
    %c0_i32 = arith.constant 0 : i32
    %c0_i32_0 = arith.constant 0 : i32
    %c0_i32_1 = arith.constant 0 : i32
    %c0_i32_2 = arith.constant 0 : i32
    return %c0_i32, %c0_i32_0, %c0_i32_1 : i32, i32, i32
  }
  func.func @transform_6(%arg0: i32) -> (i32, i32, i32) {
    %c0_i32 = arith.constant 0 : i32
    %c0_i32_0 = arith.constant 0 : i32
    %c0_i32_1 = arith.constant 0 : i32
    %c0_i32_2 = arith.constant 0 : i32
    return %c0_i32, %c0_i32_0, %c0_i32_1 : i32, i32, i32
  }
  func.func @transform_7(%arg0: i32) -> (i32, i32, i32) {
    %c0_i32 = arith.constant 0 : i32
    %c0_i32_0 = arith.constant 0 : i32
    %c0_i32_1 = arith.constant 0 : i32
    %c0_i32_2 = arith.constant 0 : i32
    return %c0_i32, %c0_i32_0, %c0_i32_1 : i32, i32, i32
  }
  func.func @transform_8(%arg0: i32) -> (i32, i32, i32) {
    %c0_i32 = arith.constant 0 : i32
    %c0_i32_0 = arith.constant 0 : i32
    %c0_i32_1 = arith.constant 0 : i32
    %c0_i32_2 = arith.constant 0 : i32
    return %c0_i32, %c0_i32_0, %c0_i32_1 : i32, i32, i32
  }
  func.func @transform_9(%arg0: i32) -> (i32, i32) {
    %c0_i32 = arith.constant 0 : i32
    %c0_i32_0 = arith.constant 0 : i32
    %c0_i32_1 = arith.constant 0 : i32
    return %c0_i32, %c0_i32_0 : i32, i32
  }
  func.func @transform_10(%arg0: i32) -> (i32, i32) {
    %c0_i32 = arith.constant 0 : i32
    %c0_i32_0 = arith.constant 0 : i32
    %c0_i32_1 = arith.constant 0 : i32
    return %c0_i32, %c0_i32_0 : i32, i32
  }
  func.func @transform_11(%arg0: i32) -> (i32, i32) {
    %c0_i32 = arith.constant 0 : i32
    %c0_i32_0 = arith.constant 0 : i32
    %c0_i32_1 = arith.constant 0 : i32
    return %c0_i32, %c0_i32_0 : i32, i32
  }
  func.func @transform_12(%arg0: i32) -> (i32, i32, i32) {
    %c0_i32 = arith.constant 0 : i32
    %c0_i32_0 = arith.constant 0 : i32
    %c0_i32_1 = arith.constant 0 : i32
    return %arg0, %c0_i32, %c0_i32_0 : i32, i32, i32
  }
}

</mosaic_0001>

<llo_original>
// kernel: residual_group_pallas.1
$region0: #{residual_group_pallas.1}
  #allocation0 [shape = 'u32[]', space=smem, size = 0x4, offset = 0x4, fixed_abs, tag = 'smem constant byte address 0x4 - core index']
  #allocation1 [shape = 'u32[144,128]{1,0:T(1,128)}', space=vmem, size = 0x12000, scoped, tag = 'internal scratch']
  #allocation2 [shape = 'bf16[32,384]{1,0:T(16,128)(2,1)}', space=vmem, size = 0x6000, scoped, tag = 'scratch operand']
  #allocation3 [shape = 'bf16[288,324]{1,0:T(16,128)(2,1)}', space=vmem, size = 0x36000, scoped, tag = 'scratch operand']
  #allocation4 [shape = 'f32[32,324]{1,0:T(8,128)}', space=vmem, size = 0xc000, scoped, tag = 'scratch operand']
  %s0 = inlined_call_operand.vmem [shape: f32[2,32,324], index: 0, kind: input, shape index: {}]
  %s1 = inlined_call_operand.vmem [shape: bf16[2,32,288], index: 1, kind: input, shape index: {}]
  %s2 = inlined_call_operand.vmem [shape: f32[2,32,1], index: 2, kind: input, shape index: {}]
  %s3 = inlined_call_operand.vmem [shape: bf16[2,32,288], index: 3, kind: input, shape index: {}]
  %s4 = inlined_call_operand.vmem [shape: f32[2,32,1], index: 4, kind: input, shape index: {}]
  %s5 = inlined_call_operand.vmem [shape: f32[2,8,32], index: 5, kind: input, shape index: {}]
  %s6 = inlined_call_operand.vmem [shape: f32[2,8,1], index: 6, kind: input, shape index: {}]
  %s7 = inlined_call_operand.vmem [shape: f32[2,32,8], index: 7, kind: input, shape index: {}]
  %s8 = inlined_call_operand.vmem [shape: f32[2,32,1], index: 8, kind: input, shape index: {}]
  %s9 = inlined_call_operand.vmem [shape: bf16[32,288], index: 9, kind: input, shape index: {}]
  %s10 = inlined_call_operand.vmem [shape: f32[32,1], index: 10, kind: input, shape index: {}]
  %s11 = inlined_call_operand.vmem [shape: f32[1,324], index: 11, kind: input, shape index: {}]
  %s12 = inlined_call_operand.vmem [shape: f32[2,32,324], index: 12, kind: output, shape index: {}]
  %s13 = sld [smem:[#allocation0]]
  $region58: #{residual_group_pallas.1} parent=0
    _
  %s15 = ssub.s32 1, %s13
  %s16 = scalar_select 0, %s15, %s13
  // Predicated region
  $region2: #{residual_group_pallas.1} parent=0 // pred_check
    _
  $region3: #{residual_group_pallas.1} parent=0 // pred_check_branch
    %18 = sbr.rel (0) target = $region5
  $region4: #{residual_group_pallas.1} parent=0 // pred_region
    _
  $region5: #{residual_group_pallas.1} parent=0 // pred_fallthru
    _
  // Predicated region
  $region6: #{residual_group_pallas.1} parent=0 // pred_check
    _
  $region7: #{residual_group_pallas.1} parent=0 // pred_check_branch
    %20 = sbr.rel (0) target = $region9
  $region8: #{residual_group_pallas.1} parent=0 // pred_region
    _
  $region9: #{residual_group_pallas.1} parent=0 // pred_fallthru
    _
  // Predicated region
  $region10: #{residual_group_pallas.1} parent=0 // pred_check
    _
  $region11: #{residual_group_pallas.1} parent=0 // pred_check_branch
    %22 = sbr.rel (0) target = $region13
  $region12: #{residual_group_pallas.1} parent=0 // pred_region
    _
  $region13: #{residual_group_pallas.1} parent=0 // pred_fallthru
    _
  // Predicated region
  $region14: #{residual_group_pallas.1} parent=0 // pred_check
    _
  $region15: #{residual_group_pallas.1} parent=0 // pred_check_branch
    %24 = sbr.rel (0) target = $region17
  $region16: #{residual_group_pallas.1} parent=0 // pred_region
    _
  $region17: #{residual_group_pallas.1} parent=0 // pred_fallthru
    _
  // Predicated region
  $region18: #{residual_group_pallas.1} parent=0 // pred_check
    _
  $region19: #{residual_group_pallas.1} parent=0 // pred_check_branch
    %26 = sbr.rel (0) target = $region21
  $region20: #{residual_group_pallas.1} parent=0 // pred_region
    _
  $region21: #{residual_group_pallas.1} parent=0 // pred_fallthru
    _
  // Predicated region
  $region22: #{residual_group_pallas.1} parent=0 // pred_check
    _
  $region23: #{residual_group_pallas.1} parent=0 // pred_check_branch
    %28 = sbr.rel (0) target = $region25
  $region24: #{residual_group_pallas.1} parent=0 // pred_region
    _
  $region25: #{residual_group_pallas.1} parent=0 // pred_fallthru
    _
  // Predicated region
  $region26: #{residual_group_pallas.1} parent=0 // pred_check
    _
  $region27: #{residual_group_pallas.1} parent=0 // pred_check_branch
    %30 = sbr.rel (0) target = $region29
  $region28: #{residual_group_pallas.1} parent=0 // pred_region
    _
  $region29: #{residual_group_pallas.1} parent=0 // pred_fallthru
    _
  // Predicated region
  $region30: #{residual_group_pallas.1} parent=0 // pred_check
    _
  $region31: #{residual_group_pallas.1} parent=0 // pred_check_branch
    %32 = sbr.rel (0) target = $region33
  $region32: #{residual_group_pallas.1} parent=0 // pred_region
    _
  $region33: #{residual_group_pallas.1} parent=0 // pred_fallthru
    _
  // Predicated region
  $region34: #{residual_group_pallas.1} parent=0 // pred_check
    _
  $region35: #{residual_group_pallas.1} parent=0 // pred_check_branch
    %34 = sbr.rel (0) target = $region37
  $region36: #{residual_group_pallas.1} parent=0 // pred_region
    _
  $region37: #{residual_group_pallas.1} parent=0 // pred_fallthru
    _
  // Predicated region
  $region38: #{residual_group_pallas.1} parent=0 // pred_check
    _
  $region39: #{residual_group_pallas.1} parent=0 // pred_check_branch
    %36 = sbr.rel (0) target = $region41
  $region40: #{residual_group_pallas.1} parent=0 // pred_region
    _
  $region41: #{residual_group_pallas.1} parent=0 // pred_fallthru
    _
  // Predicated region
  $region42: #{residual_group_pallas.1} parent=0 // pred_check
    _
  $region43: #{residual_group_pallas.1} parent=0 // pred_check_branch
    %38 = sbr.rel (0) target = $region45
  $region44: #{residual_group_pallas.1} parent=0 // pred_region
    _
  $region45: #{residual_group_pallas.1} parent=0 // pred_fallthru
    _
  // Predicated region
  $region46: #{residual_group_pallas.1} parent=0 // pred_check
    _
  $region47: #{residual_group_pallas.1} parent=0 // pred_check_branch
    %40 = sbr.rel (0) target = $region49
  $region48: #{residual_group_pallas.1} parent=0 // pred_region
    _
  $region49: #{residual_group_pallas.1} parent=0 // pred_fallthru
    _
  %42 = vst [vmem:[#allocation2] sm:$0xff] 0
  %43 = vst [vmem:[#allocation2 + $0x8] sm:$0xff] 0
  %44 = vst [vmem:[#allocation2 + $0x10] sm:$0xff] 0
  %45 = vst [vmem:[#allocation2 + $0x18] sm:$0xff] 0
  %46 = vst [vmem:[#allocation2 + $0x20] sm:$0xff] 0
  %47 = vst [vmem:[#allocation2 + $0x28] sm:$0xff] 0
  %v48 = vld [vmem:[%s0] sm:$0xff]
  %v49 = vld [vmem:[%s0 + $0x8] sm:$0xff]
  %v50 = vld [vmem:[%s0 + $0x10] sm:$0xff]
  %v51 = vld [vmem:[%s0 + $0x18] sm:$0xff]
  %v52 = vld [vmem:[%s0 + $0x20] sm:$0xff]
  %v53 = vld [vmem:[%s0 + $0x28] sm:$0xff]
  %v54 = vld [vmem:[%s0 + $0x30] sm:$0xff]
  %v55 = vld [vmem:[%s0 + $0x38] sm:$0xff]
  %v56 = vld [vmem:[%s0 + $0x40] sm:$0xff]
  %v57 = vld [vmem:[%s0 + $0x48] sm:$0xff]
  %v58 = vld [vmem:[%s0 + $0x50] sm:$0xff]
  %v59 = vld [vmem:[%s0 + $0x58] sm:$0xff]
  %60 = vst [vmem:[#allocation4] sm:$0xff] %v48
  %61 = vst [vmem:[#allocation4 + $0x8] sm:$0xff] %v49
  %vm62 = vcmask 556032
  %63 = vst.msk [vmem:[#allocation4 + $0x10] sm:$0xff] %vm62, %v50
  %64 = vst [vmem:[#allocation4 + $0x18] sm:$0xff] %v51
  %65 = vst [vmem:[#allocation4 + $0x20] sm:$0xff] %v52
  %66 = vst.msk [vmem:[#allocation4 + $0x28] sm:$0xff] %vm62, %v53
  %67 = vst [vmem:[#allocation4 + $0x30] sm:$0xff] %v54
  %68 = vst [vmem:[#allocation4 + $0x38] sm:$0xff] %v55
  %69 = vst.msk [vmem:[#allocation4 + $0x40] sm:$0xff] %vm62, %v56
  %70 = vst [vmem:[#allocation4 + $0x48] sm:$0xff] %v57
  %71 = vst [vmem:[#allocation4 + $0x50] sm:$0xff] %v58
  %72 = vst.msk [vmem:[#allocation4 + $0x58] sm:$0xff] %vm62, %v59
  %v73 = vld [vmem:[#allocation4] sm:$0xff]
  %v74 = vld [vmem:[#allocation4 + $0x8] sm:$0xff]
  %v75 = vld [vmem:[#allocation4 + $0x10] sm:$0xff]
  %v76 = vld [vmem:[#allocation4 + $0x18] sm:$0xff]
  %v77 = vld [vmem:[#allocation4 + $0x20] sm:$0xff]
  %v78 = vld [vmem:[#allocation4 + $0x28] sm:$0xff]
  %v79 = vld [vmem:[#allocation4 + $0x30] sm:$0xff]
  %v80 = vld [vmem:[#allocation4 + $0x38] sm:$0xff]
  %v81 = vld [vmem:[#allocation4 + $0x40] sm:$0xff]
  %v82 = vld [vmem:[#allocation4 + $0x48] sm:$0xff]
  %v83 = vld [vmem:[#allocation4 + $0x50] sm:$0xff]
  %v84 = vld [vmem:[#allocation4 + $0x58] sm:$0xff]
  %v85 = vld [vmem:[%s1] sm:$0xff]
  %v86 = vld [vmem:[%s1 + $0x8] sm:$0xf]
  %v87 = vld [vmem:[%s1 + $0xc] sm:$0xff]
  %v88 = vld [vmem:[%s1 + $0x14] sm:$0xf]
  %v89 = vld [vmem:[%s1 + $0x18] sm:$0xff]
  %v90 = vld [vmem:[%s1 + $0x20] sm:$0xf]
  %v91 = vld [vmem:[%s1 + $0x24] sm:$0xff]
  %v92 = vld [vmem:[%s1 + $0x2c] sm:$0xf]
  %v93 = vld [vmem:[%s2] sm:$0xff]
  %v94 = vld [vmem:[%s2 + $0x8] sm:$0xff]
  %v95 = vld [vmem:[%s2 + $0x10] sm:$0xff]
  %v96 = vld [vmem:[%s2 + $0x18] sm:$0xff]
  %v97 = vpack.c.bf16 %v76, %v73
  %v98 = vpack.c.bf16 %v77, %v74
  %v99 = vpack.c.bf16 %v78, %v75
  %v100 = vpack.c.bf16 %v82, %v79
  %v101 = vpack.c.bf16 %v83, %v80
  %v102 = vpack.c.bf16 %v84, %v81
  %109 = vrot.lane.b32.xlu0 %v97, 19
  %v110 = vpop.permute.xlu0 %109
  %111 = vrot.lane.b32.xlu0 %v98, 19
  %v112 = vpop.permute.xlu0 %111
  %113 = vrot.lane.b32.xlu0 %v99, 19
  %v114 = vpop.permute.xlu0 %113
  %115 = vrot.lane.b32.xlu0 %v100, 19
  %v116 = vpop.permute.xlu0 %115
  %117 = vrot.lane.b32.xlu0 %v101, 19
  %v118 = vpop.permute.xlu0 %117
  %119 = vrot.lane.b32.xlu0 %v102, 19
  %v120 = vpop.permute.xlu0 %119
  %vm121 = vcmask 154624
  %v122 = vsel %vm121, %v110, %v112
  %v123 = vsel %vm121, %v112, %v114
  %v124 = vsel %vm121, %v116, %v118
  %v125 = vsel %vm121, %v118, %v120
  %vm132 = vcmask 1047704
  %133 = vst.msk [vmem:[#allocation2] sm:$0xff] %vm132, %v110
  %134 = vst [vmem:[#allocation2 + $0x8] sm:$0xff] %v122
  %vm135 = vcmask 711680
  %136 = vst.msk [vmem:[#allocation2 + $0x10] sm:$0xff] %vm135, %v123
  %137 = vst.msk [vmem:[#allocation2 + $0x18] sm:$0xff] %vm132, %v116
  %138 = vst [vmem:[#allocation2 + $0x20] sm:$0xff] %v124
  %139 = vst.msk [vmem:[#allocation2 + $0x28] sm:$0xff] %vm135, %v125
  %v140 = vld [vmem:[#allocation2] sm:$0xff]
  %v141 = vld [vmem:[#allocation2 + $0x8] sm:$0xff]
  %v142 = vld [vmem:[#allocation2 + $0x10] sm:$0xff]
  %v143 = vld [vmem:[#allocation2 + $0x18] sm:$0xff]
  %v144 = vld [vmem:[#allocation2 + $0x20] sm:$0xff]
  %v145 = vld [vmem:[#allocation2 + $0x28] sm:$0xff]
  %146 = vst [vmem:[#allocation3] sm:$0xff] %v140
  %147 = vst [vmem:[#allocation3 + $0x8] sm:$0xff] %v141
  %148 = vst.msk [vmem:[#allocation3 + $0x10] sm:$0xff] %vm62, %v142
  %149 = vst [vmem:[#allocation3 + $0x18] sm:$0xff] %v143
  %150 = vst [vmem:[#allocation3 + $0x20] sm:$0xff] %v144
  %151 = vst.msk [vmem:[#allocation3 + $0x28] sm:$0xff] %vm62, %v145
  %v152 = vld [vmem:[#allocation2] sm:$0xff]
  %v153 = vld [vmem:[#allocation2 + $0x8] sm:$0xff]
  %v154 = vld [vmem:[#allocation2 + $0x10] sm:$0xff]
  %v155 = vld [vmem:[#allocation2 + $0x18] sm:$0xff]
  %v156 = vld [vmem:[#allocation2 + $0x20] sm:$0xff]
  %v157 = vld [vmem:[#allocation2 + $0x28] sm:$0xff]
  %164 = vrot.lane.b32.xlu0 %v152, 127
  %v165 = vpop.permute.xlu0 %164
  %166 = vrot.lane.b32.xlu0 %v153, 127
  %v167 = vpop.permute.xlu0 %166
  %168 = vrot.lane.b32.xlu0 %v154, 127
  %v169 = vpop.permute.xlu0 %168
  %170 = vrot.lane.b32.xlu0 %v155, 127
  %v171 = vpop.permute.xlu0 %170
  %172 = vrot.lane.b32.xlu0 %v156, 127
  %v173 = vpop.permute.xlu0 %172
  %174 = vrot.lane.b32.xlu0 %v157, 127
  %v175 = vpop.permute.xlu0 %174
  %vm176 = vcmask 1039360
  %v177 = vsel %vm176, %v165, %v167
  %v178 = vsel %vm176, %v167, %v169
  %v179 = vsel %vm176, %v171, %v173
  %v180 = vsel %vm176, %v173, %v175
  %187 = vst [vmem:[#allocation3 + $0x30] sm:$0xff] %v177
  %188 = vst [vmem:[#allocation3 + $0x38] sm:$0xff] %v178
  %189 = vst.msk [vmem:[#allocation3 + $0x40] sm:$0xff] %vm62, %v169
  %190 = vst [vmem:[#allocation3 + $0x48] sm:$0xff] %v179
  %191 = vst [vmem:[#allocation3 + $0x50] sm:$0xff] %v180
  %192 = vst.msk [vmem:[#allocation3 + $0x58] sm:$0xff] %vm62, %v175
  %v193 = vld [vmem:[#allocation2] sm:$0xff]
  %v194 = vld [vmem:[#allocation2 + $0x8] sm:$0xff]
  %v195 = vld [vmem:[#allocation2 + $0x10] sm:$0xff]
  %v196 = vld [vmem:[#allocation2 + $0x18] sm:$0xff]
  %v197 = vld [vmem:[#allocation2 + $0x20] sm:$0xff]
  %v198 = vld [vmem:[#allocation2 + $0x28] sm:$0xff]
  %205 = vrot.lane.b32.xlu0 %v193, 126
  %v206 = vpop.permute.xlu0 %205
  %207 = vrot.lane.b32.xlu0 %v194, 126
  %v208 = vpop.permute.xlu0 %207
  %209 = vrot.lane.b32.xlu0 %v195, 126
  %v210 = vpop.permute.xlu0 %209
  %211 = vrot.lane.b32.xlu0 %v196, 126
  %v212 = vpop.permute.xlu0 %211
  %213 = vrot.lane.b32.xlu0 %v197, 126
  %v214 = vpop.permute.xlu0 %213
  %215 = vrot.lane.b32.xlu0 %v198, 126
  %v216 = vpop.permute.xlu0 %215
  %vm217 = vcmask 1031168
  %v218 = vsel %vm217, %v206, %v208
  %v219 = vsel %vm217, %v208, %v210
  %v220 = vsel %vm217, %v212, %v214
  %v221 = vsel %vm217, %v214, %v216
  %228 = vst [vmem:[#allocation3 + $0x60] sm:$0xff] %v218
  %229 = vst [vmem:[#allocation3 + $0x68] sm:$0xff] %v219
  %230 = vst.msk [vmem:[#allocation3 + $0x70] sm:$0xff] %vm62, %v210
  %231 = vst [vmem:[#allocation3 + $0x78] sm:$0xff] %v220
  %232 = vst [vmem:[#allocation3 + $0x80] sm:$0xff] %v221
  %233 = vst.msk [vmem:[#allocation3 + $0x88] sm:$0xff] %vm62, %v216
  %v234 = vld [vmem:[#allocation2] sm:$0xff]
  %v235 = vld [vmem:[#allocation2 + $0x8] sm:$0xff]
  %v236 = vld [vmem:[#allocation2 + $0x10] sm:$0xff]
  %v237 = vld [vmem:[#allocation2 + $0x18] sm:$0xff]
  %v238 = vld [vmem:[#allocation2 + $0x20] sm:$0xff]
  %v239 = vld [vmem:[#allocation2 + $0x28] sm:$0xff]
  %246 = vrot.lane.b32.xlu0 %v234, 110
  %v247 = vpop.permute.xlu0 %246
  %248 = vrot.lane.b32.xlu0 %v235, 110
  %v249 = vpop.permute.xlu0 %248
  %250 = vrot.lane.b32.xlu0 %v236, 110
  %v251 = vpop.permute.xlu0 %250
  %252 = vrot.lane.b32.xlu0 %v237, 110
  %v253 = vpop.permute.xlu0 %252
  %254 = vrot.lane.b32.xlu0 %v238, 110
  %v255 = vpop.permute.xlu0 %254
  %256 = vrot.lane.b32.xlu0 %v239, 110
  %v257 = vpop.permute.xlu0 %256
  %vm258 = vcmask 900096
  %v259 = vsel %vm258, %v247, %v249
  %v260 = vsel %vm258, %v249, %v251
  %v261 = vsel %vm258, %v253, %v255
  %v262 = vsel %vm258, %v255, %v257
  %269 = vst [vmem:[#allocation3 + $0x90] sm:$0xff] %v259
  %270 = vst [vmem:[#allocation3 + $0x98] sm:$0xff] %v260
  %271 = vst.msk [vmem:[#allocation3 + $0xa0] sm:$0xff] %vm62, %v251
  %272 = vst [vmem:[#allocation3 + $0xa8] sm:$0xff] %v261
  %273 = vst [vmem:[#allocation3 + $0xb0] sm:$0xff] %v262
  %274 = vst.msk [vmem:[#allocation3 + $0xb8] sm:$0xff] %vm62, %v257
  %v275 = vld [vmem:[#allocation2] sm:$0xff]
  %v276 = vld [vmem:[#allocation2 + $0x8] sm:$0xff]
  %v277 = vld [vmem:[#allocation2 + $0x10] sm:$0xff]
  %v278 = vld [vmem:[#allocation2 + $0x18] sm:$0xff]
  %v279 = vld [vmem:[#allocation2 + $0x20] sm:$0xff]
  %v280 = vld [vmem:[#allocation2 + $0x28] sm:$0xff]
  %287 = vrot.lane.b32.xlu0 %v275, 109
  %v288 = vpop.permute.xlu0 %287
  %289 = vrot.lane.b32.xlu0 %v276, 109
  %v290 = vpop.permute.xlu0 %289
  %291 = vrot.lane.b32.xlu0 %v277, 109
  %v292 = vpop.permute.xlu0 %291
  %293 = vrot.lane.b32.xlu0 %v278, 109
  %v294 = vpop.permute.xlu0 %293
  %295 = vrot.lane.b32.xlu0 %v279, 109
  %v296 = vpop.permute.xlu0 %295
  %297 = vrot.lane.b32.xlu0 %v280, 109
  %v298 = vpop.permute.xlu0 %297
  %vm299 = vcmask 891904
  %v300 = vsel %vm299, %v288, %v290
  %v301 = vsel %vm299, %v290, %v292
  %v302 = vsel %vm299, %v294, %v296
  %v303 = vsel %vm299, %v296, %v298
  %310 = vst [vmem:[#allocation3 + $0xc0] sm:$0xff] %v300
  %311 = vst [vmem:[#allocation3 + $0xc8] sm:$0xff] %v301
  %312 = vst.msk [vmem:[#allocation3 + $0xd0] sm:$0xff] %vm62, %v292
  %313 = vst [vmem:[#allocation3 + $0xd8] sm:$0xff] %v302
  %314 = vst [vmem:[#allocation3 + $0xe0] sm:$0xff] %v303
  %315 = vst.msk [vmem:[#allocation3 + $0xe8] sm:$0xff] %vm62, %v298
  %v316 = vld [vmem:[#allocation2] sm:$0xff]
  %v317 = vld [vmem:[#allocation2 + $0x8] sm:$0xff]
  %v318 = vld [vmem:[#allocation2 + $0x10] sm:$0xff]
  %v319 = vld [vmem:[#allocation2 + $0x18] sm:$0xff]
  %v320 = vld [vmem:[#allocation2 + $0x20] sm:$0xff]
  %v321 = vld [vmem:[#allocation2 + $0x28] sm:$0xff]
  %328 = vrot.lane.b32.xlu0 %v316, 108
  %v329 = vpop.permute.xlu0 %328
  %330 = vrot.lane.b32.xlu0 %v317, 108
  %v331 = vpop.permute.xlu0 %330
  %332 = vrot.lane.b32.xlu0 %v318, 108
  %v333 = vpop.permute.xlu0 %332
  %334 = vrot.lane.b32.xlu0 %v319, 108
  %v335 = vpop.permute.xlu0 %334
  %336 = vrot.lane.b32.xlu0 %v320, 108
  %v337 = vpop.permute.xlu0 %336
  %338 = vrot.lane.b32.xlu0 %v321, 108
  %v339 = vpop.permute.xlu0 %338
  %vm340 = vcmask 883712
  %v341 = vsel %vm340, %v329, %v331
  %v342 = vsel %vm340, %v331, %v333
  %v343 = vsel %vm340, %v335, %v337
  %v344 = vsel %vm340, %v337, %v339
  %351 = vst [vmem:[#allocation3 + $0xf0] sm:$0xff] %v341
  %352 = vst [vmem:[#allocation3 + $0xf8] sm:$0xff] %v342
  %353 = vst.msk [vmem:[#allocation3 + $0x100] sm:$0xff] %vm62, %v333
  %354 = vst [vmem:[#allocation3 + $0x108] sm:$0xff] %v343
  %355 = vst [vmem:[#allocation3 + $0x110] sm:$0xff] %v344
  %356 = vst.msk [vmem:[#allocation3 + $0x118] sm:$0xff] %vm62, %v339
  %v357 = vld [vmem:[#allocation2] sm:$0xff]
  %v358 = vld [vmem:[#allocation2 + $0x8] sm:$0xff]
  %v359 = vld [vmem:[#allocation2 + $0x10] sm:$0xff]
  %v360 = vld [vmem:[#allocation2 + $0x18] sm:$0xff]
  %v361 = vld [vmem:[#allocation2 + $0x20] sm:$0xff]
  %v362 = vld [vmem:[#allocation2 + $0x28] sm:$0xff]
  %369 = vrot.lane.b32.xlu0 %v357, 92
  %v370 = vpop.permute.xlu0 %369
  %371 = vrot.lane.b32.xlu0 %v358, 92
  %v372 = vpop.permute.xlu0 %371
  %373 = vrot.lane.b32.xlu0 %v359, 92
  %v374 = vpop.permute.xlu0 %373
  %375 = vrot.lane.b32.xlu0 %v360, 92
  %v376 = vpop.permute.xlu0 %375
  %377 = vrot.lane.b32.xlu0 %v361, 92
  %v378 = vpop.permute.xlu0 %377
  %379 = vrot.lane.b32.xlu0 %v362, 92
  %v380 = vpop.permute.xlu0 %379
  %vm381 = vcmask 752640
  %v382 = vsel %vm381, %v370, %v372
  %v383 = vsel %vm381, %v372, %v374
  %v384 = vsel %vm381, %v376, %v378
  %v385 = vsel %vm381, %v378, %v380
  %392 = vst [vmem:[#allocation3 + $0x120] sm:$0xff] %v382
  %393 = vst [vmem:[#allocation3 + $0x128] sm:$0xff] %v383
  %394 = vst.msk [vmem:[#allocation3 + $0x130] sm:$0xff] %vm62, %v374
  %395 = vst [vmem:[#allocation3 + $0x138] sm:$0xff] %v384
  %396 = vst [vmem:[#allocation3 + $0x140] sm:$0xff] %v385
  %397 = vst.msk [vmem:[#allocation3 + $0x148] sm:$0xff] %vm62, %v380
  %v398 = vld [vmem:[#allocation2] sm:$0xff]
  %v399 = vld [vmem:[#allocation2 + $0x8] sm:$0xff]
  %v400 = vld [vmem:[#allocation2 + $0x10] sm:$0xff]
  %v401 = vld [vmem:[#allocation2 + $0x18] sm:$0xff]
  %v402 = vld [vmem:[#allocation2 + $0x20] sm:$0xff]
  %v403 = vld [vmem:[#allocation2 + $0x28] sm:$0xff]
  %410 = vrot.lane.b32.xlu0 %v398, 91
  %v411 = vpop.permute.xlu0 %410
  %412 = vrot.lane.b32.xlu0 %v399, 91
  %v413 = vpop.permute.xlu0 %412
  %414 = vrot.lane.b32.xlu0 %v400, 91
  %v415 = vpop.permute.xlu0 %414
  %416 = vrot.lane.b32.xlu0 %v401, 91
  %v417 = vpop.permute.xlu0 %416
  %418 = vrot.lane.b32.xlu0 %v402, 91
  %v419 = vpop.permute.xlu0 %418
  %420 = vrot.lane.b32.xlu0 %v403, 91
  %v421 = vpop.permute.xlu0 %420
  %vm422 = vcmask 744448
  %v423 = vsel %vm422, %v411, %v413
  %v424 = vsel %vm422, %v413, %v415
  %v425 = vsel %vm422, %v417, %v419
  %v426 = vsel %vm422, %v419, %v421
  %433 = vst [vmem:[#allocation3 + $0x150] sm:$0xff] %v423
  %434 = vst [vmem:[#allocation3 + $0x158] sm:$0xff] %v424
  %435 = vst.msk [vmem:[#allocation3 + $0x160] sm:$0xff] %vm62, %v415
  %436 = vst [vmem:[#allocation3 + $0x168] sm:$0xff] %v425
  %437 = vst [vmem:[#allocation3 + $0x170] sm:$0xff] %v426
  %438 = vst.msk [vmem:[#allocation3 + $0x178] sm:$0xff] %vm62, %v421
  %v439 = vld [vmem:[#allocation2] sm:$0xff]
  %v440 = vld [vmem:[#allocation2 + $0x8] sm:$0xff]
  %v441 = vld [vmem:[#allocation2 + $0x10] sm:$0xff]
  %v442 = vld [vmem:[#allocation2 + $0x18] sm:$0xff]
  %v443 = vld [vmem:[#allocation2 + $0x20] sm:$0xff]
  %v444 = vld [vmem:[#allocation2 + $0x28] sm:$0xff]
  %451 = vrot.lane.b32.xlu0 %v439, 90
  %v452 = vpop.permute.xlu0 %451
  %453 = vrot.lane.b32.xlu0 %v440, 90
  %v454 = vpop.permute.xlu0 %453
  %455 = vrot.lane.b32.xlu0 %v441, 90
  %v456 = vpop.permute.xlu0 %455
  %457 = vrot.lane.b32.xlu0 %v442, 90
  %v458 = vpop.permute.xlu0 %457
  %459 = vrot.lane.b32.xlu0 %v443, 90
  %v460 = vpop.permute.xlu0 %459
  %461 = vrot.lane.b32.xlu0 %v444, 90
  %v462 = vpop.permute.xlu0 %461
  %vm463 = vcmask 736256
  %v464 = vsel %vm463, %v452, %v454
  %v465 = vsel %vm463, %v454, %v456
  %v466 = vsel %vm463, %v458, %v460
  %v467 = vsel %vm463, %v460, %v462
  %474 = vst [vmem:[#allocation3 + $0x180] sm:$0xff] %v464
  %475 = vst [vmem:[#allocation3 + $0x188] sm:$0xff] %v465
  %476 = vst.msk [vmem:[#allocation3 + $0x190] sm:$0xff] %vm62, %v456
  %477 = vst [vmem:[#allocation3 + $0x198] sm:$0xff] %v466
  %478 = vst [vmem:[#allocation3 + $0x1a0] sm:$0xff] %v467
  %479 = vst.msk [vmem:[#allocation3 + $0x1a8] sm:$0xff] %vm62, %v462
  %v480 = vld [vmem:[#allocation3] sm:$0xff]
  %v481 = vld [vmem:[#allocation3 + $0x8] sm:$0xff]
  %v482 = vld [vmem:[#allocation3 + $0x10] sm:$0xff]
  %v483 = vld [vmem:[#allocation3 + $0x18] sm:$0xff]
  %v484 = vld [vmem:[#allocation3 + $0x20] sm:$0xff]
  %v485 = vld [vmem:[#allocation3 + $0x28] sm:$0xff]
  %v486 = vld [vmem:[#allocation3 + $0x30] sm:$0xff]
  %v487 = vld [vmem:[#allocation3 + $0x38] sm:$0xff]
  %v488 = vld [vmem:[#allocation3 + $0x40] sm:$0xff]
  %v489 = vld [vmem:[#allocation3 + $0x48] sm:$0xff]
  %v490 = vld [vmem:[#allocation3 + $0x50] sm:$0xff]
  %v491 = vld [vmem:[#allocation3 + $0x58] sm:$0xff]
  %v492 = vld [vmem:[#allocation3 + $0x60] sm:$0xff]
  %v493 = vld [vmem:[#allocation3 + $0x68] sm:$0xff]
  %v494 = vld [vmem:[#allocation3 + $0x70] sm:$0xff]
  %v495 = vld [vmem:[#allocation3 + $0x78] sm:$0xff]
  %v496 = vld [vmem:[#allocation3 + $0x80] sm:$0xff]
  %v497 = vld [vmem:[#allocation3 + $0x88] sm:$0xff]
  %v498 = vld [vmem:[#allocation3 + $0x90] sm:$0xff]
  %v499 = vld [vmem:[#allocation3 + $0x98] sm:$0xff]
  %v500 = vld [vmem:[#allocation3 + $0xa0] sm:$0xff]
  %v501 = vld [vmem:[#allocation3 + $0xa8] sm:$0xff]
  %v502 = vld [vmem:[#allocation3 + $0xb0] sm:$0xff]
  %v503 = vld [vmem:[#allocation3 + $0xb8] sm:$0xff]
  %v504 = vld [vmem:[#allocation3 + $0xc0] sm:$0xff]
  %v505 = vld [vmem:[#allocation3 + $0xc8] sm:$0xff]
  %v506 = vld [vmem:[#allocation3 + $0xd0] sm:$0xff]
  %v507 = vld [vmem:[#allocation3 + $0xd8] sm:$0xff]
  %v508 = vld [vmem:[#allocation3 + $0xe0] sm:$0xff]
  %v509 = vld [vmem:[#allocation3 + $0xe8] sm:$0xff]
  %v510 = vld [vmem:[#allocation3 + $0xf0] sm:$0xff]
  %v511 = vld [vmem:[#allocation3 + $0xf8] sm:$0xff]
  %v512 = vld [vmem:[#allocation3 + $0x100] sm:$0xff]
  %v513 = vld [vmem:[#allocation3 + $0x108] sm:$0xff]
  %v514 = vld [vmem:[#allocation3 + $0x110] sm:$0xff]
  %v515 = vld [vmem:[#allocation3 + $0x118] sm:$0xff]
  %v516 = vld [vmem:[#allocation3 + $0x120] sm:$0xff]
  %v517 = vld [vmem:[#allocation3 + $0x128] sm:$0xff]
  %v518 = vld [vmem:[#allocation3 + $0x130] sm:$0xff]
  %v519 = vld [vmem:[#allocation3 + $0x138] sm:$0xff]
  %v520 = vld [vmem:[#allocation3 + $0x140] sm:$0xff]
  %v521 = vld [vmem:[#allocation3 + $0x148] sm:$0xff]
  %v522 = vld [vmem:[#allocation3 + $0x150] sm:$0xff]
  %v523 = vld [vmem:[#allocation3 + $0x158] sm:$0xff]
  %v524 = vld [vmem:[#allocation3 + $0x160] sm:$0xff]
  %v525 = vld [vmem:[#allocation3 + $0x168] sm:$0xff]
  %v526 = vld [vmem:[#allocation3 + $0x170] sm:$0xff]
  %v527 = vld [vmem:[#allocation3 + $0x178] sm:$0xff]
  %v528 = vld [vmem:[#allocation3 + $0x180] sm:$0xff]
  %v529 = vld [vmem:[#allocation3 + $0x188] sm:$0xff]
  %v530 = vld [vmem:[#allocation3 + $0x190] sm:$0xff]
  %v531 = vld [vmem:[#allocation3 + $0x198] sm:$0xff]
  %v532 = vld [vmem:[#allocation3 + $0x1a0] sm:$0xff]
  %v533 = vld [vmem:[#allocation3 + $0x1a8] sm:$0xff]
  %535 = vset.pattern.permute.xlu0 0
  %536 = vperm.xlu0 %535, %v93
  %v537 = vpop.permute.xlu0 %536
  %540 = vset.pattern.permute.xlu0 0
  %541 = vperm.xlu0 %540, %v94
  %v542 = vpop.permute.xlu0 %541
  %545 = vset.pattern.permute.xlu0 0
  %546 = vperm.xlu0 %545, %v95
  %v547 = vpop.permute.xlu0 %546
  %550 = vset.pattern.permute.xlu0 0
  %551 = vperm.xlu0 %550, %v96
  %v552 = vpop.permute.xlu0 %551
  %v562 = vunpack.c.l.b16 %v85
  %v563 = vunpack.c.h.b16 %v85
  %v564 = vunpack.c.l.b16 %v86
  %v565 = vunpack.c.l.b16 %v87
  %v566 = vunpack.c.h.b16 %v87
  %v567 = vunpack.c.l.b16 %v88
  %v568 = vunpack.c.l.b16 %v89
  %v569 = vunpack.c.h.b16 %v89
  %v570 = vunpack.c.l.b16 %v90
  %v571 = vunpack.c.l.b16 %v91
  %v572 = vunpack.c.h.b16 %v91
  %v573 = vunpack.c.l.b16 %v92
  %v574 = vpack.c.b16 %v565, %v562
  %v575 = vpack.c.b16 %v566, %v563
  %v576 = vpack.c.b16 %v567, %v564
  %v577 = vpack.c.b16 %v571, %v568
  %v578 = vpack.c.b16 %v572, %v569
  %v579 = vpack.c.b16 %v573, %v570
  %vm584 = vcmask 261120
  %v586 = vsel %vm584, %v576, 0
  %v589 = vsel %vm584, %v579, 0
  %591 = vmatprep.subr.bf16.mxu0 %v481
  %592 = vmatpush1.bf16.msra.mxu0 %v480
  %593 = vmatprep.subr.bf16.mxu0 %v484
  %594 = vmatpush1.bf16.msra.mxu0 %v483
  %595 = vmatprep.subr.bf16.mxu0 %v487
  %596 = vmatpush1.bf16.msra.mxu0 %v486
  %597 = vmatprep.subr.bf16.mxu0 %v490
  %598 = vmatpush1.bf16.msra.mxu0 %v489
  %599 = vmatprep.subr.bf16.mxu0 %v493
  %600 = vmatpush1.bf16.msra.mxu0 %v492
  %601 = vmatprep.subr.bf16.mxu0 %v496
  %602 = vmatpush1.bf16.msra.mxu0 %v495
  %603 = vmatprep.subr.bf16.mxu0 %v499
  %604 = vmatpush1.bf16.msra.mxu0 %v498
  %605 = vmatprep.subr.bf16.mxu0 %v502
  %606 = vmatpush1.bf16.msra.mxu0 %v501
  %607 = vmatprep.subr.bf16.mxu0 %v505
  %608 = vmatpush1.bf16.msra.mxu0 %v504
  %609 = vmatprep.subr.bf16.mxu0 %v508
  %610 = vmatpush1.bf16.msra.mxu0 %v507
  %611 = vmatprep.subr.bf16.mxu0 %v511
  %612 = vmatpush1.bf16.msra.mxu0 %v510
  %613 = vmatprep.subr.bf16.mxu0 %v514
  %614 = vmatpush1.bf16.msra.mxu0 %v513
  %615 = vmatprep.subr.bf16.mxu0 %v517
  %616 = vmatpush1.bf16.msra.mxu0 %v516
  %617 = vmatprep.subr.bf16.mxu0 %v520
  %618 = vmatpush1.bf16.msra.mxu0 %v519
  %619 = vmatprep.subr.bf16.mxu0 %v523
  %620 = vmatpush1.bf16.msra.mxu0 %v522
  %621 = vmatprep.subr.bf16.mxu0 %v526
  %622 = vmatpush1.bf16.msra.mxu0 %v525
  %623 = vmatprep.mubr.bf16.mxu0 %v575
  %624 = vmatmul.mubr.bf16.gmra.mrb[0].mxu0 %v574
  %v625 = vpop.f32.mrb[0].mxu0
  %v626 = vadd.f32 %v537, %v625
  %v627 = vpop.f32.mrb[0].mxu0
  %v628 = vadd.f32 %v537, %v627
  %v629 = vpop.f32.mrb[0].mxu0
  %v630 = vadd.f32 %v542, %v629
  %v631 = vpop.f32.mrb[0].mxu0
  %v632 = vadd.f32 %v542, %v631
  %633 = vmatprep.mubr.bf16.mxu0 %v578
  %634 = vmatmul.mubr.bf16.gmra.mrb[0].mxu0 %v577
  %v635 = vpop.f32.mrb[0].mxu0
  %v636 = vadd.f32 %v547, %v635
  %v637 = vpop.f32.mrb[0].mxu0
  %v638 = vadd.f32 %v547, %v637
  %v639 = vpop.f32.mrb[0].mxu0
  %v640 = vadd.f32 %v552, %v639
  %v641 = vpop.f32.mrb[0].mxu0
  %v642 = vadd.f32 %v552, %v641
  %643 = vdwg.mxu0
  %644 = vmatprep.subr.bf16.mxu0 %v529
  %645 = vmatpush1.bf16.msra.mxu0 %v528
  %646 = vmatprep.subr.bf16.mxu0 %v532
  %647 = vmatpush1.bf16.msra.mxu0 %v531
  %648 = vmatprep.subr.bf16.mxu0 0
  %649 = vmatpush1.bf16.msra.mxu0 0
  %650 = vmatprep.subr.bf16.mxu0 0
  %651 = vmatpush1.bf16.msra.mxu0 0
  %652 = vmatprep.subr.bf16.mxu0 0
  %653 = vmatpush1.bf16.msra.mxu0 0
  %654 = vmatprep.subr.bf16.mxu0 0
  %655 = vmatpush1.bf16.msra.mxu0 0
  %656 = vmatprep.subr.bf16.mxu0 0
  %657 = vmatpush1.bf16.msra.mxu0 0
  %658 = vmatprep.subr.bf16.mxu0 0
  %659 = vmatpush1.bf16.msra.mxu0 0
  %660 = vmatprep.subr.bf16.mxu0 0
  %661 = vmatpush1.bf16.msra.mxu0 0
  %662 = vmatprep.subr.bf16.mxu0 0
  %663 = vmatpush1.bf16.msra.mxu0 0
  %664 = vmatprep.subr.bf16.mxu0 0
  %665 = vmatpush1.bf16.msra.mxu0 0
  %666 = vmatprep.subr.bf16.mxu0 0
  %667 = vmatpush1.bf16.msra.mxu0 0
  %668 = vmatprep.subr.bf16.mxu0 0
  %669 = vmatpush1.bf16.msra.mxu0 0
  %670 = vmatprep.subr.bf16.mxu0 0
  %671 = vmatpush1.bf16.msra.mxu0 0
  %672 = vmatprep.subr.bf16.mxu0 0
  %673 = vmatpush1.bf16.msra.mxu0 0
  %674 = vmatprep.subr.bf16.mxu0 0
  %675 = vmatpush1.bf16.msra.mxu0 0
  %676 = vmatprep.mubr.bf16.mxu0 0
  %677 = vmatmul.mubr.bf16.gmra.mrb[0].mxu0 %v586
  %v678 = vpop.f32.mrb[0].mxu0
  %v679 = vadd.f32 %v626, %v678
  %v680 = vpop.f32.mrb[0].mxu0
  %v681 = vadd.f32 %v628, %v680
  %v682 = vpop.f32.mrb[0].mxu0
  %v683 = vadd.f32 %v630, %v682
  %v684 = vpop.f32.mrb[0].mxu0
  %v685 = vadd.f32 %v632, %v684
  %686 = vmatprep.mubr.bf16.mxu0 0
  %687 = vmatmul.mubr.bf16.gmra.mrb[0].mxu0 %v589
  %v688 = vpop.f32.mrb[0].mxu0
  %v689 = vadd.f32 %v636, %v688
  %v690 = vpop.f32.mrb[0].mxu0
  %v691 = vadd.f32 %v638, %v690
  %v692 = vpop.f32.mrb[0].mxu0
  %v693 = vadd.f32 %v640, %v692
  %v694 = vpop.f32.mrb[0].mxu0
  %v695 = vadd.f32 %v642, %v694
  %696 = vdwg.mxu0
  %697 = vmatprep.subr.bf16.mxu0 0
  %698 = vmatpush1.bf16.msra.mxu0 %v482
  %699 = vmatprep.subr.bf16.mxu0 0
  %700 = vmatpush1.bf16.msra.mxu0 %v485
  %701 = vmatprep.subr.bf16.mxu0 0
  %702 = vmatpush1.bf16.msra.mxu0 %v488
  %703 = vmatprep.subr.bf16.mxu0 0
  %704 = vmatpush1.bf16.msra.mxu0 %v491
  %705 = vmatprep.subr.bf16.mxu0 0
  %706 = vmatpush1.bf16.msra.mxu0 %v494
  %707 = vmatprep.subr.bf16.mxu0 0
  %708 = vmatpush1.bf16.msra.mxu0 %v497
  %709 = vmatprep.subr.bf16.mxu0 0
  %710 = vmatpush1.bf16.msra.mxu0 %v500
  %711 = vmatprep.subr.bf16.mxu0 0
  %712 = vmatpush1.bf16.msra.mxu0 %v503
  %713 = vmatprep.subr.bf16.mxu0 0
  %714 = vmatpush1.bf16.msra.mxu0 %v506
  %715 = vmatprep.subr.bf16.mxu0 0
  %716 = vmatpush1.bf16.msra.mxu0 %v509
  %717 = vmatprep.subr.bf16.mxu0 0
  %718 = vmatpush1.bf16.msra.mxu0 %v512
  %719 = vmatprep.subr.bf16.mxu0 0
  %720 = vmatpush1.bf16.msra.mxu0 %v515
  %721 = vmatprep.subr.bf16.mxu0 0
  %722 = vmatpush1.bf16.msra.mxu0 %v518
  %723 = vmatprep.subr.bf16.mxu0 0
  %724 = vmatpush1.bf16.msra.mxu0 %v521
  %725 = vmatprep.subr.bf16.mxu0 0
  %726 = vmatpush1.bf16.msra.mxu0 %v524
  %727 = vmatprep.subr.bf16.mxu0 0
  %728 = vmatpush1.bf16.msra.mxu0 %v527
  %729 = vmatprep.mubr.bf16.mxu0 %v575
  %730 = vmatmul.mubr.bf16.gmra.mrb[0].mxu0 %v574
  %v731 = vpop.f32.mrb[0].mxu0
  %v732 = vadd.f32 %v537, %v731
  %v733 = vpop.f32.mrb[0].mxu0
  %v734 = vpop.f32.mrb[0].mxu0
  %v735 = vadd.f32 %v542, %v734
  %v736 = vpop.f32.mrb[0].mxu0
  %737 = vmatprep.mubr.bf16.mxu0 %v578
  %738 = vmatmul.mubr.bf16.gmra.mrb[0].mxu0 %v577
  %v739 = vpop.f32.mrb[0].mxu0
  %v740 = vadd.f32 %v547, %v739
  %v741 = vpop.f32.mrb[0].mxu0
  %v742 = vpop.f32.mrb[0].mxu0
  %v743 = vadd.f32 %v552, %v742
  %v744 = vpop.f32.mrb[0].mxu0
  %745 = vdwg.mxu0
  %746 = vmatprep.subr.bf16.mxu0 0
  %747 = vmatpush1.bf16.msra.mxu0 %v530
  %748 = vmatprep.subr.bf16.mxu0 0
  %749 = vmatpush1.bf16.msra.mxu0 %v533
  %750 = vmatprep.subr.bf16.mxu0 0
  %751 = vmatpush1.bf16.msra.mxu0 0
  %752 = vmatprep.subr.bf16.mxu0 0
  %753 = vmatpush1.bf16.msra.mxu0 0
  %754 = vmatprep.subr.bf16.mxu0 0
  %755 = vmatpush1.bf16.msra.mxu0 0
  %756 = vmatprep.subr.bf16.mxu0 0
  %757 = vmatpush1.bf16.msra.mxu0 0
  %758 = vmatprep.subr.bf16.mxu0 0
  %759 = vmatpush1.bf16.msra.mxu0 0
  %760 = vmatprep.subr.bf16.mxu0 0
  %761 = vmatpush1.bf16.msra.mxu0 0
  %762 = vmatprep.subr.bf16.mxu0 0
  %763 = vmatpush1.bf16.msra.mxu0 0
  %764 = vmatprep.subr.bf16.mxu0 0
  %765 = vmatpush1.bf16.msra.mxu0 0
  %766 = vmatprep.subr.bf16.mxu0 0
  %767 = vmatpush1.bf16.msra.mxu0 0
  %768 = vmatprep.subr.bf16.mxu0 0
  %769 = vmatpush1.bf16.msra.mxu0 0
  %770 = vmatprep.subr.bf16.mxu0 0
  %771 = vmatpush1.bf16.msra.mxu0 0
  %772 = vmatprep.subr.bf16.mxu0 0
  %773 = vmatpush1.bf16.msra.mxu0 0
  %774 = vmatprep.subr.bf16.mxu0 0
  %775 = vmatpush1.bf16.msra.mxu0 0
  %776 = vmatprep.subr.bf16.mxu0 0
  %777 = vmatpush1.bf16.msra.mxu0 0
  %778 = vmatprep.mubr.bf16.mxu0 0
  %779 = vmatmul.mubr.bf16.gmra.mrb[0].mxu0 %v586
  %v780 = vpop.f32.mrb[0].mxu0
  %v781 = vadd.f32 %v732, %v780
  %v782 = vpop.f32.mrb[0].mxu0
  %v783 = vpop.f32.mrb[0].mxu0
  %v784 = vadd.f32 %v735, %v783
  %v785 = vpop.f32.mrb[0].mxu0
  %786 = vmatprep.mubr.bf16.mxu0 0
  %787 = vmatmul.mubr.bf16.gmra.mrb[0].mxu0 %v589
  %v788 = vpop.f32.mrb[0].mxu0
  %v789 = vadd.f32 %v740, %v788
  %v790 = vpop.f32.mrb[0].mxu0
  %v791 = vpop.f32.mrb[0].mxu0
  %v792 = vadd.f32 %v743, %v791
  %v793 = vpop.f32.mrb[0].mxu0
  %794 = vdwg.mxu0
  %v795 = vld [vmem:[%s11] sm:$0x7]
  %v797 = vlaneseq
  %v798 = vshrl.u32 %v797, 7
  %v799 = vsub.s32 0, %v798
  %v800 = vrot.slane %v795, %v799
  %v801 = vlaneseq
  %v802 = vshrl.u32 %v801, 7
  %v803 = vsub.s32 1, %v802
  %v804 = vrot.slane %v795, %v803
  %v805 = vlaneseq
  %v806 = vshrl.u32 %v805, 7
  %v807 = vsub.s32 2, %v806
  %v808 = vrot.slane %v795, %v807
  %v812 = vmul.f32 %v679, %v800
  %v813 = vmul.f32 %v681, %v804
  %v814 = vmul.f32 %v781, %v808
  %v815 = vmul.f32 %v683, %v800
  %v816 = vmul.f32 %v685, %v804
  %v817 = vmul.f32 %v784, %v808
  %v818 = vmul.f32 %v689, %v800
  %v819 = vmul.f32 %v691, %v804
  %v820 = vmul.f32 %v789, %v808
  %v821 = vmul.f32 %v693, %v800
  %v822 = vmul.f32 %v695, %v804
  %v823 = vmul.f32 %v792, %v808
  %v824 = vmax.f32 %v812, 0.0
  %v825 = vmax.f32 %v813, 0.0
  %v826 = vmax.f32 %v814, 0.0
  %v827 = vmax.f32 %v815, 0.0
  %v828 = vmax.f32 %v816, 0.0
  %v829 = vmax.f32 %v817, 0.0
  %v830 = vmax.f32 %v818, 0.0
  %v831 = vmax.f32 %v819, 0.0
  %v832 = vmax.f32 %v820, 0.0
  %v833 = vmax.f32 %v821, 0.0
  %v834 = vmax.f32 %v822, 0.0
  %v835 = vmax.f32 %v823, 0.0
  %v836 = vld [vmem:[%s3] sm:$0xff]
  %v837 = vld [vmem:[%s3 + $0x8] sm:$0xf]
  %v838 = vld [vmem:[%s3 + $0xc] sm:$0xff]
  %v839 = vld [vmem:[%s3 + $0x14] sm:$0xf]
  %v840 = vld [vmem:[%s3 + $0x18] sm:$0xff]
  %v841 = vld [vmem:[%s3 + $0x20] sm:$0xf]
  %v842 = vld [vmem:[%s3 + $0x24] sm:$0xff]
  %v843 = vld [vmem:[%s3 + $0x2c] sm:$0xf]
  %v844 = vld [vmem:[%s4] sm:$0xff]
  %v845 = vld [vmem:[%s4 + $0x8] sm:$0xff]
  %v846 = vld [vmem:[%s4 + $0x10] sm:$0xff]
  %v847 = vld [vmem:[%s4 + $0x18] sm:$0xff]
  %v848 = vpack.c.bf16 %v827, %v824
  %v849 = vpack.c.bf16 %v828, %v825
  %v850 = vpack.c.bf16 %v829, %v826
  %v851 = vpack.c.bf16 %v833, %v830
  %v852 = vpack.c.bf16 %v834, %v831
  %v853 = vpack.c.bf16 %v835, %v832
  %860 = vrot.lane.b32.xlu0 %v848, 19
  %v861 = vpop.permute.xlu0 %860
  %862 = vrot.lane.b32.xlu0 %v849, 19
  %v863 = vpop.permute.xlu0 %862
  %864 = vrot.lane.b32.xlu0 %v850, 19
  %v865 = vpop.permute.xlu0 %864
  %866 = vrot.lane.b32.xlu0 %v851, 19
  %v867 = vpop.permute.xlu0 %866
  %868 = vrot.lane.b32.xlu0 %v852, 19
  %v869 = vpop.permute.xlu0 %868
  %870 = vrot.lane.b32.xlu0 %v853, 19
  %v871 = vpop.permute.xlu0 %870
  %v872 = vsel %vm121, %v861, %v863
  %v873 = vsel %vm121, %v863, %v865
  %v874 = vsel %vm121, %v867, %v869
  %v875 = vsel %vm121, %v869, %v871
  %882 = vst.msk [vmem:[#allocation2] sm:$0xff] %vm132, %v861
  %883 = vst [vmem:[#allocation2 + $0x8] sm:$0xff] %v872
  %884 = vst.msk [vmem:[#allocation2 + $0x10] sm:$0xff] %vm135, %v873
  %885 = vst.msk [vmem:[#allocation2 + $0x18] sm:$0xff] %vm132, %v867
  %886 = vst [vmem:[#allocation2 + $0x20] sm:$0xff] %v874
  %887 = vst.msk [vmem:[#allocation2 + $0x28] sm:$0xff] %vm135, %v875
  %v888 = vld [vmem:[#allocation2] sm:$0xff]
  %v889 = vld [vmem:[#allocation2 + $0x8] sm:$0xff]
  %v890 = vld [vmem:[#allocation2 + $0x10] sm:$0xff]
  %v891 = vld [vmem:[#allocation2 + $0x18] sm:$0xff]
  %v892 = vld [vmem:[#allocation2 + $0x20] sm:$0xff]
  %v893 = vld [vmem:[#allocation2 + $0x28] sm:$0xff]
  %894 = vst [vmem:[#allocation3] sm:$0xff] %v888
  %895 = vst [vmem:[#allocation3 + $0x8] sm:$0xff] %v889
  %896 = vst.msk [vmem:[#allocation3 + $0x10] sm:$0xff] %vm62, %v890
  %897 = vst [vmem:[#allocation3 + $0x18] sm:$0xff] %v891
  %898 = vst [vmem:[#allocation3 + $0x20] sm:$0xff] %v892
  %899 = vst.msk [vmem:[#allocation3 + $0x28] sm:$0xff] %vm62, %v893
  %v900 = vld [vmem:[#allocation2] sm:$0xff]
  %v901 = vld [vmem:[#allocation2 + $0x8] sm:$0xff]
  %v902 = vld [vmem:[#allocation2 + $0x10] sm:$0xff]
  %v903 = vld [vmem:[#allocation2 + $0x18] sm:$0xff]
  %v904 = vld [vmem:[#allocation2 + $0x20] sm:$0xff]
  %v905 = vld [vmem:[#allocation2 + $0x28] sm:$0xff]
  %912 = vrot.lane.b32.xlu0 %v900, 127
  %v913 = vpop.permute.xlu0 %912
  %914 = vrot.lane.b32.xlu0 %v901, 127
  %v915 = vpop.permute.xlu0 %914
  %916 = vrot.lane.b32.xlu0 %v902, 127
  %v917 = vpop.permute.xlu0 %916
  %918 = vrot.lane.b32.xlu0 %v903, 127
  %v919 = vpop.permute.xlu0 %918
  %920 = vrot.lane.b32.xlu0 %v904, 127
  %v921 = vpop.permute.xlu0 %920
  %922 = vrot.lane.b32.xlu0 %v905, 127
  %v923 = vpop.permute.xlu0 %922
  %v924 = vsel %vm176, %v913, %v915
  %v925 = vsel %vm176, %v915, %v917
  %v926 = vsel %vm176, %v919, %v921
  %v927 = vsel %vm176, %v921, %v923
  %934 = vst [vmem:[#allocation3 + $0x30] sm:$0xff] %v924
  %935 = vst [vmem:[#allocation3 + $0x38] sm:$0xff] %v925
  %936 = vst.msk [vmem:[#allocation3 + $0x40] sm:$0xff] %vm62, %v917
  %937 = vst [vmem:[#allocation3 + $0x48] sm:$0xff] %v926
  %938 = vst [vmem:[#allocation3 + $0x50] sm:$0xff] %v927
  %939 = vst.msk [vmem:[#allocation3 + $0x58] sm:$0xff] %vm62, %v923
  %v940 = vld [vmem:[#allocation2] sm:$0xff]
  %v941 = vld [vmem:[#allocation2 + $0x8] sm:$0xff]
  %v942 = vld [vmem:[#allocation2 + $0x10] sm:$0xff]
  %v943 = vld [vmem:[#allocation2 + $0x18] sm:$0xff]
  %v944 = vld [vmem:[#allocation2 + $0x20] sm:$0xff]
  %v945 = vld [vmem:[#allocation2 + $0x28] sm:$0xff]
  %952 = vrot.lane.b32.xlu0 %v940, 126
  %v953 = vpop.permute.xlu0 %952
  %954 = vrot.lane.b32.xlu0 %v941, 126
  %v955 = vpop.permute.xlu0 %954
  %956 = vrot.lane.b32.xlu0 %v942, 126
  %v957 = vpop.permute.xlu0 %956
  %958 = vrot.lane.b32.xlu0 %v943, 126
  %v959 = vpop.permute.xlu0 %958
  %960 = vrot.lane.b32.xlu0 %v944, 126
  %v961 = vpop.permute.xlu0 %960
  %962 = vrot.lane.b32.xlu0 %v945, 126
  %v963 = vpop.permute.xlu0 %962
  %v964 = vsel %vm217, %v953, %v955
  %v965 = vsel %vm217, %v955, %v957
  %v966 = vsel %vm217, %v959, %v961
  %v967 = vsel %vm217, %v961, %v963
  %974 = vst [vmem:[#allocation3 + $0x60] sm:$0xff] %v964
  %975 = vst [vmem:[#allocation3 + $0x68] sm:$0xff] %v965
  %976 = vst.msk [vmem:[#allocation3 + $0x70] sm:$0xff] %vm62, %v957
  %977 = vst [vmem:[#allocation3 + $0x78] sm:$0xff] %v966
  %978 = vst [vmem:[#allocation3 + $0x80] sm:$0xff] %v967
  %979 = vst.msk [vmem:[#allocation3 + $0x88] sm:$0xff] %vm62, %v963
  %v980 = vld [vmem:[#allocation2] sm:$0xff]
  %v981 = vld [vmem:[#allocation2 + $0x8] sm:$0xff]
  %v982 = vld [vmem:[#allocation2 + $0x10] sm:$0xff]
  %v983 = vld [vmem:[#allocation2 + $0x18] sm:$0xff]
  %v984 = vld [vmem:[#allocation2 + $0x20] sm:$0xff]
  %v985 = vld [vmem:[#allocation2 + $0x28] sm:$0xff]
  %992 = vrot.lane.b32.xlu0 %v980, 110
  %v993 = vpop.permute.xlu0 %992
  %994 = vrot.lane.b32.xlu0 %v981, 110
  %v995 = vpop.permute.xlu0 %994
  %996 = vrot.lane.b32.xlu0 %v982, 110
  %v997 = vpop.permute.xlu0 %996
  %998 = vrot.lane.b32.xlu0 %v983, 110
  %v999 = vpop.permute.xlu0 %998
  %1000 = vrot.lane.b32.xlu0 %v984, 110
  %v1001 = vpop.permute.xlu0 %1000
  %1002 = vrot.lane.b32.xlu0 %v985, 110
  %v1003 = vpop.permute.xlu0 %1002
  %v1004 = vsel %vm258, %v993, %v995
  %v1005 = vsel %vm258, %v995, %v997
  %v1006 = vsel %vm258, %v999, %v1001
  %v1007 = vsel %vm258, %v1001, %v1003
  %1014 = vst [vmem:[#allocation3 + $0x90] sm:$0xff] %v1004
  %1015 = vst [vmem:[#allocation3 + $0x98] sm:$0xff] %v1005
  %1016 = vst.msk [vmem:[#allocation3 + $0xa0] sm:$0xff] %vm62, %v997
  %1017 = vst [vmem:[#allocation3 + $0xa8] sm:$0xff] %v1006
  %1018 = vst [vmem:[#allocation3 + $0xb0] sm:$0xff] %v1007
  %1019 = vst.msk [vmem:[#allocation3 + $0xb8] sm:$0xff] %vm62, %v1003
  %v1020 = vld [vmem:[#allocation2] sm:$0xff]
  %v1021 = vld [vmem:[#allocation2 + $0x8] sm:$0xff]
  %v1022 = vld [vmem:[#allocation2 + $0x10] sm:$0xff]
  %v1023 = vld [vmem:[#allocation2 + $0x18] sm:$0xff]
  %v1024 = vld [vmem:[#allocation2 + $0x20] sm:$0xff]
  %v1025 = vld [vmem:[#allocation2 + $0x28] sm:$0xff]
  %1032 = vrot.lane.b32.xlu0 %v1020, 109
  %v1033 = vpop.permute.xlu0 %1032
  %1034 = vrot.lane.b32.xlu0 %v1021, 109
  %v1035 = vpop.permute.xlu0 %1034
  %1036 = vrot.lane.b32.xlu0 %v1022, 109
  %v1037 = vpop.permute.xlu0 %1036
  %1038 = vrot.lane.b32.xlu0 %v1023, 109
  %v1039 = vpop.permute.xlu0 %1038
  %1040 = vrot.lane.b32.xlu0 %v1024, 109
  %v1041 = vpop.permute.xlu0 %1040
  %1042 = vrot.lane.b32.xlu0 %v1025, 109
  %v1043 = vpop.permute.xlu0 %1042
  %v1044 = vsel %vm299, %v1033, %v1035
  %v1045 = vsel %vm299, %v1035, %v1037
  %v1046 = vsel %vm299, %v1039, %v1041
  %v1047 = vsel %vm299, %v1041, %v1043
  %1054 = vst [vmem:[#allocation3 + $0xc0] sm:$0xff] %v1044
  %1055 = vst [vmem:[#allocation3 + $0xc8] sm:$0xff] %v1045
  %1056 = vst.msk [vmem:[#allocation3 + $0xd0] sm:$0xff] %vm62, %v1037
  %1057 = vst [vmem:[#allocation3 + $0xd8] sm:$0xff] %v1046
  %1058 = vst [vmem:[#allocation3 + $0xe0] sm:$0xff] %v1047
  %1059 = vst.msk [vmem:[#allocation3 + $0xe8] sm:$0xff] %vm62, %v1043
  %v1060 = vld [vmem:[#allocation2] sm:$0xff]
  %v1061 = vld [vmem:[#allocation2 + $0x8] sm:$0xff]
  %v1062 = vld [vmem:[#allocation2 + $0x10] sm:$0xff]
  %v1063 = vld [vmem:[#allocation2 + $0x18] sm:$0xff]
  %v1064 = vld [vmem:[#allocation2 + $0x20] sm:$0xff]
  %v1065 = vld [vmem:[#allocation2 + $0x28] sm:$0xff]
  %1072 = vrot.lane.b32.xlu0 %v1060, 108
  %v1073 = vpop.permute.xlu0 %1072
  %1074 = vrot.lane.b32.xlu0 %v1061, 108
  %v1075 = vpop.permute.xlu0 %1074
  %1076 = vrot.lane.b32.xlu0 %v1062, 108
  %v1077 = vpop.permute.xlu0 %1076
  %1078 = vrot.lane.b32.xlu0 %v1063, 108
  %v1079 = vpop.permute.xlu0 %1078
  %1080 = vrot.lane.b32.xlu0 %v1064, 108
  %v1081 = vpop.permute.xlu0 %1080
  %1082 = vrot.lane.b32.xlu0 %v1065, 108
  %v1083 = vpop.permute.xlu0 %1082
  %v1084 = vsel %vm340, %v1073, %v1075
  %v1085 = vsel %vm340, %v1075, %v1077
  %v1086 = vsel %vm340, %v1079, %v1081
  %v1087 = vsel %vm340, %v1081, %v1083
  %1094 = vst [vmem:[#allocation3 + $0xf0] sm:$0xff] %v1084
  %1095 = vst [vmem:[#allocation3 + $0xf8] sm:$0xff] %v1085
  %1096 = vst.msk [vmem:[#allocation3 + $0x100] sm:$0xff] %vm62, %v1077
  %1097 = vst [vmem:[#allocation3 + $0x108] sm:$0xff] %v1086
  %1098 = vst [vmem:[#allocation3 + $0x110] sm:$0xff] %v1087
  %1099 = vst.msk [vmem:[#allocation3 + $0x118] sm:$0xff] %vm62, %v1083
  %v1100 = vld [vmem:[#allocation2] sm:$0xff]
  %v1101 = vld [vmem:[#allocation2 + $0x8] sm:$0xff]
  %v1102 = vld [vmem:[#allocation2 + $0x10] sm:$0xff]
  %v1103 = vld [vmem:[#allocation2 + $0x18] sm:$0xff]
  %v1104 = vld [vmem:[#allocation2 + $0x20] sm:$0xff]
  %v1105 = vld [vmem:[#allocation2 + $0x28] sm:$0xff]
  %1112 = vrot.lane.b32.xlu0 %v1100, 92
  %v1113 = vpop.permute.xlu0 %1112
  %1114 = vrot.lane.b32.xlu0 %v1101, 92
  %v1115 = vpop.permute.xlu0 %1114
  %1116 = vrot.lane.b32.xlu0 %v1102, 92
  %v1117 = vpop.permute.xlu0 %1116
  %1118 = vrot.lane.b32.xlu0 %v1103, 92
  %v1119 = vpop.permute.xlu0 %1118
  %1120 = vrot.lane.b32.xlu0 %v1104, 92
  %v1121 = vpop.permute.xlu0 %1120
  %1122 = vrot.lane.b32.xlu0 %v1105, 92
  %v1123 = vpop.permute.xlu0 %1122
  %v1124 = vsel %vm381, %v1113, %v1115
  %v1125 = vsel %vm381, %v1115, %v1117
  %v1126 = vsel %vm381, %v1119, %v1121
  %v1127 = vsel %vm381, %v1121, %v1123
  %1134 = vst [vmem:[#allocation3 + $0x120] sm:$0xff] %v1124
  %1135 = vst [vmem:[#allocation3 + $0x128] sm:$0xff] %v1125
  %1136 = vst.msk [vmem:[#allocation3 + $0x130] sm:$0xff] %vm62, %v1117
  %1137 = vst [vmem:[#allocation3 + $0x138] sm:$0xff] %v1126
  %1138 = vst [vmem:[#allocation3 + $0x140] sm:$0xff] %v1127
  %1139 = vst.msk [vmem:[#allocation3 + $0x148] sm:$0xff] %vm62, %v1123
  %v1140 = vld [vmem:[#allocation2] sm:$0xff]
  %v1141 = vld [vmem:[#allocation2 + $0x8] sm:$0xff]
  %v1142 = vld [vmem:[#allocation2 + $0x10] sm:$0xff]
  %v1143 = vld [vmem:[#allocation2 + $0x18] sm:$0xff]
  %v1144 = vld [vmem:[#allocation2 + $0x20] sm:$0xff]
  %v1145 = vld [vmem:[#allocation2 + $0x28] sm:$0xff]
  %1152 = vrot.lane.b32.xlu0 %v1140, 91
  %v1153 = vpop.permute.xlu0 %1152
  %1154 = vrot.lane.b32.xlu0 %v1141, 91
  %v1155 = vpop.permute.xlu0 %1154
  %1156 = vrot.lane.b32.xlu0 %v1142, 91
  %v1157 = vpop.permute.xlu0 %1156
  %1158 = vrot.lane.b32.xlu0 %v1143, 91
  %v1159 = vpop.permute.xlu0 %1158
  %1160 = vrot.lane.b32.xlu0 %v1144, 91
  %v1161 = vpop.permute.xlu0 %1160
  %1162 = vrot.lane.b32.xlu0 %v1145, 91
  %v1163 = vpop.permute.xlu0 %1162
  %v1164 = vsel %vm422, %v1153, %v1155
  %v1165 = vsel %vm422, %v1155, %v1157
  %v1166 = vsel %vm422, %v1159, %v1161
  %v1167 = vsel %vm422, %v1161, %v1163
  %1174 = vst [vmem:[#allocation3 + $0x150] sm:$0xff] %v1164
  %1175 = vst [vmem:[#allocation3 + $0x158] sm:$0xff] %v1165
  %1176 = vst.msk [vmem:[#allocation3 + $0x160] sm:$0xff] %vm62, %v1157
  %1177 = vst [vmem:[#allocation3 + $0x168] sm:$0xff] %v1166
  %1178 = vst [vmem:[#allocation3 + $0x170] sm:$0xff] %v1167
  %1179 = vst.msk [vmem:[#allocation3 + $0x178] sm:$0xff] %vm62, %v1163
  %v1180 = vld [vmem:[#allocation2] sm:$0xff]
  %v1181 = vld [vmem:[#allocation2 + $0x8] sm:$0xff]
  %v1182 = vld [vmem:[#allocation2 + $0x10] sm:$0xff]
  %v1183 = vld [vmem:[#allocation2 + $0x18] sm:$0xff]
  %v1184 = vld [vmem:[#allocation2 + $0x20] sm:$0xff]
  %v1185 = vld [vmem:[#allocation2 + $0x28] sm:$0xff]
  %1192 = vrot.lane.b32.xlu0 %v1180, 90
  %v1193 = vpop.permute.xlu0 %1192
  %1194 = vrot.lane.b32.xlu0 %v1181, 90
  %v1195 = vpop.permute.xlu0 %1194
  %1196 = vrot.lane.b32.xlu0 %v1182, 90
  %v1197 = vpop.permute.xlu0 %1196
  %1198 = vrot.lane.b32.xlu0 %v1183, 90
  %v1199 = vpop.permute.xlu0 %1198
  %1200 = vrot.lane.b32.xlu0 %v1184, 90
  %v1201 = vpop.permute.xlu0 %1200
  %1202 = vrot.lane.b32.xlu0 %v1185, 90
  %v1203 = vpop.permute.xlu0 %1202
  %v1204 = vsel %vm463, %v1193, %v1195
  %v1205 = vsel %vm463, %v1195, %v1197
  %v1206 = vsel %vm463, %v1199, %v1201
  %v1207 = vsel %vm463, %v1201, %v1203
  %1214 = vst [vmem:[#allocation3 + $0x180] sm:$0xff] %v1204
  %1215 = vst [vmem:[#allocation3 + $0x188] sm:$0xff] %v1205
  %1216 = vst.msk [vmem:[#allocation3 + $0x190] sm:$0xff] %vm62, %v1197
  %1217 = vst [vmem:[#allocation3 + $0x198] sm:$0xff] %v1206
  %1218 = vst [vmem:[#allocation3 + $0x1a0] sm:$0xff] %v1207
  %1219 = vst.msk [vmem:[#allocation3 + $0x1a8] sm:$0xff] %vm62, %v1203
  %v1220 = vld [vmem:[#allocation3] sm:$0xff]
  %v1221 = vld [vmem:[#allocation3 + $0x8] sm:$0xff]
  %v1222 = vld [vmem:[#allocation3 + $0x10] sm:$0xff]
  %v1223 = vld [vmem:[#allocation3 + $0x18] sm:$0xff]
  %v1224 = vld [vmem:[#allocation3 + $0x20] sm:$0xff]
  %v1225 = vld [vmem:[#allocation3 + $0x28] sm:$0xff]
  %v1226 = vld [vmem:[#allocation3 + $0x30] sm:$0xff]
  %v1227 = vld [vmem:[#allocation3 + $0x38] sm:$0xff]
  %v1228 = vld [vmem:[#allocation3 + $0x40] sm:$0xff]
  %v1229 = vld [vmem:[#allocation3 + $0x48] sm:$0xff]
  %v1230 = vld [vmem:[#allocation3 + $0x50] sm:$0xff]
  %v1231 = vld [vmem:[#allocation3 + $0x58] sm:$0xff]
  %v1232 = vld [vmem:[#allocation3 + $0x60] sm:$0xff]
  %v1233 = vld [vmem:[#allocation3 + $0x68] sm:$0xff]
  %v1234 = vld [vmem:[#allocation3 + $0x70] sm:$0xff]
  %v1235 = vld [vmem:[#allocation3 + $0x78] sm:$0xff]
  %v1236 = vld [vmem:[#allocation3 + $0x80] sm:$0xff]
  %v1237 = vld [vmem:[#allocation3 + $0x88] sm:$0xff]
  %v1238 = vld [vmem:[#allocation3 + $0x90] sm:$0xff]
  %v1239 = vld [vmem:[#allocation3 + $0x98] sm:$0xff]
  %v1240 = vld [vmem:[#allocation3 + $0xa0] sm:$0xff]
  %v1241 = vld [vmem:[#allocation3 + $0xa8] sm:$0xff]
  %v1242 = vld [vmem:[#allocation3 + $0xb0] sm:$0xff]
  %v1243 = vld [vmem:[#allocation3 + $0xb8] sm:$0xff]
  %v1244 = vld [vmem:[#allocation3 + $0xc0] sm:$0xff]
  %v1245 = vld [vmem:[#allocation3 + $0xc8] sm:$0xff]
  %v1246 = vld [vmem:[#allocation3 + $0xd0] sm:$0xff]
  %v1247 = vld [vmem:[#allocation3 + $0xd8] sm:$0xff]
  %v1248 = vld [vmem:[#allocation3 + $0xe0] sm:$0xff]
  %v1249 = vld [vmem:[#allocation3 + $0xe8] sm:$0xff]
  %v1250 = vld [vmem:[#allocation3 + $0xf0] sm:$0xff]
  %v1251 = vld [vmem:[#allocation3 + $0xf8] sm:$0xff]
  %v1252 = vld [vmem:[#allocation3 + $0x100] sm:$0xff]
  %v1253 = vld [vmem:[#allocation3 + $0x108] sm:$0xff]
  %v1254 = vld [vmem:[#allocation3 + $0x110] sm:$0xff]
  %v1255 = vld [vmem:[#allocation3 + $0x118] sm:$0xff]
  %v1256 = vld [vmem:[#allocation3 + $0x120] sm:$0xff]
  %v1257 = vld [vmem:[#allocation3 + $0x128] sm:$0xff]
  %v1258 = vld [vmem:[#allocation3 + $0x130] sm:$0xff]
  %v1259 = vld [vmem:[#allocation3 + $0x138] sm:$0xff]
  %v1260 = vld [vmem:[#allocation3 + $0x140] sm:$0xff]
  %v1261 = vld [vmem:[#allocation3 + $0x148] sm:$0xff]
  %v1262 = vld [vmem:[#allocation3 + $0x150] sm:$0xff]
  %v1263 = vld [vmem:[#allocation3 + $0x158] sm:$0xff]
  %v1264 = vld [vmem:[#allocation3 + $0x160] sm:$0xff]
  %v1265 = vld [vmem:[#allocation3 + $0x168] sm:$0xff]
  %v1266 = vld [vmem:[#allocation3 + $0x170] sm:$0xff]
  %v1267 = vld [vmem:[#allocation3 + $0x178] sm:$0xff]
  %v1268 = vld [vmem:[#allocation3 + $0x180] sm:$0xff]
  %v1269 = vld [vmem:[#allocation3 + $0x188] sm:$0xff]
  %v1270 = vld [vmem:[#allocation3 + $0x190] sm:$0xff]
  %v1271 = vld [vmem:[#allocation3 + $0x198] sm:$0xff]
  %v1272 = vld [vmem:[#allocation3 + $0x1a0] sm:$0xff]
  %v1273 = vld [vmem:[#allocation3 + $0x1a8] sm:$0xff]
  %1275 = vset.pattern.permute.xlu0 0
  %1276 = vperm.xlu0 %1275, %v844
  %v1277 = vpop.permute.xlu0 %1276
  %1280 = vset.pattern.permute.xlu0 0
  %1281 = vperm.xlu0 %1280, %v845
  %v1282 = vpop.permute.xlu0 %1281
  %1285 = vset.pattern.permute.xlu0 0
  %1286 = vperm.xlu0 %1285, %v846
  %v1287 = vpop.permute.xlu0 %1286
  %1290 = vset.pattern.permute.xlu0 0
  %1291 = vperm.xlu0 %1290, %v847
  %v1292 = vpop.permute.xlu0 %1291
  %v1302 = vunpack.c.l.b16 %v836
  %v1303 = vunpack.c.h.b16 %v836
  %v1304 = vunpack.c.l.b16 %v837
  %v1305 = vunpack.c.l.b16 %v838
  %v1306 = vunpack.c.h.b16 %v838
  %v1307 = vunpack.c.l.b16 %v839
  %v1308 = vunpack.c.l.b16 %v840
  %v1309 = vunpack.c.h.b16 %v840
  %v1310 = vunpack.c.l.b16 %v841
  %v1311 = vunpack.c.l.b16 %v842
  %v1312 = vunpack.c.h.b16 %v842
  %v1313 = vunpack.c.l.b16 %v843
  %v1314 = vpack.c.b16 %v1305, %v1302
  %v1315 = vpack.c.b16 %v1306, %v1303
  %v1316 = vpack.c.b16 %v1307, %v1304
  %v1317 = vpack.c.b16 %v1311, %v1308
  %v1318 = vpack.c.b16 %v1312, %v1309
  %v1319 = vpack.c.b16 %v1313, %v1310
  %v1325 = vsel %vm584, %v1316, 0
  %v1328 = vsel %vm584, %v1319, 0
  %1330 = vmatprep.subr.bf16.mxu0 %v1221
  %1331 = vmatpush1.bf16.msra.mxu0 %v1220
  %1332 = vmatprep.subr.bf16.mxu0 %v1224
  %1333 = vmatpush1.bf16.msra.mxu0 %v1223
  %1334 = vmatprep.subr.bf16.mxu0 %v1227
  %1335 = vmatpush1.bf16.msra.mxu0 %v1226
  %1336 = vmatprep.subr.bf16.mxu0 %v1230
  %1337 = vmatpush1.bf16.msra.mxu0 %v1229
  %1338 = vmatprep.subr.bf16.mxu0 %v1233
  %1339 = vmatpush1.bf16.msra.mxu0 %v1232
  %1340 = vmatprep.subr.bf16.mxu0 %v1236
  %1341 = vmatpush1.bf16.msra.mxu0 %v1235
  %1342 = vmatprep.subr.bf16.mxu0 %v1239
  %1343 = vmatpush1.bf16.msra.mxu0 %v1238
  %1344 = vmatprep.subr.bf16.mxu0 %v1242
  %1345 = vmatpush1.bf16.msra.mxu0 %v1241
  %1346 = vmatprep.subr.bf16.mxu0 %v1245
  %1347 = vmatpush1.bf16.msra.mxu0 %v1244
  %1348 = vmatprep.subr.bf16.mxu0 %v1248
  %1349 = vmatpush1.bf16.msra.mxu0 %v1247
  %1350 = vmatprep.subr.bf16.mxu0 %v1251
  %1351 = vmatpush1.bf16.msra.mxu0 %v1250
  %1352 = vmatprep.subr.bf16.mxu0 %v1254
  %1353 = vmatpush1.bf16.msra.mxu0 %v1253
  %1354 = vmatprep.subr.bf16.mxu0 %v1257
  %1355 = vmatpush1.bf16.msra.mxu0 %v1256
  %1356 = vmatprep.subr.bf16.mxu0 %v1260
  %1357 = vmatpush1.bf16.msra.mxu0 %v1259
  %1358 = vmatprep.subr.bf16.mxu0 %v1263
  %1359 = vmatpush1.bf16.msra.mxu0 %v1262
  %1360 = vmatprep.subr.bf16.mxu0 %v1266
  %1361 = vmatpush1.bf16.msra.mxu0 %v1265
  %1362 = vmatprep.mubr.bf16.mxu0 %v1315
  %1363 = vmatmul.mubr.bf16.gmra.mrb[0].mxu0 %v1314
  %v1364 = vpop.f32.mrb[0].mxu0
  %v1365 = vadd.f32 %v1277, %v1364
  %v1366 = vpop.f32.mrb[0].mxu0
  %v1367 = vadd.f32 %v1277, %v1366
  %v1368 = vpop.f32.mrb[0].mxu0
  %v1369 = vadd.f32 %v1282, %v1368
  %v1370 = vpop.f32.mrb[0].mxu0
  %v1371 = vadd.f32 %v1282, %v1370
  %1372 = vmatprep.mubr.bf16.mxu0 %v1318
  %1373 = vmatmul.mubr.bf16.gmra.mrb[0].mxu0 %v1317
  %v1374 = vpop.f32.mrb[0].mxu0
  %v1375 = vadd.f32 %v1287, %v1374
  %v1376 = vpop.f32.mrb[0].mxu0
  %v1377 = vadd.f32 %v1287, %v1376
  %v1378 = vpop.f32.mrb[0].mxu0
  %v1379 = vadd.f32 %v1292, %v1378
  %v1380 = vpop.f32.mrb[0].mxu0
  %v1381 = vadd.f32 %v1292, %v1380
  %1382 = vdwg.mxu0
  %1383 = vmatprep.subr.bf16.mxu0 %v1269
  %1384 = vmatpush1.bf16.msra.mxu0 %v1268
  %1385 = vmatprep.subr.bf16.mxu0 %v1272
  %1386 = vmatpush1.bf16.msra.mxu0 %v1271
  %1387 = vmatprep.subr.bf16.mxu0 0
  %1388 = vmatpush1.bf16.msra.mxu0 0
  %1389 = vmatprep.subr.bf16.mxu0 0
  %1390 = vmatpush1.bf16.msra.mxu0 0
  %1391 = vmatprep.subr.bf16.mxu0 0
  %1392 = vmatpush1.bf16.msra.mxu0 0
  %1393 = vmatprep.subr.bf16.mxu0 0
  %1394 = vmatpush1.bf16.msra.mxu0 0
  %1395 = vmatprep.subr.bf16.mxu0 0
  %1396 = vmatpush1.bf16.msra.mxu0 0
  %1397 = vmatprep.subr.bf16.mxu0 0
  %1398 = vmatpush1.bf16.msra.mxu0 0
  %1399 = vmatprep.subr.bf16.mxu0 0
  %1400 = vmatpush1.bf16.msra.mxu0 0
  %1401 = vmatprep.subr.bf16.mxu0 0
  %1402 = vmatpush1.bf16.msra.mxu0 0
  %1403 = vmatprep.subr.bf16.mxu0 0
  %1404 = vmatpush1.bf16.msra.mxu0 0
  %1405 = vmatprep.subr.bf16.mxu0 0
  %1406 = vmatpush1.bf16.msra.mxu0 0
  %1407 = vmatprep.subr.bf16.mxu0 0
  %1408 = vmatpush1.bf16.msra.mxu0 0
  %1409 = vmatprep.subr.bf16.mxu0 0
  %1410 = vmatpush1.bf16.msra.mxu0 0
  %1411 = vmatprep.subr.bf16.mxu0 0
  %1412 = vmatpush1.bf16.msra.mxu0 0
  %1413 = vmatprep.subr.bf16.mxu0 0
  %1414 = vmatpush1.bf16.msra.mxu0 0
  %1415 = vmatprep.mubr.bf16.mxu0 0
  %1416 = vmatmul.mubr.bf16.gmra.mrb[0].mxu0 %v1325
  %v1417 = vpop.f32.mrb[0].mxu0
  %v1418 = vadd.f32 %v1365, %v1417
  %v1419 = vpop.f32.mrb[0].mxu0
  %v1420 = vadd.f32 %v1367, %v1419
  %v1421 = vpop.f32.mrb[0].mxu0
  %v1422 = vadd.f32 %v1369, %v1421
  %v1423 = vpop.f32.mrb[0].mxu0
  %v1424 = vadd.f32 %v1371, %v1423
  %1425 = vmatprep.mubr.bf16.mxu0 0
  %1426 = vmatmul.mubr.bf16.gmra.mrb[0].mxu0 %v1328
  %v1427 = vpop.f32.mrb[0].mxu0
  %v1428 = vadd.f32 %v1375, %v1427
  %v1429 = vpop.f32.mrb[0].mxu0
  %v1430 = vadd.f32 %v1377, %v1429
  %v1431 = vpop.f32.mrb[0].mxu0
  %v1432 = vadd.f32 %v1379, %v1431
  %v1433 = vpop.f32.mrb[0].mxu0
  %v1434 = vadd.f32 %v1381, %v1433
  %1435 = vdwg.mxu0
  %1436 = vmatprep.subr.bf16.mxu0 0
  %1437 = vmatpush1.bf16.msra.mxu0 %v1222
  %1438 = vmatprep.subr.bf16.mxu0 0
  %1439 = vmatpush1.bf16.msra.mxu0 %v1225
  %1440 = vmatprep.subr.bf16.mxu0 0
  %1441 = vmatpush1.bf16.msra.mxu0 %v1228
  %1442 = vmatprep.subr.bf16.mxu0 0
  %1443 = vmatpush1.bf16.msra.mxu0 %v1231
  %1444 = vmatprep.subr.bf16.mxu0 0
  %1445 = vmatpush1.bf16.msra.mxu0 %v1234
  %1446 = vmatprep.subr.bf16.mxu0 0
  %1447 = vmatpush1.bf16.msra.mxu0 %v1237
  %1448 = vmatprep.subr.bf16.mxu0 0
  %1449 = vmatpush1.bf16.msra.mxu0 %v1240
  %1450 = vmatprep.subr.bf16.mxu0 0
  %1451 = vmatpush1.bf16.msra.mxu0 %v1243
  %1452 = vmatprep.subr.bf16.mxu0 0
  %1453 = vmatpush1.bf16.msra.mxu0 %v1246
  %1454 = vmatprep.subr.bf16.mxu0 0
  %1455 = vmatpush1.bf16.msra.mxu0 %v1249
  %1456 = vmatprep.subr.bf16.mxu0 0
  %1457 = vmatpush1.bf16.msra.mxu0 %v1252
  %1458 = vmatprep.subr.bf16.mxu0 0
  %1459 = vmatpush1.bf16.msra.mxu0 %v1255
  %1460 = vmatprep.subr.bf16.mxu0 0
  %1461 = vmatpush1.bf16.msra.mxu0 %v1258
  %1462 = vmatprep.subr.bf16.mxu0 0
  %1463 = vmatpush1.bf16.msra.mxu0 %v1261
  %1464 = vmatprep.subr.bf16.mxu0 0
  %1465 = vmatpush1.bf16.msra.mxu0 %v1264
  %1466 = vmatprep.subr.bf16.mxu0 0
  %1467 = vmatpush1.bf16.msra.mxu0 %v1267
  %1468 = vmatprep.mubr.bf16.mxu0 %v1315
  %1469 = vmatmul.mubr.bf16.gmra.mrb[0].mxu0 %v1314
  %v1470 = vpop.f32.mrb[0].mxu0
  %v1471 = vadd.f32 %v1277, %v1470
  %v1472 = vpop.f32.mrb[0].mxu0
  %v1473 = vpop.f32.mrb[0].mxu0
  %v1474 = vadd.f32 %v1282, %v1473
  %v1475 = vpop.f32.mrb[0].mxu0
  %1476 = vmatprep.mubr.bf16.mxu0 %v1318
  %1477 = vmatmul.mubr.bf16.gmra.mrb[0].mxu0 %v1317
  %v1478 = vpop.f32.mrb[0].mxu0
  %v1479 = vadd.f32 %v1287, %v1478
  %v1480 = vpop.f32.mrb[0].mxu0
  %v1481 = vpop.f32.mrb[0].mxu0
  %v1482 = vadd.f32 %v1292, %v1481
  %v1483 = vpop.f32.mrb[0].mxu0
  %1484 = vdwg.mxu0
  %1485 = vmatprep.subr.bf16.mxu0 0
  %1486 = vmatpush1.bf16.msra.mxu0 %v1270
  %1487 = vmatprep.subr.bf16.mxu0 0
  %1488 = vmatpush1.bf16.msra.mxu0 %v1273
  %1489 = vmatprep.subr.bf16.mxu0 0
  %1490 = vmatpush1.bf16.msra.mxu0 0
  %1491 = vmatprep.subr.bf16.mxu0 0
  %1492 = vmatpush1.bf16.msra.mxu0 0
  %1493 = vmatprep.subr.bf16.mxu0 0
  %1494 = vmatpush1.bf16.msra.mxu0 0
  %1495 = vmatprep.subr.bf16.mxu0 0
  %1496 = vmatpush1.bf16.msra.mxu0 0
  %1497 = vmatprep.subr.bf16.mxu0 0
  %1498 = vmatpush1.bf16.msra.mxu0 0
  %1499 = vmatprep.subr.bf16.mxu0 0
  %1500 = vmatpush1.bf16.msra.mxu0 0
  %1501 = vmatprep.subr.bf16.mxu0 0
  %1502 = vmatpush1.bf16.msra.mxu0 0
  %1503 = vmatprep.subr.bf16.mxu0 0
  %1504 = vmatpush1.bf16.msra.mxu0 0
  %1505 = vmatprep.subr.bf16.mxu0 0
  %1506 = vmatpush1.bf16.msra.mxu0 0
  %1507 = vmatprep.subr.bf16.mxu0 0
  %1508 = vmatpush1.bf16.msra.mxu0 0
  %1509 = vmatprep.subr.bf16.mxu0 0
  %1510 = vmatpush1.bf16.msra.mxu0 0
  %1511 = vmatprep.subr.bf16.mxu0 0
  %1512 = vmatpush1.bf16.msra.mxu0 0
  %1513 = vmatprep.subr.bf16.mxu0 0
  %1514 = vmatpush1.bf16.msra.mxu0 0
  %1515 = vmatprep.subr.bf16.mxu0 0
  %1516 = vmatpush1.bf16.msra.mxu0 0
  %1517 = vmatprep.mubr.bf16.mxu0 0
  %1518 = vmatmul.mubr.bf16.gmra.mrb[0].mxu0 %v1325
  %v1519 = vpop.f32.mrb[0].mxu0
  %v1520 = vadd.f32 %v1471, %v1519
  %v1521 = vpop.f32.mrb[0].mxu0
  %v1522 = vpop.f32.mrb[0].mxu0
  %v1523 = vadd.f32 %v1474, %v1522
  %v1524 = vpop.f32.mrb[0].mxu0
  %1525 = vmatprep.mubr.bf16.mxu0 0
  %1526 = vmatmul.mubr.bf16.gmra.mrb[0].mxu0 %v1328
  %v1527 = vpop.f32.mrb[0].mxu0
  %v1528 = vadd.f32 %v1479, %v1527
  %v1529 = vpop.f32.mrb[0].mxu0
  %v1530 = vpop.f32.mrb[0].mxu0
  %v1531 = vadd.f32 %v1482, %v1530
  %v1532 = vpop.f32.mrb[0].mxu0
  %1533 = vdwg.mxu0
  %v1534 = vld [vmem:[%s11] sm:$0x7]
  %v1536 = vlaneseq
  %v1537 = vshrl.u32 %v1536, 7
  %v1538 = vsub.s32 0, %v1537
  %v1539 = vrot.slane %v1534, %v1538
  %v1540 = vlaneseq
  %v1541 = vshrl.u32 %v1540, 7
  %v1542 = vsub.s32 1, %v1541
  %v1543 = vrot.slane %v1534, %v1542
  %v1544 = vlaneseq
  %v1545 = vshrl.u32 %v1544, 7
  %v1546 = vsub.s32 2, %v1545
  %v1547 = vrot.slane %v1534, %v1546
  %v1551 = vmul.f32 %v1418, %v1539
  %v1552 = vmul.f32 %v1420, %v1543
  %v1553 = vmul.f32 %v1520, %v1547
  %v1554 = vmul.f32 %v1422, %v1539
  %v1555 = vmul.f32 %v1424, %v1543
  %v1556 = vmul.f32 %v1523, %v1547
  %v1557 = vmul.f32 %v1428, %v1539
  %v1558 = vmul.f32 %v1430, %v1543
  %v1559 = vmul.f32 %v1528, %v1547
  %v1560 = vmul.f32 %v1432, %v1539
  %v1561 = vmul.f32 %v1434, %v1543
  %v1562 = vmul.f32 %v1531, %v1547
  %v1563 = vadd.f32 %v1551, %v1552
  %v1564 = vsel %vm62, %v1553, 0.0
  %v1565 = vadd.f32 %v1563, %v1564
  %1566 = vadd.xlane.f32.xlu0 %v1565
  %v1567 = vpop.xlane.xlu0 %1566
  %v1568 = vadd.f32 %v1554, %v1555
  %v1569 = vsel %vm62, %v1556, 0.0
  %v1570 = vadd.f32 %v1568, %v1569
  %1571 = vadd.xlane.f32.xlu0 %v1570
  %v1572 = vpop.xlane.xlu0 %1571
  %v1573 = vadd.f32 %v1557, %v1558
  %v1574 = vsel %vm62, %v1559, 0.0
  %v1575 = vadd.f32 %v1573, %v1574
  %1576 = vadd.xlane.f32.xlu0 %v1575
  %v1577 = vpop.xlane.xlu0 %1576
  %v1578 = vadd.f32 %v1560, %v1561
  %v1579 = vsel %vm62, %v1562, 0.0
  %v1580 = vadd.f32 %v1578, %v1579
  %1581 = vadd.xlane.f32.xlu0 %v1580
  %v1582 = vpop.xlane.xlu0 %1581
  %v1583 = vmul.f32 %v1567, 0.00390625
  %v1584 = vmul.f32 %v1572, 0.00390625
  %v1585 = vmul.f32 %v1577, 0.00390625
  %v1586 = vmul.f32 %v1582, 0.00390625
  %v1587 = vld [vmem:[%s5] sm:$0xff]
  %v1588 = vld [vmem:[%s6] sm:$0xff]
  %v1590 = vsel %vm584, %v1587, 0
  %1592 = vmatprep.subr.mxu0 0.0
  %1593 = vmatpush1.msra.mxu0 %v1583
  %1594 = vmatprep.subr.mxu0 0.0
  %1595 = vmatpush1.msra.mxu0 %v1584
  %1596 = vmatprep.subr.mxu0 0.0
  %1597 = vmatpush1.msra.mxu0 %v1585
  %1598 = vmatprep.subr.mxu0 0.0
  %1599 = vmatpush1.msra.mxu0 %v1586
  %1600 = vmatprep.subr.mxu0 0.0
  %1601 = vmatpush1.msra.mxu0 0.0
  %1602 = vmatprep.subr.mxu0 0.0
  %1603 = vmatpush1.msra.mxu0 0.0
  %1604 = vmatprep.subr.mxu0 0.0
  %1605 = vmatpush1.msra.mxu0 0.0
  %1606 = vmatprep.subr.mxu0 0.0
  %1607 = vmatpush1.msra.mxu0 0.0
  %1608 = vmatprep.subr.mxu0 0.0
  %1609 = vmatpush1.msra.mxu0 0.0
  %1610 = vmatprep.subr.mxu0 0.0
  %1611 = vmatpush1.msra.mxu0 0.0
  %1612 = vmatprep.subr.mxu0 0.0
  %1613 = vmatpush1.msra.mxu0 0.0
  %1614 = vmatprep.subr.mxu0 0.0
  %1615 = vmatpush1.msra.mxu0 0.0
  %1616 = vmatprep.subr.mxu0 0.0
  %1617 = vmatpush1.msra.mxu0 0.0
  %1618 = vmatprep.subr.mxu0 0.0
  %1619 = vmatpush1.msra.mxu0 0.0
  %1620 = vmatprep.subr.mxu0 0.0
  %1621 = vmatpush1.msra.mxu0 0.0
  %1622 = vmatprep.subr.mxu0 0.0
  %1623 = vmatpush1.msra.mxu0 0.0
  %1624 = vmatprep.subr.mxu0 0.0
  %1625 = vmatpush1.msra.mxu0 0.0
  %1626 = vmatprep.subr.mxu0 0.0
  %1627 = vmatpush1.msra.mxu0 0.0
  %1628 = vmatprep.subr.mxu0 0.0
  %1629 = vmatpush1.msra.mxu0 0.0
  %1630 = vmatprep.subr.mxu0 0.0
  %1631 = vmatpush1.msra.mxu0 0.0
  %1632 = vmatprep.subr.mxu0 0.0
  %1633 = vmatpush1.msra.mxu0 0.0
  %1634 = vmatprep.subr.mxu0 0.0
  %1635 = vmatpush1.msra.mxu0 0.0
  %1636 = vmatprep.subr.mxu0 0.0
  %1637 = vmatpush1.msra.mxu0 0.0
  %1638 = vmatprep.subr.mxu0 0.0
  %1639 = vmatpush1.msra.mxu0 0.0
  %1640 = vmatprep.subr.mxu0 0.0
  %1641 = vmatpush1.msra.mxu0 0.0
  %1642 = vmatprep.subr.mxu0 0.0
  %1643 = vmatpush1.msra.mxu0 0.0
  %1644 = vmatprep.subr.mxu0 0.0
  %1645 = vmatpush1.msra.mxu0 0.0
  %1646 = vmatprep.subr.mxu0 0.0
  %1647 = vmatpush1.msra.mxu0 0.0
  %1648 = vmatprep.subr.mxu0 0.0
  %1649 = vmatpush1.msra.mxu0 0.0
  %1650 = vmatprep.subr.mxu0 0.0
  %1651 = vmatpush1.msra.mxu0 0.0
  %1652 = vmatprep.subr.mxu0 0.0
  %1653 = vmatpush1.msra.mxu0 0.0
  %1654 = vmatprep.subr.mxu0 0.0
  %1655 = vmatpush1.msra.mxu0 0.0
  %1656 = vmatprep.mubr.f32.mxu0 0.0
  %1657 = vmatmul.mubr.f32.gmra.mrb[0].mxu0 %v1590
  %v1658 = vpop.f32.mrb[0].mxu0
  %v1659 = vadd.f32 %v1588, %v1658
  %v1660 = vpop.f32.mrb[0].mxu0
  %1661 = vdwg.mxu0
  %v1662 = vmax.f32 %v1659, 0.0
  %v1663 = vld [vmem:[%s7] sm:$0xff]
  %v1664 = vld [vmem:[%s7 + $0x8] sm:$0xff]
  %v1665 = vld [vmem:[%s7 + $0x10] sm:$0xff]
  %v1666 = vld [vmem:[%s7 + $0x18] sm:$0xff]
  %v1667 = vld [vmem:[%s8] sm:$0xff]
  %v1668 = vld [vmem:[%s8 + $0x8] sm:$0xff]
  %v1669 = vld [vmem:[%s8 + $0x10] sm:$0xff]
  %v1670 = vld [vmem:[%s8 + $0x18] sm:$0xff]
  %vm1671 = vcmask 64512
  %v1673 = vsel %vm1671, %v1663, 0
  %v1676 = vsel %vm1671, %v1664, 0
  %v1679 = vsel %vm1671, %v1665, 0
  %v1682 = vsel %vm1671, %v1666, 0
  %1684 = vmatprep.subr.mxu0 0.0
  %1685 = vmatpush1.msra.mxu0 %v1662
  %1686 = vmatprep.subr.mxu0 0.0
  %1687 = vmatpush1.msra.mxu0 0.0
  %1688 = vmatprep.subr.mxu0 0.0
  %1689 = vmatpush1.msra.mxu0 0.0
  %1690 = vmatprep.subr.mxu0 0.0
  %1691 = vmatpush1.msra.mxu0 0.0
  %1692 = vmatprep.subr.mxu0 0.0
  %1693 = vmatpush1.msra.mxu0 0.0
  %1694 = vmatprep.subr.mxu0 0.0
  %1695 = vmatpush1.msra.mxu0 0.0
  %1696 = vmatprep.subr.mxu0 0.0
  %1697 = vmatpush1.msra.mxu0 0.0
  %1698 = vmatprep.subr.mxu0 0.0
  %1699 = vmatpush1.msra.mxu0 0.0
  %1700 = vmatprep.subr.mxu0 0.0
  %1701 = vmatpush1.msra.mxu0 0.0
  %1702 = vmatprep.subr.mxu0 0.0
  %1703 = vmatpush1.msra.mxu0 0.0
  %1704 = vmatprep.subr.mxu0 0.0
  %1705 = vmatpush1.msra.mxu0 0.0
  %1706 = vmatprep.subr.mxu0 0.0
  %1707 = vmatpush1.msra.mxu0 0.0
  %1708 = vmatprep.subr.mxu0 0.0
  %1709 = vmatpush1.msra.mxu0 0.0
  %1710 = vmatprep.subr.mxu0 0.0
  %1711 = vmatpush1.msra.mxu0 0.0
  %1712 = vmatprep.subr.mxu0 0.0
  %1713 = vmatpush1.msra.mxu0 0.0
  %1714 = vmatprep.subr.mxu0 0.0
  %1715 = vmatpush1.msra.mxu0 0.0
  %1716 = vmatprep.subr.mxu0 0.0
  %1717 = vmatpush1.msra.mxu0 0.0
  %1718 = vmatprep.subr.mxu0 0.0
  %1719 = vmatpush1.msra.mxu0 0.0
  %1720 = vmatprep.subr.mxu0 0.0
  %1721 = vmatpush1.msra.mxu0 0.0
  %1722 = vmatprep.subr.mxu0 0.0
  %1723 = vmatpush1.msra.mxu0 0.0
  %1724 = vmatprep.subr.mxu0 0.0
  %1725 = vmatpush1.msra.mxu0 0.0
  %1726 = vmatprep.subr.mxu0 0.0
  %1727 = vmatpush1.msra.mxu0 0.0
  %1728 = vmatprep.subr.mxu0 0.0
  %1729 = vmatpush1.msra.mxu0 0.0
  %1730 = vmatprep.subr.mxu0 0.0
  %1731 = vmatpush1.msra.mxu0 0.0
  %1732 = vmatprep.subr.mxu0 0.0
  %1733 = vmatpush1.msra.mxu0 0.0
  %1734 = vmatprep.subr.mxu0 0.0
  %1735 = vmatpush1.msra.mxu0 0.0
  %1736 = vmatprep.subr.mxu0 0.0
  %1737 = vmatpush1.msra.mxu0 0.0
  %1738 = vmatprep.subr.mxu0 0.0
  %1739 = vmatpush1.msra.mxu0 0.0
  %1740 = vmatprep.subr.mxu0 0.0
  %1741 = vmatpush1.msra.mxu0 0.0
  %1742 = vmatprep.subr.mxu0 0.0
  %1743 = vmatpush1.msra.mxu0 0.0
  %1744 = vmatprep.subr.mxu0 0.0
  %1745 = vmatpush1.msra.mxu0 0.0
  %1746 = vmatprep.subr.mxu0 0.0
  %1747 = vmatpush1.msra.mxu0 0.0
  %1748 = vmatprep.mubr.f32.mxu0 0.0
  %1749 = vmatmul.mubr.f32.gmra.mrb[0].mxu0 %v1673
  %v1750 = vpop.f32.mrb[0].mxu0
  %v1751 = vadd.f32 %v1667, %v1750
  %v1752 = vpop.f32.mrb[0].mxu0
  %1753 = vmatprep.mubr.f32.mxu0 0.0
  %1754 = vmatmul.mubr.f32.gmra.mrb[0].mxu0 %v1676
  %v1755 = vpop.f32.mrb[0].mxu0
  %v1756 = vadd.f32 %v1668, %v1755
  %v1757 = vpop.f32.mrb[0].mxu0
  %1758 = vmatprep.mubr.f32.mxu0 0.0
  %1759 = vmatmul.mubr.f32.gmra.mrb[0].mxu0 %v1679
  %v1760 = vpop.f32.mrb[0].mxu0
  %v1761 = vadd.f32 %v1669, %v1760
  %v1762 = vpop.f32.mrb[0].mxu0
  %1763 = vmatprep.mubr.f32.mxu0 0.0
  %1764 = vmatmul.mubr.f32.gmra.mrb[0].mxu0 %v1682
  %v1765 = vpop.f32.mrb[0].mxu0
  %v1766 = vadd.f32 %v1670, %v1765
  %v1767 = vpop.f32.mrb[0].mxu0
  %1768 = vdwg.mxu0
  %v1769 = vxor.u32 %v1751, 2147483648
  %v1770 = vxor.u32 %v1756, 2147483648
  %v1771 = vxor.u32 %v1761, 2147483648
  %v1772 = vxor.u32 %v1766, 2147483648
  %v1773 = vmul.f32 %v1769, 1.442695
  %v1774 = vpow.pop %v1773
  %v1775 = vmul.f32 %v1770, 1.442695
  %v1776 = vpow.pop %v1775
  %v1777 = vmul.f32 %v1771, 1.442695
  %v1778 = vpow.pop %v1777
  %v1779 = vmul.f32 %v1772, 1.442695
  %v1780 = vpow.pop %v1779
  %v1781 = vadd.f32 %v1774, 1.0
  %v1782 = vadd.f32 %v1776, 1.0
  %v1783 = vadd.f32 %v1778, 1.0
  %v1784 = vadd.f32 %v1780, 1.0
  %v1785 = vrcp.pop %v1781
  %v1786 = vmul.f32 1.0, %v1785
  %v1787 = vrcp.pop %v1782
  %v1788 = vmul.f32 1.0, %v1787
  %v1789 = vrcp.pop %v1783
  %v1790 = vmul.f32 1.0, %v1789
  %v1791 = vrcp.pop %v1784
  %v1792 = vmul.f32 1.0, %v1791
  %v1793 = vld [vmem:[#allocation4] sm:$0xff]
  %v1794 = vld [vmem:[#allocation4 + $0x8] sm:$0xff]
  %v1795 = vld [vmem:[#allocation4 + $0x10] sm:$0xff]
  %v1796 = vld [vmem:[#allocation4 + $0x18] sm:$0xff]
  %v1797 = vld [vmem:[#allocation4 + $0x20] sm:$0xff]
  %v1798 = vld [vmem:[#allocation4 + $0x28] sm:$0xff]
  %v1799 = vld [vmem:[#allocation4 + $0x30] sm:$0xff]
  %v1800 = vld [vmem:[#allocation4 + $0x38] sm:$0xff]
  %v1801 = vld [vmem:[#allocation4 + $0x40] sm:$0xff]
  %v1802 = vld [vmem:[#allocation4 + $0x48] sm:$0xff]
  %v1803 = vld [vmem:[#allocation4 + $0x50] sm:$0xff]
  %v1804 = vld [vmem:[#allocation4 + $0x58] sm:$0xff]
  %1806 = vset.pattern.permute.xlu0 0
  %1807 = vperm.xlu0 %1806, %v1786
  %v1808 = vpop.permute.xlu0 %1807
  %1811 = vset.pattern.permute.xlu0 0
  %1812 = vperm.xlu0 %1811, %v1788
  %v1813 = vpop.permute.xlu0 %1812
  %1816 = vset.pattern.permute.xlu0 0
  %1817 = vperm.xlu0 %1816, %v1790
  %v1818 = vpop.permute.xlu0 %1817
  %1821 = vset.pattern.permute.xlu0 0
  %1822 = vperm.xlu0 %1821, %v1792
  %v1823 = vpop.permute.xlu0 %1822
  %v1825 = vmul.f32 %v1551, %v1808
  %v1826 = vmul.f32 %v1552, %v1808
  %v1827 = vmul.f32 %v1553, %v1808
  %v1828 = vmul.f32 %v1554, %v1813
  %v1829 = vmul.f32 %v1555, %v1813
  %v1830 = vmul.f32 %v1556, %v1813
  %v1831 = vmul.f32 %v1557, %v1818
  %v1832 = vmul.f32 %v1558, %v1818
  %v1833 = vmul.f32 %v1559, %v1818
  %v1834 = vmul.f32 %v1560, %v1823
  %v1835 = vmul.f32 %v1561, %v1823
  %v1836 = vmul.f32 %v1562, %v1823
  %v1837 = vadd.f32 %v1793, %v1825
  %v1838 = vadd.f32 %v1794, %v1826
  %v1839 = vadd.f32 %v1795, %v1827
  %v1840 = vadd.f32 %v1796, %v1828
  %v1841 = vadd.f32 %v1797, %v1829
  %v1842 = vadd.f32 %v1798, %v1830
  %v1843 = vadd.f32 %v1799, %v1831
  %v1844 = vadd.f32 %v1800, %v1832
  %v1845 = vadd.f32 %v1801, %v1833
  %v1846 = vadd.f32 %v1802, %v1834
  %v1847 = vadd.f32 %v1803, %v1835
  %v1848 = vadd.f32 %v1804, %v1836
  %1849 = vst [vmem:[#allocation4] sm:$0xff] %v1837
  %1850 = vst [vmem:[#allocation4 + $0x8] sm:$0xff] %v1838
  %1851 = vst.msk [vmem:[#allocation4 + $0x10] sm:$0xff] %vm62, %v1839
  %1852 = vst [vmem:[#allocation4 + $0x18] sm:$0xff] %v1840
  %1853 = vst [vmem:[#allocation4 + $0x20] sm:$0xff] %v1841
  %1854 = vst.msk [vmem:[#allocation4 + $0x28] sm:$0xff] %vm62, %v1842
  %1855 = vst [vmem:[#allocation4 + $0x30] sm:$0xff] %v1843
  %1856 = vst [vmem:[#allocation4 + $0x38] sm:$0xff] %v1844
  %1857 = vst.msk [vmem:[#allocation4 + $0x40] sm:$0xff] %vm62, %v1845
  %1858 = vst [vmem:[#allocation4 + $0x48] sm:$0xff] %v1846
  %1859 = vst [vmem:[#allocation4 + $0x50] sm:$0xff] %v1847
  %1860 = vst.msk [vmem:[#allocation4 + $0x58] sm:$0xff] %vm62, %v1848
  %v1861 = vld [vmem:[#allocation4] sm:$0xff]
  %v1862 = vld [vmem:[#allocation4 + $0x8] sm:$0xff]
  %v1863 = vld [vmem:[#allocation4 + $0x10] sm:$0xff]
  %v1864 = vld [vmem:[#allocation4 + $0x18] sm:$0xff]
  %v1865 = vld [vmem:[#allocation4 + $0x20] sm:$0xff]
  %v1866 = vld [vmem:[#allocation4 + $0x28] sm:$0xff]
  %v1867 = vld [vmem:[#allocation4 + $0x30] sm:$0xff]
  %v1868 = vld [vmem:[#allocation4 + $0x38] sm:$0xff]
  %v1869 = vld [vmem:[#allocation4 + $0x40] sm:$0xff]
  %v1870 = vld [vmem:[#allocation4 + $0x48] sm:$0xff]
  %v1871 = vld [vmem:[#allocation4 + $0x50] sm:$0xff]
  %v1872 = vld [vmem:[#allocation4 + $0x58] sm:$0xff]
  %s1873 = scalar_lea.vmem %s1, 48
  %v1874 = vld [vmem:[%s1873] sm:$0xff]
  %v1875 = vld [vmem:[%s1873 + $0x8] sm:$0xf]
  %v1876 = vld [vmem:[%s1873 + $0xc] sm:$0xff]
  %v1877 = vld [vmem:[%s1873 + $0x14] sm:$0xf]
  %v1878 = vld [vmem:[%s1873 + $0x18] sm:$0xff]
  %v1879 = vld [vmem:[%s1873 + $0x20] sm:$0xf]
  %v1880 = vld [vmem:[%s1873 + $0x24] sm:$0xff]
  %v1881 = vld [vmem:[%s1873 + $0x2c] sm:$0xf]
  %s1882 = scalar_lea.vmem %s2, 32
  %v1883 = vld [vmem:[%s1882] sm:$0xff]
  %v1884 = vld [vmem:[%s1882 + $0x8] sm:$0xff]
  %v1885 = vld [vmem:[%s1882 + $0x10] sm:$0xff]
  %v1886 = vld [vmem:[%s1882 + $0x18] sm:$0xff]
  %v1887 = vpack.c.bf16 %v1864, %v1861
  %v1888 = vpack.c.bf16 %v1865, %v1862
  %v1889 = vpack.c.bf16 %v1866, %v1863
  %v1890 = vpack.c.bf16 %v1870, %v1867
  %v1891 = vpack.c.bf16 %v1871, %v1868
  %v1892 = vpack.c.bf16 %v1872, %v1869
  %1899 = vrot.lane.b32.xlu0 %v1887, 19
  %v1900 = vpop.permute.xlu0 %1899
  %1901 = vrot.lane.b32.xlu0 %v1888, 19
  %v1902 = vpop.permute.xlu0 %1901
  %1903 = vrot.lane.b32.xlu0 %v1889, 19
  %v1904 = vpop.permute.xlu0 %1903
  %1905 = vrot.lane.b32.xlu0 %v1890, 19
  %v1906 = vpop.permute.xlu0 %1905
  %1907 = vrot.lane.b32.xlu0 %v1891, 19
  %v1908 = vpop.permute.xlu0 %1907
  %1909 = vrot.lane.b32.xlu0 %v1892, 19
  %v1910 = vpop.permute.xlu0 %1909
  %v1911 = vsel %vm121, %v1900, %v1902
  %v1912 = vsel %vm121, %v1902, %v1904
  %v1913 = vsel %vm121, %v1906, %v1908
  %v1914 = vsel %vm121, %v1908, %v1910
  %1921 = vst.msk [vmem:[#allocation2] sm:$0xff] %vm132, %v1900
  %1922 = vst [vmem:[#allocation2 + $0x8] sm:$0xff] %v1911
  %1923 = vst.msk [vmem:[#allocation2 + $0x10] sm:$0xff] %vm135, %v1912
  %1924 = vst.msk [vmem:[#allocation2 + $0x18] sm:$0xff] %vm132, %v1906
  %1925 = vst [vmem:[#allocation2 + $0x20] sm:$0xff] %v1913
  %1926 = vst.msk [vmem:[#allocation2 + $0x28] sm:$0xff] %vm135, %v1914
  %v1927 = vld [vmem:[#allocation2] sm:$0xff]
  %v1928 = vld [vmem:[#allocation2 + $0x8] sm:$0xff]
  %v1929 = vld [vmem:[#allocation2 + $0x10] sm:$0xff]
  %v1930 = vld [vmem:[#allocation2 + $0x18] sm:$0xff]
  %v1931 = vld [vmem:[#allocation2 + $0x20] sm:$0xff]
  %v1932 = vld [vmem:[#allocation2 + $0x28] sm:$0xff]
  %1933 = vst [vmem:[#allocation3] sm:$0xff] %v1927
  %1934 = vst [vmem:[#allocation3 + $0x8] sm:$0xff] %v1928
  %1935 = vst.msk [vmem:[#allocation3 + $0x10] sm:$0xff] %vm62, %v1929
  %1936 = vst [vmem:[#allocation3 + $0x18] sm:$0xff] %v1930
  %1937 = vst [vmem:[#allocation3 + $0x20] sm:$0xff] %v1931
  %1938 = vst.msk [vmem:[#allocation3 + $0x28] sm:$0xff] %vm62, %v1932
  %v1939 = vld [vmem:[#allocation2] sm:$0xff]
  %v1940 = vld [vmem:[#allocation2 + $0x8] sm:$0xff]
  %v1941 = vld [vmem:[#allocation2 + $0x10] sm:$0xff]
  %v1942 = vld [vmem:[#allocation2 + $0x18] sm:$0xff]
  %v1943 = vld [vmem:[#allocation2 + $0x20] sm:$0xff]
  %v1944 = vld [vmem:[#allocation2 + $0x28] sm:$0xff]
  %1951 = vrot.lane.b32.xlu0 %v1939, 127
  %v1952 = vpop.permute.xlu0 %1951
  %1953 = vrot.lane.b32.xlu0 %v1940, 127
  %v1954 = vpop.permute.xlu0 %1953
  %1955 = vrot.lane.b32.xlu0 %v1941, 127
  %v1956 = vpop.permute.xlu0 %1955
  %1957 = vrot.lane.b32.xlu0 %v1942, 127
  %v1958 = vpop.permute.xlu0 %1957
  %1959 = vrot.lane.b32.xlu0 %v1943, 127
  %v1960 = vpop.permute.xlu0 %1959
  %1961 = vrot.lane.b32.xlu0 %v1944, 127
  %v1962 = vpop.permute.xlu0 %1961
  %v1963 = vsel %vm176, %v1952, %v1954
  %v1964 = vsel %vm176, %v1954, %v1956
  %v1965 = vsel %vm176, %v1958, %v1960
  %v1966 = vsel %vm176, %v1960, %v1962
  %1973 = vst [vmem:[#allocation3 + $0x30] sm:$0xff] %v1963
  %1974 = vst [vmem:[#allocation3 + $0x38] sm:$0xff] %v1964
  %1975 = vst.msk [vmem:[#allocation3 + $0x40] sm:$0xff] %vm62, %v1956
  %1976 = vst [vmem:[#allocation3 + $0x48] sm:$0xff] %v1965
  %1977 = vst [vmem:[#allocation3 + $0x50] sm:$0xff] %v1966
  %1978 = vst.msk [vmem:[#allocation3 + $0x58] sm:$0xff] %vm62, %v1962
  %v1979 = vld [vmem:[#allocation2] sm:$0xff]
  %v1980 = vld [vmem:[#allocation2 + $0x8] sm:$0xff]
  %v1981 = vld [vmem:[#allocation2 + $0x10] sm:$0xff]
  %v1982 = vld [vmem:[#allocation2 + $0x18] sm:$0xff]
  %v1983 = vld [vmem:[#allocation2 + $0x20] sm:$0xff]
  %v1984 = vld [vmem:[#allocation2 + $0x28] sm:$0xff]
  %1991 = vrot.lane.b32.xlu0 %v1979, 126
  %v1992 = vpop.permute.xlu0 %1991
  %1993 = vrot.lane.b32.xlu0 %v1980, 126
  %v1994 = vpop.permute.xlu0 %1993
  %1995 = vrot.lane.b32.xlu0 %v1981, 126
  %v1996 = vpop.permute.xlu0 %1995
  %1997 = vrot.lane.b32.xlu0 %v1982, 126
  %v1998 = vpop.permute.xlu0 %1997
  %1999 = vrot.lane.b32.xlu0 %v1983, 126
  %v2000 = vpop.permute.xlu0 %1999
  %2001 = vrot.lane.b32.xlu0 %v1984, 126
  %v2002 = vpop.permute.xlu0 %2001
  %v2003 = vsel %vm217, %v1992, %v1994
  %v2004 = vsel %vm217, %v1994, %v1996
  %v2005 = vsel %vm217, %v1998, %v2000
  %v2006 = vsel %vm217, %v2000, %v2002
  %2013 = vst [vmem:[#allocation3 + $0x60] sm:$0xff] %v2003
  %2014 = vst [vmem:[#allocation3 + $0x68] sm:$0xff] %v2004
  %2015 = vst.msk [vmem:[#allocation3 + $0x70] sm:$0xff] %vm62, %v1996
  %2016 = vst [vmem:[#allocation3 + $0x78] sm:$0xff] %v2005
  %2017 = vst [vmem:[#allocation3 + $0x80] sm:$0xff] %v2006
  %2018 = vst.msk [vmem:[#allocation3 + $0x88] sm:$0xff] %vm62, %v2002
  %v2019 = vld [vmem:[#allocation2] sm:$0xff]
  %v2020 = vld [vmem:[#allocation2 + $0x8] sm:$0xff]
  %v2021 = vld [vmem:[#allocation2 + $0x10] sm:$0xff]
  %v2022 = vld [vmem:[#allocation2 + $0x18] sm:$0xff]
  %v2023 = vld [vmem:[#allocation2 + $0x20] sm:$0xff]
  %v2024 = vld [vmem:[#allocation2 + $0x28] sm:$0xff]
  %2031 = vrot.lane.b32.xlu0 %v2019, 110
  %v2032 = vpop.permute.xlu0 %2031
  %2033 = vrot.lane.b32.xlu0 %v2020, 110
  %v2034 = vpop.permute.xlu0 %2033
  %2035 = vrot.lane.b32.xlu0 %v2021, 110
  %v2036 = vpop.permute.xlu0 %2035
  %2037 = vrot.lane.b32.xlu0 %v2022, 110
  %v2038 = vpop.permute.xlu0 %2037
  %2039 = vrot.lane.b32.xlu0 %v2023, 110
  %v2040 = vpop.permute.xlu0 %2039
  %2041 = vrot.lane.b32.xlu0 %v2024, 110
  %v2042 = vpop.permute.xlu0 %2041
  %v2043 = vsel %vm258, %v2032, %v2034
  %v2044 = vsel %vm258, %v2034, %v2036
  %v2045 = vsel %vm258, %v2038, %v2040
  %v2046 = vsel %vm258, %v2040, %v2042
  %2053 = vst [vmem:[#allocation3 + $0x90] sm:$0xff] %v2043
  %2054 = vst [vmem:[#allocation3 + $0x98] sm:$0xff] %v2044
  %2055 = vst.msk [vmem:[#allocation3 + $0xa0] sm:$0xff] %vm62, %v2036
  %2056 = vst [vmem:[#allocation3 + $0xa8] sm:$0xff] %v2045
  %2057 = vst [vmem:[#allocation3 + $0xb0] sm:$0xff] %v2046
  %2058 = vst.msk [vmem:[#allocation3 + $0xb8] sm:$0xff] %vm62, %v2042
  %v2059 = vld [vmem:[#allocation2] sm:$0xff]
  %v2060 = vld [vmem:[#allocation2 + $0x8] sm:$0xff]
  %v2061 = vld [vmem:[#allocation2 + $0x10] sm:$0xff]
  %v2062 = vld [vmem:[#allocation2 + $0x18] sm:$0xff]
  %v2063 = vld [vmem:[#allocation2 + $0x20] sm:$0xff]
  %v2064 = vld [vmem:[#allocation2 + $0x28] sm:$0xff]
  %2071 = vrot.lane.b32.xlu0 %v2059, 109
  %v2072 = vpop.permute.xlu0 %2071
  %2073 = vrot.lane.b32.xlu0 %v2060, 109
  %v2074 = vpop.permute.xlu0 %2073
  %2075 = vrot.lane.b32.xlu0 %v2061, 109
  %v2076 = vpop.permute.xlu0 %2075
  %2077 = vrot.lane.b32.xlu0 %v2062, 109
  %v2078 = vpop.permute.xlu0 %2077
  %2079 = vrot.lane.b32.xlu0 %v2063, 109
  %v2080 = vpop.permute.xlu0 %2079
  %2081 = vrot.lane.b32.xlu0 %v2064, 109
  %v2082 = vpop.permute.xlu0 %2081
  %v2083 = vsel %vm299, %v2072, %v2074
  %v2084 = vsel %vm299, %v2074, %v2076
  %v2085 = vsel %vm299, %v2078, %v2080
  %v2086 = vsel %vm299, %v2080, %v2082
  %2093 = vst [vmem:[#allocation3 + $0xc0] sm:$0xff] %v2083
  %2094 = vst [vmem:[#allocation3 + $0xc8] sm:$0xff] %v2084
  %2095 = vst.msk [vmem:[#allocation3 + $0xd0] sm:$0xff] %vm62, %v2076
  %2096 = vst [vmem:[#allocation3 + $0xd8] sm:$0xff] %v2085
  %2097 = vst [vmem:[#allocation3 + $0xe0] sm:$0xff] %v2086
  %2098 = vst.msk [vmem:[#allocation3 + $0xe8] sm:$0xff] %vm62, %v2082
  %v2099 = vld [vmem:[#allocation2] sm:$0xff]
  %v2100 = vld [vmem:[#allocation2 + $0x8] sm:$0xff]
  %v2101 = vld [vmem:[#allocation2 + $0x10] sm:$0xff]
  %v2102 = vld [vmem:[#allocation2 + $0x18] sm:$0xff]
  %v2103 = vld [vmem:[#allocation2 + $0x20] sm:$0xff]
  %v2104 = vld [vmem:[#allocation2 + $0x28] sm:$0xff]
  %2111 = vrot.lane.b32.xlu0 %v2099, 108
  %v2112 = vpop.permute.xlu0 %2111
  %2113 = vrot.lane.b32.xlu0 %v2100, 108
  %v2114 = vpop.permute.xlu0 %2113
  %2115 = vrot.lane.b32.xlu0 %v2101, 108
  %v2116 = vpop.permute.xlu0 %2115
  %2117 = vrot.lane.b32.xlu0 %v2102, 108
  %v2118 = vpop.permute.xlu0 %2117
  %2119 = vrot.lane.b32.xlu0 %v2103, 108
  %v2120 = vpop.permute.xlu0 %2119
  %2121 = vrot.lane.b32.xlu0 %v2104, 108
  %v2122 = vpop.permute.xlu0 %2121
  %v2123 = vsel %vm340, %v2112, %v2114
  %v2124 = vsel %vm340, %v2114, %v2116
  %v2125 = vsel %vm340, %v2118, %v2120
  %v2126 = vsel %vm340, %v2120, %v2122
  %2133 = vst [vmem:[#allocation3 + $0xf0] sm:$0xff] %v2123
  %2134 = vst [vmem:[#allocation3 + $0xf8] sm:$0xff] %v2124
  %2135 = vst.msk [vmem:[#allocation3 + $0x100] sm:$0xff] %vm62, %v2116
  %2136 = vst [vmem:[#allocation3 + $0x108] sm:$0xff] %v2125
  %2137 = vst [vmem:[#allocation3 + $0x110] sm:$0xff] %v2126
  %2138 = vst.msk [vmem:[#allocation3 + $0x118] sm:$0xff] %vm62, %v2122
  %v2139 = vld [vmem:[#allocation2] sm:$0xff]
  %v2140 = vld [vmem:[#allocation2 + $0x8] sm:$0xff]
  %v2141 = vld [vmem:[#allocation2 + $0x10] sm:$0xff]
  %v2142 = vld [vmem:[#allocation2 + $0x18] sm:$0xff]
  %v2143 = vld [vmem:[#allocation2 + $0x20] sm:$0xff]
  %v2144 = vld [vmem:[#allocation2 + $0x28] sm:$0xff]
  %2151 = vrot.lane.b32.xlu0 %v2139, 92
  %v2152 = vpop.permute.xlu0 %2151
  %2153 = vrot.lane.b32.xlu0 %v2140, 92
  %v2154 = vpop.permute.xlu0 %2153
  %2155 = vrot.lane.b32.xlu0 %v2141, 92
  %v2156 = vpop.permute.xlu0 %2155
  %2157 = vrot.lane.b32.xlu0 %v2142, 92
  %v2158 = vpop.permute.xlu0 %2157
  %2159 = vrot.lane.b32.xlu0 %v2143, 92
  %v2160 = vpop.permute.xlu0 %2159
  %2161 = vrot.lane.b32.xlu0 %v2144, 92
  %v2162 = vpop.permute.xlu0 %2161
  %v2163 = vsel %vm381, %v2152, %v2154
  %v2164 = vsel %vm381, %v2154, %v2156
  %v2165 = vsel %vm381, %v2158, %v2160
  %v2166 = vsel %vm381, %v2160, %v2162
  %2173 = vst [vmem:[#allocation3 + $0x120] sm:$0xff] %v2163
  %2174 = vst [vmem:[#allocation3 + $0x128] sm:$0xff] %v2164
  %2175 = vst.msk [vmem:[#allocation3 + $0x130] sm:$0xff] %vm62, %v2156
  %2176 = vst [vmem:[#allocation3 + $0x138] sm:$0xff] %v2165
  %2177 = vst [vmem:[#allocation3 + $0x140] sm:$0xff] %v2166
  %2178 = vst.msk [vmem:[#allocation3 + $0x148] sm:$0xff] %vm62, %v2162
  %v2179 = vld [vmem:[#allocation2] sm:$0xff]
  %v2180 = vld [vmem:[#allocation2 + $0x8] sm:$0xff]
  %v2181 = vld [vmem:[#allocation2 + $0x10] sm:$0xff]
  %v2182 = vld [vmem:[#allocation2 + $0x18] sm:$0xff]
  %v2183 = vld [vmem:[#allocation2 + $0x20] sm:$0xff]
  %v2184 = vld [vmem:[#allocation2 + $0x28] sm:$0xff]
  %2191 = vrot.lane.b32.xlu0 %v2179, 91
  %v2192 = vpop.permute.xlu0 %2191
  %2193 = vrot.lane.b32.xlu0 %v2180, 91
  %v2194 = vpop.permute.xlu0 %2193
  %2195 = vrot.lane.b32.xlu0 %v2181, 91
  %v2196 = vpop.permute.xlu0 %2195
  %2197 = vrot.lane.b32.xlu0 %v2182, 91
  %v2198 = vpop.permute.xlu0 %2197
  %2199 = vrot.lane.b32.xlu0 %v2183, 91
  %v2200 = vpop.permute.xlu0 %2199
  %2201 = vrot.lane.b32.xlu0 %v2184, 91
  %v2202 = vpop.permute.xlu0 %2201
  %v2203 = vsel %vm422, %v2192, %v2194
  %v2204 = vsel %vm422, %v2194, %v2196
  %v2205 = vsel %vm422, %v2198, %v2200
  %v2206 = vsel %vm422, %v2200, %v2202
  %2213 = vst [vmem:[#allocation3 + $0x150] sm:$0xff] %v2203
  %2214 = vst [vmem:[#allocation3 + $0x158] sm:$0xff] %v2204
  %2215 = vst.msk [vmem:[#allocation3 + $0x160] sm:$0xff] %vm62, %v2196
  %2216 = vst [vmem:[#allocation3 + $0x168] sm:$0xff] %v2205
  %2217 = vst [vmem:[#allocation3 + $0x170] sm:$0xff] %v2206
  %2218 = vst.msk [vmem:[#allocation3 + $0x178] sm:$0xff] %vm62, %v2202
  %v2219 = vld [vmem:[#allocation2] sm:$0xff]
  %v2220 = vld [vmem:[#allocation2 + $0x8] sm:$0xff]
  %v2221 = vld [vmem:[#allocation2 + $0x10] sm:$0xff]
  %v2222 = vld [vmem:[#allocation2 + $0x18] sm:$0xff]
  %v2223 = vld [vmem:[#allocation2 + $0x20] sm:$0xff]
  %v2224 = vld [vmem:[#allocation2 + $0x28] sm:$0xff]
  %2231 = vrot.lane.b32.xlu0 %v2219, 90
  %v2232 = vpop.permute.xlu0 %2231
  %2233 = vrot.lane.b32.xlu0 %v2220, 90
  %v2234 = vpop.permute.xlu0 %2233
  %2235 = vrot.lane.b32.xlu0 %v2221, 90
  %v2236 = vpop.permute.xlu0 %2235
  %2237 = vrot.lane.b32.xlu0 %v2222, 90
  %v2238 = vpop.permute.xlu0 %2237
  %2239 = vrot.lane.b32.xlu0 %v2223, 90
  %v2240 = vpop.permute.xlu0 %2239
  %2241 = vrot.lane.b32.xlu0 %v2224, 90
  %v2242 = vpop.permute.xlu0 %2241
  %v2243 = vsel %vm463, %v2232, %v2234
  %v2244 = vsel %vm463, %v2234, %v2236
  %v2245 = vsel %vm463, %v2238, %v2240
  %v2246 = vsel %vm463, %v2240, %v2242
  %2253 = vst [vmem:[#allocation3 + $0x180] sm:$0xff] %v2243
  %2254 = vst [vmem:[#allocation3 + $0x188] sm:$0xff] %v2244
  %2255 = vst.msk [vmem:[#allocation3 + $0x190] sm:$0xff] %vm62, %v2236
  %2256 = vst [vmem:[#allocation3 + $0x198] sm:$0xff] %v2245
  %2257 = vst [vmem:[#allocation3 + $0x1a0] sm:$0xff] %v2246
  %2258 = vst.msk [vmem:[#allocation3 + $0x1a8] sm:$0xff] %vm62, %v2242
  %v2259 = vld [vmem:[#allocation3] sm:$0xff]
  %v2260 = vld [vmem:[#allocation3 + $0x8] sm:$0xff]
  %v2261 = vld [vmem:[#allocation3 + $0x10] sm:$0xff]
  %v2262 = vld [vmem:[#allocation3 + $0x18] sm:$0xff]
  %v2263 = vld [vmem:[#allocation3 + $0x20] sm:$0xff]
  %v2264 = vld [vmem:[#allocation3 + $0x28] sm:$0xff]
  %v2265 = vld [vmem:[#allocation3 + $0x30] sm:$0xff]
  %v2266 = vld [vmem:[#allocation3 + $0x38] sm:$0xff]
  %v2267 = vld [vmem:[#allocation3 + $0x40] sm:$0xff]
  %v2268 = vld [vmem:[#allocation3 + $0x48] sm:$0xff]
  %v2269 = vld [vmem:[#allocation3 + $0x50] sm:$0xff]
  %v2270 = vld [vmem:[#allocation3 + $0x58] sm:$0xff]
  %v2271 = vld [vmem:[#allocation3 + $0x60] sm:$0xff]
  %v2272 = vld [vmem:[#allocation3 + $0x68] sm:$0xff]
  %v2273 = vld [vmem:[#allocation3 + $0x70] sm:$0xff]
  %v2274 = vld [vmem:[#allocation3 + $0x78] sm:$0xff]
  %v2275 = vld [vmem:[#allocation3 + $0x80] sm:$0xff]
  %v2276 = vld [vmem:[#allocation3 + $0x88] sm:$0xff]
  %v2277 = vld [vmem:[#allocation3 + $0x90] sm:$0xff]
  %v2278 = vld [vmem:[#allocation3 + $0x98] sm:$0xff]
  %v2279 = vld [vmem:[#allocation3 + $0xa0] sm:$0xff]
  %v2280 = vld [vmem:[#allocation3 + $0xa8] sm:$0xff]
  %v2281 = vld [vmem:[#allocation3 + $0xb0] sm:$0xff]
  %v2282 = vld [vmem:[#allocation3 + $0xb8] sm:$0xff]
  %v2283 = vld [vmem:[#allocation3 + $0xc0] sm:$0xff]
  %v2284 = vld [vmem:[#allocation3 + $0xc8] sm:$0xff]
  %v2285 = vld [vmem:[#allocation3 + $0xd0] sm:$0xff]
  %v2286 = vld [vmem:[#allocation3 + $0xd8] sm:$0xff]
  %v2287 = vld [vmem:[#allocation3 + $0xe0] sm:$0xff]
  %v2288 = vld [vmem:[#allocation3 + $0xe8] sm:$0xff]
  %v2289 = vld [vmem:[#allocation3 + $0xf0] sm:$0xff]
  %v2290 = vld [vmem:[#allocation3 + $0xf8] sm:$0xff]
  %v2291 = vld [vmem:[#allocation3 + $0x100] sm:$0xff]
  %v2292 = vld [vmem:[#allocation3 + $0x108] sm:$0xff]
  %v2293 = vld [vmem:[#allocation3 + $0x110] sm:$0xff]
  %v2294 = vld [vmem:[#allocation3 + $0x118] sm:$0xff]
  %v2295 = vld [vmem:[#allocation3 + $0x120] sm:$0xff]
  %v2296 = vld [vmem:[#allocation3 + $0x128] sm:$0xff]
  %v2297 = vld [vmem:[#allocation3 + $0x130] sm:$0xff]
  %v2298 = vld [vmem:[#allocation3 + $0x138] sm:$0xff]
  %v2299 = vld [vmem:[#allocation3 + $0x140] sm:$0xff]
  %v2300 = vld [vmem:[#allocation3 + $0x148] sm:$0xff]
  %v2301 = vld [vmem:[#allocation3 + $0x150] sm:$0xff]
  %v2302 = vld [vmem:[#allocation3 + $0x158] sm:$0xff]
  %v2303 = vld [vmem:[#allocation3 + $0x160] sm:$0xff]
  %v2304 = vld [vmem:[#allocation3 + $0x168] sm:$0xff]
  %v2305 = vld [vmem:[#allocation3 + $0x170] sm:$0xff]
  %v2306 = vld [vmem:[#allocation3 + $0x178] sm:$0xff]
  %v2307 = vld [vmem:[#allocation3 + $0x180] sm:$0xff]
  %v2308 = vld [vmem:[#allocation3 + $0x188] sm:$0xff]
  %v2309 = vld [vmem:[#allocation3 + $0x190] sm:$0xff]
  %v2310 = vld [vmem:[#allocation3 + $0x198] sm:$0xff]
  %v2311 = vld [vmem:[#allocation3 + $0x1a0] sm:$0xff]
  %v2312 = vld [vmem:[#allocation3 + $0x1a8] sm:$0xff]
  %2314 = vset.pattern.permute.xlu0 0
  %2315 = vperm.xlu0 %2314, %v1883
  %v2316 = vpop.permute.xlu0 %2315
  %2319 = vset.pattern.permute.xlu0 0
  %2320 = vperm.xlu0 %2319, %v1884
  %v2321 = vpop.permute.xlu0 %2320
  %2324 = vset.pattern.permute.xlu0 0
  %2325 = vperm.xlu0 %2324, %v1885
  %v2326 = vpop.permute.xlu0 %2325
  %2329 = vset.pattern.permute.xlu0 0
  %2330 = vperm.xlu0 %2329, %v1886
  %v2331 = vpop.permute.xlu0 %2330
  %v2341 = vunpack.c.l.b16 %v1874
  %v2342 = vunpack.c.h.b16 %v1874
  %v2343 = vunpack.c.l.b16 %v1875
  %v2344 = vunpack.c.l.b16 %v1876
  %v2345 = vunpack.c.h.b16 %v1876
  %v2346 = vunpack.c.l.b16 %v1877
  %v2347 = vunpack.c.l.b16 %v1878
  %v2348 = vunpack.c.h.b16 %v1878
  %v2349 = vunpack.c.l.b16 %v1879
  %v2350 = vunpack.c.l.b16 %v1880
  %v2351 = vunpack.c.h.b16 %v1880
  %v2352 = vunpack.c.l.b16 %v1881
  %v2353 = vpack.c.b16 %v2344, %v2341
  %v2354 = vpack.c.b16 %v2345, %v2342
  %v2355 = vpack.c.b16 %v2346, %v2343
  %v2356 = vpack.c.b16 %v2350, %v2347
  %v2357 = vpack.c.b16 %v2351, %v2348
  %v2358 = vpack.c.b16 %v2352, %v2349
  %v2364 = vsel %vm584, %v2355, 0
  %v2367 = vsel %vm584, %v2358, 0
  %2369 = vmatprep.subr.bf16.mxu0 %v2260
  %2370 = vmatpush1.bf16.msra.mxu0 %v2259
  %2371 = vmatprep.subr.bf16.mxu0 %v2263
  %2372 = vmatpush1.bf16.msra.mxu0 %v2262
  %2373 = vmatprep.subr.bf16.mxu0 %v2266
  %2374 = vmatpush1.bf16.msra.mxu0 %v2265
  %2375 = vmatprep.subr.bf16.mxu0 %v2269
  %2376 = vmatpush1.bf16.msra.mxu0 %v2268
  %2377 = vmatprep.subr.bf16.mxu0 %v2272
  %2378 = vmatpush1.bf16.msra.mxu0 %v2271
  %2379 = vmatprep.subr.bf16.mxu0 %v2275
  %2380 = vmatpush1.bf16.msra.mxu0 %v2274
  %2381 = vmatprep.subr.bf16.mxu0 %v2278
  %2382 = vmatpush1.bf16.msra.mxu0 %v2277
  %2383 = vmatprep.subr.bf16.mxu0 %v2281
  %2384 = vmatpush1.bf16.msra.mxu0 %v2280
  %2385 = vmatprep.subr.bf16.mxu0 %v2284
  %2386 = vmatpush1.bf16.msra.mxu0 %v2283
  %2387 = vmatprep.subr.bf16.mxu0 %v2287
  %2388 = vmatpush1.bf16.msra.mxu0 %v2286
  %2389 = vmatprep.subr.bf16.mxu0 %v2290
  %2390 = vmatpush1.bf16.msra.mxu0 %v2289
  %2391 = vmatprep.subr.bf16.mxu0 %v2293
  %2392 = vmatpush1.bf16.msra.mxu0 %v2292
  %2393 = vmatprep.subr.bf16.mxu0 %v2296
  %2394 = vmatpush1.bf16.msra.mxu0 %v2295
  %2395 = vmatprep.subr.bf16.mxu0 %v2299
  %2396 = vmatpush1.bf16.msra.mxu0 %v2298
  %2397 = vmatprep.subr.bf16.mxu0 %v2302
  %2398 = vmatpush1.bf16.msra.mxu0 %v2301
  %2399 = vmatprep.subr.bf16.mxu0 %v2305
  %2400 = vmatpush1.bf16.msra.mxu0 %v2304
  %2401 = vmatprep.mubr.bf16.mxu0 %v2354
  %2402 = vmatmul.mubr.bf16.gmra.mrb[0].mxu0 %v2353
  %v2403 = vpop.f32.mrb[0].mxu0
  %v2404 = vadd.f32 %v2316, %v2403
  %v2405 = vpop.f32.mrb[0].mxu0
  %v2406 = vadd.f32 %v2316, %v2405
  %v2407 = vpop.f32.mrb[0].mxu0
  %v2408 = vadd.f32 %v2321, %v2407
  %v2409 = vpop.f32.mrb[0].mxu0
  %v2410 = vadd.f32 %v2321, %v2409
  %2411 = vmatprep.mubr.bf16.mxu0 %v2357
  %2412 = vmatmul.mubr.bf16.gmra.mrb[0].mxu0 %v2356
  %v2413 = vpop.f32.mrb[0].mxu0
  %v2414 = vadd.f32 %v2326, %v2413
  %v2415 = vpop.f32.mrb[0].mxu0
  %v2416 = vadd.f32 %v2326, %v2415
  %v2417 = vpop.f32.mrb[0].mxu0
  %v2418 = vadd.f32 %v2331, %v2417
  %v2419 = vpop.f32.mrb[0].mxu0
  %v2420 = vadd.f32 %v2331, %v2419
  %2421 = vdwg.mxu0
  %2422 = vmatprep.subr.bf16.mxu0 %v2308
  %2423 = vmatpush1.bf16.msra.mxu0 %v2307
  %2424 = vmatprep.subr.bf16.mxu0 %v2311
  %2425 = vmatpush1.bf16.msra.mxu0 %v2310
  %2426 = vmatprep.subr.bf16.mxu0 0
  %2427 = vmatpush1.bf16.msra.mxu0 0
  %2428 = vmatprep.subr.bf16.mxu0 0
  %2429 = vmatpush1.bf16.msra.mxu0 0
  %2430 = vmatprep.subr.bf16.mxu0 0
  %2431 = vmatpush1.bf16.msra.mxu0 0
  %2432 = vmatprep.subr.bf16.mxu0 0
  %2433 = vmatpush1.bf16.msra.mxu0 0
  %2434 = vmatprep.subr.bf16.mxu0 0
  %2435 = vmatpush1.bf16.msra.mxu0 0
  %2436 = vmatprep.subr.bf16.mxu0 0
  %2437 = vmatpush1.bf16.msra.mxu0 0
  %2438 = vmatprep.subr.bf16.mxu0 0
  %2439 = vmatpush1.bf16.msra.mxu0 0
  %2440 = vmatprep.subr.bf16.mxu0 0
  %2441 = vmatpush1.bf16.msra.mxu0 0
  %2442 = vmatprep.subr.bf16.mxu0 0
  %2443 = vmatpush1.bf16.msra.mxu0 0
  %2444 = vmatprep.subr.bf16.mxu0 0
  %2445 = vmatpush1.bf16.msra.mxu0 0
  %2446 = vmatprep.subr.bf16.mxu0 0
  %2447 = vmatpush1.bf16.msra.mxu0 0
  %2448 = vmatprep.subr.bf16.mxu0 0
  %2449 = vmatpush1.bf16.msra.mxu0 0
  %2450 = vmatprep.subr.bf16.mxu0 0
  %2451 = vmatpush1.bf16.msra.mxu0 0
  %2452 = vmatprep.subr.bf16.mxu0 0
  %2453 = vmatpush1.bf16.msra.mxu0 0
  %2454 = vmatprep.mubr.bf16.mxu0 0
  %2455 = vmatmul.mubr.bf16.gmra.mrb[0].mxu0 %v2364
  %v2456 = vpop.f32.mrb[0].mxu0
  %v2457 = vadd.f32 %v2404, %v2456
  %v2458 = vpop.f32.mrb[0].mxu0
  %v2459 = vadd.f32 %v2406, %v2458
  %v2460 = vpop.f32.mrb[0].mxu0
  %v2461 = vadd.f32 %v2408, %v2460
  %v2462 = vpop.f32.mrb[0].mxu0
  %v2463 = vadd.f32 %v2410, %v2462
  %2464 = vmatprep.mubr.bf16.mxu0 0
  %2465 = vmatmul.mubr.bf16.gmra.mrb[0].mxu0 %v2367
  %v2466 = vpop.f32.mrb[0].mxu0
  %v2467 = vadd.f32 %v2414, %v2466
  %v2468 = vpop.f32.mrb[0].mxu0
  %v2469 = vadd.f32 %v2416, %v2468
  %v2470 = vpop.f32.mrb[0].mxu0
  %v2471 = vadd.f32 %v2418, %v2470
  %v2472 = vpop.f32.mrb[0].mxu0
  %v2473 = vadd.f32 %v2420, %v2472
  %2474 = vdwg.mxu0
  %2475 = vmatprep.subr.bf16.mxu0 0
  %2476 = vmatpush1.bf16.msra.mxu0 %v2261
  %2477 = vmatprep.subr.bf16.mxu0 0
  %2478 = vmatpush1.bf16.msra.mxu0 %v2264
  %2479 = vmatprep.subr.bf16.mxu0 0
  %2480 = vmatpush1.bf16.msra.mxu0 %v2267
  %2481 = vmatprep.subr.bf16.mxu0 0
  %2482 = vmatpush1.bf16.msra.mxu0 %v2270
  %2483 = vmatprep.subr.bf16.mxu0 0
  %2484 = vmatpush1.bf16.msra.mxu0 %v2273
  %2485 = vmatprep.subr.bf16.mxu0 0
  %2486 = vmatpush1.bf16.msra.mxu0 %v2276
  %2487 = vmatprep.subr.bf16.mxu0 0
  %2488 = vmatpush1.bf16.msra.mxu0 %v2279
  %2489 = vmatprep.subr.bf16.mxu0 0
  %2490 = vmatpush1.bf16.msra.mxu0 %v2282
  %2491 = vmatprep.subr.bf16.mxu0 0
  %2492 = vmatpush1.bf16.msra.mxu0 %v2285
  %2493 = vmatprep.subr.bf16.mxu0 0
  %2494 = vmatpush1.bf16.msra.mxu0 %v2288
  %2495 = vmatprep.subr.bf16.mxu0 0
  %2496 = vmatpush1.bf16.msra.mxu0 %v2291
  %2497 = vmatprep.subr.bf16.mxu0 0
  %2498 = vmatpush1.bf16.msra.mxu0 %v2294
  %2499 = vmatprep.subr.bf16.mxu0 0
  %2500 = vmatpush1.bf16.msra.mxu0 %v2297
  %2501 = vmatprep.subr.bf16.mxu0 0
  %2502 = vmatpush1.bf16.msra.mxu0 %v2300
  %2503 = vmatprep.subr.bf16.mxu0 0
  %2504 = vmatpush1.bf16.msra.mxu0 %v2303
  %2505 = vmatprep.subr.bf16.mxu0 0
  %2506 = vmatpush1.bf16.msra.mxu0 %v2306
  %2507 = vmatprep.mubr.bf16.mxu0 %v2354
  %2508 = vmatmul.mubr.bf16.gmra.mrb[0].mxu0 %v2353
  %v2509 = vpop.f32.mrb[0].mxu0
  %v2510 = vadd.f32 %v2316, %v2509
  %v2511 = vpop.f32.mrb[0].mxu0
  %v2512 = vpop.f32.mrb[0].mxu0
  %v2513 = vadd.f32 %v2321, %v2512
  %v2514 = vpop.f32.mrb[0].mxu0
  %2515 = vmatprep.mubr.bf16.mxu0 %v2357
  %2516 = vmatmul.mubr.bf16.gmra.mrb[0].mxu0 %v2356
  %v2517 = vpop.f32.mrb[0].mxu0
  %v2518 = vadd.f32 %v2326, %v2517
  %v2519 = vpop.f32.mrb[0].mxu0
  %v2520 = vpop.f32.mrb[0].mxu0
  %v2521 = vadd.f32 %v2331, %v2520
  %v2522 = vpop.f32.mrb[0].mxu0
  %2523 = vdwg.mxu0
  %2524 = vmatprep.subr.bf16.mxu0 0
  %2525 = vmatpush1.bf16.msra.mxu0 %v2309
  %2526 = vmatprep.subr.bf16.mxu0 0
  %2527 = vmatpush1.bf16.msra.mxu0 %v2312
  %2528 = vmatprep.subr.bf16.mxu0 0
  %2529 = vmatpush1.bf16.msra.mxu0 0
  %2530 = vmatprep.subr.bf16.mxu0 0
  %2531 = vmatpush1.bf16.msra.mxu0 0
  %2532 = vmatprep.subr.bf16.mxu0 0
  %2533 = vmatpush1.bf16.msra.mxu0 0
  %2534 = vmatprep.subr.bf16.mxu0 0
  %2535 = vmatpush1.bf16.msra.mxu0 0
  %2536 = vmatprep.subr.bf16.mxu0 0
  %2537 = vmatpush1.bf16.msra.mxu0 0
  %2538 = vmatprep.subr.bf16.mxu0 0
  %2539 = vmatpush1.bf16.msra.mxu0 0
  %2540 = vmatprep.subr.bf16.mxu0 0
  %2541 = vmatpush1.bf16.msra.mxu0 0
  %2542 = vmatprep.subr.bf16.mxu0 0
  %2543 = vmatpush1.bf16.msra.mxu0 0
  %2544 = vmatprep.subr.bf16.mxu0 0
  %2545 = vmatpush1.bf16.msra.mxu0 0
  %2546 = vmatprep.subr.bf16.mxu0 0
  %2547 = vmatpush1.bf16.msra.mxu0 0
  %2548 = vmatprep.subr.bf16.mxu0 0
  %2549 = vmatpush1.bf16.msra.mxu0 0
  %2550 = vmatprep.subr.bf16.mxu0 0
  %2551 = vmatpush1.bf16.msra.mxu0 0
  %2552 = vmatprep.subr.bf16.mxu0 0
  %2553 = vmatpush1.bf16.msra.mxu0 0
  %2554 = vmatprep.subr.bf16.mxu0 0
  %2555 = vmatpush1.bf16.msra.mxu0 0
  %2556 = vmatprep.mubr.bf16.mxu0 0
  %2557 = vmatmul.mubr.bf16.gmra.mrb[0].mxu0 %v2364
  %v2558 = vpop.f32.mrb[0].mxu0
  %v2559 = vadd.f32 %v2510, %v2558
  %v2560 = vpop.f32.mrb[0].mxu0
  %v2561 = vpop.f32.mrb[0].mxu0
  %v2562 = vadd.f32 %v2513, %v2561
  %v2563 = vpop.f32.mrb[0].mxu0
  %2564 = vmatprep.mubr.bf16.mxu0 0
  %2565 = vmatmul.mubr.bf16.gmra.mrb[0].mxu0 %v2367
  %v2566 = vpop.f32.mrb[0].mxu0
  %v2567 = vadd.f32 %v2518, %v2566
  %v2568 = vpop.f32.mrb[0].mxu0
  %v2569 = vpop.f32.mrb[0].mxu0
  %v2570 = vadd.f32 %v2521, %v2569
  %v2571 = vpop.f32.mrb[0].mxu0
  %2572 = vdwg.mxu0
  %v2573 = vld [vmem:[%s11] sm:$0x7]
  %v2575 = vlaneseq
  %v2576 = vshrl.u32 %v2575, 7
  %v2577 = vsub.s32 0, %v2576
  %v2578 = vrot.slane %v2573, %v2577
  %v2579 = vlaneseq
  %v2580 = vshrl.u32 %v2579, 7
  %v2581 = vsub.s32 1, %v2580
  %v2582 = vrot.slane %v2573, %v2581
  %v2583 = vlaneseq
  %v2584 = vshrl.u32 %v2583, 7
  %v2585 = vsub.s32 2, %v2584
  %v2586 = vrot.slane %v2573, %v2585
  %v2590 = vmul.f32 %v2457, %v2578
  %v2591 = vmul.f32 %v2459, %v2582
  %v2592 = vmul.f32 %v2559, %v2586
  %v2593 = vmul.f32 %v2461, %v2578
  %v2594 = vmul.f32 %v2463, %v2582
  %v2595 = vmul.f32 %v2562, %v2586
  %v2596 = vmul.f32 %v2467, %v2578
  %v2597 = vmul.f32 %v2469, %v2582
  %v2598 = vmul.f32 %v2567, %v2586
  %v2599 = vmul.f32 %v2471, %v2578
  %v2600 = vmul.f32 %v2473, %v2582
  %v2601 = vmul.f32 %v2570, %v2586
  %v2602 = vmax.f32 %v2590, 0.0
  %v2603 = vmax.f32 %v2591, 0.0
  %v2604 = vmax.f32 %v2592, 0.0
  %v2605 = vmax.f32 %v2593, 0.0
  %v2606 = vmax.f32 %v2594, 0.0
  %v2607 = vmax.f32 %v2595, 0.0
  %v2608 = vmax.f32 %v2596, 0.0
  %v2609 = vmax.f32 %v2597, 0.0
  %v2610 = vmax.f32 %v2598, 0.0
  %v2611 = vmax.f32 %v2599, 0.0
  %v2612 = vmax.f32 %v2600, 0.0
  %v2613 = vmax.f32 %v2601, 0.0
  %s2614 = scalar_lea.vmem %s3, 48
  %v2615 = vld [vmem:[%s2614] sm:$0xff]
  %v2616 = vld [vmem:[%s2614 + $0x8] sm:$0xf]
  %v2617 = vld [vmem:[%s2614 + $0xc] sm:$0xff]
  %v2618 = vld [vmem:[%s2614 + $0x14] sm:$0xf]
  %v2619 = vld [vmem:[%s2614 + $0x18] sm:$0xff]
  %v2620 = vld [vmem:[%s2614 + $0x20] sm:$0xf]
  %v2621 = vld [vmem:[%s2614 + $0x24] sm:$0xff]
  %v2622 = vld [vmem:[%s2614 + $0x2c] sm:$0xf]
  %s2623 = scalar_lea.vmem %s4, 32
  %v2624 = vld [vmem:[%s2623] sm:$0xff]
  %v2625 = vld [vmem:[%s2623 + $0x8] sm:$0xff]
  %v2626 = vld [vmem:[%s2623 + $0x10] sm:$0xff]
  %v2627 = vld [vmem:[%s2623 + $0x18] sm:$0xff]
  %v2628 = vpack.c.bf16 %v2605, %v2602
  %v2629 = vpack.c.bf16 %v2606, %v2603
  %v2630 = vpack.c.bf16 %v2607, %v2604
  %v2631 = vpack.c.bf16 %v2611, %v2608
  %v2632 = vpack.c.bf16 %v2612, %v2609
  %v2633 = vpack.c.bf16 %v2613, %v2610
  %2640 = vrot.lane.b32.xlu0 %v2628, 19
  %v2641 = vpop.permute.xlu0 %2640
  %2642 = vrot.lane.b32.xlu0 %v2629, 19
  %v2643 = vpop.permute.xlu0 %2642
  %2644 = vrot.lane.b32.xlu0 %v2630, 19
  %v2645 = vpop.permute.xlu0 %2644
  %2646 = vrot.lane.b32.xlu0 %v2631, 19
  %v2647 = vpop.permute.xlu0 %2646
  %2648 = vrot.lane.b32.xlu0 %v2632, 19
  %v2649 = vpop.permute.xlu0 %2648
  %2650 = vrot.lane.b32.xlu0 %v2633, 19
  %v2651 = vpop.permute.xlu0 %2650
  %v2652 = vsel %vm121, %v2641, %v2643
  %v2653 = vsel %vm121, %v2643, %v2645
  %v2654 = vsel %vm121, %v2647, %v2649
  %v2655 = vsel %vm121, %v2649, %v2651
  %2662 = vst.msk [vmem:[#allocation2] sm:$0xff] %vm132, %v2641
  %2663 = vst [vmem:[#allocation2 + $0x8] sm:$0xff] %v2652
  %2664 = vst.msk [vmem:[#allocation2 + $0x10] sm:$0xff] %vm135, %v2653
  %2665 = vst.msk [vmem:[#allocation2 + $0x18] sm:$0xff] %vm132, %v2647
  %2666 = vst [vmem:[#allocation2 + $0x20] sm:$0xff] %v2654
  %2667 = vst.msk [vmem:[#allocation2 + $0x28] sm:$0xff] %vm135, %v2655
  %v2668 = vld [vmem:[#allocation2] sm:$0xff]
  %v2669 = vld [vmem:[#allocation2 + $0x8] sm:$0xff]
  %v2670 = vld [vmem:[#allocation2 + $0x10] sm:$0xff]
  %v2671 = vld [vmem:[#allocation2 + $0x18] sm:$0xff]
  %v2672 = vld [vmem:[#allocation2 + $0x20] sm:$0xff]
  %v2673 = vld [vmem:[#allocation2 + $0x28] sm:$0xff]
  %2674 = vst [vmem:[#allocation3] sm:$0xff] %v2668
  %2675 = vst [vmem:[#allocation3 + $0x8] sm:$0xff] %v2669
  %2676 = vst.msk [vmem:[#allocation3 + $0x10] sm:$0xff] %vm62, %v2670
  %2677 = vst [vmem:[#allocation3 + $0x18] sm:$0xff] %v2671
  %2678 = vst [vmem:[#allocation3 + $0x20] sm:$0xff] %v2672
  %2679 = vst.msk [vmem:[#allocation3 + $0x28] sm:$0xff] %vm62, %v2673
  %v2680 = vld [vmem:[#allocation2] sm:$0xff]
  %v2681 = vld [vmem:[#allocation2 + $0x8] sm:$0xff]
  %v2682 = vld [vmem:[#allocation2 + $0x10] sm:$0xff]
  %v2683 = vld [vmem:[#allocation2 + $0x18] sm:$0xff]
  %v2684 = vld [vmem:[#allocation2 + $0x20] sm:$0xff]
  %v2685 = vld [vmem:[#allocation2 + $0x28] sm:$0xff]
  %2692 = vrot.lane.b32.xlu0 %v2680, 127
  %v2693 = vpop.permute.xlu0 %2692
  %2694 = vrot.lane.b32.xlu0 %v2681, 127
  %v2695 = vpop.permute.xlu0 %2694
  %2696 = vrot.lane.b32.xlu0 %v2682, 127
  %v2697 = vpop.permute.xlu0 %2696
  %2698 = vrot.lane.b32.xlu0 %v2683, 127
  %v2699 = vpop.permute.xlu0 %2698
  %2700 = vrot.lane.b32.xlu0 %v2684, 127
  %v2701 = vpop.permute.xlu0 %2700
  %2702 = vrot.lane.b32.xlu0 %v2685, 127
  %v2703 = vpop.permute.xlu0 %2702
  %v2704 = vsel %vm176, %v2693, %v2695
  %v2705 = vsel %vm176, %v2695, %v2697
  %v2706 = vsel %vm176, %v2699, %v2701
  %v2707 = vsel %vm176, %v2701, %v2703
  %2714 = vst [vmem:[#allocation3 + $0x30] sm:$0xff] %v2704
  %2715 = vst [vmem:[#allocation3 + $0x38] sm:$0xff] %v2705
  %2716 = vst.msk [vmem:[#allocation3 + $0x40] sm:$0xff] %vm62, %v2697
  %2717 = vst [vmem:[#allocation3 + $0x48] sm:$0xff] %v2706
  %2718 = vst [vmem:[#allocation3 + $0x50] sm:$0xff] %v2707
  %2719 = vst.msk [vmem:[#allocation3 + $0x58] sm:$0xff] %vm62, %v2703
  %v2720 = vld [vmem:[#allocation2] sm:$0xff]
  %v2721 = vld [vmem:[#allocation2 + $0x8] sm:$0xff]
  %v2722 = vld [vmem:[#allocation2 + $0x10] sm:$0xff]
  %v2723 = vld [vmem:[#allocation2 + $0x18] sm:$0xff]
  %v2724 = vld [vmem:[#allocation2 + $0x20] sm:$0xff]
  %v2725 = vld [vmem:[#allocation2 + $0x28] sm:$0xff]
  %2732 = vrot.lane.b32.xlu0 %v2720, 126
  %v2733 = vpop.permute.xlu0 %2732
  %2734 = vrot.lane.b32.xlu0 %v2721, 126
  %v2735 = vpop.permute.xlu0 %2734
  %2736 = vrot.lane.b32.xlu0 %v2722, 126
  %v2737 = vpop.permute.xlu0 %2736
  %2738 = vrot.lane.b32.xlu0 %v2723, 126
  %v2739 = vpop.permute.xlu0 %2738
  %2740 = vrot.lane.b32.xlu0 %v2724, 126
  %v2741 = vpop.permute.xlu0 %2740
  %2742 = vrot.lane.b32.xlu0 %v2725, 126
  %v2743 = vpop.permute.xlu0 %2742
  %v2744 = vsel %vm217, %v2733, %v2735
  %v2745 = vsel %vm217, %v2735, %v2737
  %v2746 = vsel %vm217, %v2739, %v2741
  %v2747 = vsel %vm217, %v2741, %v2743
  %2754 = vst [vmem:[#allocation3 + $0x60] sm:$0xff] %v2744
  %2755 = vst [vmem:[#allocation3 + $0x68] sm:$0xff] %v2745
  %2756 = vst.msk [vmem:[#allocation3 + $0x70] sm:$0xff] %vm62, %v2737
  %2757 = vst [vmem:[#allocation3 + $0x78] sm:$0xff] %v2746
  %2758 = vst [vmem:[#allocation3 + $0x80] sm:$0xff] %v2747
  %2759 = vst.msk [vmem:[#allocation3 + $0x88] sm:$0xff] %vm62, %v2743
  %v2760 = vld [vmem:[#allocation2] sm:$0xff]
  %v2761 = vld [vmem:[#allocation2 + $0x8] sm:$0xff]
  %v2762 = vld [vmem:[#allocation2 + $0x10] sm:$0xff]
  %v2763 = vld [vmem:[#allocation2 + $0x18] sm:$0xff]
  %v2764 = vld [vmem:[#allocation2 + $0x20] sm:$0xff]
  %v2765 = vld [vmem:[#allocation2 + $0x28] sm:$0xff]
  %2772 = vrot.lane.b32.xlu0 %v2760, 110
  %v2773 = vpop.permute.xlu0 %2772
  %2774 = vrot.lane.b32.xlu0 %v2761, 110
  %v2775 = vpop.permute.xlu0 %2774
  %2776 = vrot.lane.b32.xlu0 %v2762, 110
  %v2777 = vpop.permute.xlu0 %2776
  %2778 = vrot.lane.b32.xlu0 %v2763, 110
  %v2779 = vpop.permute.xlu0 %2778
  %2780 = vrot.lane.b32.xlu0 %v2764, 110
  %v2781 = vpop.permute.xlu0 %2780
  %2782 = vrot.lane.b32.xlu0 %v2765, 110
  %v2783 = vpop.permute.xlu0 %2782
  %v2784 = vsel %vm258, %v2773, %v2775
  %v2785 = vsel %vm258, %v2775, %v2777
  %v2786 = vsel %vm258, %v2779, %v2781
  %v2787 = vsel %vm258, %v2781, %v2783
  %2794 = vst [vmem:[#allocation3 + $0x90] sm:$0xff] %v2784
  %2795 = vst [vmem:[#allocation3 + $0x98] sm:$0xff] %v2785
  %2796 = vst.msk [vmem:[#allocation3 + $0xa0] sm:$0xff] %vm62, %v2777
  %2797 = vst [vmem:[#allocation3 + $0xa8] sm:$0xff] %v2786
  %2798 = vst [vmem:[#allocation3 + $0xb0] sm:$0xff] %v2787
  %2799 = vst.msk [vmem:[#allocation3 + $0xb8] sm:$0xff] %vm62, %v2783
  %v2800 = vld [vmem:[#allocation2] sm:$0xff]
  %v2801 = vld [vmem:[#allocation2 + $0x8] sm:$0xff]
  %v2802 = vld [vmem:[#allocation2 + $0x10] sm:$0xff]
  %v2803 = vld [vmem:[#allocation2 + $0x18] sm:$0xff]
  %v2804 = vld [vmem:[#allocation2 + $0x20] sm:$0xff]
  %v2805 = vld [vmem:[#allocation2 + $0x28] sm:$0xff]
  %2812 = vrot.lane.b32.xlu0 %v2800, 109
  %v2813 = vpop.permute.xlu0 %2812
  %2814 = vrot.lane.b32.xlu0 %v2801, 109
  %v2815 = vpop.permute.xlu0 %2814
  %2816 = vrot.lane.b32.xlu0 %v2802, 109
  %v2817 = vpop.permute.xlu0 %2816
  %2818 = vrot.lane.b32.xlu0 %v2803, 109
  %v2819 = vpop.permute.xlu0 %2818
  %2820 = vrot.lane.b32.xlu0 %v2804, 109
  %v2821 = vpop.permute.xlu0 %2820
  %2822 = vrot.lane.b32.xlu0 %v2805, 109
  %v2823 = vpop.permute.xlu0 %2822
  %v2824 = vsel %vm299, %v2813, %v2815
  %v2825 = vsel %vm299, %v2815, %v2817
  %v2826 = vsel %vm299, %v2819, %v2821
  %v2827 = vsel %vm299, %v2821, %v2823
  %2834 = vst [vmem:[#allocation3 + $0xc0] sm:$0xff] %v2824
  %2835 = vst [vmem:[#allocation3 + $0xc8] sm:$0xff] %v2825
  %2836 = vst.msk [vmem:[#allocation3 + $0xd0] sm:$0xff] %vm62, %v2817
  %2837 = vst [vmem:[#allocation3 + $0xd8] sm:$0xff] %v2826
  %2838 = vst [vmem:[#allocation3 + $0xe0] sm:$0xff] %v2827
  %2839 = vst.msk [vmem:[#allocation3 + $0xe8] sm:$0xff] %vm62, %v2823
  %v2840 = vld [vmem:[#allocation2] sm:$0xff]
  %v2841 = vld [vmem:[#allocation2 + $0x8] sm:$0xff]
  %v2842 = vld [vmem:[#allocation2 + $0x10] sm:$0xff]
  %v2843 = vld [vmem:[#allocation2 + $0x18] sm:$0xff]
  %v2844 = vld [vmem:[#allocation2 + $0x20] sm:$0xff]
  %v2845 = vld [vmem:[#allocation2 + $0x28] sm:$0xff]
  %2852 = vrot.lane.b32.xlu0 %v2840, 108
  %v2853 = vpop.permute.xlu0 %2852
  %2854 = vrot.lane.b32.xlu0 %v2841, 108
  %v2855 = vpop.permute.xlu0 %2854
  %2856 = vrot.lane.b32.xlu0 %v2842, 108
  %v2857 = vpop.permute.xlu0 %2856
  %2858 = vrot.lane.b32.xlu0 %v2843, 108
  %v2859 = vpop.permute.xlu0 %2858
  %2860 = vrot.lane.b32.xlu0 %v2844, 108
  %v2861 = vpop.permute.xlu0 %2860
  %2862 = vrot.lane.b32.xlu0 %v2845, 108
  %v2863 = vpop.permute.xlu0 %2862
  %v2864 = vsel %vm340, %v2853, %v2855
  %v2865 = vsel %vm340, %v2855, %v2857
  %v2866 = vsel %vm340, %v2859, %v2861
  %v2867 = vsel %vm340, %v2861, %v2863
  %2874 = vst [vmem:[#allocation3 + $0xf0] sm:$0xff] %v2864
  %2875 = vst [vmem:[#allocation3 + $0xf8] sm:$0xff] %v2865
  %2876 = vst.msk [vmem:[#allocation3 + $0x100] sm:$0xff] %vm62, %v2857
  %2877 = vst [vmem:[#allocation3 + $0x108] sm:$0xff] %v2866
  %2878 = vst [vmem:[#allocation3 + $0x110] sm:$0xff] %v2867
  %2879 = vst.msk [vmem:[#allocation3 + $0x118] sm:$0xff] %vm62, %v2863
  %v2880 = vld [vmem:[#allocation2] sm:$0xff]
  %v2881 = vld [vmem:[#allocation2 + $0x8] sm:$0xff]
  %v2882 = vld [vmem:[#allocation2 + $0x10] sm:$0xff]
  %v2883 = vld [vmem:[#allocation2 + $0x18] sm:$0xff]
  %v2884 = vld [vmem:[#allocation2 + $0x20] sm:$0xff]
  %v2885 = vld [vmem:[#allocation2 + $0x28] sm:$0xff]
  %2892 = vrot.lane.b32.xlu0 %v2880, 92
  %v2893 = vpop.permute.xlu0 %2892
  %2894 = vrot.lane.b32.xlu0 %v2881, 92
  %v2895 = vpop.permute.xlu0 %2894
  %2896 = vrot.lane.b32.xlu0 %v2882, 92
  %v2897 = vpop.permute.xlu0 %2896
  %2898 = vrot.lane.b32.xlu0 %v2883, 92
  %v2899 = vpop.permute.xlu0 %2898
  %2900 = vrot.lane.b32.xlu0 %v2884, 92
  %v2901 = vpop.permute.xlu0 %2900
  %2902 = vrot.lane.b32.xlu0 %v2885, 92
  %v2903 = vpop.permute.xlu0 %2902
  %v2904 = vsel %vm381, %v2893, %v2895
  %v2905 = vsel %vm381, %v2895, %v2897
  %v2906 = vsel %vm381, %v2899, %v2901
  %v2907 = vsel %vm381, %v2901, %v2903
  %2914 = vst [vmem:[#allocation3 + $0x120] sm:$0xff] %v2904
  %2915 = vst [vmem:[#allocation3 + $0x128] sm:$0xff] %v2905
  %2916 = vst.msk [vmem:[#allocation3 + $0x130] sm:$0xff] %vm62, %v2897
  %2917 = vst [vmem:[#allocation3 + $0x138] sm:$0xff] %v2906
  %2918 = vst [vmem:[#allocation3 + $0x140] sm:$0xff] %v2907
  %2919 = vst.msk [vmem:[#allocation3 + $0x148] sm:$0xff] %vm62, %v2903
  %v2920 = vld [vmem:[#allocation2] sm:$0xff]
  %v2921 = vld [vmem:[#allocation2 + $0x8] sm:$0xff]
  %v2922 = vld [vmem:[#allocation2 + $0x10] sm:$0xff]
  %v2923 = vld [vmem:[#allocation2 + $0x18] sm:$0xff]
  %v2924 = vld [vmem:[#allocation2 + $0x20] sm:$0xff]
  %v2925 = vld [vmem:[#allocation2 + $0x28] sm:$0xff]
  %2932 = vrot.lane.b32.xlu0 %v2920, 91
  %v2933 = vpop.permute.xlu0 %2932
  %2934 = vrot.lane.b32.xlu0 %v2921, 91
  %v2935 = vpop.permute.xlu0 %2934
  %2936 = vrot.lane.b32.xlu0 %v2922, 91
  %v2937 = vpop.permute.xlu0 %2936
  %2938 = vrot.lane.b32.xlu0 %v2923, 91
  %v2939 = vpop.permute.xlu0 %2938
  %2940 = vrot.lane.b32.xlu0 %v2924, 91
  %v2941 = vpop.permute.xlu0 %2940
  %2942 = vrot.lane.b32.xlu0 %v2925, 91
  %v2943 = vpop.permute.xlu0 %2942
  %v2944 = vsel %vm422, %v2933, %v2935
  %v2945 = vsel %vm422, %v2935, %v2937
  %v2946 = vsel %vm422, %v2939, %v2941
  %v2947 = vsel %vm422, %v2941, %v2943
  %2954 = vst [vmem:[#allocation3 + $0x150] sm:$0xff] %v2944
  %2955 = vst [vmem:[#allocation3 + $0x158] sm:$0xff] %v2945
  %2956 = vst.msk [vmem:[#allocation3 + $0x160] sm:$0xff] %vm62, %v2937
  %2957 = vst [vmem:[#allocation3 + $0x168] sm:$0xff] %v2946
  %2958 = vst [vmem:[#allocation3 + $0x170] sm:$0xff] %v2947
  %2959 = vst.msk [vmem:[#allocation3 + $0x178] sm:$0xff] %vm62, %v2943
  %v2960 = vld [vmem:[#allocation2] sm:$0xff]
  %v2961 = vld [vmem:[#allocation2 + $0x8] sm:$0xff]
  %v2962 = vld [vmem:[#allocation2 + $0x10] sm:$0xff]
  %v2963 = vld [vmem:[#allocation2 + $0x18] sm:$0xff]
  %v2964 = vld [vmem:[#allocation2 + $0x20] sm:$0xff]
  %v2965 = vld [vmem:[#allocation2 + $0x28] sm:$0xff]
  %2972 = vrot.lane.b32.xlu0 %v2960, 90
  %v2973 = vpop.permute.xlu0 %2972
  %2974 = vrot.lane.b32.xlu0 %v2961, 90
  %v2975 = vpop.permute.xlu0 %2974
  %2976 = vrot.lane.b32.xlu0 %v2962, 90
  %v2977 = vpop.permute.xlu0 %2976
  %2978 = vrot.lane.b32.xlu0 %v2963, 90
  %v2979 = vpop.permute.xlu0 %2978
  %2980 = vrot.lane.b32.xlu0 %v2964, 90
  %v2981 = vpop.permute.xlu0 %2980
  %2982 = vrot.lane.b32.xlu0 %v2965, 90
  %v2983 = vpop.permute.xlu0 %2982
  %v2984 = vsel %vm463, %v2973, %v2975
  %v2985 = vsel %vm463, %v2975, %v2977
  %v2986 = vsel %vm463, %v2979, %v2981
  %v2987 = vsel %vm463, %v2981, %v2983
  %2994 = vst [vmem:[#allocation3 + $0x180] sm:$0xff] %v2984
  %2995 = vst [vmem:[#allocation3 + $0x188] sm:$0xff] %v2985
  %2996 = vst.msk [vmem:[#allocation3 + $0x190] sm:$0xff] %vm62, %v2977
  %2997 = vst [vmem:[#allocation3 + $0x198] sm:$0xff] %v2986
  %2998 = vst [vmem:[#allocation3 + $0x1a0] sm:$0xff] %v2987
  %2999 = vst.msk [vmem:[#allocation3 + $0x1a8] sm:$0xff] %vm62, %v2983
  %v3000 = vld [vmem:[#allocation3] sm:$0xff]
  %v3001 = vld [vmem:[#allocation3 + $0x8] sm:$0xff]
  %v3002 = vld [vmem:[#allocation3 + $0x10] sm:$0xff]
  %v3003 = vld [vmem:[#allocation3 + $0x18] sm:$0xff]
  %v3004 = vld [vmem:[#allocation3 + $0x20] sm:$0xff]
  %v3005 = vld [vmem:[#allocation3 + $0x28] sm:$0xff]
  %v3006 = vld [vmem:[#allocation3 + $0x30] sm:$0xff]
  %v3007 = vld [vmem:[#allocation3 + $0x38] sm:$0xff]
  %v3008 = vld [vmem:[#allocation3 + $0x40] sm:$0xff]
  %v3009 = vld [vmem:[#allocation3 + $0x48] sm:$0xff]
  %v3010 = vld [vmem:[#allocation3 + $0x50] sm:$0xff]
  %v3011 = vld [vmem:[#allocation3 + $0x58] sm:$0xff]
  %v3012 = vld [vmem:[#allocation3 + $0x60] sm:$0xff]
  %v3013 = vld [vmem:[#allocation3 + $0x68] sm:$0xff]
  %v3014 = vld [vmem:[#allocation3 + $0x70] sm:$0xff]
  %v3015 = vld [vmem:[#allocation3 + $0x78] sm:$0xff]
  %v3016 = vld [vmem:[#allocation3 + $0x80] sm:$0xff]
  %v3017 = vld [vmem:[#allocation3 + $0x88] sm:$0xff]
  %v3018 = vld [vmem:[#allocation3 + $0x90] sm:$0xff]
  %v3019 = vld [vmem:[#allocation3 + $0x98] sm:$0xff]
  %v3020 = vld [vmem:[#allocation3 + $0xa0] sm:$0xff]
  %v3021 = vld [vmem:[#allocation3 + $0xa8] sm:$0xff]
  %v3022 = vld [vmem:[#allocation3 + $0xb0] sm:$0xff]
  %v3023 = vld [vmem:[#allocation3 + $0xb8] sm:$0xff]
  %v3024 = vld [vmem:[#allocation3 + $0xc0] sm:$0xff]
  %v3025 = vld [vmem:[#allocation3 + $0xc8] sm:$0xff]
  %v3026 = vld [vmem:[#allocation3 + $0xd0] sm:$0xff]
  %v3027 = vld [vmem:[#allocation3 + $0xd8] sm:$0xff]
  %v3028 = vld [vmem:[#allocation3 + $0xe0] sm:$0xff]
  %v3029 = vld [vmem:[#allocation3 + $0xe8] sm:$0xff]
  %v3030 = vld [vmem:[#allocation3 + $0xf0] sm:$0xff]
  %v3031 = vld [vmem:[#allocation3 + $0xf8] sm:$0xff]
  %v3032 = vld [vmem:[#allocation3 + $0x100] sm:$0xff]
  %v3033 = vld [vmem:[#allocation3 + $0x108] sm:$0xff]
  %v3034 = vld [vmem:[#allocation3 + $0x110] sm:$0xff]
  %v3035 = vld [vmem:[#allocation3 + $0x118] sm:$0xff]
  %v3036 = vld [vmem:[#allocation3 + $0x120] sm:$0xff]
  %v3037 = vld [vmem:[#allocation3 + $0x128] sm:$0xff]
  %v3038 = vld [vmem:[#allocation3 + $0x130] sm:$0xff]
  %v3039 = vld [vmem:[#allocation3 + $0x138] sm:$0xff]
  %v3040 = vld [vmem:[#allocation3 + $0x140] sm:$0xff]
  %v3041 = vld [vmem:[#allocation3 + $0x148] sm:$0xff]
  %v3042 = vld [vmem:[#allocation3 + $0x150] sm:$0xff]
  %v3043 = vld [vmem:[#allocation3 + $0x158] sm:$0xff]
  %v3044 = vld [vmem:[#allocation3 + $0x160] sm:$0xff]
  %v3045 = vld [vmem:[#allocation3 + $0x168] sm:$0xff]
  %v3046 = vld [vmem:[#allocation3 + $0x170] sm:$0xff]
  %v3047 = vld [vmem:[#allocation3 + $0x178] sm:$0xff]
  %v3048 = vld [vmem:[#allocation3 + $0x180] sm:$0xff]
  %v3049 = vld [vmem:[#allocation3 + $0x188] sm:$0xff]
  %v3050 = vld [vmem:[#allocation3 + $0x190] sm:$0xff]
  %v3051 = vld [vmem:[#allocation3 + $0x198] sm:$0xff]
  %v3052 = vld [vmem:[#allocation3 + $0x1a0] sm:$0xff]
  %v3053 = vld [vmem:[#allocation3 + $0x1a8] sm:$0xff]
  %3055 = vset.pattern.permute.xlu0 0
  %3056 = vperm.xlu0 %3055, %v2624
  %v3057 = vpop.permute.xlu0 %3056
  %3060 = vset.pattern.permute.xlu0 0
  %3061 = vperm.xlu0 %3060, %v2625
  %v3062 = vpop.permute.xlu0 %3061
  %3065 = vset.pattern.permute.xlu0 0
  %3066 = vperm.xlu0 %3065, %v2626
  %v3067 = vpop.permute.xlu0 %3066
  %3070 = vset.pattern.permute.xlu0 0
  %3071 = vperm.xlu0 %3070, %v2627
  %v3072 = vpop.permute.xlu0 %3071
  %v3082 = vunpack.c.l.b16 %v2615
  %v3083 = vunpack.c.h.b16 %v2615
  %v3084 = vunpack.c.l.b16 %v2616
  %v3085 = vunpack.c.l.b16 %v2617
  %v3086 = vunpack.c.h.b16 %v2617
  %v3087 = vunpack.c.l.b16 %v2618
  %v3088 = vunpack.c.l.b16 %v2619
  %v3089 = vunpack.c.h.b16 %v2619
  %v3090 = vunpack.c.l.b16 %v2620
  %v3091 = vunpack.c.l.b16 %v2621
  %v3092 = vunpack.c.h.b16 %v2621
  %v3093 = vunpack.c.l.b16 %v2622
  %v3094 = vpack.c.b16 %v3085, %v3082
  %v3095 = vpack.c.b16 %v3086, %v3083
  %v3096 = vpack.c.b16 %v3087, %v3084
  %v3097 = vpack.c.b16 %v3091, %v3088
  %v3098 = vpack.c.b16 %v3092, %v3089
  %v3099 = vpack.c.b16 %v3093, %v3090
  %v3105 = vsel %vm584, %v3096, 0
  %v3108 = vsel %vm584, %v3099, 0
  %3110 = vmatprep.subr.bf16.mxu0 %v3001
  %3111 = vmatpush1.bf16.msra.mxu0 %v3000
  %3112 = vmatprep.subr.bf16.mxu0 %v3004
  %3113 = vmatpush1.bf16.msra.mxu0 %v3003
  %3114 = vmatprep.subr.bf16.mxu0 %v3007
  %3115 = vmatpush1.bf16.msra.mxu0 %v3006
  %3116 = vmatprep.subr.bf16.mxu0 %v3010
  %3117 = vmatpush1.bf16.msra.mxu0 %v3009
  %3118 = vmatprep.subr.bf16.mxu0 %v3013
  %3119 = vmatpush1.bf16.msra.mxu0 %v3012
  %3120 = vmatprep.subr.bf16.mxu0 %v3016
  %3121 = vmatpush1.bf16.msra.mxu0 %v3015
  %3122 = vmatprep.subr.bf16.mxu0 %v3019
  %3123 = vmatpush1.bf16.msra.mxu0 %v3018
  %3124 = vmatprep.subr.bf16.mxu0 %v3022
  %3125 = vmatpush1.bf16.msra.mxu0 %v3021
  %3126 = vmatprep.subr.bf16.mxu0 %v3025
  %3127 = vmatpush1.bf16.msra.mxu0 %v3024
  %3128 = vmatprep.subr.bf16.mxu0 %v3028
  %3129 = vmatpush1.bf16.msra.mxu0 %v3027
  %3130 = vmatprep.subr.bf16.mxu0 %v3031
  %3131 = vmatpush1.bf16.msra.mxu0 %v3030
  %3132 = vmatprep.subr.bf16.mxu0 %v3034
  %3133 = vmatpush1.bf16.msra.mxu0 %v3033
  %3134 = vmatprep.subr.bf16.mxu0 %v3037
  %3135 = vmatpush1.bf16.msra.mxu0 %v3036
  %3136 = vmatprep.subr.bf16.mxu0 %v3040
  %3137 = vmatpush1.bf16.msra.mxu0 %v3039
  %3138 = vmatprep.subr.bf16.mxu0 %v3043
  %3139 = vmatpush1.bf16.msra.mxu0 %v3042
  %3140 = vmatprep.subr.bf16.mxu0 %v3046
  %3141 = vmatpush1.bf16.msra.mxu0 %v3045
  %3142 = vmatprep.mubr.bf16.mxu0 %v3095
  %3143 = vmatmul.mubr.bf16.gmra.mrb[0].mxu0 %v3094
  %v3144 = vpop.f32.mrb[0].mxu0
  %v3145 = vadd.f32 %v3057, %v3144
  %v3146 = vpop.f32.mrb[0].mxu0
  %v3147 = vadd.f32 %v3057, %v3146
  %v3148 = vpop.f32.mrb[0].mxu0
  %v3149 = vadd.f32 %v3062, %v3148
  %v3150 = vpop.f32.mrb[0].mxu0
  %v3151 = vadd.f32 %v3062, %v3150
  %3152 = vmatprep.mubr.bf16.mxu0 %v3098
  %3153 = vmatmul.mubr.bf16.gmra.mrb[0].mxu0 %v3097
  %v3154 = vpop.f32.mrb[0].mxu0
  %v3155 = vadd.f32 %v3067, %v3154
  %v3156 = vpop.f32.mrb[0].mxu0
  %v3157 = vadd.f32 %v3067, %v3156
  %v3158 = vpop.f32.mrb[0].mxu0
  %v3159 = vadd.f32 %v3072, %v3158
  %v3160 = vpop.f32.mrb[0].mxu0
  %v3161 = vadd.f32 %v3072, %v3160
  %3162 = vdwg.mxu0
  %3163 = vmatprep.subr.bf16.mxu0 %v3049
  %3164 = vmatpush1.bf16.msra.mxu0 %v3048
  %3165 = vmatprep.subr.bf16.mxu0 %v3052
  %3166 = vmatpush1.bf16.msra.mxu0 %v3051
  %3167 = vmatprep.subr.bf16.mxu0 0
  %3168 = vmatpush1.bf16.msra.mxu0 0
  %3169 = vmatprep.subr.bf16.mxu0 0
  %3170 = vmatpush1.bf16.msra.mxu0 0
  %3171 = vmatprep.subr.bf16.mxu0 0
  %3172 = vmatpush1.bf16.msra.mxu0 0
  %3173 = vmatprep.subr.bf16.mxu0 0
  %3174 = vmatpush1.bf16.msra.mxu0 0
  %3175 = vmatprep.subr.bf16.mxu0 0
  %3176 = vmatpush1.bf16.msra.mxu0 0
  %3177 = vmatprep.subr.bf16.mxu0 0
  %3178 = vmatpush1.bf16.msra.mxu0 0
  %3179 = vmatprep.subr.bf16.mxu0 0
  %3180 = vmatpush1.bf16.msra.mxu0 0
  %3181 = vmatprep.subr.bf16.mxu0 0
  %3182 = vmatpush1.bf16.msra.mxu0 0
  %3183 = vmatprep.subr.bf16.mxu0 0
  %3184 = vmatpush1.bf16.msra.mxu0 0
  %3185 = vmatprep.subr.bf16.mxu0 0
  %3186 = vmatpush1.bf16.msra.mxu0 0
  %3187 = vmatprep.subr.bf16.mxu0 0
  %3188 = vmatpush1.bf16.msra.mxu0 0
  %3189 = vmatprep.subr.bf16.mxu0 0
  %3190 = vmatpush1.bf16.msra.mxu0 0
  %3191 = vmatprep.subr.bf16.mxu0 0
  %3192 = vmatpush1.bf16.msra.mxu0 0
  %3193 = vmatprep.subr.bf16.mxu0 0
  %3194 = vmatpush1.bf16.msra.mxu0 0
  %3195 = vmatprep.mubr.bf16.mxu0 0
  %3196 = vmatmul.mubr.bf16.gmra.mrb[0].mxu0 %v3105
  %v3197 = vpop.f32.mrb[0].mxu0
  %v3198 = vadd.f32 %v3145, %v3197
  %v3199 = vpop.f32.mrb[0].mxu0
  %v3200 = vadd.f32 %v3147, %v3199
  %v3201 = vpop.f32.mrb[0].mxu0
  %v3202 = vadd.f32 %v3149, %v3201
  %v3203 = vpop.f32.mrb[0].mxu0
  %v3204 = vadd.f32 %v3151, %v3203
  %3205 = vmatprep.mubr.bf16.mxu0 0
  %3206 = vmatmul.mubr.bf16.gmra.mrb[0].mxu0 %v3108
  %v3207 = vpop.f32.mrb[0].mxu0
  %v3208 = vadd.f32 %v3155, %v3207
  %v3209 = vpop.f32.mrb[0].mxu0
  %v3210 = vadd.f32 %v3157, %v3209
  %v3211 = vpop.f32.mrb[0].mxu0
  %v3212 = vadd.f32 %v3159, %v3211
  %v3213 = vpop.f32.mrb[0].mxu0
  %v3214 = vadd.f32 %v3161, %v3213
  %3215 = vdwg.mxu0
  %3216 = vmatprep.subr.bf16.mxu0 0
  %3217 = vmatpush1.bf16.msra.mxu0 %v3002
  %3218 = vmatprep.subr.bf16.mxu0 0
  %3219 = vmatpush1.bf16.msra.mxu0 %v3005
  %3220 = vmatprep.subr.bf16.mxu0 0
  %3221 = vmatpush1.bf16.msra.mxu0 %v3008
  %3222 = vmatprep.subr.bf16.mxu0 0
  %3223 = vmatpush1.bf16.msra.mxu0 %v3011
  %3224 = vmatprep.subr.bf16.mxu0 0
  %3225 = vmatpush1.bf16.msra.mxu0 %v3014
  %3226 = vmatprep.subr.bf16.mxu0 0
  %3227 = vmatpush1.bf16.msra.mxu0 %v3017
  %3228 = vmatprep.subr.bf16.mxu0 0
  %3229 = vmatpush1.bf16.msra.mxu0 %v3020
  %3230 = vmatprep.subr.bf16.mxu0 0
  %3231 = vmatpush1.bf16.msra.mxu0 %v3023
  %3232 = vmatprep.subr.bf16.mxu0 0
  %3233 = vmatpush1.bf16.msra.mxu0 %v3026
  %3234 = vmatprep.subr.bf16.mxu0 0
  %3235 = vmatpush1.bf16.msra.mxu0 %v3029
  %3236 = vmatprep.subr.bf16.mxu0 0
  %3237 = vmatpush1.bf16.msra.mxu0 %v3032
  %3238 = vmatprep.subr.bf16.mxu0 0
  %3239 = vmatpush1.bf16.msra.mxu0 %v3035
  %3240 = vmatprep.subr.bf16.mxu0 0
  %3241 = vmatpush1.bf16.msra.mxu0 %v3038
  %3242 = vmatprep.subr.bf16.mxu0 0
  %3243 = vmatpush1.bf16.msra.mxu0 %v3041
  %3244 = vmatprep.subr.bf16.mxu0 0
  %3245 = vmatpush1.bf16.msra.mxu0 %v3044
  %3246 = vmatprep.subr.bf16.mxu0 0
  %3247 = vmatpush1.bf16.msra.mxu0 %v3047
  %3248 = vmatprep.mubr.bf16.mxu0 %v3095
  %3249 = vmatmul.mubr.bf16.gmra.mrb[0].mxu0 %v3094
  %v3250 = vpop.f32.mrb[0].mxu0
  %v3251 = vadd.f32 %v3057, %v3250
  %v3252 = vpop.f32.mrb[0].mxu0
  %v3253 = vpop.f32.mrb[0].mxu0
  %v3254 = vadd.f32 %v3062, %v3253
  %v3255 = vpop.f32.mrb[0].mxu0
  %3256 = vmatprep.mubr.bf16.mxu0 %v3098
  %3257 = vmatmul.mubr.bf16.gmra.mrb[0].mxu0 %v3097
  %v3258 = vpop.f32.mrb[0].mxu0
  %v3259 = vadd.f32 %v3067, %v3258
  %v3260 = vpop.f32.mrb[0].mxu0
  %v3261 = vpop.f32.mrb[0].mxu0
  %v3262 = vadd.f32 %v3072, %v3261
  %v3263 = vpop.f32.mrb[0].mxu0
  %3264 = vdwg.mxu0
  %3265 = vmatprep.subr.bf16.mxu0 0
  %3266 = vmatpush1.bf16.msra.mxu0 %v3050
  %3267 = vmatprep.subr.bf16.mxu0 0
  %3268 = vmatpush1.bf16.msra.mxu0 %v3053
  %3269 = vmatprep.subr.bf16.mxu0 0
  %3270 = vmatpush1.bf16.msra.mxu0 0
  %3271 = vmatprep.subr.bf16.mxu0 0
  %3272 = vmatpush1.bf16.msra.mxu0 0
  %3273 = vmatprep.subr.bf16.mxu0 0
  %3274 = vmatpush1.bf16.msra.mxu0 0
  %3275 = vmatprep.subr.bf16.mxu0 0
  %3276 = vmatpush1.bf16.msra.mxu0 0
  %3277 = vmatprep.subr.bf16.mxu0 0
  %3278 = vmatpush1.bf16.msra.mxu0 0
  %3279 = vmatprep.subr.bf16.mxu0 0
  %3280 = vmatpush1.bf16.msra.mxu0 0
  %3281 = vmatprep.subr.bf16.mxu0 0
  %3282 = vmatpush1.bf16.msra.mxu0 0
  %3283 = vmatprep.subr.bf16.mxu0 0
  %3284 = vmatpush1.bf16.msra.mxu0 0
  %3285 = vmatprep.subr.bf16.mxu0 0
  %3286 = vmatpush1.bf16.msra.mxu0 0
  %3287 = vmatprep.subr.bf16.mxu0 0
  %3288 = vmatpush1.bf16.msra.mxu0 0
  %3289 = vmatprep.subr.bf16.mxu0 0
  %3290 = vmatpush1.bf16.msra.mxu0 0
  %3291 = vmatprep.subr.bf16.mxu0 0
  %3292 = vmatpush1.bf16.msra.mxu0 0
  %3293 = vmatprep.subr.bf16.mxu0 0
  %3294 = vmatpush1.bf16.msra.mxu0 0
  %3295 = vmatprep.subr.bf16.mxu0 0
  %3296 = vmatpush1.bf16.msra.mxu0 0
  %3297 = vmatprep.mubr.bf16.mxu0 0
  %3298 = vmatmul.mubr.bf16.gmra.mrb[0].mxu0 %v3105
  %v3299 = vpop.f32.mrb[0].mxu0
  %v3300 = vadd.f32 %v3251, %v3299
  %v3301 = vpop.f32.mrb[0].mxu0
  %v3302 = vpop.f32.mrb[0].mxu0
  %v3303 = vadd.f32 %v3254, %v3302
  %v3304 = vpop.f32.mrb[0].mxu0
  %3305 = vmatprep.mubr.bf16.mxu0 0
  %3306 = vmatmul.mubr.bf16.gmra.mrb[0].mxu0 %v3108
  %v3307 = vpop.f32.mrb[0].mxu0
  %v3308 = vadd.f32 %v3259, %v3307
  %v3309 = vpop.f32.mrb[0].mxu0
  %v3310 = vpop.f32.mrb[0].mxu0
  %v3311 = vadd.f32 %v3262, %v3310
  %v3312 = vpop.f32.mrb[0].mxu0
  %3313 = vdwg.mxu0
  %v3314 = vld [vmem:[%s11] sm:$0x7]
  %v3316 = vlaneseq
  %v3317 = vshrl.u32 %v3316, 7
  %v3318 = vsub.s32 0, %v3317
  %v3319 = vrot.slane %v3314, %v3318
  %v3320 = vlaneseq
  %v3321 = vshrl.u32 %v3320, 7
  %v3322 = vsub.s32 1, %v3321
  %v3323 = vrot.slane %v3314, %v3322
  %v3324 = vlaneseq
  %v3325 = vshrl.u32 %v3324, 7
  %v3326 = vsub.s32 2, %v3325
  %v3327 = vrot.slane %v3314, %v3326
  %v3331 = vmul.f32 %v3198, %v3319
  %v3332 = vmul.f32 %v3200, %v3323
  %v3333 = vmul.f32 %v3300, %v3327
  %v3334 = vmul.f32 %v3202, %v3319
  %v3335 = vmul.f32 %v3204, %v3323
  %v3336 = vmul.f32 %v3303, %v3327
  %v3337 = vmul.f32 %v3208, %v3319
  %v3338 = vmul.f32 %v3210, %v3323
  %v3339 = vmul.f32 %v3308, %v3327
  %v3340 = vmul.f32 %v3212, %v3319
  %v3341 = vmul.f32 %v3214, %v3323
  %v3342 = vmul.f32 %v3311, %v3327
  %v3343 = vadd.f32 %v3331, %v3332
  %v3344 = vsel %vm62, %v3333, 0.0
  %v3345 = vadd.f32 %v3343, %v3344
  %3346 = vadd.xlane.f32.xlu0 %v3345
  %v3347 = vpop.xlane.xlu0 %3346
  %v3348 = vadd.f32 %v3334, %v3335
  %v3349 = vsel %vm62, %v3336, 0.0
  %v3350 = vadd.f32 %v3348, %v3349
  %3351 = vadd.xlane.f32.xlu0 %v3350
  %v3352 = vpop.xlane.xlu0 %3351
  %v3353 = vadd.f32 %v3337, %v3338
  %v3354 = vsel %vm62, %v3339, 0.0
  %v3355 = vadd.f32 %v3353, %v3354
  %3356 = vadd.xlane.f32.xlu0 %v3355
  %v3357 = vpop.xlane.xlu0 %3356
  %v3358 = vadd.f32 %v3340, %v3341
  %v3359 = vsel %vm62, %v3342, 0.0
  %v3360 = vadd.f32 %v3358, %v3359
  %3361 = vadd.xlane.f32.xlu0 %v3360
  %v3362 = vpop.xlane.xlu0 %3361
  %v3363 = vmul.f32 %v3347, 0.00390625
  %v3364 = vmul.f32 %v3352, 0.00390625
  %v3365 = vmul.f32 %v3357, 0.00390625
  %v3366 = vmul.f32 %v3362, 0.00390625
  %s3367 = scalar_lea.vmem %s5, 8
  %v3368 = vld [vmem:[%s3367] sm:$0xff]
  %s3369 = scalar_lea.vmem %s6, 8
  %v3370 = vld [vmem:[%s3369] sm:$0xff]
  %v3372 = vsel %vm584, %v3368, 0
  %3374 = vmatprep.subr.mxu0 0.0
  %3375 = vmatpush1.msra.mxu0 %v3363
  %3376 = vmatprep.subr.mxu0 0.0
  %3377 = vmatpush1.msra.mxu0 %v3364
  %3378 = vmatprep.subr.mxu0 0.0
  %3379 = vmatpush1.msra.mxu0 %v3365
  %3380 = vmatprep.subr.mxu0 0.0
  %3381 = vmatpush1.msra.mxu0 %v3366
  %3382 = vmatprep.subr.mxu0 0.0
  %3383 = vmatpush1.msra.mxu0 0.0
  %3384 = vmatprep.subr.mxu0 0.0
  %3385 = vmatpush1.msra.mxu0 0.0
  %3386 = vmatprep.subr.mxu0 0.0
  %3387 = vmatpush1.msra.mxu0 0.0
  %3388 = vmatprep.subr.mxu0 0.0
  %3389 = vmatpush1.msra.mxu0 0.0
  %3390 = vmatprep.subr.mxu0 0.0
  %3391 = vmatpush1.msra.mxu0 0.0
  %3392 = vmatprep.subr.mxu0 0.0
  %3393 = vmatpush1.msra.mxu0 0.0
  %3394 = vmatprep.subr.mxu0 0.0
  %3395 = vmatpush1.msra.mxu0 0.0
  %3396 = vmatprep.subr.mxu0 0.0
  %3397 = vmatpush1.msra.mxu0 0.0
  %3398 = vmatprep.subr.mxu0 0.0
  %3399 = vmatpush1.msra.mxu0 0.0
  %3400 = vmatprep.subr.mxu0 0.0
  %3401 = vmatpush1.msra.mxu0 0.0
  %3402 = vmatprep.subr.mxu0 0.0
  %3403 = vmatpush1.msra.mxu0 0.0
  %3404 = vmatprep.subr.mxu0 0.0
  %3405 = vmatpush1.msra.mxu0 0.0
  %3406 = vmatprep.subr.mxu0 0.0
  %3407 = vmatpush1.msra.mxu0 0.0
  %3408 = vmatprep.subr.mxu0 0.0
  %3409 = vmatpush1.msra.mxu0 0.0
  %3410 = vmatprep.subr.mxu0 0.0
  %3411 = vmatpush1.msra.mxu0 0.0
  %3412 = vmatprep.subr.mxu0 0.0
  %3413 = vmatpush1.msra.mxu0 0.0
  %3414 = vmatprep.subr.mxu0 0.0
  %3415 = vmatpush1.msra.mxu0 0.0
  %3416 = vmatprep.subr.mxu0 0.0
  %3417 = vmatpush1.msra.mxu0 0.0
  %3418 = vmatprep.subr.mxu0 0.0
  %3419 = vmatpush1.msra.mxu0 0.0
  %3420 = vmatprep.subr.mxu0 0.0
  %3421 = vmatpush1.msra.mxu0 0.0
  %3422 = vmatprep.subr.mxu0 0.0
  %3423 = vmatpush1.msra.mxu0 0.0
  %3424 = vmatprep.subr.mxu0 0.0
  %3425 = vmatpush1.msra.mxu0 0.0
  %3426 = vmatprep.subr.mxu0 0.0
  %3427 = vmatpush1.msra.mxu0 0.0
  %3428 = vmatprep.subr.mxu0 0.0
  %3429 = vmatpush1.msra.mxu0 0.0
  %3430 = vmatprep.subr.mxu0 0.0
  %3431 = vmatpush1.msra.mxu0 0.0
  %3432 = vmatprep.subr.mxu0 0.0
  %3433 = vmatpush1.msra.mxu0 0.0
  %3434 = vmatprep.subr.mxu0 0.0
  %3435 = vmatpush1.msra.mxu0 0.0
  %3436 = vmatprep.subr.mxu0 0.0
  %3437 = vmatpush1.msra.mxu0 0.0
  %3438 = vmatprep.mubr.f32.mxu0 0.0
  %3439 = vmatmul.mubr.f32.gmra.mrb[0].mxu0 %v3372
  %v3440 = vpop.f32.mrb[0].mxu0
  %v3441 = vadd.f32 %v3370, %v3440
  %v3442 = vpop.f32.mrb[0].mxu0
  %3443 = vdwg.mxu0
  %v3444 = vmax.f32 %v3441, 0.0
  %s3445 = scalar_lea.vmem %s7, 32
  %v3446 = vld [vmem:[%s3445] sm:$0xff]
  %v3447 = vld [vmem:[%s3445 + $0x8] sm:$0xff]
  %v3448 = vld [vmem:[%s3445 + $0x10] sm:$0xff]
  %v3449 = vld [vmem:[%s3445 + $0x18] sm:$0xff]
  %s3450 = scalar_lea.vmem %s8, 32
  %v3451 = vld [vmem:[%s3450] sm:$0xff]
  %v3452 = vld [vmem:[%s3450 + $0x8] sm:$0xff]
  %v3453 = vld [vmem:[%s3450 + $0x10] sm:$0xff]
  %v3454 = vld [vmem:[%s3450 + $0x18] sm:$0xff]
  %v3456 = vsel %vm1671, %v3446, 0
  %v3459 = vsel %vm1671, %v3447, 0
  %v3462 = vsel %vm1671, %v3448, 0
  %v3465 = vsel %vm1671, %v3449, 0
  %3467 = vmatprep.subr.mxu0 0.0
  %3468 = vmatpush1.msra.mxu0 %v3444
  %3469 = vmatprep.subr.mxu0 0.0
  %3470 = vmatpush1.msra.mxu0 0.0
  %3471 = vmatprep.subr.mxu0 0.0
  %3472 = vmatpush1.msra.mxu0 0.0
  %3473 = vmatprep.subr.mxu0 0.0
  %3474 = vmatpush1.msra.mxu0 0.0
  %3475 = vmatprep.subr.mxu0 0.0
  %3476 = vmatpush1.msra.mxu0 0.0
  %3477 = vmatprep.subr.mxu0 0.0
  %3478 = vmatpush1.msra.mxu0 0.0
  %3479 = vmatprep.subr.mxu0 0.0
  %3480 = vmatpush1.msra.mxu0 0.0
  %3481 = vmatprep.subr.mxu0 0.0
  %3482 = vmatpush1.msra.mxu0 0.0
  %3483 = vmatprep.subr.mxu0 0.0
  %3484 = vmatpush1.msra.mxu0 0.0
  %3485 = vmatprep.subr.mxu0 0.0
  %3486 = vmatpush1.msra.mxu0 0.0
  %3487 = vmatprep.subr.mxu0 0.0
  %3488 = vmatpush1.msra.mxu0 0.0
  %3489 = vmatprep.subr.mxu0 0.0
  %3490 = vmatpush1.msra.mxu0 0.0
  %3491 = vmatprep.subr.mxu0 0.0
  %3492 = vmatpush1.msra.mxu0 0.0
  %3493 = vmatprep.subr.mxu0 0.0
  %3494 = vmatpush1.msra.mxu0 0.0
  %3495 = vmatprep.subr.mxu0 0.0
  %3496 = vmatpush1.msra.mxu0 0.0
  %3497 = vmatprep.subr.mxu0 0.0
  %3498 = vmatpush1.msra.mxu0 0.0
  %3499 = vmatprep.subr.mxu0 0.0
  %3500 = vmatpush1.msra.mxu0 0.0
  %3501 = vmatprep.subr.mxu0 0.0
  %3502 = vmatpush1.msra.mxu0 0.0
  %3503 = vmatprep.subr.mxu0 0.0
  %3504 = vmatpush1.msra.mxu0 0.0
  %3505 = vmatprep.subr.mxu0 0.0
  %3506 = vmatpush1.msra.mxu0 0.0
  %3507 = vmatprep.subr.mxu0 0.0
  %3508 = vmatpush1.msra.mxu0 0.0
  %3509 = vmatprep.subr.mxu0 0.0
  %3510 = vmatpush1.msra.mxu0 0.0
  %3511 = vmatprep.subr.mxu0 0.0
  %3512 = vmatpush1.msra.mxu0 0.0
  %3513 = vmatprep.subr.mxu0 0.0
  %3514 = vmatpush1.msra.mxu0 0.0
  %3515 = vmatprep.subr.mxu0 0.0
  %3516 = vmatpush1.msra.mxu0 0.0
  %3517 = vmatprep.subr.mxu0 0.0
  %3518 = vmatpush1.msra.mxu0 0.0
  %3519 = vmatprep.subr.mxu0 0.0
  %3520 = vmatpush1.msra.mxu0 0.0
  %3521 = vmatprep.subr.mxu0 0.0
  %3522 = vmatpush1.msra.mxu0 0.0
  %3523 = vmatprep.subr.mxu0 0.0
  %3524 = vmatpush1.msra.mxu0 0.0
  %3525 = vmatprep.subr.mxu0 0.0
  %3526 = vmatpush1.msra.mxu0 0.0
  %3527 = vmatprep.subr.mxu0 0.0
  %3528 = vmatpush1.msra.mxu0 0.0
  %3529 = vmatprep.subr.mxu0 0.0
  %3530 = vmatpush1.msra.mxu0 0.0
  %3531 = vmatprep.mubr.f32.mxu0 0.0
  %3532 = vmatmul.mubr.f32.gmra.mrb[0].mxu0 %v3456
  %v3533 = vpop.f32.mrb[0].mxu0
  %v3534 = vadd.f32 %v3451, %v3533
  %v3535 = vpop.f32.mrb[0].mxu0
  %3536 = vmatprep.mubr.f32.mxu0 0.0
  %3537 = vmatmul.mubr.f32.gmra.mrb[0].mxu0 %v3459
  %v3538 = vpop.f32.mrb[0].mxu0
  %v3539 = vadd.f32 %v3452, %v3538
  %v3540 = vpop.f32.mrb[0].mxu0
  %3541 = vmatprep.mubr.f32.mxu0 0.0
  %3542 = vmatmul.mubr.f32.gmra.mrb[0].mxu0 %v3462
  %v3543 = vpop.f32.mrb[0].mxu0
  %v3544 = vadd.f32 %v3453, %v3543
  %v3545 = vpop.f32.mrb[0].mxu0
  %3546 = vmatprep.mubr.f32.mxu0 0.0
  %3547 = vmatmul.mubr.f32.gmra.mrb[0].mxu0 %v3465
  %v3548 = vpop.f32.mrb[0].mxu0
  %v3549 = vadd.f32 %v3454, %v3548
  %v3550 = vpop.f32.mrb[0].mxu0
  %3551 = vdwg.mxu0
  %v3552 = vxor.u32 %v3534, 2147483648
  %v3553 = vxor.u32 %v3539, 2147483648
  %v3554 = vxor.u32 %v3544, 2147483648
  %v3555 = vxor.u32 %v3549, 2147483648
  %v3556 = vmul.f32 %v3552, 1.442695
  %v3557 = vpow.pop %v3556
  %v3558 = vmul.f32 %v3553, 1.442695
  %v3559 = vpow.pop %v3558
  %v3560 = vmul.f32 %v3554, 1.442695
  %v3561 = vpow.pop %v3560
  %v3562 = vmul.f32 %v3555, 1.442695
  %v3563 = vpow.pop %v3562
  %v3564 = vadd.f32 %v3557, 1.0
  %v3565 = vadd.f32 %v3559, 1.0
  %v3566 = vadd.f32 %v3561, 1.0
  %v3567 = vadd.f32 %v3563, 1.0
  %v3568 = vrcp.pop %v3564
  %v3569 = vmul.f32 1.0, %v3568
  %v3570 = vrcp.pop %v3565
  %v3571 = vmul.f32 1.0, %v3570
  %v3572 = vrcp.pop %v3566
  %v3573 = vmul.f32 1.0, %v3572
  %v3574 = vrcp.pop %v3567
  %v3575 = vmul.f32 1.0, %v3574
  %v3576 = vld [vmem:[#allocation4] sm:$0xff]
  %v3577 = vld [vmem:[#allocation4 + $0x8] sm:$0xff]
  %v3578 = vld [vmem:[#allocation4 + $0x10] sm:$0xff]
  %v3579 = vld [vmem:[#allocation4 + $0x18] sm:$0xff]
  %v3580 = vld [vmem:[#allocation4 + $0x20] sm:$0xff]
  %v3581 = vld [vmem:[#allocation4 + $0x28] sm:$0xff]
  %v3582 = vld [vmem:[#allocation4 + $0x30] sm:$0xff]
  %v3583 = vld [vmem:[#allocation4 + $0x38] sm:$0xff]
  %v3584 = vld [vmem:[#allocation4 + $0x40] sm:$0xff]
  %v3585 = vld [vmem:[#allocation4 + $0x48] sm:$0xff]
  %v3586 = vld [vmem:[#allocation4 + $0x50] sm:$0xff]
  %v3587 = vld [vmem:[#allocation4 + $0x58] sm:$0xff]
  %3589 = vset.pattern.permute.xlu0 0
  %3590 = vperm.xlu0 %3589, %v3569
  %v3591 = vpop.permute.xlu0 %3590
  %3594 = vset.pattern.permute.xlu0 0
  %3595 = vperm.xlu0 %3594, %v3571
  %v3596 = vpop.permute.xlu0 %3595
  %3599 = vset.pattern.permute.xlu0 0
  %3600 = vperm.xlu0 %3599, %v3573
  %v3601 = vpop.permute.xlu0 %3600
  %3604 = vset.pattern.permute.xlu0 0
  %3605 = vperm.xlu0 %3604, %v3575
  %v3606 = vpop.permute.xlu0 %3605
  %v3608 = vmul.f32 %v3331, %v3591
  %v3609 = vmul.f32 %v3332, %v3591
  %v3610 = vmul.f32 %v3333, %v3591
  %v3611 = vmul.f32 %v3334, %v3596
  %v3612 = vmul.f32 %v3335, %v3596
  %v3613 = vmul.f32 %v3336, %v3596
  %v3614 = vmul.f32 %v3337, %v3601
  %v3615 = vmul.f32 %v3338, %v3601
  %v3616 = vmul.f32 %v3339, %v3601
  %v3617 = vmul.f32 %v3340, %v3606
  %v3618 = vmul.f32 %v3341, %v3606
  %v3619 = vmul.f32 %v3342, %v3606
  %v3620 = vadd.f32 %v3576, %v3608
  %v3621 = vadd.f32 %v3577, %v3609
  %v3622 = vadd.f32 %v3578, %v3610
  %v3623 = vadd.f32 %v3579, %v3611
  %v3624 = vadd.f32 %v3580, %v3612
  %v3625 = vadd.f32 %v3581, %v3613
  %v3626 = vadd.f32 %v3582, %v3614
  %v3627 = vadd.f32 %v3583, %v3615
  %v3628 = vadd.f32 %v3584, %v3616
  %v3629 = vadd.f32 %v3585, %v3617
  %v3630 = vadd.f32 %v3586, %v3618
  %v3631 = vadd.f32 %v3587, %v3619
  %3632 = vst [vmem:[#allocation4] sm:$0xff] %v3620
  %3633 = vst [vmem:[#allocation4 + $0x8] sm:$0xff] %v3621
  %3634 = vst.msk [vmem:[#allocation4 + $0x10] sm:$0xff] %vm62, %v3622
  %3635 = vst [vmem:[#allocation4 + $0x18] sm:$0xff] %v3623
  %3636 = vst [vmem:[#allocation4 + $0x20] sm:$0xff] %v3624
  %3637 = vst.msk [vmem:[#allocation4 + $0x28] sm:$0xff] %vm62, %v3625
  %3638 = vst [vmem:[#allocation4 + $0x30] sm:$0xff] %v3626
  %3639 = vst [vmem:[#allocation4 + $0x38] sm:$0xff] %v3627
  %3640 = vst.msk [vmem:[#allocation4 + $0x40] sm:$0xff] %vm62, %v3628
  %3641 = vst [vmem:[#allocation4 + $0x48] sm:$0xff] %v3629
  %3642 = vst [vmem:[#allocation4 + $0x50] sm:$0xff] %v3630
  %3643 = vst.msk [vmem:[#allocation4 + $0x58] sm:$0xff] %vm62, %v3631
  %v3644 = vld [vmem:[#allocation4] sm:$0xff]
  %v3645 = vld [vmem:[#allocation4 + $0x8] sm:$0xff]
  %v3646 = vld [vmem:[#allocation4 + $0x10] sm:$0xff]
  %v3647 = vld [vmem:[#allocation4 + $0x18] sm:$0xff]
  %v3648 = vld [vmem:[#allocation4 + $0x20] sm:$0xff]
  %v3649 = vld [vmem:[#allocation4 + $0x28] sm:$0xff]
  %v3650 = vld [vmem:[#allocation4 + $0x30] sm:$0xff]
  %v3651 = vld [vmem:[#allocation4 + $0x38] sm:$0xff]
  %v3652 = vld [vmem:[#allocation4 + $0x40] sm:$0xff]
  %v3653 = vld [vmem:[#allocation4 + $0x48] sm:$0xff]
  %v3654 = vld [vmem:[#allocation4 + $0x50] sm:$0xff]
  %v3655 = vld [vmem:[#allocation4 + $0x58] sm:$0xff]
  %v3656 = vld [vmem:[%s9] sm:$0xff]
  %v3657 = vld [vmem:[%s9 + $0x8] sm:$0xf]
  %v3658 = vld [vmem:[%s9 + $0xc] sm:$0xff]
  %v3659 = vld [vmem:[%s9 + $0x14] sm:$0xf]
  %v3660 = vld [vmem:[%s9 + $0x18] sm:$0xff]
  %v3661 = vld [vmem:[%s9 + $0x20] sm:$0xf]
  %v3662 = vld [vmem:[%s9 + $0x24] sm:$0xff]
  %v3663 = vld [vmem:[%s9 + $0x2c] sm:$0xf]
  %v3664 = vld [vmem:[%s10] sm:$0xff]
  %v3665 = vld [vmem:[%s10 + $0x8] sm:$0xff]
  %v3666 = vld [vmem:[%s10 + $0x10] sm:$0xff]
  %v3667 = vld [vmem:[%s10 + $0x18] sm:$0xff]
  %v3668 = vpack.c.bf16 %v3647, %v3644
  %v3669 = vpack.c.bf16 %v3648, %v3645
  %v3670 = vpack.c.bf16 %v3649, %v3646
  %v3671 = vpack.c.bf16 %v3653, %v3650
  %v3672 = vpack.c.bf16 %v3654, %v3651
  %v3673 = vpack.c.bf16 %v3655, %v3652
  %3680 = vrot.lane.b32.xlu0 %v3668, 19
  %v3681 = vpop.permute.xlu0 %3680
  %3682 = vrot.lane.b32.xlu0 %v3669, 19
  %v3683 = vpop.permute.xlu0 %3682
  %3684 = vrot.lane.b32.xlu0 %v3670, 19
  %v3685 = vpop.permute.xlu0 %3684
  %3686 = vrot.lane.b32.xlu0 %v3671, 19
  %v3687 = vpop.permute.xlu0 %3686
  %3688 = vrot.lane.b32.xlu0 %v3672, 19
  %v3689 = vpop.permute.xlu0 %3688
  %3690 = vrot.lane.b32.xlu0 %v3673, 19
  %v3691 = vpop.permute.xlu0 %3690
  %v3692 = vsel %vm121, %v3681, %v3683
  %v3693 = vsel %vm121, %v3683, %v3685
  %v3694 = vsel %vm121, %v3687, %v3689
  %v3695 = vsel %vm121, %v3689, %v3691
  %3702 = vst.msk [vmem:[#allocation2] sm:$0xff] %vm132, %v3681
  %3703 = vst [vmem:[#allocation2 + $0x8] sm:$0xff] %v3692
  %3704 = vst.msk [vmem:[#allocation2 + $0x10] sm:$0xff] %vm135, %v3693
  %3705 = vst.msk [vmem:[#allocation2 + $0x18] sm:$0xff] %vm132, %v3687
  %3706 = vst [vmem:[#allocation2 + $0x20] sm:$0xff] %v3694
  %3707 = vst.msk [vmem:[#allocation2 + $0x28] sm:$0xff] %vm135, %v3695
  %v3708 = vld [vmem:[#allocation2] sm:$0xff]
  %v3709 = vld [vmem:[#allocation2 + $0x8] sm:$0xff]
  %v3710 = vld [vmem:[#allocation2 + $0x10] sm:$0xff]
  %v3711 = vld [vmem:[#allocation2 + $0x18] sm:$0xff]
  %v3712 = vld [vmem:[#allocation2 + $0x20] sm:$0xff]
  %v3713 = vld [vmem:[#allocation2 + $0x28] sm:$0xff]
  %3714 = vst [vmem:[#allocation3] sm:$0xff] %v3708
  %3715 = vst [vmem:[#allocation3 + $0x8] sm:$0xff] %v3709
  %3716 = vst.msk [vmem:[#allocation3 + $0x10] sm:$0xff] %vm62, %v3710
  %3717 = vst [vmem:[#allocation3 + $0x18] sm:$0xff] %v3711
  %3718 = vst [vmem:[#allocation3 + $0x20] sm:$0xff] %v3712
  %3719 = vst.msk [vmem:[#allocation3 + $0x28] sm:$0xff] %vm62, %v3713
  %v3720 = vld [vmem:[#allocation2] sm:$0xff]
  %v3721 = vld [vmem:[#allocation2 + $0x8] sm:$0xff]
  %v3722 = vld [vmem:[#allocation2 + $0x10] sm:$0xff]
  %v3723 = vld [vmem:[#allocation2 + $0x18] sm:$0xff]
  %v3724 = vld [vmem:[#allocation2 + $0x20] sm:$0xff]
  %v3725 = vld [vmem:[#allocation2 + $0x28] sm:$0xff]
  %3732 = vrot.lane.b32.xlu0 %v3720, 127
  %v3733 = vpop.permute.xlu0 %3732
  %3734 = vrot.lane.b32.xlu0 %v3721, 127
  %v3735 = vpop.permute.xlu0 %3734
  %3736 = vrot.lane.b32.xlu0 %v3722, 127
  %v3737 = vpop.permute.xlu0 %3736
  %3738 = vrot.lane.b32.xlu0 %v3723, 127
  %v3739 = vpop.permute.xlu0 %3738
  %3740 = vrot.lane.b32.xlu0 %v3724, 127
  %v3741 = vpop.permute.xlu0 %3740
  %3742 = vrot.lane.b32.xlu0 %v3725, 127
  %v3743 = vpop.permute.xlu0 %3742
  %v3744 = vsel %vm176, %v3733, %v3735
  %v3745 = vsel %vm176, %v3735, %v3737
  %v3746 = vsel %vm176, %v3739, %v3741
  %v3747 = vsel %vm176, %v3741, %v3743
  %3754 = vst [vmem:[#allocation3 + $0x30] sm:$0xff] %v3744
  %3755 = vst [vmem:[#allocation3 + $0x38] sm:$0xff] %v3745
  %3756 = vst.msk [vmem:[#allocation3 + $0x40] sm:$0xff] %vm62, %v3737
  %3757 = vst [vmem:[#allocation3 + $0x48] sm:$0xff] %v3746
  %3758 = vst [vmem:[#allocation3 + $0x50] sm:$0xff] %v3747
  %3759 = vst.msk [vmem:[#allocation3 + $0x58] sm:$0xff] %vm62, %v3743
  %v3760 = vld [vmem:[#allocation2] sm:$0xff]
  %v3761 = vld [vmem:[#allocation2 + $0x8] sm:$0xff]
  %v3762 = vld [vmem:[#allocation2 + $0x10] sm:$0xff]
  %v3763 = vld [vmem:[#allocation2 + $0x18] sm:$0xff]
  %v3764 = vld [vmem:[#allocation2 + $0x20] sm:$0xff]
  %v3765 = vld [vmem:[#allocation2 + $0x28] sm:$0xff]
  %3772 = vrot.lane.b32.xlu0 %v3760, 126
  %v3773 = vpop.permute.xlu0 %3772
  %3774 = vrot.lane.b32.xlu0 %v3761, 126
  %v3775 = vpop.permute.xlu0 %3774
  %3776 = vrot.lane.b32.xlu0 %v3762, 126
  %v3777 = vpop.permute.xlu0 %3776
  %3778 = vrot.lane.b32.xlu0 %v3763, 126
  %v3779 = vpop.permute.xlu0 %3778
  %3780 = vrot.lane.b32.xlu0 %v3764, 126
  %v3781 = vpop.permute.xlu0 %3780
  %3782 = vrot.lane.b32.xlu0 %v3765, 126
  %v3783 = vpop.permute.xlu0 %3782
  %v3784 = vsel %vm217, %v3773, %v3775
  %v3785 = vsel %vm217, %v3775, %v3777
  %v3786 = vsel %vm217, %v3779, %v3781
  %v3787 = vsel %vm217, %v3781, %v3783
  %3794 = vst [vmem:[#allocation3 + $0x60] sm:$0xff] %v3784
  %3795 = vst [vmem:[#allocation3 + $0x68] sm:$0xff] %v3785
  %3796 = vst.msk [vmem:[#allocation3 + $0x70] sm:$0xff] %vm62, %v3777
  %3797 = vst [vmem:[#allocation3 + $0x78] sm:$0xff] %v3786
  %3798 = vst [vmem:[#allocation3 + $0x80] sm:$0xff] %v3787
  %3799 = vst.msk [vmem:[#allocation3 + $0x88] sm:$0xff] %vm62, %v3783
  %v3800 = vld [vmem:[#allocation2] sm:$0xff]
  %v3801 = vld [vmem:[#allocation2 + $0x8] sm:$0xff]
  %v3802 = vld [vmem:[#allocation2 + $0x10] sm:$0xff]
  %v3803 = vld [vmem:[#allocation2 + $0x18] sm:$0xff]
  %v3804 = vld [vmem:[#allocation2 + $0x20] sm:$0xff]
  %v3805 = vld [vmem:[#allocation2 + $0x28] sm:$0xff]
  %3812 = vrot.lane.b32.xlu0 %v3800, 110
  %v3813 = vpop.permute.xlu0 %3812
  %3814 = vrot.lane.b32.xlu0 %v3801, 110
  %v3815 = vpop.permute.xlu0 %3814
  %3816 = vrot.lane.b32.xlu0 %v3802, 110
  %v3817 = vpop.permute.xlu0 %3816
  %3818 = vrot.lane.b32.xlu0 %v3803, 110
  %v3819 = vpop.permute.xlu0 %3818
  %3820 = vrot.lane.b32.xlu0 %v3804, 110
  %v3821 = vpop.permute.xlu0 %3820
  %3822 = vrot.lane.b32.xlu0 %v3805, 110
  %v3823 = vpop.permute.xlu0 %3822
  %v3824 = vsel %vm258, %v3813, %v3815
  %v3825 = vsel %vm258, %v3815, %v3817
  %v3826 = vsel %vm258, %v3819, %v3821
  %v3827 = vsel %vm258, %v3821, %v3823
  %3834 = vst [vmem:[#allocation3 + $0x90] sm:$0xff] %v3824
  %3835 = vst [vmem:[#allocation3 + $0x98] sm:$0xff] %v3825
  %3836 = vst.msk [vmem:[#allocation3 + $0xa0] sm:$0xff] %vm62, %v3817
  %3837 = vst [vmem:[#allocation3 + $0xa8] sm:$0xff] %v3826
  %3838 = vst [vmem:[#allocation3 + $0xb0] sm:$0xff] %v3827
  %3839 = vst.msk [vmem:[#allocation3 + $0xb8] sm:$0xff] %vm62, %v3823
  %v3840 = vld [vmem:[#allocation2] sm:$0xff]
  %v3841 = vld [vmem:[#allocation2 + $0x8] sm:$0xff]
  %v3842 = vld [vmem:[#allocation2 + $0x10] sm:$0xff]
  %v3843 = vld [vmem:[#allocation2 + $0x18] sm:$0xff]
  %v3844 = vld [vmem:[#allocation2 + $0x20] sm:$0xff]
  %v3845 = vld [vmem:[#allocation2 + $0x28] sm:$0xff]
  %3852 = vrot.lane.b32.xlu0 %v3840, 109
  %v3853 = vpop.permute.xlu0 %3852
  %3854 = vrot.lane.b32.xlu0 %v3841, 109
  %v3855 = vpop.permute.xlu0 %3854
  %3856 = vrot.lane.b32.xlu0 %v3842, 109
  %v3857 = vpop.permute.xlu0 %3856
  %3858 = vrot.lane.b32.xlu0 %v3843, 109
  %v3859 = vpop.permute.xlu0 %3858
  %3860 = vrot.lane.b32.xlu0 %v3844, 109
  %v3861 = vpop.permute.xlu0 %3860
  %3862 = vrot.lane.b32.xlu0 %v3845, 109
  %v3863 = vpop.permute.xlu0 %3862
  %v3864 = vsel %vm299, %v3853, %v3855
  %v3865 = vsel %vm299, %v3855, %v3857
  %v3866 = vsel %vm299, %v3859, %v3861
  %v3867 = vsel %vm299, %v3861, %v3863
  %3874 = vst [vmem:[#allocation3 + $0xc0] sm:$0xff] %v3864
  %3875 = vst [vmem:[#allocation3 + $0xc8] sm:$0xff] %v3865
  %3876 = vst.msk [vmem:[#allocation3 + $0xd0] sm:$0xff] %vm62, %v3857
  %3877 = vst [vmem:[#allocation3 + $0xd8] sm:$0xff] %v3866
  %3878 = vst [vmem:[#allocation3 + $0xe0] sm:$0xff] %v3867
  %3879 = vst.msk [vmem:[#allocation3 + $0xe8] sm:$0xff] %vm62, %v3863
  %v3880 = vld [vmem:[#allocation2] sm:$0xff]
  %v3881 = vld [vmem:[#allocation2 + $0x8] sm:$0xff]
  %v3882 = vld [vmem:[#allocation2 + $0x10] sm:$0xff]
  %v3883 = vld [vmem:[#allocation2 + $0x18] sm:$0xff]
  %v3884 = vld [vmem:[#allocation2 + $0x20] sm:$0xff]
  %v3885 = vld [vmem:[#allocation2 + $0x28] sm:$0xff]
  %3892 = vrot.lane.b32.xlu0 %v3880, 108
  %v3893 = vpop.permute.xlu0 %3892
  %3894 = vrot.lane.b32.xlu0 %v3881, 108
  %v3895 = vpop.permute.xlu0 %3894
  %3896 = vrot.lane.b32.xlu0 %v3882, 108
  %v3897 = vpop.permute.xlu0 %3896
  %3898 = vrot.lane.b32.xlu0 %v3883, 108
  %v3899 = vpop.permute.xlu0 %3898
  %3900 = vrot.lane.b32.xlu0 %v3884, 108
  %v3901 = vpop.permute.xlu0 %3900
  %3902 = vrot.lane.b32.xlu0 %v3885, 108
  %v3903 = vpop.permute.xlu0 %3902
  %v3904 = vsel %vm340, %v3893, %v3895
  %v3905 = vsel %vm340, %v3895, %v3897
  %v3906 = vsel %vm340, %v3899, %v3901
  %v3907 = vsel %vm340, %v3901, %v3903
  %3914 = vst [vmem:[#allocation3 + $0xf0] sm:$0xff] %v3904
  %3915 = vst [vmem:[#allocation3 + $0xf8] sm:$0xff] %v3905
  %3916 = vst.msk [vmem:[#allocation3 + $0x100] sm:$0xff] %vm62, %v3897
  %3917 = vst [vmem:[#allocation3 + $0x108] sm:$0xff] %v3906
  %3918 = vst [vmem:[#allocation3 + $0x110] sm:$0xff] %v3907
  %3919 = vst.msk [vmem:[#allocation3 + $0x118] sm:$0xff] %vm62, %v3903
  %v3920 = vld [vmem:[#allocation2] sm:$0xff]
  %v3921 = vld [vmem:[#allocation2 + $0x8] sm:$0xff]
  %v3922 = vld [vmem:[#allocation2 + $0x10] sm:$0xff]
  %v3923 = vld [vmem:[#allocation2 + $0x18] sm:$0xff]
  %v3924 = vld [vmem:[#allocation2 + $0x20] sm:$0xff]
  %v3925 = vld [vmem:[#allocation2 + $0x28] sm:$0xff]
  %3932 = vrot.lane.b32.xlu0 %v3920, 92
  %v3933 = vpop.permute.xlu0 %3932
  %3934 = vrot.lane.b32.xlu0 %v3921, 92
  %v3935 = vpop.permute.xlu0 %3934
  %3936 = vrot.lane.b32.xlu0 %v3922, 92
  %v3937 = vpop.permute.xlu0 %3936
  %3938 = vrot.lane.b32.xlu0 %v3923, 92
  %v3939 = vpop.permute.xlu0 %3938
  %3940 = vrot.lane.b32.xlu0 %v3924, 92
  %v3941 = vpop.permute.xlu0 %3940
  %3942 = vrot.lane.b32.xlu0 %v3925, 92
  %v3943 = vpop.permute.xlu0 %3942
  %v3944 = vsel %vm381, %v3933, %v3935
  %v3945 = vsel %vm381, %v3935, %v3937
  %v3946 = vsel %vm381, %v3939, %v3941
  %v3947 = vsel %vm381, %v3941, %v3943
  %3954 = vst [vmem:[#allocation3 + $0x120] sm:$0xff] %v3944
  %3955 = vst [vmem:[#allocation3 + $0x128] sm:$0xff] %v3945
  %3956 = vst.msk [vmem:[#allocation3 + $0x130] sm:$0xff] %vm62, %v3937
  %3957 = vst [vmem:[#allocation3 + $0x138] sm:$0xff] %v3946
  %3958 = vst [vmem:[#allocation3 + $0x140] sm:$0xff] %v3947
  %3959 = vst.msk [vmem:[#allocation3 + $0x148] sm:$0xff] %vm62, %v3943
  %v3960 = vld [vmem:[#allocation2] sm:$0xff]
  %v3961 = vld [vmem:[#allocation2 + $0x8] sm:$0xff]
  %v3962 = vld [vmem:[#allocation2 + $0x10] sm:$0xff]
  %v3963 = vld [vmem:[#allocation2 + $0x18] sm:$0xff]
  %v3964 = vld [vmem:[#allocation2 + $0x20] sm:$0xff]
  %v3965 = vld [vmem:[#allocation2 + $0x28] sm:$0xff]
  %3972 = vrot.lane.b32.xlu0 %v3960, 91
  %v3973 = vpop.permute.xlu0 %3972
  %3974 = vrot.lane.b32.xlu0 %v3961, 91
  %v3975 = vpop.permute.xlu0 %3974
  %3976 = vrot.lane.b32.xlu0 %v3962, 91
  %v3977 = vpop.permute.xlu0 %3976
  %3978 = vrot.lane.b32.xlu0 %v3963, 91
  %v3979 = vpop.permute.xlu0 %3978
  %3980 = vrot.lane.b32.xlu0 %v3964, 91
  %v3981 = vpop.permute.xlu0 %3980
  %3982 = vrot.lane.b32.xlu0 %v3965, 91
  %v3983 = vpop.permute.xlu0 %3982
  %v3984 = vsel %vm422, %v3973, %v3975
  %v3985 = vsel %vm422, %v3975, %v3977
  %v3986 = vsel %vm422, %v3979, %v3981
  %v3987 = vsel %vm422, %v3981, %v3983
  %3994 = vst [vmem:[#allocation3 + $0x150] sm:$0xff] %v3984
  %3995 = vst [vmem:[#allocation3 + $0x158] sm:$0xff] %v3985
  %3996 = vst.msk [vmem:[#allocation3 + $0x160] sm:$0xff] %vm62, %v3977
  %3997 = vst [vmem:[#allocation3 + $0x168] sm:$0xff] %v3986
  %3998 = vst [vmem:[#allocation3 + $0x170] sm:$0xff] %v3987
  %3999 = vst.msk [vmem:[#allocation3 + $0x178] sm:$0xff] %vm62, %v3983
  %v4000 = vld [vmem:[#allocation2] sm:$0xff]
  %v4001 = vld [vmem:[#allocation2 + $0x8] sm:$0xff]
  %v4002 = vld [vmem:[#allocation2 + $0x10] sm:$0xff]
  %v4003 = vld [vmem:[#allocation2 + $0x18] sm:$0xff]
  %v4004 = vld [vmem:[#allocation2 + $0x20] sm:$0xff]
  %v4005 = vld [vmem:[#allocation2 + $0x28] sm:$0xff]
  %4012 = vrot.lane.b32.xlu0 %v4000, 90
  %v4013 = vpop.permute.xlu0 %4012
  %4014 = vrot.lane.b32.xlu0 %v4001, 90
  %v4015 = vpop.permute.xlu0 %4014
  %4016 = vrot.lane.b32.xlu0 %v4002, 90
  %v4017 = vpop.permute.xlu0 %4016
  %4018 = vrot.lane.b32.xlu0 %v4003, 90
  %v4019 = vpop.permute.xlu0 %4018
  %4020 = vrot.lane.b32.xlu0 %v4004, 90
  %v4021 = vpop.permute.xlu0 %4020
  %4022 = vrot.lane.b32.xlu0 %v4005, 90
  %v4023 = vpop.permute.xlu0 %4022
  %v4024 = vsel %vm463, %v4013, %v4015
  %v4025 = vsel %vm463, %v4015, %v4017
  %v4026 = vsel %vm463, %v4019, %v4021
  %v4027 = vsel %vm463, %v4021, %v4023
  %4034 = vst [vmem:[#allocation3 + $0x180] sm:$0xff] %v4024
  %4035 = vst [vmem:[#allocation3 + $0x188] sm:$0xff] %v4025
  %4036 = vst.msk [vmem:[#allocation3 + $0x190] sm:$0xff] %vm62, %v4017
  %4037 = vst [vmem:[#allocation3 + $0x198] sm:$0xff] %v4026
  %4038 = vst [vmem:[#allocation3 + $0x1a0] sm:$0xff] %v4027
  %4039 = vst.msk [vmem:[#allocation3 + $0x1a8] sm:$0xff] %vm62, %v4023
  %v4040 = vld [vmem:[#allocation3] sm:$0xff]
  %v4041 = vld [vmem:[#allocation3 + $0x8] sm:$0xff]
  %v4042 = vld [vmem:[#allocation3 + $0x10] sm:$0xff]
  %v4043 = vld [vmem:[#allocation3 + $0x18] sm:$0xff]
  %v4044 = vld [vmem:[#allocation3 + $0x20] sm:$0xff]
  %v4045 = vld [vmem:[#allocation3 + $0x28] sm:$0xff]
  %v4046 = vld [vmem:[#allocation3 + $0x30] sm:$0xff]
  %v4047 = vld [vmem:[#allocation3 + $0x38] sm:$0xff]
  %v4048 = vld [vmem:[#allocation3 + $0x40] sm:$0xff]
  %v4049 = vld [vmem:[#allocation3 + $0x48] sm:$0xff]
  %v4050 = vld [vmem:[#allocation3 + $0x50] sm:$0xff]
  %v4051 = vld [vmem:[#allocation3 + $0x58] sm:$0xff]
  %v4052 = vld [vmem:[#allocation3 + $0x60] sm:$0xff]
  %v4053 = vld [vmem:[#allocation3 + $0x68] sm:$0xff]
  %v4054 = vld [vmem:[#allocation3 + $0x70] sm:$0xff]
  %v4055 = vld [vmem:[#allocation3 + $0x78] sm:$0xff]
  %v4056 = vld [vmem:[#allocation3 + $0x80] sm:$0xff]
  %v4057 = vld [vmem:[#allocation3 + $0x88] sm:$0xff]
  %v4058 = vld [vmem:[#allocation3 + $0x90] sm:$0xff]
  %v4059 = vld [vmem:[#allocation3 + $0x98] sm:$0xff]
  %v4060 = vld [vmem:[#allocation3 + $0xa0] sm:$0xff]
  %v4061 = vld [vmem:[#allocation3 + $0xa8] sm:$0xff]
  %v4062 = vld [vmem:[#allocation3 + $0xb0] sm:$0xff]
  %v4063 = vld [vmem:[#allocation3 + $0xb8] sm:$0xff]
  %v4064 = vld [vmem:[#allocation3 + $0xc0] sm:$0xff]
  %v4065 = vld [vmem:[#allocation3 + $0xc8] sm:$0xff]
  %v4066 = vld [vmem:[#allocation3 + $0xd0] sm:$0xff]
  %v4067 = vld [vmem:[#allocation3 + $0xd8] sm:$0xff]
  %v4068 = vld [vmem:[#allocation3 + $0xe0] sm:$0xff]
  %v4069 = vld [vmem:[#allocation3 + $0xe8] sm:$0xff]
  %v4070 = vld [vmem:[#allocation3 + $0xf0] sm:$0xff]
  %v4071 = vld [vmem:[#allocation3 + $0xf8] sm:$0xff]
  %v4072 = vld [vmem:[#allocation3 + $0x100] sm:$0xff]
  %v4073 = vld [vmem:[#allocation3 + $0x108] sm:$0xff]
  %v4074 = vld [vmem:[#allocation3 + $0x110] sm:$0xff]
  %v4075 = vld [vmem:[#allocation3 + $0x118] sm:$0xff]
  %v4076 = vld [vmem:[#allocation3 + $0x120] sm:$0xff]
  %v4077 = vld [vmem:[#allocation3 + $0x128] sm:$0xff]
  %v4078 = vld [vmem:[#allocation3 + $0x130] sm:$0xff]
  %v4079 = vld [vmem:[#allocation3 + $0x138] sm:$0xff]
  %v4080 = vld [vmem:[#allocation3 + $0x140] sm:$0xff]
  %v4081 = vld [vmem:[#allocation3 + $0x148] sm:$0xff]
  %v4082 = vld [vmem:[#allocation3 + $0x150] sm:$0xff]
  %v4083 = vld [vmem:[#allocation3 + $0x158] sm:$0xff]
  %v4084 = vld [vmem:[#allocation3 + $0x160] sm:$0xff]
  %v4085 = vld [vmem:[#allocation3 + $0x168] sm:$0xff]
  %v4086 = vld [vmem:[#allocation3 + $0x170] sm:$0xff]
  %v4087 = vld [vmem:[#allocation3 + $0x178] sm:$0xff]
  %v4088 = vld [vmem:[#allocation3 + $0x180] sm:$0xff]
  %v4089 = vld [vmem:[#allocation3 + $0x188] sm:$0xff]
  %v4090 = vld [vmem:[#allocation3 + $0x190] sm:$0xff]
  %v4091 = vld [vmem:[#allocation3 + $0x198] sm:$0xff]
  %v4092 = vld [vmem:[#allocation3 + $0x1a0] sm:$0xff]
  %v4093 = vld [vmem:[#allocation3 + $0x1a8] sm:$0xff]
  %4095 = vset.pattern.permute.xlu0 0
  %4096 = vperm.xlu0 %4095, %v3664
  %v4097 = vpop.permute.xlu0 %4096
  %4100 = vset.pattern.permute.xlu0 0
  %4101 = vperm.xlu0 %4100, %v3665
  %v4102 = vpop.permute.xlu0 %4101
  %4105 = vset.pattern.permute.xlu0 0
  %4106 = vperm.xlu0 %4105, %v3666
  %v4107 = vpop.permute.xlu0 %4106
  %4110 = vset.pattern.permute.xlu0 0
  %4111 = vperm.xlu0 %4110, %v3667
  %v4112 = vpop.permute.xlu0 %4111
  %v4122 = vunpack.c.l.b16 %v3656
  %v4123 = vunpack.c.h.b16 %v3656
  %v4124 = vunpack.c.l.b16 %v3657
  %v4125 = vunpack.c.l.b16 %v3658
  %v4126 = vunpack.c.h.b16 %v3658
  %v4127 = vunpack.c.l.b16 %v3659
  %v4128 = vunpack.c.l.b16 %v3660
  %v4129 = vunpack.c.h.b16 %v3660
  %v4130 = vunpack.c.l.b16 %v3661
  %v4131 = vunpack.c.l.b16 %v3662
  %v4132 = vunpack.c.h.b16 %v3662
  %v4133 = vunpack.c.l.b16 %v3663
  %v4134 = vpack.c.b16 %v4125, %v4122
  %v4135 = vpack.c.b16 %v4126, %v4123
  %v4136 = vpack.c.b16 %v4127, %v4124
  %v4137 = vpack.c.b16 %v4131, %v4128
  %v4138 = vpack.c.b16 %v4132, %v4129
  %v4139 = vpack.c.b16 %v4133, %v4130
  %v4145 = vsel %vm584, %v4136, 0
  %v4148 = vsel %vm584, %v4139, 0
  %4150 = vmatprep.subr.bf16.mxu0 %v4041
  %4151 = vmatpush1.bf16.msra.mxu0 %v4040
  %4152 = vmatprep.subr.bf16.mxu0 %v4044
  %4153 = vmatpush1.bf16.msra.mxu0 %v4043
  %4154 = vmatprep.subr.bf16.mxu0 %v4047
  %4155 = vmatpush1.bf16.msra.mxu0 %v4046
  %4156 = vmatprep.subr.bf16.mxu0 %v4050
  %4157 = vmatpush1.bf16.msra.mxu0 %v4049
  %4158 = vmatprep.subr.bf16.mxu0 %v4053
  %4159 = vmatpush1.bf16.msra.mxu0 %v4052
  %4160 = vmatprep.subr.bf16.mxu0 %v4056
  %4161 = vmatpush1.bf16.msra.mxu0 %v4055
  %4162 = vmatprep.subr.bf16.mxu0 %v4059
  %4163 = vmatpush1.bf16.msra.mxu0 %v4058
  %4164 = vmatprep.subr.bf16.mxu0 %v4062
  %4165 = vmatpush1.bf16.msra.mxu0 %v4061
  %4166 = vmatprep.subr.bf16.mxu0 %v4065
  %4167 = vmatpush1.bf16.msra.mxu0 %v4064
  %4168 = vmatprep.subr.bf16.mxu0 %v4068
  %4169 = vmatpush1.bf16.msra.mxu0 %v4067
  %4170 = vmatprep.subr.bf16.mxu0 %v4071
  %4171 = vmatpush1.bf16.msra.mxu0 %v4070
  %4172 = vmatprep.subr.bf16.mxu0 %v4074
  %4173 = vmatpush1.bf16.msra.mxu0 %v4073
  %4174 = vmatprep.subr.bf16.mxu0 %v4077
  %4175 = vmatpush1.bf16.msra.mxu0 %v4076
  %4176 = vmatprep.subr.bf16.mxu0 %v4080
  %4177 = vmatpush1.bf16.msra.mxu0 %v4079
  %4178 = vmatprep.subr.bf16.mxu0 %v4083
  %4179 = vmatpush1.bf16.msra.mxu0 %v4082
  %4180 = vmatprep.subr.bf16.mxu0 %v4086
  %4181 = vmatpush1.bf16.msra.mxu0 %v4085
  %4182 = vmatprep.mubr.bf16.mxu0 %v4135
  %4183 = vmatmul.mubr.bf16.gmra.mrb[0].mxu0 %v4134
  %v4184 = vpop.f32.mrb[0].mxu0
  %v4185 = vadd.f32 %v4097, %v4184
  %v4186 = vpop.f32.mrb[0].mxu0
  %v4187 = vadd.f32 %v4097, %v4186
  %v4188 = vpop.f32.mrb[0].mxu0
  %v4189 = vadd.f32 %v4102, %v4188
  %v4190 = vpop.f32.mrb[0].mxu0
  %v4191 = vadd.f32 %v4102, %v4190
  %4192 = vmatprep.mubr.bf16.mxu0 %v4138
  %4193 = vmatmul.mubr.bf16.gmra.mrb[0].mxu0 %v4137
  %v4194 = vpop.f32.mrb[0].mxu0
  %v4195 = vadd.f32 %v4107, %v4194
  %v4196 = vpop.f32.mrb[0].mxu0
  %v4197 = vadd.f32 %v4107, %v4196
  %v4198 = vpop.f32.mrb[0].mxu0
  %v4199 = vadd.f32 %v4112, %v4198
  %v4200 = vpop.f32.mrb[0].mxu0
  %v4201 = vadd.f32 %v4112, %v4200
  %4202 = vdwg.mxu0
  %4203 = vmatprep.subr.bf16.mxu0 %v4089
  %4204 = vmatpush1.bf16.msra.mxu0 %v4088
  %4205 = vmatprep.subr.bf16.mxu0 %v4092
  %4206 = vmatpush1.bf16.msra.mxu0 %v4091
  %4207 = vmatprep.subr.bf16.mxu0 0
  %4208 = vmatpush1.bf16.msra.mxu0 0
  %4209 = vmatprep.subr.bf16.mxu0 0
  %4210 = vmatpush1.bf16.msra.mxu0 0
  %4211 = vmatprep.subr.bf16.mxu0 0
  %4212 = vmatpush1.bf16.msra.mxu0 0
  %4213 = vmatprep.subr.bf16.mxu0 0
  %4214 = vmatpush1.bf16.msra.mxu0 0
  %4215 = vmatprep.subr.bf16.mxu0 0
  %4216 = vmatpush1.bf16.msra.mxu0 0
  %4217 = vmatprep.subr.bf16.mxu0 0
  %4218 = vmatpush1.bf16.msra.mxu0 0
  %4219 = vmatprep.subr.bf16.mxu0 0
  %4220 = vmatpush1.bf16.msra.mxu0 0
  %4221 = vmatprep.subr.bf16.mxu0 0
  %4222 = vmatpush1.bf16.msra.mxu0 0
  %4223 = vmatprep.subr.bf16.mxu0 0
  %4224 = vmatpush1.bf16.msra.mxu0 0
  %4225 = vmatprep.subr.bf16.mxu0 0
  %4226 = vmatpush1.bf16.msra.mxu0 0
  %4227 = vmatprep.subr.bf16.mxu0 0
  %4228 = vmatpush1.bf16.msra.mxu0 0
  %4229 = vmatprep.subr.bf16.mxu0 0
  %4230 = vmatpush1.bf16.msra.mxu0 0
  %4231 = vmatprep.subr.bf16.mxu0 0
  %4232 = vmatpush1.bf16.msra.mxu0 0
  %4233 = vmatprep.subr.bf16.mxu0 0
  %4234 = vmatpush1.bf16.msra.mxu0 0
  %4235 = vmatprep.mubr.bf16.mxu0 0
  %4236 = vmatmul.mubr.bf16.gmra.mrb[0].mxu0 %v4145
  %v4237 = vpop.f32.mrb[0].mxu0
  %v4238 = vadd.f32 %v4185, %v4237
  %v4239 = vpop.f32.mrb[0].mxu0
  %v4240 = vadd.f32 %v4187, %v4239
  %v4241 = vpop.f32.mrb[0].mxu0
  %v4242 = vadd.f32 %v4189, %v4241
  %v4243 = vpop.f32.mrb[0].mxu0
  %v4244 = vadd.f32 %v4191, %v4243
  %4245 = vmatprep.mubr.bf16.mxu0 0
  %4246 = vmatmul.mubr.bf16.gmra.mrb[0].mxu0 %v4148
  %v4247 = vpop.f32.mrb[0].mxu0
  %v4248 = vadd.f32 %v4195, %v4247
  %v4249 = vpop.f32.mrb[0].mxu0
  %v4250 = vadd.f32 %v4197, %v4249
  %v4251 = vpop.f32.mrb[0].mxu0
  %v4252 = vadd.f32 %v4199, %v4251
  %v4253 = vpop.f32.mrb[0].mxu0
  %v4254 = vadd.f32 %v4201, %v4253
  %4255 = vdwg.mxu0
  %4256 = vmatprep.subr.bf16.mxu0 0
  %4257 = vmatpush1.bf16.msra.mxu0 %v4042
  %4258 = vmatprep.subr.bf16.mxu0 0
  %4259 = vmatpush1.bf16.msra.mxu0 %v4045
  %4260 = vmatprep.subr.bf16.mxu0 0
  %4261 = vmatpush1.bf16.msra.mxu0 %v4048
  %4262 = vmatprep.subr.bf16.mxu0 0
  %4263 = vmatpush1.bf16.msra.mxu0 %v4051
  %4264 = vmatprep.subr.bf16.mxu0 0
  %4265 = vmatpush1.bf16.msra.mxu0 %v4054
  %4266 = vmatprep.subr.bf16.mxu0 0
  %4267 = vmatpush1.bf16.msra.mxu0 %v4057
  %4268 = vmatprep.subr.bf16.mxu0 0
  %4269 = vmatpush1.bf16.msra.mxu0 %v4060
  %4270 = vmatprep.subr.bf16.mxu0 0
  %4271 = vmatpush1.bf16.msra.mxu0 %v4063
  %4272 = vmatprep.subr.bf16.mxu0 0
  %4273 = vmatpush1.bf16.msra.mxu0 %v4066
  %4274 = vmatprep.subr.bf16.mxu0 0
  %4275 = vmatpush1.bf16.msra.mxu0 %v4069
  %4276 = vmatprep.subr.bf16.mxu0 0
  %4277 = vmatpush1.bf16.msra.mxu0 %v4072
  %4278 = vmatprep.subr.bf16.mxu0 0
  %4279 = vmatpush1.bf16.msra.mxu0 %v4075
  %4280 = vmatprep.subr.bf16.mxu0 0
  %4281 = vmatpush1.bf16.msra.mxu0 %v4078
  %4282 = vmatprep.subr.bf16.mxu0 0
  %4283 = vmatpush1.bf16.msra.mxu0 %v4081
  %4284 = vmatprep.subr.bf16.mxu0 0
  %4285 = vmatpush1.bf16.msra.mxu0 %v4084
  %4286 = vmatprep.subr.bf16.mxu0 0
  %4287 = vmatpush1.bf16.msra.mxu0 %v4087
  %4288 = vmatprep.mubr.bf16.mxu0 %v4135
  %4289 = vmatmul.mubr.bf16.gmra.mrb[0].mxu0 %v4134
  %v4290 = vpop.f32.mrb[0].mxu0
  %v4291 = vadd.f32 %v4097, %v4290
  %v4292 = vpop.f32.mrb[0].mxu0
  %v4293 = vpop.f32.mrb[0].mxu0
  %v4294 = vadd.f32 %v4102, %v4293
  %v4295 = vpop.f32.mrb[0].mxu0
  %4296 = vmatprep.mubr.bf16.mxu0 %v4138
  %4297 = vmatmul.mubr.bf16.gmra.mrb[0].mxu0 %v4137
  %v4298 = vpop.f32.mrb[0].mxu0
  %v4299 = vadd.f32 %v4107, %v4298
  %v4300 = vpop.f32.mrb[0].mxu0
  %v4301 = vpop.f32.mrb[0].mxu0
  %v4302 = vadd.f32 %v4112, %v4301
  %v4303 = vpop.f32.mrb[0].mxu0
  %4304 = vdwg.mxu0
  %4305 = vmatprep.subr.bf16.mxu0 0
  %4306 = vmatpush1.bf16.msra.mxu0 %v4090
  %4307 = vmatprep.subr.bf16.mxu0 0
  %4308 = vmatpush1.bf16.msra.mxu0 %v4093
  %4309 = vmatprep.subr.bf16.mxu0 0
  %4310 = vmatpush1.bf16.msra.mxu0 0
  %4311 = vmatprep.subr.bf16.mxu0 0
  %4312 = vmatpush1.bf16.msra.mxu0 0
  %4313 = vmatprep.subr.bf16.mxu0 0
  %4314 = vmatpush1.bf16.msra.mxu0 0
  %4315 = vmatprep.subr.bf16.mxu0 0
  %4316 = vmatpush1.bf16.msra.mxu0 0
  %4317 = vmatprep.subr.bf16.mxu0 0
  %4318 = vmatpush1.bf16.msra.mxu0 0
  %4319 = vmatprep.subr.bf16.mxu0 0
  %4320 = vmatpush1.bf16.msra.mxu0 0
  %4321 = vmatprep.subr.bf16.mxu0 0
  %4322 = vmatpush1.bf16.msra.mxu0 0
  %4323 = vmatprep.subr.bf16.mxu0 0
  %4324 = vmatpush1.bf16.msra.mxu0 0
  %4325 = vmatprep.subr.bf16.mxu0 0
  %4326 = vmatpush1.bf16.msra.mxu0 0
  %4327 = vmatprep.subr.bf16.mxu0 0
  %4328 = vmatpush1.bf16.msra.mxu0 0
  %4329 = vmatprep.subr.bf16.mxu0 0
  %4330 = vmatpush1.bf16.msra.mxu0 0
  %4331 = vmatprep.subr.bf16.mxu0 0
  %4332 = vmatpush1.bf16.msra.mxu0 0
  %4333 = vmatprep.subr.bf16.mxu0 0
  %4334 = vmatpush1.bf16.msra.mxu0 0
  %4335 = vmatprep.subr.bf16.mxu0 0
  %4336 = vmatpush1.bf16.msra.mxu0 0
  %4337 = vmatprep.mubr.bf16.mxu0 0
  %4338 = vmatmul.mubr.bf16.gmra.mrb[0].mxu0 %v4145
  %v4339 = vpop.f32.mrb[0].mxu0
  %v4340 = vadd.f32 %v4291, %v4339
  %v4341 = vpop.f32.mrb[0].mxu0
  %v4342 = vpop.f32.mrb[0].mxu0
  %v4343 = vadd.f32 %v4294, %v4342
  %v4344 = vpop.f32.mrb[0].mxu0
  %4345 = vmatprep.mubr.bf16.mxu0 0
  %4346 = vmatmul.mubr.bf16.gmra.mrb[0].mxu0 %v4148
  %v4347 = vpop.f32.mrb[0].mxu0
  %v4348 = vadd.f32 %v4299, %v4347
  %v4349 = vpop.f32.mrb[0].mxu0
  %v4350 = vpop.f32.mrb[0].mxu0
  %v4351 = vadd.f32 %v4302, %v4350
  %v4352 = vpop.f32.mrb[0].mxu0
  %4353 = vdwg.mxu0
  %v4354 = vld [vmem:[%s11] sm:$0x7]
  %v4356 = vlaneseq
  %v4357 = vshrl.u32 %v4356, 7
  %v4358 = vsub.s32 0, %v4357
  %v4359 = vrot.slane %v4354, %v4358
  %v4360 = vlaneseq
  %v4361 = vshrl.u32 %v4360, 7
  %v4362 = vsub.s32 1, %v4361
  %v4363 = vrot.slane %v4354, %v4362
  %v4364 = vlaneseq
  %v4365 = vshrl.u32 %v4364, 7
  %v4366 = vsub.s32 2, %v4365
  %v4367 = vrot.slane %v4354, %v4366
  %v4371 = vmul.f32 %v4238, %v4359
  %v4372 = vmul.f32 %v4240, %v4363
  %v4373 = vmul.f32 %v4340, %v4367
  %v4374 = vmul.f32 %v4242, %v4359
  %v4375 = vmul.f32 %v4244, %v4363
  %v4376 = vmul.f32 %v4343, %v4367
  %v4377 = vmul.f32 %v4248, %v4359
  %v4378 = vmul.f32 %v4250, %v4363
  %v4379 = vmul.f32 %v4348, %v4367
  %v4380 = vmul.f32 %v4252, %v4359
  %v4381 = vmul.f32 %v4254, %v4363
  %v4382 = vmul.f32 %v4351, %v4367
  %v4383 = vld [vmem:[%s0] sm:$0xff]
  %v4384 = vld [vmem:[%s0 + $0x8] sm:$0xff]
  %v4385 = vld [vmem:[%s0 + $0x10] sm:$0xff]
  %v4386 = vld [vmem:[%s0 + $0x18] sm:$0xff]
  %v4387 = vld [vmem:[%s0 + $0x20] sm:$0xff]
  %v4388 = vld [vmem:[%s0 + $0x28] sm:$0xff]
  %v4389 = vld [vmem:[%s0 + $0x30] sm:$0xff]
  %v4390 = vld [vmem:[%s0 + $0x38] sm:$0xff]
  %v4391 = vld [vmem:[%s0 + $0x40] sm:$0xff]
  %v4392 = vld [vmem:[%s0 + $0x48] sm:$0xff]
  %v4393 = vld [vmem:[%s0 + $0x50] sm:$0xff]
  %v4394 = vld [vmem:[%s0 + $0x58] sm:$0xff]
  %v4395 = vadd.f32 %v4371, %v4383
  %v4396 = vadd.f32 %v4372, %v4384
  %v4397 = vadd.f32 %v4373, %v4385
  %v4398 = vadd.f32 %v4374, %v4386
  %v4399 = vadd.f32 %v4375, %v4387
  %v4400 = vadd.f32 %v4376, %v4388
  %v4401 = vadd.f32 %v4377, %v4389
  %v4402 = vadd.f32 %v4378, %v4390
  %v4403 = vadd.f32 %v4379, %v4391
  %v4404 = vadd.f32 %v4380, %v4392
  %v4405 = vadd.f32 %v4381, %v4393
  %v4406 = vadd.f32 %v4382, %v4394
  %4407 = vst [vmem:[%s12] sm:$0xff] %v4395
  %4408 = vst [vmem:[%s12 + $0x8] sm:$0xff] %v4396
  %4409 = vst.msk [vmem:[%s12 + $0x10] sm:$0xff] %vm62, %v4397
  %4410 = vst [vmem:[%s12 + $0x18] sm:$0xff] %v4398
  %4411 = vst [vmem:[%s12 + $0x20] sm:$0xff] %v4399
  %4412 = vst.msk [vmem:[%s12 + $0x28] sm:$0xff] %vm62, %v4400
  %4413 = vst [vmem:[%s12 + $0x30] sm:$0xff] %v4401
  %4414 = vst [vmem:[%s12 + $0x38] sm:$0xff] %v4402
  %4415 = vst.msk [vmem:[%s12 + $0x40] sm:$0xff] %vm62, %v4403
  %4416 = vst [vmem:[%s12 + $0x48] sm:$0xff] %v4404
  %4417 = vst [vmem:[%s12 + $0x50] sm:$0xff] %v4405
  %4418 = vst.msk [vmem:[%s12 + $0x58] sm:$0xff] %vm62, %v4406
  %s4419 = scalar_lea.vmem %s0, 96
  %v4420 = vld [vmem:[%s4419] sm:$0xff]
  %v4421 = vld [vmem:[%s4419 + $0x8] sm:$0xff]
  %v4422 = vld [vmem:[%s4419 + $0x10] sm:$0xff]
  %v4423 = vld [vmem:[%s4419 + $0x18] sm:$0xff]
  %v4424 = vld [vmem:[%s4419 + $0x20] sm:$0xff]
  %v4425 = vld [vmem:[%s4419 + $0x28] sm:$0xff]
  %v4426 = vld [vmem:[%s4419 + $0x30] sm:$0xff]
  %v4427 = vld [vmem:[%s4419 + $0x38] sm:$0xff]
  %v4428 = vld [vmem:[%s4419 + $0x40] sm:$0xff]
  %v4429 = vld [vmem:[%s4419 + $0x48] sm:$0xff]
  %v4430 = vld [vmem:[%s4419 + $0x50] sm:$0xff]
  %v4431 = vld [vmem:[%s4419 + $0x58] sm:$0xff]
  %4432 = vst [vmem:[#allocation4] sm:$0xff] %v4420
  %4433 = vst [vmem:[#allocation4 + $0x8] sm:$0xff] %v4421
  %4434 = vst.msk [vmem:[#allocation4 + $0x10] sm:$0xff] %vm62, %v4422
  %4435 = vst [vmem:[#allocation4 + $0x18] sm:$0xff] %v4423
  %4436 = vst [vmem:[#allocation4 + $0x20] sm:$0xff] %v4424
  %4437 = vst.msk [vmem:[#allocation4 + $0x28] sm:$0xff] %vm62, %v4425
  %4438 = vst [vmem:[#allocation4 + $0x30] sm:$0xff] %v4426
  %4439 = vst [vmem:[#allocation4 + $0x38] sm:$0xff] %v4427
  %4440 = vst.msk [vmem:[#allocation4 + $0x40] sm:$0xff] %vm62, %v4428
  %4441 = vst [vmem:[#allocation4 + $0x48] sm:$0xff] %v4429
  %4442 = vst [vmem:[#allocation4 + $0x50] sm:$0xff] %v4430
  %4443 = vst.msk [vmem:[#allocation4 + $0x58] sm:$0xff] %vm62, %v4431
  %v4444 = vld [vmem:[#allocation4] sm:$0xff]
  %v4445 = vld [vmem:[#allocation4 + $0x8] sm:$0xff]
  %v4446 = vld [vmem:[#allocation4 + $0x10] sm:$0xff]
  %v4447 = vld [vmem:[#allocation4 + $0x18] sm:$0xff]
  %v4448 = vld [vmem:[#allocation4 + $0x20] sm:$0xff]
  %v4449 = vld [vmem:[#allocation4 + $0x28] sm:$0xff]
  %v4450 = vld [vmem:[#allocation4 + $0x30] sm:$0xff]
  %v4451 = vld [vmem:[#allocation4 + $0x38] sm:$0xff]
  %v4452 = vld [vmem:[#allocation4 + $0x40] sm:$0xff]
  %v4453 = vld [vmem:[#allocation4 + $0x48] sm:$0xff]
  %v4454 = vld [vmem:[#allocation4 + $0x50] sm:$0xff]
  %v4455 = vld [vmem:[#allocation4 + $0x58] sm:$0xff]
  %v4456 = vld [vmem:[%s1] sm:$0xff]
  %v4457 = vld [vmem:[%s1 + $0x8] sm:$0xf]
  %v4458 = vld [vmem:[%s1 + $0xc] sm:$0xff]
  %v4459 = vld [vmem:[%s1 + $0x14] sm:$0xf]
  %v4460 = vld [vmem:[%s1 + $0x18] sm:$0xff]
  %v4461 = vld [vmem:[%s1 + $0x20] sm:$0xf]
  %v4462 = vld [vmem:[%s1 + $0x24] sm:$0xff]
  %v4463 = vld [vmem:[%s1 + $0x2c] sm:$0xf]
  %v4464 = vld [vmem:[%s2] sm:$0xff]
  %v4465 = vld [vmem:[%s2 + $0x8] sm:$0xff]
  %v4466 = vld [vmem:[%s2 + $0x10] sm:$0xff]
  %v4467 = vld [vmem:[%s2 + $0x18] sm:$0xff]
  %v4468 = vpack.c.bf16 %v4447, %v4444
  %v4469 = vpack.c.bf16 %v4448, %v4445
  %v4470 = vpack.c.bf16 %v4449, %v4446
  %v4471 = vpack.c.bf16 %v4453, %v4450
  %v4472 = vpack.c.bf16 %v4454, %v4451
  %v4473 = vpack.c.bf16 %v4455, %v4452
  %4480 = vrot.lane.b32.xlu0 %v4468, 19
  %v4481 = vpop.permute.xlu0 %4480
  %4482 = vrot.lane.b32.xlu0 %v4469, 19
  %v4483 = vpop.permute.xlu0 %4482
  %4484 = vrot.lane.b32.xlu0 %v4470, 19
  %v4485 = vpop.permute.xlu0 %4484
  %4486 = vrot.lane.b32.xlu0 %v4471, 19
  %v4487 = vpop.permute.xlu0 %4486
  %4488 = vrot.lane.b32.xlu0 %v4472, 19
  %v4489 = vpop.permute.xlu0 %4488
  %4490 = vrot.lane.b32.xlu0 %v4473, 19
  %v4491 = vpop.permute.xlu0 %4490
  %v4492 = vsel %vm121, %v4481, %v4483
  %v4493 = vsel %vm121, %v4483, %v4485
  %v4494 = vsel %vm121, %v4487, %v4489
  %v4495 = vsel %vm121, %v4489, %v4491
  %4502 = vst.msk [vmem:[#allocation2] sm:$0xff] %vm132, %v4481
  %4503 = vst [vmem:[#allocation2 + $0x8] sm:$0xff] %v4492
  %4504 = vst.msk [vmem:[#allocation2 + $0x10] sm:$0xff] %vm135, %v4493
  %4505 = vst.msk [vmem:[#allocation2 + $0x18] sm:$0xff] %vm132, %v4487
  %4506 = vst [vmem:[#allocation2 + $0x20] sm:$0xff] %v4494
  %4507 = vst.msk [vmem:[#allocation2 + $0x28] sm:$0xff] %vm135, %v4495
  %v4508 = vld [vmem:[#allocation2] sm:$0xff]
  %v4509 = vld [vmem:[#allocation2 + $0x8] sm:$0xff]
  %v4510 = vld [vmem:[#allocation2 + $0x10] sm:$0xff]
  %v4511 = vld [vmem:[#allocation2 + $0x18] sm:$0xff]
  %v4512 = vld [vmem:[#allocation2 + $0x20] sm:$0xff]
  %v4513 = vld [vmem:[#allocation2 + $0x28] sm:$0xff]
  %4514 = vst [vmem:[#allocation3] sm:$0xff] %v4508
  %4515 = vst [vmem:[#allocation3 + $0x8] sm:$0xff] %v4509
  %4516 = vst.msk [vmem:[#allocation3 + $0x10] sm:$0xff] %vm62, %v4510
  %4517 = vst [vmem:[#allocation3 + $0x18] sm:$0xff] %v4511
  %4518 = vst [vmem:[#allocation3 + $0x20] sm:$0xff] %v4512
  %4519 = vst.msk [vmem:[#allocation3 + $0x28] sm:$0xff] %vm62, %v4513
  %v4520 = vld [vmem:[#allocation2] sm:$0xff]
  %v4521 = vld [vmem:[#allocation2 + $0x8] sm:$0xff]
  %v4522 = vld [vmem:[#allocation2 + $0x10] sm:$0xff]
  %v4523 = vld [vmem:[#allocation2 + $0x18] sm:$0xff]
  %v4524 = vld [vmem:[#allocation2 + $0x20] sm:$0xff]
  %v4525 = vld [vmem:[#allocation2 + $0x28] sm:$0xff]
  %4532 = vrot.lane.b32.xlu0 %v4520, 127
  %v4533 = vpop.permute.xlu0 %4532
  %4534 = vrot.lane.b32.xlu0 %v4521, 127
  %v4535 = vpop.permute.xlu0 %4534
  %4536 = vrot.lane.b32.xlu0 %v4522, 127
  %v4537 = vpop.permute.xlu0 %4536
  %4538 = vrot.lane.b32.xlu0 %v4523, 127
  %v4539 = vpop.permute.xlu0 %4538
  %4540 = vrot.lane.b32.xlu0 %v4524, 127
  %v4541 = vpop.permute.xlu0 %4540
  %4542 = vrot.lane.b32.xlu0 %v4525, 127
  %v4543 = vpop.permute.xlu0 %4542
  %v4544 = vsel %vm176, %v4533, %v4535
  %v4545 = vsel %vm176, %v4535, %v4537
  %v4546 = vsel %vm176, %v4539, %v4541
  %v4547 = vsel %vm176, %v4541, %v4543
  %4554 = vst [vmem:[#allocation3 + $0x30] sm:$0xff] %v4544
  %4555 = vst [vmem:[#allocation3 + $0x38] sm:$0xff] %v4545
  %4556 = vst.msk [vmem:[#allocation3 + $0x40] sm:$0xff] %vm62, %v4537
  %4557 = vst [vmem:[#allocation3 + $0x48] sm:$0xff] %v4546
  %4558 = vst [vmem:[#allocation3 + $0x50] sm:$0xff] %v4547
  %4559 = vst.msk [vmem:[#allocation3 + $0x58] sm:$0xff] %vm62, %v4543
  %v4560 = vld [vmem:[#allocation2] sm:$0xff]
  %v4561 = vld [vmem:[#allocation2 + $0x8] sm:$0xff]
  %v4562 = vld [vmem:[#allocation2 + $0x10] sm:$0xff]
  %v4563 = vld [vmem:[#allocation2 + $0x18] sm:$0xff]
  %v4564 = vld [vmem:[#allocation2 + $0x20] sm:$0xff]
  %v4565 = vld [vmem:[#allocation2 + $0x28] sm:$0xff]
  %4572 = vrot.lane.b32.xlu0 %v4560, 126
  %v4573 = vpop.permute.xlu0 %4572
  %4574 = vrot.lane.b32.xlu0 %v4561, 126
  %v4575 = vpop.permute.xlu0 %4574
  %4576 = vrot.lane.b32.xlu0 %v4562, 126
  %v4577 = vpop.permute.xlu0 %4576
  %4578 = vrot.lane.b32.xlu0 %v4563, 126
  %v4579 = vpop.permute.xlu0 %4578
  %4580 = vrot.lane.b32.xlu0 %v4564, 126
  %v4581 = vpop.permute.xlu0 %4580
  %4582 = vrot.lane.b32.xlu0 %v4565, 126
  %v4583 = vpop.permute.xlu0 %4582
  %v4584 = vsel %vm217, %v4573, %v4575
  %v4585 = vsel %vm217, %v4575, %v4577
  %v4586 = vsel %vm217, %v4579, %v4581
  %v4587 = vsel %vm217, %v4581, %v4583
  %4594 = vst [vmem:[#allocation3 + $0x60] sm:$0xff] %v4584
  %4595 = vst [vmem:[#allocation3 + $0x68] sm:$0xff] %v4585
  %4596 = vst.msk [vmem:[#allocation3 + $0x70] sm:$0xff] %vm62, %v4577
  %4597 = vst [vmem:[#allocation3 + $0x78] sm:$0xff] %v4586
  %4598 = vst [vmem:[#allocation3 + $0x80] sm:$0xff] %v4587
  %4599 = vst.msk [vmem:[#allocation3 + $0x88] sm:$0xff] %vm62, %v4583
  %v4600 = vld [vmem:[#allocation2] sm:$0xff]
  %v4601 = vld [vmem:[#allocation2 + $0x8] sm:$0xff]
  %v4602 = vld [vmem:[#allocation2 + $0x10] sm:$0xff]
  %v4603 = vld [vmem:[#allocation2 + $0x18] sm:$0xff]
  %v4604 = vld [vmem:[#allocation2 + $0x20] sm:$0xff]
  %v4605 = vld [vmem:[#allocation2 + $0x28] sm:$0xff]
  %4612 = vrot.lane.b32.xlu0 %v4600, 110
  %v4613 = vpop.permute.xlu0 %4612
  %4614 = vrot.lane.b32.xlu0 %v4601, 110
  %v4615 = vpop.permute.xlu0 %4614
  %4616 = vrot.lane.b32.xlu0 %v4602, 110
  %v4617 = vpop.permute.xlu0 %4616
  %4618 = vrot.lane.b32.xlu0 %v4603, 110
  %v4619 = vpop.permute.xlu0 %4618
  %4620 = vrot.lane.b32.xlu0 %v4604, 110
  %v4621 = vpop.permute.xlu0 %4620
  %4622 = vrot.lane.b32.xlu0 %v4605, 110
  %v4623 = vpop.permute.xlu0 %4622
  %v4624 = vsel %vm258, %v4613, %v4615
  %v4625 = vsel %vm258, %v4615, %v4617
  %v4626 = vsel %vm258, %v4619, %v4621
  %v4627 = vsel %vm258, %v4621, %v4623
  %4634 = vst [vmem:[#allocation3 + $0x90] sm:$0xff] %v4624
  %4635 = vst [vmem:[#allocation3 + $0x98] sm:$0xff] %v4625
  %4636 = vst.msk [vmem:[#allocation3 + $0xa0] sm:$0xff] %vm62, %v4617
  %4637 = vst [vmem:[#allocation3 + $0xa8] sm:$0xff] %v4626
  %4638 = vst [vmem:[#allocation3 + $0xb0] sm:$0xff] %v4627
  %4639 = vst.msk [vmem:[#allocation3 + $0xb8] sm:$0xff] %vm62, %v4623
  %v4640 = vld [vmem:[#allocation2] sm:$0xff]
  %v4641 = vld [vmem:[#allocation2 + $0x8] sm:$0xff]
  %v4642 = vld [vmem:[#allocation2 + $0x10] sm:$0xff]
  %v4643 = vld [vmem:[#allocation2 + $0x18] sm:$0xff]
  %v4644 = vld [vmem:[#allocation2 + $0x20] sm:$0xff]
  %v4645 = vld [vmem:[#allocation2 + $0x28] sm:$0xff]
  %4652 = vrot.lane.b32.xlu0 %v4640, 109
  %v4653 = vpop.permute.xlu0 %4652
  %4654 = vrot.lane.b32.xlu0 %v4641, 109
  %v4655 = vpop.permute.xlu0 %4654
  %4656 = vrot.lane.b32.xlu0 %v4642, 109
  %v4657 = vpop.permute.xlu0 %4656
  %4658 = vrot.lane.b32.xlu0 %v4643, 109
  %v4659 = vpop.permute.xlu0 %4658
  %4660 = vrot.lane.b32.xlu0 %v4644, 109
  %v4661 = vpop.permute.xlu0 %4660
  %4662 = vrot.lane.b32.xlu0 %v4645, 109
  %v4663 = vpop.permute.xlu0 %4662
  %v4664 = vsel %vm299, %v4653, %v4655
  %v4665 = vsel %vm299, %v4655, %v4657
  %v4666 = vsel %vm299, %v4659, %v4661
  %v4667 = vsel %vm299, %v4661, %v4663
  %4674 = vst [vmem:[#allocation3 + $0xc0] sm:$0xff] %v4664
  %4675 = vst [vmem:[#allocation3 + $0xc8] sm:$0xff] %v4665
  %4676 = vst.msk [vmem:[#allocation3 + $0xd0] sm:$0xff] %vm62, %v4657
  %4677 = vst [vmem:[#allocation3 + $0xd8] sm:$0xff] %v4666
  %4678 = vst [vmem:[#allocation3 + $0xe0] sm:$0xff] %v4667
  %4679 = vst.msk [vmem:[#allocation3 + $0xe8] sm:$0xff] %vm62, %v4663
  %v4680 = vld [vmem:[#allocation2] sm:$0xff]
  %v4681 = vld [vmem:[#allocation2 + $0x8] sm:$0xff]
  %v4682 = vld [vmem:[#allocation2 + $0x10] sm:$0xff]
  %v4683 = vld [vmem:[#allocation2 + $0x18] sm:$0xff]
  %v4684 = vld [vmem:[#allocation2 + $0x20] sm:$0xff]
  %v4685 = vld [vmem:[#allocation2 + $0x28] sm:$0xff]
  %4692 = vrot.lane.b32.xlu0 %v4680, 108
  %v4693 = vpop.permute.xlu0 %4692
  %4694 = vrot.lane.b32.xlu0 %v4681, 108
  %v4695 = vpop.permute.xlu0 %4694
  %4696 = vrot.lane.b32.xlu0 %v4682, 108
  %v4697 = vpop.permute.xlu0 %4696
  %4698 = vrot.lane.b32.xlu0 %v4683, 108
  %v4699 = vpop.permute.xlu0 %4698
  %4700 = vrot.lane.b32.xlu0 %v4684, 108
  %v4701 = vpop.permute.xlu0 %4700
  %4702 = vrot.lane.b32.xlu0 %v4685, 108
  %v4703 = vpop.permute.xlu0 %4702
  %v4704 = vsel %vm340, %v4693, %v4695
  %v4705 = vsel %vm340, %v4695, %v4697
  %v4706 = vsel %vm340, %v4699, %v4701
  %v4707 = vsel %vm340, %v4701, %v4703
  %4714 = vst [vmem:[#allocation3 + $0xf0] sm:$0xff] %v4704
  %4715 = vst [vmem:[#allocation3 + $0xf8] sm:$0xff] %v4705
  %4716 = vst.msk [vmem:[#allocation3 + $0x100] sm:$0xff] %vm62, %v4697
  %4717 = vst [vmem:[#allocation3 + $0x108] sm:$0xff] %v4706
  %4718 = vst [vmem:[#allocation3 + $0x110] sm:$0xff] %v4707
  %4719 = vst.msk [vmem:[#allocation3 + $0x118] sm:$0xff] %vm62, %v4703
  %v4720 = vld [vmem:[#allocation2] sm:$0xff]
  %v4721 = vld [vmem:[#allocation2 + $0x8] sm:$0xff]
  %v4722 = vld [vmem:[#allocation2 + $0x10] sm:$0xff]
  %v4723 = vld [vmem:[#allocation2 + $0x18] sm:$0xff]
  %v4724 = vld [vmem:[#allocation2 + $0x20] sm:$0xff]
  %v4725 = vld [vmem:[#allocation2 + $0x28] sm:$0xff]
  %4732 = vrot.lane.b32.xlu0 %v4720, 92
  %v4733 = vpop.permute.xlu0 %4732
  %4734 = vrot.lane.b32.xlu0 %v4721, 92
  %v4735 = vpop.permute.xlu0 %4734
  %4736 = vrot.lane.b32.xlu0 %v4722, 92
  %v4737 = vpop.permute.xlu0 %4736
  %4738 = vrot.lane.b32.xlu0 %v4723, 92
  %v4739 = vpop.permute.xlu0 %4738
  %4740 = vrot.lane.b32.xlu0 %v4724, 92
  %v4741 = vpop.permute.xlu0 %4740
  %4742 = vrot.lane.b32.xlu0 %v4725, 92
  %v4743 = vpop.permute.xlu0 %4742
  %v4744 = vsel %vm381, %v4733, %v4735
  %v4745 = vsel %vm381, %v4735, %v4737
  %v4746 = vsel %vm381, %v4739, %v4741
  %v4747 = vsel %vm381, %v4741, %v4743
  %4754 = vst [vmem:[#allocation3 + $0x120] sm:$0xff] %v4744
  %4755 = vst [vmem:[#allocation3 + $0x128] sm:$0xff] %v4745
  %4756 = vst.msk [vmem:[#allocation3 + $0x130] sm:$0xff] %vm62, %v4737
  %4757 = vst [vmem:[#allocation3 + $0x138] sm:$0xff] %v4746
  %4758 = vst [vmem:[#allocation3 + $0x140] sm:$0xff] %v4747
  %4759 = vst.msk [vmem:[#allocation3 + $0x148] sm:$0xff] %vm62, %v4743
  %v4760 = vld [vmem:[#allocation2] sm:$0xff]
  %v4761 = vld [vmem:[#allocation2 + $0x8] sm:$0xff]
  %v4762 = vld [vmem:[#allocation2 + $0x10] sm:$0xff]
  %v4763 = vld [vmem:[#allocation2 + $0x18] sm:$0xff]
  %v4764 = vld [vmem:[#allocation2 + $0x20] sm:$0xff]
  %v4765 = vld [vmem:[#allocation2 + $0x28] sm:$0xff]
  %4772 = vrot.lane.b32.xlu0 %v4760, 91
  %v4773 = vpop.permute.xlu0 %4772
  %4774 = vrot.lane.b32.xlu0 %v4761, 91
  %v4775 = vpop.permute.xlu0 %4774
  %4776 = vrot.lane.b32.xlu0 %v4762, 91
  %v4777 = vpop.permute.xlu0 %4776
  %4778 = vrot.lane.b32.xlu0 %v4763, 91
  %v4779 = vpop.permute.xlu0 %4778
  %4780 = vrot.lane.b32.xlu0 %v4764, 91
  %v4781 = vpop.permute.xlu0 %4780
  %4782 = vrot.lane.b32.xlu0 %v4765, 91
  %v4783 = vpop.permute.xlu0 %4782
  %v4784 = vsel %vm422, %v4773, %v4775
  %v4785 = vsel %vm422, %v4775, %v4777
  %v4786 = vsel %vm422, %v4779, %v4781
  %v4787 = vsel %vm422, %v4781, %v4783
  %4794 = vst [vmem:[#allocation3 + $0x150] sm:$0xff] %v4784
  %4795 = vst [vmem:[#allocation3 + $0x158] sm:$0xff] %v4785
  %4796 = vst.msk [vmem:[#allocation3 + $0x160] sm:$0xff] %vm62, %v4777
  %4797 = vst [vmem:[#allocation3 + $0x168] sm:$0xff] %v4786
  %4798 = vst [vmem:[#allocation3 + $0x170] sm:$0xff] %v4787
  %4799 = vst.msk [vmem:[#allocation3 + $0x178] sm:$0xff] %vm62, %v4783
  %v4800 = vld [vmem:[#allocation2] sm:$0xff]
  %v4801 = vld [vmem:[#allocation2 + $0x8] sm:$0xff]
  %v4802 = vld [vmem:[#allocation2 + $0x10] sm:$0xff]
  %v4803 = vld [vmem:[#allocation2 + $0x18] sm:$0xff]
  %v4804 = vld [vmem:[#allocation2 + $0x20] sm:$0xff]
  %v4805 = vld [vmem:[#allocation2 + $0x28] sm:$0xff]
  %4812 = vrot.lane.b32.xlu0 %v4800, 90
  %v4813 = vpop.permute.xlu0 %4812
  %4814 = vrot.lane.b32.xlu0 %v4801, 90
  %v4815 = vpop.permute.xlu0 %4814
  %4816 = vrot.lane.b32.xlu0 %v4802, 90
  %v4817 = vpop.permute.xlu0 %4816
  %4818 = vrot.lane.b32.xlu0 %v4803, 90
  %v4819 = vpop.permute.xlu0 %4818
  %4820 = vrot.lane.b32.xlu0 %v4804, 90
  %v4821 = vpop.permute.xlu0 %4820
  %4822 = vrot.lane.b32.xlu0 %v4805, 90
  %v4823 = vpop.permute.xlu0 %4822
  %v4824 = vsel %vm463, %v4813, %v4815
  %v4825 = vsel %vm463, %v4815, %v4817
  %v4826 = vsel %vm463, %v4819, %v4821
  %v4827 = vsel %vm463, %v4821, %v4823
  %4834 = vst [vmem:[#allocation3 + $0x180] sm:$0xff] %v4824
  %4835 = vst [vmem:[#allocation3 + $0x188] sm:$0xff] %v4825
  %4836 = vst.msk [vmem:[#allocation3 + $0x190] sm:$0xff] %vm62, %v4817
  %4837 = vst [vmem:[#allocation3 + $0x198] sm:$0xff] %v4826
  %4838 = vst [vmem:[#allocation3 + $0x1a0] sm:$0xff] %v4827
  %4839 = vst.msk [vmem:[#allocation3 + $0x1a8] sm:$0xff] %vm62, %v4823
  %v4840 = vld [vmem:[#allocation3] sm:$0xff]
  %v4841 = vld [vmem:[#allocation3 + $0x8] sm:$0xff]
  %v4842 = vld [vmem:[#allocation3 + $0x10] sm:$0xff]
  %v4843 = vld [vmem:[#allocation3 + $0x18] sm:$0xff]
  %v4844 = vld [vmem:[#allocation3 + $0x20] sm:$0xff]
  %v4845 = vld [vmem:[#allocation3 + $0x28] sm:$0xff]
  %v4846 = vld [vmem:[#allocation3 + $0x30] sm:$0xff]
  %v4847 = vld [vmem:[#allocation3 + $0x38] sm:$0xff]
  %v4848 = vld [vmem:[#allocation3 + $0x40] sm:$0xff]
  %v4849 = vld [vmem:[#allocation3 + $0x48] sm:$0xff]
  %v4850 = vld [vmem:[#allocation3 + $0x50] sm:$0xff]
  %v4851 = vld [vmem:[#allocation3 + $0x58] sm:$0xff]
  %v4852 = vld [vmem:[#allocation3 + $0x60] sm:$0xff]
  %v4853 = vld [vmem:[#allocation3 + $0x68] sm:$0xff]
  %v4854 = vld [vmem:[#allocation3 + $0x70] sm:$0xff]
  %v4855 = vld [vmem:[#allocation3 + $0x78] sm:$0xff]
  %v4856 = vld [vmem:[#allocation3 + $0x80] sm:$0xff]
  %v4857 = vld [vmem:[#allocation3 + $0x88] sm:$0xff]
  %v4858 = vld [vmem:[#allocation3 + $0x90] sm:$0xff]
  %v4859 = vld [vmem:[#allocation3 + $0x98] sm:$0xff]
  %v4860 = vld [vmem:[#allocation3 + $0xa0] sm:$0xff]
  %v4861 = vld [vmem:[#allocation3 + $0xa8] sm:$0xff]
  %v4862 = vld [vmem:[#allocation3 + $0xb0] sm:$0xff]
  %v4863 = vld [vmem:[#allocation3 + $0xb8] sm:$0xff]
  %v4864 = vld [vmem:[#allocation3 + $0xc0] sm:$0xff]
  %v4865 = vld [vmem:[#allocation3 + $0xc8] sm:$0xff]
  %v4866 = vld [vmem:[#allocation3 + $0xd0] sm:$0xff]
  %v4867 = vld [vmem:[#allocation3 + $0xd8] sm:$0xff]
  %v4868 = vld [vmem:[#allocation3 + $0xe0] sm:$0xff]
  %v4869 = vld [vmem:[#allocation3 + $0xe8] sm:$0xff]
  %v4870 = vld [vmem:[#allocation3 + $0xf0] sm:$0xff]
  %v4871 = vld [vmem:[#allocation3 + $0xf8] sm:$0xff]
  %v4872 = vld [vmem:[#allocation3 + $0x100] sm:$0xff]
  %v4873 = vld [vmem:[#allocation3 + $0x108] sm:$0xff]
  %v4874 = vld [vmem:[#allocation3 + $0x110] sm:$0xff]
  %v4875 = vld [vmem:[#allocation3 + $0x118] sm:$0xff]
  %v4876 = vld [vmem:[#allocation3 + $0x120] sm:$0xff]
  %v4877 = vld [vmem:[#allocation3 + $0x128] sm:$0xff]
  %v4878 = vld [vmem:[#allocation3 + $0x130] sm:$0xff]
  %v4879 = vld [vmem:[#allocation3 + $0x138] sm:$0xff]
  %v4880 = vld [vmem:[#allocation3 + $0x140] sm:$0xff]
  %v4881 = vld [vmem:[#allocation3 + $0x148] sm:$0xff]
  %v4882 = vld [vmem:[#allocation3 + $0x150] sm:$0xff]
  %v4883 = vld [vmem:[#allocation3 + $0x158] sm:$0xff]
  %v4884 = vld [vmem:[#allocation3 + $0x160] sm:$0xff]
  %v4885 = vld [vmem:[#allocation3 + $0x168] sm:$0xff]
  %v4886 = vld [vmem:[#allocation3 + $0x170] sm:$0xff]
  %v4887 = vld [vmem:[#allocation3 + $0x178] sm:$0xff]
  %v4888 = vld [vmem:[#allocation3 + $0x180] sm:$0xff]
  %v4889 = vld [vmem:[#allocation3 + $0x188] sm:$0xff]
  %v4890 = vld [vmem:[#allocation3 + $0x190] sm:$0xff]
  %v4891 = vld [vmem:[#allocation3 + $0x198] sm:$0xff]
  %v4892 = vld [vmem:[#allocation3 + $0x1a0] sm:$0xff]
  %v4893 = vld [vmem:[#allocation3 + $0x1a8] sm:$0xff]
  %4895 = vset.pattern.permute.xlu0 0
  %4896 = vperm.xlu0 %4895, %v4464
  %v4897 = vpop.permute.xlu0 %4896
  %4900 = vset.pattern.permute.xlu0 0
  %4901 = vperm.xlu0 %4900, %v4465
  %v4902 = vpop.permute.xlu0 %4901
  %4905 = vset.pattern.permute.xlu0 0
  %4906 = vperm.xlu0 %4905, %v4466
  %v4907 = vpop.permute.xlu0 %4906
  %4910 = vset.pattern.permute.xlu0 0
  %4911 = vperm.xlu0 %4910, %v4467
  %v4912 = vpop.permute.xlu0 %4911
  %v4922 = vunpack.c.l.b16 %v4456
  %v4923 = vunpack.c.h.b16 %v4456
  %v4924 = vunpack.c.l.b16 %v4457
  %v4925 = vunpack.c.l.b16 %v4458
  %v4926 = vunpack.c.h.b16 %v4458
  %v4927 = vunpack.c.l.b16 %v4459
  %v4928 = vunpack.c.l.b16 %v4460
  %v4929 = vunpack.c.h.b16 %v4460
  %v4930 = vunpack.c.l.b16 %v4461
  %v4931 = vunpack.c.l.b16 %v4462
  %v4932 = vunpack.c.h.b16 %v4462
  %v4933 = vunpack.c.l.b16 %v4463
  %v4934 = vpack.c.b16 %v4925, %v4922
  %v4935 = vpack.c.b16 %v4926, %v4923
  %v4936 = vpack.c.b16 %v4927, %v4924
  %v4937 = vpack.c.b16 %v4931, %v4928
  %v4938 = vpack.c.b16 %v4932, %v4929
  %v4939 = vpack.c.b16 %v4933, %v4930
  %v4945 = vsel %vm584, %v4936, 0
  %v4948 = vsel %vm584, %v4939, 0
  %4950 = vmatprep.subr.bf16.mxu0 %v4841
  %4951 = vmatpush1.bf16.msra.mxu0 %v4840
  %4952 = vmatprep.subr.bf16.mxu0 %v4844
  %4953 = vmatpush1.bf16.msra.mxu0 %v4843
  %4954 = vmatprep.subr.bf16.mxu0 %v4847
  %4955 = vmatpush1.bf16.msra.mxu0 %v4846
  %4956 = vmatprep.subr.bf16.mxu0 %v4850
  %4957 = vmatpush1.bf16.msra.mxu0 %v4849
  %4958 = vmatprep.subr.bf16.mxu0 %v4853
  %4959 = vmatpush1.bf16.msra.mxu0 %v4852
  %4960 = vmatprep.subr.bf16.mxu0 %v4856
  %4961 = vmatpush1.bf16.msra.mxu0 %v4855
  %4962 = vmatprep.subr.bf16.mxu0 %v4859
  %4963 = vmatpush1.bf16.msra.mxu0 %v4858
  %4964 = vmatprep.subr.bf16.mxu0 %v4862
  %4965 = vmatpush1.bf16.msra.mxu0 %v4861
  %4966 = vmatprep.subr.bf16.mxu0 %v4865
  %4967 = vmatpush1.bf16.msra.mxu0 %v4864
  %4968 = vmatprep.subr.bf16.mxu0 %v4868
  %4969 = vmatpush1.bf16.msra.mxu0 %v4867
  %4970 = vmatprep.subr.bf16.mxu0 %v4871
  %4971 = vmatpush1.bf16.msra.mxu0 %v4870
  %4972 = vmatprep.subr.bf16.mxu0 %v4874
  %4973 = vmatpush1.bf16.msra.mxu0 %v4873
  %4974 = vmatprep.subr.bf16.mxu0 %v4877
  %4975 = vmatpush1.bf16.msra.mxu0 %v4876
  %4976 = vmatprep.subr.bf16.mxu0 %v4880
  %4977 = vmatpush1.bf16.msra.mxu0 %v4879
  %4978 = vmatprep.subr.bf16.mxu0 %v4883
  %4979 = vmatpush1.bf16.msra.mxu0 %v4882
  %4980 = vmatprep.subr.bf16.mxu0 %v4886
  %4981 = vmatpush1.bf16.msra.mxu0 %v4885
  %4982 = vmatprep.mubr.bf16.mxu0 %v4935
  %4983 = vmatmul.mubr.bf16.gmra.mrb[0].mxu0 %v4934
  %v4984 = vpop.f32.mrb[0].mxu0
  %v4985 = vadd.f32 %v4897, %v4984
  %v4986 = vpop.f32.mrb[0].mxu0
  %v4987 = vadd.f32 %v4897, %v4986
  %v4988 = vpop.f32.mrb[0].mxu0
  %v4989 = vadd.f32 %v4902, %v4988
  %v4990 = vpop.f32.mrb[0].mxu0
  %v4991 = vadd.f32 %v4902, %v4990
  %4992 = vmatprep.mubr.bf16.mxu0 %v4938
  %4993 = vmatmul.mubr.bf16.gmra.mrb[0].mxu0 %v4937
  %v4994 = vpop.f32.mrb[0].mxu0
  %v4995 = vadd.f32 %v4907, %v4994
  %v4996 = vpop.f32.mrb[0].mxu0
  %v4997 = vadd.f32 %v4907, %v4996
  %v4998 = vpop.f32.mrb[0].mxu0
  %v4999 = vadd.f32 %v4912, %v4998
  %v5000 = vpop.f32.mrb[0].mxu0
  %v5001 = vadd.f32 %v4912, %v5000
  %5002 = vdwg.mxu0
  %5003 = vmatprep.subr.bf16.mxu0 %v4889
  %5004 = vmatpush1.bf16.msra.mxu0 %v4888
  %5005 = vmatprep.subr.bf16.mxu0 %v4892
  %5006 = vmatpush1.bf16.msra.mxu0 %v4891
  %5007 = vmatprep.subr.bf16.mxu0 0
  %5008 = vmatpush1.bf16.msra.mxu0 0
  %5009 = vmatprep.subr.bf16.mxu0 0
  %5010 = vmatpush1.bf16.msra.mxu0 0
  %5011 = vmatprep.subr.bf16.mxu0 0
  %5012 = vmatpush1.bf16.msra.mxu0 0
  %5013 = vmatprep.subr.bf16.mxu0 0
  %5014 = vmatpush1.bf16.msra.mxu0 0
  %5015 = vmatprep.subr.bf16.mxu0 0
  %5016 = vmatpush1.bf16.msra.mxu0 0
  %5017 = vmatprep.subr.bf16.mxu0 0
  %5018 = vmatpush1.bf16.msra.mxu0 0
  %5019 = vmatprep.subr.bf16.mxu0 0
  %5020 = vmatpush1.bf16.msra.mxu0 0
  %5021 = vmatprep.subr.bf16.mxu0 0
  %5022 = vmatpush1.bf16.msra.mxu0 0
  %5023 = vmatprep.subr.bf16.mxu0 0
  %5024 = vmatpush1.bf16.msra.mxu0 0
  %5025 = vmatprep.subr.bf16.mxu0 0
  %5026 = vmatpush1.bf16.msra.mxu0 0
  %5027 = vmatprep.subr.bf16.mxu0 0
  %5028 = vmatpush1.bf16.msra.mxu0 0
  %5029 = vmatprep.subr.bf16.mxu0 0
  %5030 = vmatpush1.bf16.msra.mxu0 0
  %5031 = vmatprep.subr.bf16.mxu0 0
  %5032 = vmatpush1.bf16.msra.mxu0 0
  %5033 = vmatprep.subr.bf16.mxu0 0
  %5034 = vmatpush1.bf16.msra.mxu0 0
  %5035 = vmatprep.mubr.bf16.mxu0 0
  %5036 = vmatmul.mubr.bf16.gmra.mrb[0].mxu0 %v4945
  %v5037 = vpop.f32.mrb[0].mxu0
  %v5038 = vadd.f32 %v4985, %v5037
  %v5039 = vpop.f32.mrb[0].mxu0
  %v5040 = vadd.f32 %v4987, %v5039
  %v5041 = vpop.f32.mrb[0].mxu0
  %v5042 = vadd.f32 %v4989, %v5041
  %v5043 = vpop.f32.mrb[0].mxu0
  %v5044 = vadd.f32 %v4991, %v5043
  %5045 = vmatprep.mubr.bf16.mxu0 0
  %5046 = vmatmul.mubr.bf16.gmra.mrb[0].mxu0 %v4948
  %v5047 = vpop.f32.mrb[0].mxu0
  %v5048 = vadd.f32 %v4995, %v5047
  %v5049 = vpop.f32.mrb[0].mxu0
  %v5050 = vadd.f32 %v4997, %v5049
  %v5051 = vpop.f32.mrb[0].mxu0
  %v5052 = vadd.f32 %v4999, %v5051
  %v5053 = vpop.f32.mrb[0].mxu0
  %v5054 = vadd.f32 %v5001, %v5053
  %5055 = vdwg.mxu0
  %5056 = vmatprep.subr.bf16.mxu0 0
  %5057 = vmatpush1.bf16.msra.mxu0 %v4842
  %5058 = vmatprep.subr.bf16.mxu0 0
  %5059 = vmatpush1.bf16.msra.mxu0 %v4845
  %5060 = vmatprep.subr.bf16.mxu0 0
  %5061 = vmatpush1.bf16.msra.mxu0 %v4848
  %5062 = vmatprep.subr.bf16.mxu0 0
  %5063 = vmatpush1.bf16.msra.mxu0 %v4851
  %5064 = vmatprep.subr.bf16.mxu0 0
  %5065 = vmatpush1.bf16.msra.mxu0 %v4854
  %5066 = vmatprep.subr.bf16.mxu0 0
  %5067 = vmatpush1.bf16.msra.mxu0 %v4857
  %5068 = vmatprep.subr.bf16.mxu0 0
  %5069 = vmatpush1.bf16.msra.mxu0 %v4860
  %5070 = vmatprep.subr.bf16.mxu0 0
  %5071 = vmatpush1.bf16.msra.mxu0 %v4863
  %5072 = vmatprep.subr.bf16.mxu0 0
  %5073 = vmatpush1.bf16.msra.mxu0 %v4866
  %5074 = vmatprep.subr.bf16.mxu0 0
  %5075 = vmatpush1.bf16.msra.mxu0 %v4869
  %5076 = vmatprep.subr.bf16.mxu0 0
  %5077 = vmatpush1.bf16.msra.mxu0 %v4872
  %5078 = vmatprep.subr.bf16.mxu0 0
  %5079 = vmatpush1.bf16.msra.mxu0 %v4875
  %5080 = vmatprep.subr.bf16.mxu0 0
  %5081 = vmatpush1.bf16.msra.mxu0 %v4878
  %5082 = vmatprep.subr.bf16.mxu0 0
  %5083 = vmatpush1.bf16.msra.mxu0 %v4881
  %5084 = vmatprep.subr.bf16.mxu0 0
  %5085 = vmatpush1.bf16.msra.mxu0 %v4884
  %5086 = vmatprep.subr.bf16.mxu0 0
  %5087 = vmatpush1.bf16.msra.mxu0 %v4887
  %5088 = vmatprep.mubr.bf16.mxu0 %v4935
  %5089 = vmatmul.mubr.bf16.gmra.mrb[0].mxu0 %v4934
  %v5090 = vpop.f32.mrb[0].mxu0
  %v5091 = vadd.f32 %v4897, %v5090
  %v5092 = vpop.f32.mrb[0].mxu0
  %v5093 = vpop.f32.mrb[0].mxu0
  %v5094 = vadd.f32 %v4902, %v5093
  %v5095 = vpop.f32.mrb[0].mxu0
  %5096 = vmatprep.mubr.bf16.mxu0 %v4938
  %5097 = vmatmul.mubr.bf16.gmra.mrb[0].mxu0 %v4937
  %v5098 = vpop.f32.mrb[0].mxu0
  %v5099 = vadd.f32 %v4907, %v5098
  %v5100 = vpop.f32.mrb[0].mxu0
  %v5101 = vpop.f32.mrb[0].mxu0
  %v5102 = vadd.f32 %v4912, %v5101
  %v5103 = vpop.f32.mrb[0].mxu0
  %5104 = vdwg.mxu0
  %5105 = vmatprep.subr.bf16.mxu0 0
  %5106 = vmatpush1.bf16.msra.mxu0 %v4890
  %5107 = vmatprep.subr.bf16.mxu0 0
  %5108 = vmatpush1.bf16.msra.mxu0 %v4893
  %5109 = vmatprep.subr.bf16.mxu0 0
  %5110 = vmatpush1.bf16.msra.mxu0 0
  %5111 = vmatprep.subr.bf16.mxu0 0
  %5112 = vmatpush1.bf16.msra.mxu0 0
  %5113 = vmatprep.subr.bf16.mxu0 0
  %5114 = vmatpush1.bf16.msra.mxu0 0
  %5115 = vmatprep.subr.bf16.mxu0 0
  %5116 = vmatpush1.bf16.msra.mxu0 0
  %5117 = vmatprep.subr.bf16.mxu0 0
  %5118 = vmatpush1.bf16.msra.mxu0 0
  %5119 = vmatprep.subr.bf16.mxu0 0
  %5120 = vmatpush1.bf16.msra.mxu0 0
  %5121 = vmatprep.subr.bf16.mxu0 0
  %5122 = vmatpush1.bf16.msra.mxu0 0
  %5123 = vmatprep.subr.bf16.mxu0 0
  %5124 = vmatpush1.bf16.msra.mxu0 0
  %5125 = vmatprep.subr.bf16.mxu0 0
  %5126 = vmatpush1.bf16.msra.mxu0 0
  %5127 = vmatprep.subr.bf16.mxu0 0
  %5128 = vmatpush1.bf16.msra.mxu0 0
  %5129 = vmatprep.subr.bf16.mxu0 0
  %5130 = vmatpush1.bf16.msra.mxu0 0
  %5131 = vmatprep.subr.bf16.mxu0 0
  %5132 = vmatpush1.bf16.msra.mxu0 0
  %5133 = vmatprep.subr.bf16.mxu0 0
  %5134 = vmatpush1.bf16.msra.mxu0 0
  %5135 = vmatprep.subr.bf16.mxu0 0
  %5136 = vmatpush1.bf16.msra.mxu0 0
  %5137 = vmatprep.mubr.bf16.mxu0 0
  %5138 = vmatmul.mubr.bf16.gmra.mrb[0].mxu0 %v4945
  %v5139 = vpop.f32.mrb[0].mxu0
  %v5140 = vadd.f32 %v5091, %v5139
  %v5141 = vpop.f32.mrb[0].mxu0
  %v5142 = vpop.f32.mrb[0].mxu0
  %v5143 = vadd.f32 %v5094, %v5142
  %v5144 = vpop.f32.mrb[0].mxu0
  %5145 = vmatprep.mubr.bf16.mxu0 0
  %5146 = vmatmul.mubr.bf16.gmra.mrb[0].mxu0 %v4948
  %v5147 = vpop.f32.mrb[0].mxu0
  %v5148 = vadd.f32 %v5099, %v5147
  %v5149 = vpop.f32.mrb[0].mxu0
  %v5150 = vpop.f32.mrb[0].mxu0
  %v5151 = vadd.f32 %v5102, %v5150
  %v5152 = vpop.f32.mrb[0].mxu0
  %5153 = vdwg.mxu0
  %v5154 = vld [vmem:[%s11] sm:$0x7]
  %v5156 = vlaneseq
  %v5157 = vshrl.u32 %v5156, 7
  %v5158 = vsub.s32 0, %v5157
  %v5159 = vrot.slane %v5154, %v5158
  %v5160 = vlaneseq
  %v5161 = vshrl.u32 %v5160, 7
  %v5162 = vsub.s32 1, %v5161
  %v5163 = vrot.slane %v5154, %v5162
  %v5164 = vlaneseq
  %v5165 = vshrl.u32 %v5164, 7
  %v5166 = vsub.s32 2, %v5165
  %v5167 = vrot.slane %v5154, %v5166
  %v5171 = vmul.f32 %v5038, %v5159
  %v5172 = vmul.f32 %v5040, %v5163
  %v5173 = vmul.f32 %v5140, %v5167
  %v5174 = vmul.f32 %v5042, %v5159
  %v5175 = vmul.f32 %v5044, %v5163
  %v5176 = vmul.f32 %v5143, %v5167
  %v5177 = vmul.f32 %v5048, %v5159
  %v5178 = vmul.f32 %v5050, %v5163
  %v5179 = vmul.f32 %v5148, %v5167
  %v5180 = vmul.f32 %v5052, %v5159
  %v5181 = vmul.f32 %v5054, %v5163
  %v5182 = vmul.f32 %v5151, %v5167
  %v5183 = vmax.f32 %v5171, 0.0
  %v5184 = vmax.f32 %v5172, 0.0
  %v5185 = vmax.f32 %v5173, 0.0
  %v5186 = vmax.f32 %v5174, 0.0
  %v5187 = vmax.f32 %v5175, 0.0
  %v5188 = vmax.f32 %v5176, 0.0
  %v5189 = vmax.f32 %v5177, 0.0
  %v5190 = vmax.f32 %v5178, 0.0
  %v5191 = vmax.f32 %v5179, 0.0
  %v5192 = vmax.f32 %v5180, 0.0
  %v5193 = vmax.f32 %v5181, 0.0
  %v5194 = vmax.f32 %v5182, 0.0
  %v5195 = vld [vmem:[%s3] sm:$0xff]
  %v5196 = vld [vmem:[%s3 + $0x8] sm:$0xf]
  %v5197 = vld [vmem:[%s3 + $0xc] sm:$0xff]
  %v5198 = vld [vmem:[%s3 + $0x14] sm:$0xf]
  %v5199 = vld [vmem:[%s3 + $0x18] sm:$0xff]
  %v5200 = vld [vmem:[%s3 + $0x20] sm:$0xf]
  %v5201 = vld [vmem:[%s3 + $0x24] sm:$0xff]
  %v5202 = vld [vmem:[%s3 + $0x2c] sm:$0xf]
  %v5203 = vld [vmem:[%s4] sm:$0xff]
  %v5204 = vld [vmem:[%s4 + $0x8] sm:$0xff]
  %v5205 = vld [vmem:[%s4 + $0x10] sm:$0xff]
  %v5206 = vld [vmem:[%s4 + $0x18] sm:$0xff]
  %v5207 = vpack.c.bf16 %v5186, %v5183
  %v5208 = vpack.c.bf16 %v5187, %v5184
  %v5209 = vpack.c.bf16 %v5188, %v5185
  %v5210 = vpack.c.bf16 %v5192, %v5189
  %v5211 = vpack.c.bf16 %v5193, %v5190
  %v5212 = vpack.c.bf16 %v5194, %v5191
  %5219 = vrot.lane.b32.xlu0 %v5207, 19
  %v5220 = vpop.permute.xlu0 %5219
  %5221 = vrot.lane.b32.xlu0 %v5208, 19
  %v5222 = vpop.permute.xlu0 %5221
  %5223 = vrot.lane.b32.xlu0 %v5209, 19
  %v5224 = vpop.permute.xlu0 %5223
  %5225 = vrot.lane.b32.xlu0 %v5210, 19
  %v5226 = vpop.permute.xlu0 %5225
  %5227 = vrot.lane.b32.xlu0 %v5211, 19
  %v5228 = vpop.permute.xlu0 %5227
  %5229 = vrot.lane.b32.xlu0 %v5212, 19
  %v5230 = vpop.permute.xlu0 %5229
  %v5231 = vsel %vm121, %v5220, %v5222
  %v5232 = vsel %vm121, %v5222, %v5224
  %v5233 = vsel %vm121, %v5226, %v5228
  %v5234 = vsel %vm121, %v5228, %v5230
  %5241 = vst.msk [vmem:[#allocation2] sm:$0xff] %vm132, %v5220
  %5242 = vst [vmem:[#allocation2 + $0x8] sm:$0xff] %v5231
  %5243 = vst.msk [vmem:[#allocation2 + $0x10] sm:$0xff] %vm135, %v5232
  %5244 = vst.msk [vmem:[#allocation2 + $0x18] sm:$0xff] %vm132, %v5226
  %5245 = vst [vmem:[#allocation2 + $0x20] sm:$0xff] %v5233
  %5246 = vst.msk [vmem:[#allocation2 + $0x28] sm:$0xff] %vm135, %v5234
  %v5247 = vld [vmem:[#allocation2] sm:$0xff]
  %v5248 = vld [vmem:[#allocation2 + $0x8] sm:$0xff]
  %v5249 = vld [vmem:[#allocation2 + $0x10] sm:$0xff]
  %v5250 = vld [vmem:[#allocation2 + $0x18] sm:$0xff]
  %v5251 = vld [vmem:[#allocation2 + $0x20] sm:$0xff]
  %v5252 = vld [vmem:[#allocation2 + $0x28] sm:$0xff]
  %5253 = vst [vmem:[#allocation3] sm:$0xff] %v5247
  %5254 = vst [vmem:[#allocation3 + $0x8] sm:$0xff] %v5248
  %5255 = vst.msk [vmem:[#allocation3 + $0x10] sm:$0xff] %vm62, %v5249
  %5256 = vst [vmem:[#allocation3 + $0x18] sm:$0xff] %v5250
  %5257 = vst [vmem:[#allocation3 + $0x20] sm:$0xff] %v5251
  %5258 = vst.msk [vmem:[#allocation3 + $0x28] sm:$0xff] %vm62, %v5252
  %v5259 = vld [vmem:[#allocation2] sm:$0xff]
  %v5260 = vld [vmem:[#allocation2 + $0x8] sm:$0xff]
  %v5261 = vld [vmem:[#allocation2 + $0x10] sm:$0xff]
  %v5262 = vld [vmem:[#allocation2 + $0x18] sm:$0xff]
  %v5263 = vld [vmem:[#allocation2 + $0x20] sm:$0xff]
  %v5264 = vld [vmem:[#allocation2 + $0x28] sm:$0xff]
  %5271 = vrot.lane.b32.xlu0 %v5259, 127
  %v5272 = vpop.permute.xlu0 %5271
  %5273 = vrot.lane.b32.xlu0 %v5260, 127
  %v5274 = vpop.permute.xlu0 %5273
  %5275 = vrot.lane.b32.xlu0 %v5261, 127
  %v5276 = vpop.permute.xlu0 %5275
  %5277 = vrot.lane.b32.xlu0 %v5262, 127
  %v5278 = vpop.permute.xlu0 %5277
  %5279 = vrot.lane.b32.xlu0 %v5263, 127
  %v5280 = vpop.permute.xlu0 %5279
  %5281 = vrot.lane.b32.xlu0 %v5264, 127
  %v5282 = vpop.permute.xlu0 %5281
  %v5283 = vsel %vm176, %v5272, %v5274
  %v5284 = vsel %vm176, %v5274, %v5276
  %v5285 = vsel %vm176, %v5278, %v5280
  %v5286 = vsel %vm176, %v5280, %v5282
  %5293 = vst [vmem:[#allocation3 + $0x30] sm:$0xff] %v5283
  %5294 = vst [vmem:[#allocation3 + $0x38] sm:$0xff] %v5284
  %5295 = vst.msk [vmem:[#allocation3 + $0x40] sm:$0xff] %vm62, %v5276
  %5296 = vst [vmem:[#allocation3 + $0x48] sm:$0xff] %v5285
  %5297 = vst [vmem:[#allocation3 + $0x50] sm:$0xff] %v5286
  %5298 = vst.msk [vmem:[#allocation3 + $0x58] sm:$0xff] %vm62, %v5282
  %v5299 = vld [vmem:[#allocation2] sm:$0xff]
  %v5300 = vld [vmem:[#allocation2 + $0x8] sm:$0xff]
  %v5301 = vld [vmem:[#allocation2 + $0x10] sm:$0xff]
  %v5302 = vld [vmem:[#allocation2 + $0x18] sm:$0xff]
  %v5303 = vld [vmem:[#allocation2 + $0x20] sm:$0xff]
  %v5304 = vld [vmem:[#allocation2 + $0x28] sm:$0xff]
  %5311 = vrot.lane.b32.xlu0 %v5299, 126
  %v5312 = vpop.permute.xlu0 %5311
  %5313 = vrot.lane.b32.xlu0 %v5300, 126
  %v5314 = vpop.permute.xlu0 %5313
  %5315 = vrot.lane.b32.xlu0 %v5301, 126
  %v5316 = vpop.permute.xlu0 %5315
  %5317 = vrot.lane.b32.xlu0 %v5302, 126
  %v5318 = vpop.permute.xlu0 %5317
  %5319 = vrot.lane.b32.xlu0 %v5303, 126
  %v5320 = vpop.permute.xlu0 %5319
  %5321 = vrot.lane.b32.xlu0 %v5304, 126
  %v5322 = vpop.permute.xlu0 %5321
  %v5323 = vsel %vm217, %v5312, %v5314
  %v5324 = vsel %vm217, %v5314, %v5316
  %v5325 = vsel %vm217, %v5318, %v5320
  %v5326 = vsel %vm217, %v5320, %v5322
  %5333 = vst [vmem:[#allocation3 + $0x60] sm:$0xff] %v5323
  %5334 = vst [vmem:[#allocation3 + $0x68] sm:$0xff] %v5324
  %5335 = vst.msk [vmem:[#allocation3 + $0x70] sm:$0xff] %vm62, %v5316
  %5336 = vst [vmem:[#allocation3 + $0x78] sm:$0xff] %v5325
  %5337 = vst [vmem:[#allocation3 + $0x80] sm:$0xff] %v5326
  %5338 = vst.msk [vmem:[#allocation3 + $0x88] sm:$0xff] %vm62, %v5322
  %v5339 = vld [vmem:[#allocation2] sm:$0xff]
  %v5340 = vld [vmem:[#allocation2 + $0x8] sm:$0xff]
  %v5341 = vld [vmem:[#allocation2 + $0x10] sm:$0xff]
  %v5342 = vld [vmem:[#allocation2 + $0x18] sm:$0xff]
  %v5343 = vld [vmem:[#allocation2 + $0x20] sm:$0xff]
  %v5344 = vld [vmem:[#allocation2 + $0x28] sm:$0xff]
  %5351 = vrot.lane.b32.xlu0 %v5339, 110
  %v5352 = vpop.permute.xlu0 %5351
  %5353 = vrot.lane.b32.xlu0 %v5340, 110
  %v5354 = vpop.permute.xlu0 %5353
  %5355 = vrot.lane.b32.xlu0 %v5341, 110
  %v5356 = vpop.permute.xlu0 %5355
  %5357 = vrot.lane.b32.xlu0 %v5342, 110
  %v5358 = vpop.permute.xlu0 %5357
  %5359 = vrot.lane.b32.xlu0 %v5343, 110
  %v5360 = vpop.permute.xlu0 %5359
  %5361 = vrot.lane.b32.xlu0 %v5344, 110
  %v5362 = vpop.permute.xlu0 %5361
  %v5363 = vsel %vm258, %v5352, %v5354
  %v5364 = vsel %vm258, %v5354, %v5356
  %v5365 = vsel %vm258, %v5358, %v5360
  %v5366 = vsel %vm258, %v5360, %v5362
  %5373 = vst [vmem:[#allocation3 + $0x90] sm:$0xff] %v5363
  %5374 = vst [vmem:[#allocation3 + $0x98] sm:$0xff] %v5364
  %5375 = vst.msk [vmem:[#allocation3 + $0xa0] sm:$0xff] %vm62, %v5356
  %5376 = vst [vmem:[#allocation3 + $0xa8] sm:$0xff] %v5365
  %5377 = vst [vmem:[#allocation3 + $0xb0] sm:$0xff] %v5366
  %5378 = vst.msk [vmem:[#allocation3 + $0xb8] sm:$0xff] %vm62, %v5362
  %v5379 = vld [vmem:[#allocation2] sm:$0xff]
  %v5380 = vld [vmem:[#allocation2 + $0x8] sm:$0xff]
  %v5381 = vld [vmem:[#allocation2 + $0x10] sm:$0xff]
  %v5382 = vld [vmem:[#allocation2 + $0x18] sm:$0xff]
  %v5383 = vld [vmem:[#allocation2 + $0x20] sm:$0xff]
  %v5384 = vld [vmem:[#allocation2 + $0x28] sm:$0xff]
  %5391 = vrot.lane.b32.xlu0 %v5379, 109
  %v5392 = vpop.permute.xlu0 %5391
  %5393 = vrot.lane.b32.xlu0 %v5380, 109
  %v5394 = vpop.permute.xlu0 %5393
  %5395 = vrot.lane.b32.xlu0 %v5381, 109
  %v5396 = vpop.permute.xlu0 %5395
  %5397 = vrot.lane.b32.xlu0 %v5382, 109
  %v5398 = vpop.permute.xlu0 %5397
  %5399 = vrot.lane.b32.xlu0 %v5383, 109
  %v5400 = vpop.permute.xlu0 %5399
  %5401 = vrot.lane.b32.xlu0 %v5384, 109
  %v5402 = vpop.permute.xlu0 %5401
  %v5403 = vsel %vm299, %v5392, %v5394
  %v5404 = vsel %vm299, %v5394, %v5396
  %v5405 = vsel %vm299, %v5398, %v5400
  %v5406 = vsel %vm299, %v5400, %v5402
  %5413 = vst [vmem:[#allocation3 + $0xc0] sm:$0xff] %v5403
  %5414 = vst [vmem:[#allocation3 + $0xc8] sm:$0xff] %v5404
  %5415 = vst.msk [vmem:[#allocation3 + $0xd0] sm:$0xff] %vm62, %v5396
  %5416 = vst [vmem:[#allocation3 + $0xd8] sm:$0xff] %v5405
  %5417 = vst [vmem:[#allocation3 + $0xe0] sm:$0xff] %v5406
  %5418 = vst.msk [vmem:[#allocation3 + $0xe8] sm:$0xff] %vm62, %v5402
  %v5419 = vld [vmem:[#allocation2] sm:$0xff]
  %v5420 = vld [vmem:[#allocation2 + $0x8] sm:$0xff]
  %v5421 = vld [vmem:[#allocation2 + $0x10] sm:$0xff]
  %v5422 = vld [vmem:[#allocation2 + $0x18] sm:$0xff]
  %v5423 = vld [vmem:[#allocation2 + $0x20] sm:$0xff]
  %v5424 = vld [vmem:[#allocation2 + $0x28] sm:$0xff]
  %5431 = vrot.lane.b32.xlu0 %v5419, 108
  %v5432 = vpop.permute.xlu0 %5431
  %5433 = vrot.lane.b32.xlu0 %v5420, 108
  %v5434 = vpop.permute.xlu0 %5433
  %5435 = vrot.lane.b32.xlu0 %v5421, 108
  %v5436 = vpop.permute.xlu0 %5435
  %5437 = vrot.lane.b32.xlu0 %v5422, 108
  %v5438 = vpop.permute.xlu0 %5437
  %5439 = vrot.lane.b32.xlu0 %v5423, 108
  %v5440 = vpop.permute.xlu0 %5439
  %5441 = vrot.lane.b32.xlu0 %v5424, 108
  %v5442 = vpop.permute.xlu0 %5441
  %v5443 = vsel %vm340, %v5432, %v5434
  %v5444 = vsel %vm340, %v5434, %v5436
  %v5445 = vsel %vm340, %v5438, %v5440
  %v5446 = vsel %vm340, %v5440, %v5442
  %5453 = vst [vmem:[#allocation3 + $0xf0] sm:$0xff] %v5443
  %5454 = vst [vmem:[#allocation3 + $0xf8] sm:$0xff] %v5444
  %5455 = vst.msk [vmem:[#allocation3 + $0x100] sm:$0xff] %vm62, %v5436
  %5456 = vst [vmem:[#allocation3 + $0x108] sm:$0xff] %v5445
  %5457 = vst [vmem:[#allocation3 + $0x110] sm:$0xff] %v5446
  %5458 = vst.msk [vmem:[#allocation3 + $0x118] sm:$0xff] %vm62, %v5442
  %v5459 = vld [vmem:[#allocation2] sm:$0xff]
  %v5460 = vld [vmem:[#allocation2 + $0x8] sm:$0xff]
  %v5461 = vld [vmem:[#allocation2 + $0x10] sm:$0xff]
  %v5462 = vld [vmem:[#allocation2 + $0x18] sm:$0xff]
  %v5463 = vld [vmem:[#allocation2 + $0x20] sm:$0xff]
  %v5464 = vld [vmem:[#allocation2 + $0x28] sm:$0xff]
  %5471 = vrot.lane.b32.xlu0 %v5459, 92
  %v5472 = vpop.permute.xlu0 %5471
  %5473 = vrot.lane.b32.xlu0 %v5460, 92
  %v5474 = vpop.permute.xlu0 %5473
  %5475 = vrot.lane.b32.xlu0 %v5461, 92
  %v5476 = vpop.permute.xlu0 %5475
  %5477 = vrot.lane.b32.xlu0 %v5462, 92
  %v5478 = vpop.permute.xlu0 %5477
  %5479 = vrot.lane.b32.xlu0 %v5463, 92
  %v5480 = vpop.permute.xlu0 %5479
  %5481 = vrot.lane.b32.xlu0 %v5464, 92
  %v5482 = vpop.permute.xlu0 %5481
  %v5483 = vsel %vm381, %v5472, %v5474
  %v5484 = vsel %vm381, %v5474, %v5476
  %v5485 = vsel %vm381, %v5478, %v5480
  %v5486 = vsel %vm381, %v5480, %v5482
  %5493 = vst [vmem:[#allocation3 + $0x120] sm:$0xff] %v5483
  %5494 = vst [vmem:[#allocation3 + $0x128] sm:$0xff] %v5484
  %5495 = vst.msk [vmem:[#allocation3 + $0x130] sm:$0xff] %vm62, %v5476
  %5496 = vst [vmem:[#allocation3 + $0x138] sm:$0xff] %v5485
  %5497 = vst [vmem:[#allocation3 + $0x140] sm:$0xff] %v5486
  %5498 = vst.msk [vmem:[#allocation3 + $0x148] sm:$0xff] %vm62, %v5482
  %v5499 = vld [vmem:[#allocation2] sm:$0xff]
  %v5500 = vld [vmem:[#allocation2 + $0x8] sm:$0xff]
  %v5501 = vld [vmem:[#allocation2 + $0x10] sm:$0xff]
  %v5502 = vld [vmem:[#allocation2 + $0x18] sm:$0xff]
  %v5503 = vld [vmem:[#allocation2 + $0x20] sm:$0xff]
  %v5504 = vld [vmem:[#allocation2 + $0x28] sm:$0xff]
  %5511 = vrot.lane.b32.xlu0 %v5499, 91
  %v5512 = vpop.permute.xlu0 %5511
  %5513 = vrot.lane.b32.xlu0 %v5500, 91
  %v5514 = vpop.permute.xlu0 %5513
  %5515 = vrot.lane.b32.xlu0 %v5501, 91
  %v5516 = vpop.permute.xlu0 %5515
  %5517 = vrot.lane.b32.xlu0 %v5502, 91
  %v5518 = vpop.permute.xlu0 %5517
  %5519 = vrot.lane.b32.xlu0 %v5503, 91
  %v5520 = vpop.permute.xlu0 %5519
  %5521 = vrot.lane.b32.xlu0 %v5504, 91
  %v5522 = vpop.permute.xlu0 %5521
  %v5523 = vsel %vm422, %v5512, %v5514
  %v5524 = vsel %vm422, %v5514, %v5516
  %v5525 = vsel %vm422, %v5518, %v5520
  %v5526 = vsel %vm422, %v5520, %v5522
  %5533 = vst [vmem:[#allocation3 + $0x150] sm:$0xff] %v5523
  %5534 = vst [vmem:[#allocation3 + $0x158] sm:$0xff] %v5524
  %5535 = vst.msk [vmem:[#allocation3 + $0x160] sm:$0xff] %vm62, %v5516
  %5536 = vst [vmem:[#allocation3 + $0x168] sm:$0xff] %v5525
  %5537 = vst [vmem:[#allocation3 + $0x170] sm:$0xff] %v5526
  %5538 = vst.msk [vmem:[#allocation3 + $0x178] sm:$0xff] %vm62, %v5522
  %v5539 = vld [vmem:[#allocation2] sm:$0xff]
  %v5540 = vld [vmem:[#allocation2 + $0x8] sm:$0xff]
  %v5541 = vld [vmem:[#allocation2 + $0x10] sm:$0xff]
  %v5542 = vld [vmem:[#allocation2 + $0x18] sm:$0xff]
  %v5543 = vld [vmem:[#allocation2 + $0x20] sm:$0xff]
  %v5544 = vld [vmem:[#allocation2 + $0x28] sm:$0xff]
  %5551 = vrot.lane.b32.xlu0 %v5539, 90
  %v5552 = vpop.permute.xlu0 %5551
  %5553 = vrot.lane.b32.xlu0 %v5540, 90
  %v5554 = vpop.permute.xlu0 %5553
  %5555 = vrot.lane.b32.xlu0 %v5541, 90
  %v5556 = vpop.permute.xlu0 %5555
  %5557 = vrot.lane.b32.xlu0 %v5542, 90
  %v5558 = vpop.permute.xlu0 %5557
  %5559 = vrot.lane.b32.xlu0 %v5543, 90
  %v5560 = vpop.permute.xlu0 %5559
  %5561 = vrot.lane.b32.xlu0 %v5544, 90
  %v5562 = vpop.permute.xlu0 %5561
  %v5563 = vsel %vm463, %v5552, %v5554
  %v5564 = vsel %vm463, %v5554, %v5556
  %v5565 = vsel %vm463, %v5558, %v5560
  %v5566 = vsel %vm463, %v5560, %v5562
  %5573 = vst [vmem:[#allocation3 + $0x180] sm:$0xff] %v5563
  %5574 = vst [vmem:[#allocation3 + $0x188] sm:$0xff] %v5564
  %5575 = vst.msk [vmem:[#allocation3 + $0x190] sm:$0xff] %vm62, %v5556
  %5576 = vst [vmem:[#allocation3 + $0x198] sm:$0xff] %v5565
  %5577 = vst [vmem:[#allocation3 + $0x1a0] sm:$0xff] %v5566
  %5578 = vst.msk [vmem:[#allocation3 + $0x1a8] sm:$0xff] %vm62, %v5562
  %v5579 = vld [vmem:[#allocation3] sm:$0xff]
  %v5580 = vld [vmem:[#allocation3 + $0x8] sm:$0xff]
  %v5581 = vld [vmem:[#allocation3 + $0x10] sm:$0xff]
  %v5582 = vld [vmem:[#allocation3 + $0x18] sm:$0xff]
  %v5583 = vld [vmem:[#allocation3 + $0x20] sm:$0xff]
  %v5584 = vld [vmem:[#allocation3 + $0x28] sm:$0xff]
  %v5585 = vld [vmem:[#allocation3 + $0x30] sm:$0xff]
  %v5586 = vld [vmem:[#allocation3 + $0x38] sm:$0xff]
  %v5587 = vld [vmem:[#allocation3 + $0x40] sm:$0xff]
  %v5588 = vld [vmem:[#allocation3 + $0x48] sm:$0xff]
  %v5589 = vld [vmem:[#allocation3 + $0x50] sm:$0xff]
  %v5590 = vld [vmem:[#allocation3 + $0x58] sm:$0xff]
  %v5591 = vld [vmem:[#allocation3 + $0x60] sm:$0xff]
  %v5592 = vld [vmem:[#allocation3 + $0x68] sm:$0xff]
  %v5593 = vld [vmem:[#allocation3 + $0x70] sm:$0xff]
  %v5594 = vld [vmem:[#allocation3 + $0x78] sm:$0xff]
  %v5595 = vld [vmem:[#allocation3 + $0x80] sm:$0xff]
  %v5596 = vld [vmem:[#allocation3 + $0x88] sm:$0xff]
  %v5597 = vld [vmem:[#allocation3 + $0x90] sm:$0xff]
  %v5598 = vld [vmem:[#allocation3 + $0x98] sm:$0xff]
  %v5599 = vld [vmem:[#allocation3 + $0xa0] sm:$0xff]
  %v5600 = vld [vmem:[#allocation3 + $0xa8] sm:$0xff]
  %v5601 = vld [vmem:[#allocation3 + $0xb0] sm:$0xff]
  %v5602 = vld [vmem:[#allocation3 + $0xb8] sm:$0xff]
  %v5603 = vld [vmem:[#allocation3 + $0xc0] sm:$0xff]
  %v5604 = vld [vmem:[#allocation3 + $0xc8] sm:$0xff]
  %v5605 = vld [vmem:[#allocation3 + $0xd0] sm:$0xff]
  %v5606 = vld [vmem:[#allocation3 + $0xd8] sm:$0xff]
  %v5607 = vld [vmem:[#allocation3 + $0xe0] sm:$0xff]
  %v5608 = vld [vmem:[#allocation3 + $0xe8] sm:$0xff]
  %v5609 = vld [vmem:[#allocation3 + $0xf0] sm:$0xff]
  %v5610 = vld [vmem:[#allocation3 + $0xf8] sm:$0xff]
  %v5611 = vld [vmem:[#allocation3 + $0x100] sm:$0xff]
  %v5612 = vld [vmem:[#allocation3 + $0x108] sm:$0xff]
  %v5613 = vld [vmem:[#allocation3 + $0x110] sm:$0xff]
  %v5614 = vld [vmem:[#allocation3 + $0x118] sm:$0xff]
  %v5615 = vld [vmem:[#allocation3 + $0x120] sm:$0xff]
  %v5616 = vld [vmem:[#allocation3 + $0x128] sm:$0xff]
  %v5617 = vld [vmem:[#allocation3 + $0x130] sm:$0xff]
  %v5618 = vld [vmem:[#allocation3 + $0x138] sm:$0xff]
  %v5619 = vld [vmem:[#allocation3 + $0x140] sm:$0xff]
  %v5620 = vld [vmem:[#allocation3 + $0x148] sm:$0xff]
  %v5621 = vld [vmem:[#allocation3 + $0x150] sm:$0xff]
  %v5622 = vld [vmem:[#allocation3 + $0x158] sm:$0xff]
  %v5623 = vld [vmem:[#allocation3 + $0x160] sm:$0xff]
  %v5624 = vld [vmem:[#allocation3 + $0x168] sm:$0xff]
  %v5625 = vld [vmem:[#allocation3 + $0x170] sm:$0xff]
  %v5626 = vld [vmem:[#allocation3 + $0x178] sm:$0xff]
  %v5627 = vld [vmem:[#allocation3 + $0x180] sm:$0xff]
  %v5628 = vld [vmem:[#allocation3 + $0x188] sm:$0xff]
  %v5629 = vld [vmem:[#allocation3 + $0x190] sm:$0xff]
  %v5630 = vld [vmem:[#allocation3 + $0x198] sm:$0xff]
  %v5631 = vld [vmem:[#allocation3 + $0x1a0] sm:$0xff]
  %v5632 = vld [vmem:[#allocation3 + $0x1a8] sm:$0xff]
  %5634 = vset.pattern.permute.xlu0 0
  %5635 = vperm.xlu0 %5634, %v5203
  %v5636 = vpop.permute.xlu0 %5635
  %5639 = vset.pattern.permute.xlu0 0
  %5640 = vperm.xlu0 %5639, %v5204
  %v5641 = vpop.permute.xlu0 %5640
  %5644 = vset.pattern.permute.xlu0 0
  %5645 = vperm.xlu0 %5644, %v5205
  %v5646 = vpop.permute.xlu0 %5645
  %5649 = vset.pattern.permute.xlu0 0
  %5650 = vperm.xlu0 %5649, %v5206
  %v5651 = vpop.permute.xlu0 %5650
  %v5661 = vunpack.c.l.b16 %v5195
  %v5662 = vunpack.c.h.b16 %v5195
  %v5663 = vunpack.c.l.b16 %v5196
  %v5664 = vunpack.c.l.b16 %v5197
  %v5665 = vunpack.c.h.b16 %v5197
  %v5666 = vunpack.c.l.b16 %v5198
  %v5667 = vunpack.c.l.b16 %v5199
  %v5668 = vunpack.c.h.b16 %v5199
  %v5669 = vunpack.c.l.b16 %v5200
  %v5670 = vunpack.c.l.b16 %v5201
  %v5671 = vunpack.c.h.b16 %v5201
  %v5672 = vunpack.c.l.b16 %v5202
  %v5673 = vpack.c.b16 %v5664, %v5661
  %v5674 = vpack.c.b16 %v5665, %v5662
  %v5675 = vpack.c.b16 %v5666, %v5663
  %v5676 = vpack.c.b16 %v5670, %v5667
  %v5677 = vpack.c.b16 %v5671, %v5668
  %v5678 = vpack.c.b16 %v5672, %v5669
  %v5684 = vsel %vm584, %v5675, 0
  %v5687 = vsel %vm584, %v5678, 0
  %5689 = vmatprep.subr.bf16.mxu0 %v5580
  %5690 = vmatpush1.bf16.msra.mxu0 %v5579
  %5691 = vmatprep.subr.bf16.mxu0 %v5583
  %5692 = vmatpush1.bf16.msra.mxu0 %v5582
  %5693 = vmatprep.subr.bf16.mxu0 %v5586
  %5694 = vmatpush1.bf16.msra.mxu0 %v5585
  %5695 = vmatprep.subr.bf16.mxu0 %v5589
  %5696 = vmatpush1.bf16.msra.mxu0 %v5588
  %5697 = vmatprep.subr.bf16.mxu0 %v5592
  %5698 = vmatpush1.bf16.msra.mxu0 %v5591
  %5699 = vmatprep.subr.bf16.mxu0 %v5595
  %5700 = vmatpush1.bf16.msra.mxu0 %v5594
  %5701 = vmatprep.subr.bf16.mxu0 %v5598
  %5702 = vmatpush1.bf16.msra.mxu0 %v5597
  %5703 = vmatprep.subr.bf16.mxu0 %v5601
  %5704 = vmatpush1.bf16.msra.mxu0 %v5600
  %5705 = vmatprep.subr.bf16.mxu0 %v5604
  %5706 = vmatpush1.bf16.msra.mxu0 %v5603
  %5707 = vmatprep.subr.bf16.mxu0 %v5607
  %5708 = vmatpush1.bf16.msra.mxu0 %v5606
  %5709 = vmatprep.subr.bf16.mxu0 %v5610
  %5710 = vmatpush1.bf16.msra.mxu0 %v5609
  %5711 = vmatprep.subr.bf16.mxu0 %v5613
  %5712 = vmatpush1.bf16.msra.mxu0 %v5612
  %5713 = vmatprep.subr.bf16.mxu0 %v5616
  %5714 = vmatpush1.bf16.msra.mxu0 %v5615
  %5715 = vmatprep.subr.bf16.mxu0 %v5619
  %5716 = vmatpush1.bf16.msra.mxu0 %v5618
  %5717 = vmatprep.subr.bf16.mxu0 %v5622
  %5718 = vmatpush1.bf16.msra.mxu0 %v5621
  %5719 = vmatprep.subr.bf16.mxu0 %v5625
  %5720 = vmatpush1.bf16.msra.mxu0 %v5624
  %5721 = vmatprep.mubr.bf16.mxu0 %v5674
  %5722 = vmatmul.mubr.bf16.gmra.mrb[0].mxu0 %v5673
  %v5723 = vpop.f32.mrb[0].mxu0
  %v5724 = vadd.f32 %v5636, %v5723
  %v5725 = vpop.f32.mrb[0].mxu0
  %v5726 = vadd.f32 %v5636, %v5725
  %v5727 = vpop.f32.mrb[0].mxu0
  %v5728 = vadd.f32 %v5641, %v5727
  %v5729 = vpop.f32.mrb[0].mxu0
  %v5730 = vadd.f32 %v5641, %v5729
  %5731 = vmatprep.mubr.bf16.mxu0 %v5677
  %5732 = vmatmul.mubr.bf16.gmra.mrb[0].mxu0 %v5676
  %v5733 = vpop.f32.mrb[0].mxu0
  %v5734 = vadd.f32 %v5646, %v5733
  %v5735 = vpop.f32.mrb[0].mxu0
  %v5736 = vadd.f32 %v5646, %v5735
  %v5737 = vpop.f32.mrb[0].mxu0
  %v5738 = vadd.f32 %v5651, %v5737
  %v5739 = vpop.f32.mrb[0].mxu0
  %v5740 = vadd.f32 %v5651, %v5739
  %5741 = vdwg.mxu0
  %5742 = vmatprep.subr.bf16.mxu0 %v5628
  %5743 = vmatpush1.bf16.msra.mxu0 %v5627
  %5744 = vmatprep.subr.bf16.mxu0 %v5631
  %5745 = vmatpush1.bf16.msra.mxu0 %v5630
  %5746 = vmatprep.subr.bf16.mxu0 0
  %5747 = vmatpush1.bf16.msra.mxu0 0
  %5748 = vmatprep.subr.bf16.mxu0 0
  %5749 = vmatpush1.bf16.msra.mxu0 0
  %5750 = vmatprep.subr.bf16.mxu0 0
  %5751 = vmatpush1.bf16.msra.mxu0 0
  %5752 = vmatprep.subr.bf16.mxu0 0
  %5753 = vmatpush1.bf16.msra.mxu0 0
  %5754 = vmatprep.subr.bf16.mxu0 0
  %5755 = vmatpush1.bf16.msra.mxu0 0
  %5756 = vmatprep.subr.bf16.mxu0 0
  %5757 = vmatpush1.bf16.msra.mxu0 0
  %5758 = vmatprep.subr.bf16.mxu0 0
  %5759 = vmatpush1.bf16.msra.mxu0 0
  %5760 = vmatprep.subr.bf16.mxu0 0
  %5761 = vmatpush1.bf16.msra.mxu0 0
  %5762 = vmatprep.subr.bf16.mxu0 0
  %5763 = vmatpush1.bf16.msra.mxu0 0
  %5764 = vmatprep.subr.bf16.mxu0 0
  %5765 = vmatpush1.bf16.msra.mxu0 0
  %5766 = vmatprep.subr.bf16.mxu0 0
  %5767 = vmatpush1.bf16.msra.mxu0 0
  %5768 = vmatprep.subr.bf16.mxu0 0
  %5769 = vmatpush1.bf16.msra.mxu0 0
  %5770 = vmatprep.subr.bf16.mxu0 0
  %5771 = vmatpush1.bf16.msra.mxu0 0
  %5772 = vmatprep.subr.bf16.mxu0 0
  %5773 = vmatpush1.bf16.msra.mxu0 0
  %5774 = vmatprep.mubr.bf16.mxu0 0
  %5775 = vmatmul.mubr.bf16.gmra.mrb[0].mxu0 %v5684
  %v5776 = vpop.f32.mrb[0].mxu0
  %v5777 = vadd.f32 %v5724, %v5776
  %v5778 = vpop.f32.mrb[0].mxu0
  %v5779 = vadd.f32 %v5726, %v5778
  %v5780 = vpop.f32.mrb[0].mxu0
  %v5781 = vadd.f32 %v5728, %v5780
  %v5782 = vpop.f32.mrb[0].mxu0
  %v5783 = vadd.f32 %v5730, %v5782
  %5784 = vmatprep.mubr.bf16.mxu0 0
  %5785 = vmatmul.mubr.bf16.gmra.mrb[0].mxu0 %v5687
  %v5786 = vpop.f32.mrb[0].mxu0
  %v5787 = vadd.f32 %v5734, %v5786
  %v5788 = vpop.f32.mrb[0].mxu0
  %v5789 = vadd.f32 %v5736, %v5788
  %v5790 = vpop.f32.mrb[0].mxu0
  %v5791 = vadd.f32 %v5738, %v5790
  %v5792 = vpop.f32.mrb[0].mxu0
  %v5793 = vadd.f32 %v5740, %v5792
  %5794 = vdwg.mxu0
  %5795 = vmatprep.subr.bf16.mxu0 0
  %5796 = vmatpush1.bf16.msra.mxu0 %v5581
  %5797 = vmatprep.subr.bf16.mxu0 0
  %5798 = vmatpush1.bf16.msra.mxu0 %v5584
  %5799 = vmatprep.subr.bf16.mxu0 0
  %5800 = vmatpush1.bf16.msra.mxu0 %v5587
  %5801 = vmatprep.subr.bf16.mxu0 0
  %5802 = vmatpush1.bf16.msra.mxu0 %v5590
  %5803 = vmatprep.subr.bf16.mxu0 0
  %5804 = vmatpush1.bf16.msra.mxu0 %v5593
  %5805 = vmatprep.subr.bf16.mxu0 0
  %5806 = vmatpush1.bf16.msra.mxu0 %v5596
  %5807 = vmatprep.subr.bf16.mxu0 0
  %5808 = vmatpush1.bf16.msra.mxu0 %v5599
  %5809 = vmatprep.subr.bf16.mxu0 0
  %5810 = vmatpush1.bf16.msra.mxu0 %v5602
  %5811 = vmatprep.subr.bf16.mxu0 0
  %5812 = vmatpush1.bf16.msra.mxu0 %v5605
  %5813 = vmatprep.subr.bf16.mxu0 0
  %5814 = vmatpush1.bf16.msra.mxu0 %v5608
  %5815 = vmatprep.subr.bf16.mxu0 0
  %5816 = vmatpush1.bf16.msra.mxu0 %v5611
  %5817 = vmatprep.subr.bf16.mxu0 0
  %5818 = vmatpush1.bf16.msra.mxu0 %v5614
  %5819 = vmatprep.subr.bf16.mxu0 0
  %5820 = vmatpush1.bf16.msra.mxu0 %v5617
  %5821 = vmatprep.subr.bf16.mxu0 0
  %5822 = vmatpush1.bf16.msra.mxu0 %v5620
  %5823 = vmatprep.subr.bf16.mxu0 0
  %5824 = vmatpush1.bf16.msra.mxu0 %v5623
  %5825 = vmatprep.subr.bf16.mxu0 0
  %5826 = vmatpush1.bf16.msra.mxu0 %v5626
  %5827 = vmatprep.mubr.bf16.mxu0 %v5674
  %5828 = vmatmul.mubr.bf16.gmra.mrb[0].mxu0 %v5673
  %v5829 = vpop.f32.mrb[0].mxu0
  %v5830 = vadd.f32 %v5636, %v5829
  %v5831 = vpop.f32.mrb[0].mxu0
  %v5832 = vpop.f32.mrb[0].mxu0
  %v5833 = vadd.f32 %v5641, %v5832
  %v5834 = vpop.f32.mrb[0].mxu0
  %5835 = vmatprep.mubr.bf16.mxu0 %v5677
  %5836 = vmatmul.mubr.bf16.gmra.mrb[0].mxu0 %v5676
  %v5837 = vpop.f32.mrb[0].mxu0
  %v5838 = vadd.f32 %v5646, %v5837
  %v5839 = vpop.f32.mrb[0].mxu0
  %v5840 = vpop.f32.mrb[0].mxu0
  %v5841 = vadd.f32 %v5651, %v5840
  %v5842 = vpop.f32.mrb[0].mxu0
  %5843 = vdwg.mxu0
  %5844 = vmatprep.subr.bf16.mxu0 0
  %5845 = vmatpush1.bf16.msra.mxu0 %v5629
  %5846 = vmatprep.subr.bf16.mxu0 0
  %5847 = vmatpush1.bf16.msra.mxu0 %v5632
  %5848 = vmatprep.subr.bf16.mxu0 0
  %5849 = vmatpush1.bf16.msra.mxu0 0
  %5850 = vmatprep.subr.bf16.mxu0 0
  %5851 = vmatpush1.bf16.msra.mxu0 0
  %5852 = vmatprep.subr.bf16.mxu0 0
  %5853 = vmatpush1.bf16.msra.mxu0 0
  %5854 = vmatprep.subr.bf16.mxu0 0
  %5855 = vmatpush1.bf16.msra.mxu0 0
  %5856 = vmatprep.subr.bf16.mxu0 0
  %5857 = vmatpush1.bf16.msra.mxu0 0
  %5858 = vmatprep.subr.bf16.mxu0 0
  %5859 = vmatpush1.bf16.msra.mxu0 0
  %5860 = vmatprep.subr.bf16.mxu0 0
  %5861 = vmatpush1.bf16.msra.mxu0 0
  %5862 = vmatprep.subr.bf16.mxu0 0
  %5863 = vmatpush1.bf16.msra.mxu0 0
  %5864 = vmatprep.subr.bf16.mxu0 0
  %5865 = vmatpush1.bf16.msra.mxu0 0
  %5866 = vmatprep.subr.bf16.mxu0 0
  %5867 = vmatpush1.bf16.msra.mxu0 0
  %5868 = vmatprep.subr.bf16.mxu0 0
  %5869 = vmatpush1.bf16.msra.mxu0 0
  %5870 = vmatprep.subr.bf16.mxu0 0
  %5871 = vmatpush1.bf16.msra.mxu0 0
  %5872 = vmatprep.subr.bf16.mxu0 0
  %5873 = vmatpush1.bf16.msra.mxu0 0
  %5874 = vmatprep.subr.bf16.mxu0 0
  %5875 = vmatpush1.bf16.msra.mxu0 0
  %5876 = vmatprep.mubr.bf16.mxu0 0
  %5877 = vmatmul.mubr.bf16.gmra.mrb[0].mxu0 %v5684
  %v5878 = vpop.f32.mrb[0].mxu0
  %v5879 = vadd.f32 %v5830, %v5878
  %v5880 = vpop.f32.mrb[0].mxu0
  %v5881 = vpop.f32.mrb[0].mxu0
  %v5882 = vadd.f32 %v5833, %v5881
  %v5883 = vpop.f32.mrb[0].mxu0
  %5884 = vmatprep.mubr.bf16.mxu0 0
  %5885 = vmatmul.mubr.bf16.gmra.mrb[0].mxu0 %v5687
  %v5886 = vpop.f32.mrb[0].mxu0
  %v5887 = vadd.f32 %v5838, %v5886
  %v5888 = vpop.f32.mrb[0].mxu0
  %v5889 = vpop.f32.mrb[0].mxu0
  %v5890 = vadd.f32 %v5841, %v5889
  %v5891 = vpop.f32.mrb[0].mxu0
  %5892 = vdwg.mxu0
  %v5893 = vld [vmem:[%s11] sm:$0x7]
  %v5895 = vlaneseq
  %v5896 = vshrl.u32 %v5895, 7
  %v5897 = vsub.s32 0, %v5896
  %v5898 = vrot.slane %v5893, %v5897
  %v5899 = vlaneseq
  %v5900 = vshrl.u32 %v5899, 7
  %v5901 = vsub.s32 1, %v5900
  %v5902 = vrot.slane %v5893, %v5901
  %v5903 = vlaneseq
  %v5904 = vshrl.u32 %v5903, 7
  %v5905 = vsub.s32 2, %v5904
  %v5906 = vrot.slane %v5893, %v5905
  %v5910 = vmul.f32 %v5777, %v5898
  %v5911 = vmul.f32 %v5779, %v5902
  %v5912 = vmul.f32 %v5879, %v5906
  %v5913 = vmul.f32 %v5781, %v5898
  %v5914 = vmul.f32 %v5783, %v5902
  %v5915 = vmul.f32 %v5882, %v5906
  %v5916 = vmul.f32 %v5787, %v5898
  %v5917 = vmul.f32 %v5789, %v5902
  %v5918 = vmul.f32 %v5887, %v5906
  %v5919 = vmul.f32 %v5791, %v5898
  %v5920 = vmul.f32 %v5793, %v5902
  %v5921 = vmul.f32 %v5890, %v5906
  %v5922 = vadd.f32 %v5910, %v5911
  %v5923 = vsel %vm62, %v5912, 0.0
  %v5924 = vadd.f32 %v5922, %v5923
  %5925 = vadd.xlane.f32.xlu0 %v5924
  %v5926 = vpop.xlane.xlu0 %5925
  %v5927 = vadd.f32 %v5913, %v5914
  %v5928 = vsel %vm62, %v5915, 0.0
  %v5929 = vadd.f32 %v5927, %v5928
  %5930 = vadd.xlane.f32.xlu0 %v5929
  %v5931 = vpop.xlane.xlu0 %5930
  %v5932 = vadd.f32 %v5916, %v5917
  %v5933 = vsel %vm62, %v5918, 0.0
  %v5934 = vadd.f32 %v5932, %v5933
  %5935 = vadd.xlane.f32.xlu0 %v5934
  %v5936 = vpop.xlane.xlu0 %5935
  %v5937 = vadd.f32 %v5919, %v5920
  %v5938 = vsel %vm62, %v5921, 0.0
  %v5939 = vadd.f32 %v5937, %v5938
  %5940 = vadd.xlane.f32.xlu0 %v5939
  %v5941 = vpop.xlane.xlu0 %5940
  %v5942 = vmul.f32 %v5926, 0.00390625
  %v5943 = vmul.f32 %v5931, 0.00390625
  %v5944 = vmul.f32 %v5936, 0.00390625
  %v5945 = vmul.f32 %v5941, 0.00390625
  %v5946 = vld [vmem:[%s5] sm:$0xff]
  %v5947 = vld [vmem:[%s6] sm:$0xff]
  %v5949 = vsel %vm584, %v5946, 0
  %5951 = vmatprep.subr.mxu0 0.0
  %5952 = vmatpush1.msra.mxu0 %v5942
  %5953 = vmatprep.subr.mxu0 0.0
  %5954 = vmatpush1.msra.mxu0 %v5943
  %5955 = vmatprep.subr.mxu0 0.0
  %5956 = vmatpush1.msra.mxu0 %v5944
  %5957 = vmatprep.subr.mxu0 0.0
  %5958 = vmatpush1.msra.mxu0 %v5945
  %5959 = vmatprep.subr.mxu0 0.0
  %5960 = vmatpush1.msra.mxu0 0.0
  %5961 = vmatprep.subr.mxu0 0.0
  %5962 = vmatpush1.msra.mxu0 0.0
  %5963 = vmatprep.subr.mxu0 0.0
  %5964 = vmatpush1.msra.mxu0 0.0
  %5965 = vmatprep.subr.mxu0 0.0
  %5966 = vmatpush1.msra.mxu0 0.0
  %5967 = vmatprep.subr.mxu0 0.0
  %5968 = vmatpush1.msra.mxu0 0.0
  %5969 = vmatprep.subr.mxu0 0.0
  %5970 = vmatpush1.msra.mxu0 0.0
  %5971 = vmatprep.subr.mxu0 0.0
  %5972 = vmatpush1.msra.mxu0 0.0
  %5973 = vmatprep.subr.mxu0 0.0
  %5974 = vmatpush1.msra.mxu0 0.0
  %5975 = vmatprep.subr.mxu0 0.0
  %5976 = vmatpush1.msra.mxu0 0.0
  %5977 = vmatprep.subr.mxu0 0.0
  %5978 = vmatpush1.msra.mxu0 0.0
  %5979 = vmatprep.subr.mxu0 0.0
  %5980 = vmatpush1.msra.mxu0 0.0
  %5981 = vmatprep.subr.mxu0 0.0
  %5982 = vmatpush1.msra.mxu0 0.0
  %5983 = vmatprep.subr.mxu0 0.0
  %5984 = vmatpush1.msra.mxu0 0.0
  %5985 = vmatprep.subr.mxu0 0.0
  %5986 = vmatpush1.msra.mxu0 0.0
  %5987 = vmatprep.subr.mxu0 0.0
  %5988 = vmatpush1.msra.mxu0 0.0
  %5989 = vmatprep.subr.mxu0 0.0
  %5990 = vmatpush1.msra.mxu0 0.0
  %5991 = vmatprep.subr.mxu0 0.0
  %5992 = vmatpush1.msra.mxu0 0.0
  %5993 = vmatprep.subr.mxu0 0.0
  %5994 = vmatpush1.msra.mxu0 0.0
  %5995 = vmatprep.subr.mxu0 0.0
  %5996 = vmatpush1.msra.mxu0 0.0
  %5997 = vmatprep.subr.mxu0 0.0
  %5998 = vmatpush1.msra.mxu0 0.0
  %5999 = vmatprep.subr.mxu0 0.0
  %6000 = vmatpush1.msra.mxu0 0.0
  %6001 = vmatprep.subr.mxu0 0.0
  %6002 = vmatpush1.msra.mxu0 0.0
  %6003 = vmatprep.subr.mxu0 0.0
  %6004 = vmatpush1.msra.mxu0 0.0
  %6005 = vmatprep.subr.mxu0 0.0
  %6006 = vmatpush1.msra.mxu0 0.0
  %6007 = vmatprep.subr.mxu0 0.0
  %6008 = vmatpush1.msra.mxu0 0.0
  %6009 = vmatprep.subr.mxu0 0.0
  %6010 = vmatpush1.msra.mxu0 0.0
  %6011 = vmatprep.subr.mxu0 0.0
  %6012 = vmatpush1.msra.mxu0 0.0
  %6013 = vmatprep.subr.mxu0 0.0
  %6014 = vmatpush1.msra.mxu0 0.0
  %6015 = vmatprep.mubr.f32.mxu0 0.0
  %6016 = vmatmul.mubr.f32.gmra.mrb[0].mxu0 %v5949
  %v6017 = vpop.f32.mrb[0].mxu0
  %v6018 = vadd.f32 %v5947, %v6017
  %v6019 = vpop.f32.mrb[0].mxu0
  %6020 = vdwg.mxu0
  %v6021 = vmax.f32 %v6018, 0.0
  %v6022 = vld [vmem:[%s7] sm:$0xff]
  %v6023 = vld [vmem:[%s7 + $0x8] sm:$0xff]
  %v6024 = vld [vmem:[%s7 + $0x10] sm:$0xff]
  %v6025 = vld [vmem:[%s7 + $0x18] sm:$0xff]
  %v6026 = vld [vmem:[%s8] sm:$0xff]
  %v6027 = vld [vmem:[%s8 + $0x8] sm:$0xff]
  %v6028 = vld [vmem:[%s8 + $0x10] sm:$0xff]
  %v6029 = vld [vmem:[%s8 + $0x18] sm:$0xff]
  %v6031 = vsel %vm1671, %v6022, 0
  %v6034 = vsel %vm1671, %v6023, 0
  %v6037 = vsel %vm1671, %v6024, 0
  %v6040 = vsel %vm1671, %v6025, 0
  %6042 = vmatprep.subr.mxu0 0.0
  %6043 = vmatpush1.msra.mxu0 %v6021
  %6044 = vmatprep.subr.mxu0 0.0
  %6045 = vmatpush1.msra.mxu0 0.0
  %6046 = vmatprep.subr.mxu0 0.0
  %6047 = vmatpush1.msra.mxu0 0.0
  %6048 = vmatprep.subr.mxu0 0.0
  %6049 = vmatpush1.msra.mxu0 0.0
  %6050 = vmatprep.subr.mxu0 0.0
  %6051 = vmatpush1.msra.mxu0 0.0
  %6052 = vmatprep.subr.mxu0 0.0
  %6053 = vmatpush1.msra.mxu0 0.0
  %6054 = vmatprep.subr.mxu0 0.0
  %6055 = vmatpush1.msra.mxu0 0.0
  %6056 = vmatprep.subr.mxu0 0.0
  %6057 = vmatpush1.msra.mxu0 0.0
  %6058 = vmatprep.subr.mxu0 0.0
  %6059 = vmatpush1.msra.mxu0 0.0
  %6060 = vmatprep.subr.mxu0 0.0
  %6061 = vmatpush1.msra.mxu0 0.0
  %6062 = vmatprep.subr.mxu0 0.0
  %6063 = vmatpush1.msra.mxu0 0.0
  %6064 = vmatprep.subr.mxu0 0.0
  %6065 = vmatpush1.msra.mxu0 0.0
  %6066 = vmatprep.subr.mxu0 0.0
  %6067 = vmatpush1.msra.mxu0 0.0
  %6068 = vmatprep.subr.mxu0 0.0
  %6069 = vmatpush1.msra.mxu0 0.0
  %6070 = vmatprep.subr.mxu0 0.0
  %6071 = vmatpush1.msra.mxu0 0.0
  %6072 = vmatprep.subr.mxu0 0.0
  %6073 = vmatpush1.msra.mxu0 0.0
  %6074 = vmatprep.subr.mxu0 0.0
  %6075 = vmatpush1.msra.mxu0 0.0
  %6076 = vmatprep.subr.mxu0 0.0
  %6077 = vmatpush1.msra.mxu0 0.0
  %6078 = vmatprep.subr.mxu0 0.0
  %6079 = vmatpush1.msra.mxu0 0.0
  %6080 = vmatprep.subr.mxu0 0.0
  %6081 = vmatpush1.msra.mxu0 0.0
  %6082 = vmatprep.subr.mxu0 0.0
  %6083 = vmatpush1.msra.mxu0 0.0
  %6084 = vmatprep.subr.mxu0 0.0
  %6085 = vmatpush1.msra.mxu0 0.0
  %6086 = vmatprep.subr.mxu0 0.0
  %6087 = vmatpush1.msra.mxu0 0.0
  %6088 = vmatprep.subr.mxu0 0.0
  %6089 = vmatpush1.msra.mxu0 0.0
  %6090 = vmatprep.subr.mxu0 0.0
  %6091 = vmatpush1.msra.mxu0 0.0
  %6092 = vmatprep.subr.mxu0 0.0
  %6093 = vmatpush1.msra.mxu0 0.0
  %6094 = vmatprep.subr.mxu0 0.0
  %6095 = vmatpush1.msra.mxu0 0.0
  %6096 = vmatprep.subr.mxu0 0.0
  %6097 = vmatpush1.msra.mxu0 0.0
  %6098 = vmatprep.subr.mxu0 0.0
  %6099 = vmatpush1.msra.mxu0 0.0
  %6100 = vmatprep.subr.mxu0 0.0
  %6101 = vmatpush1.msra.mxu0 0.0
  %6102 = vmatprep.subr.mxu0 0.0
  %6103 = vmatpush1.msra.mxu0 0.0
  %6104 = vmatprep.subr.mxu0 0.0
  %6105 = vmatpush1.msra.mxu0 0.0
  %6106 = vmatprep.mubr.f32.mxu0 0.0
  %6107 = vmatmul.mubr.f32.gmra.mrb[0].mxu0 %v6031
  %v6108 = vpop.f32.mrb[0].mxu0
  %v6109 = vadd.f32 %v6026, %v6108
  %v6110 = vpop.f32.mrb[0].mxu0
  %6111 = vmatprep.mubr.f32.mxu0 0.0
  %6112 = vmatmul.mubr.f32.gmra.mrb[0].mxu0 %v6034
  %v6113 = vpop.f32.mrb[0].mxu0
  %v6114 = vadd.f32 %v6027, %v6113
  %v6115 = vpop.f32.mrb[0].mxu0
  %6116 = vmatprep.mubr.f32.mxu0 0.0
  %6117 = vmatmul.mubr.f32.gmra.mrb[0].mxu0 %v6037
  %v6118 = vpop.f32.mrb[0].mxu0
  %v6119 = vadd.f32 %v6028, %v6118
  %v6120 = vpop.f32.mrb[0].mxu0
  %6121 = vmatprep.mubr.f32.mxu0 0.0
  %6122 = vmatmul.mubr.f32.gmra.mrb[0].mxu0 %v6040
  %v6123 = vpop.f32.mrb[0].mxu0
  %v6124 = vadd.f32 %v6029, %v6123
  %v6125 = vpop.f32.mrb[0].mxu0
  %6126 = vdwg.mxu0
  %v6127 = vxor.u32 %v6109, 2147483648
  %v6128 = vxor.u32 %v6114, 2147483648
  %v6129 = vxor.u32 %v6119, 2147483648
  %v6130 = vxor.u32 %v6124, 2147483648
  %v6131 = vmul.f32 %v6127, 1.442695
  %v6132 = vpow.pop %v6131
  %v6133 = vmul.f32 %v6128, 1.442695
  %v6134 = vpow.pop %v6133
  %v6135 = vmul.f32 %v6129, 1.442695
  %v6136 = vpow.pop %v6135
  %v6137 = vmul.f32 %v6130, 1.442695
  %v6138 = vpow.pop %v6137
  %v6139 = vadd.f32 %v6132, 1.0
  %v6140 = vadd.f32 %v6134, 1.0
  %v6141 = vadd.f32 %v6136, 1.0
  %v6142 = vadd.f32 %v6138, 1.0
  %v6143 = vrcp.pop %v6139
  %v6144 = vmul.f32 1.0, %v6143
  %v6145 = vrcp.pop %v6140
  %v6146 = vmul.f32 1.0, %v6145
  %v6147 = vrcp.pop %v6141
  %v6148 = vmul.f32 1.0, %v6147
  %v6149 = vrcp.pop %v6142
  %v6150 = vmul.f32 1.0, %v6149
  %v6151 = vld [vmem:[#allocation4] sm:$0xff]
  %v6152 = vld [vmem:[#allocation4 + $0x8] sm:$0xff]
  %v6153 = vld [vmem:[#allocation4 + $0x10] sm:$0xff]
  %v6154 = vld [vmem:[#allocation4 + $0x18] sm:$0xff]
  %v6155 = vld [vmem:[#allocation4 + $0x20] sm:$0xff]
  %v6156 = vld [vmem:[#allocation4 + $0x28] sm:$0xff]
  %v6157 = vld [vmem:[#allocation4 + $0x30] sm:$0xff]
  %v6158 = vld [vmem:[#allocation4 + $0x38] sm:$0xff]
  %v6159 = vld [vmem:[#allocation4 + $0x40] sm:$0xff]
  %v6160 = vld [vmem:[#allocation4 + $0x48] sm:$0xff]
  %v6161 = vld [vmem:[#allocation4 + $0x50] sm:$0xff]
  %v6162 = vld [vmem:[#allocation4 + $0x58] sm:$0xff]
  %6164 = vset.pattern.permute.xlu0 0
  %6165 = vperm.xlu0 %6164, %v6144
  %v6166 = vpop.permute.xlu0 %6165
  %6169 = vset.pattern.permute.xlu0 0
  %6170 = vperm.xlu0 %6169, %v6146
  %v6171 = vpop.permute.xlu0 %6170
  %6174 = vset.pattern.permute.xlu0 0
  %6175 = vperm.xlu0 %6174, %v6148
  %v6176 = vpop.permute.xlu0 %6175
  %6179 = vset.pattern.permute.xlu0 0
  %6180 = vperm.xlu0 %6179, %v6150
  %v6181 = vpop.permute.xlu0 %6180
  %v6183 = vmul.f32 %v5910, %v6166
  %v6184 = vmul.f32 %v5911, %v6166
  %v6185 = vmul.f32 %v5912, %v6166
  %v6186 = vmul.f32 %v5913, %v6171
  %v6187 = vmul.f32 %v5914, %v6171
  %v6188 = vmul.f32 %v5915, %v6171
  %v6189 = vmul.f32 %v5916, %v6176
  %v6190 = vmul.f32 %v5917, %v6176
  %v6191 = vmul.f32 %v5918, %v6176
  %v6192 = vmul.f32 %v5919, %v6181
  %v6193 = vmul.f32 %v5920, %v6181
  %v6194 = vmul.f32 %v5921, %v6181
  %v6195 = vadd.f32 %v6151, %v6183
  %v6196 = vadd.f32 %v6152, %v6184
  %v6197 = vadd.f32 %v6153, %v6185
  %v6198 = vadd.f32 %v6154, %v6186
  %v6199 = vadd.f32 %v6155, %v6187
  %v6200 = vadd.f32 %v6156, %v6188
  %v6201 = vadd.f32 %v6157, %v6189
  %v6202 = vadd.f32 %v6158, %v6190
  %v6203 = vadd.f32 %v6159, %v6191
  %v6204 = vadd.f32 %v6160, %v6192
  %v6205 = vadd.f32 %v6161, %v6193
  %v6206 = vadd.f32 %v6162, %v6194
  %6207 = vst [vmem:[#allocation4] sm:$0xff] %v6195
  %6208 = vst [vmem:[#allocation4 + $0x8] sm:$0xff] %v6196
  %6209 = vst.msk [vmem:[#allocation4 + $0x10] sm:$0xff] %vm62, %v6197
  %6210 = vst [vmem:[#allocation4 + $0x18] sm:$0xff] %v6198
  %6211 = vst [vmem:[#allocation4 + $0x20] sm:$0xff] %v6199
  %6212 = vst.msk [vmem:[#allocation4 + $0x28] sm:$0xff] %vm62, %v6200
  %6213 = vst [vmem:[#allocation4 + $0x30] sm:$0xff] %v6201
  %6214 = vst [vmem:[#allocation4 + $0x38] sm:$0xff] %v6202
  %6215 = vst.msk [vmem:[#allocation4 + $0x40] sm:$0xff] %vm62, %v6203
  %6216 = vst [vmem:[#allocation4 + $0x48] sm:$0xff] %v6204
  %6217 = vst [vmem:[#allocation4 + $0x50] sm:$0xff] %v6205
  %6218 = vst.msk [vmem:[#allocation4 + $0x58] sm:$0xff] %vm62, %v6206
  %v6219 = vld [vmem:[#allocation4] sm:$0xff]
  %v6220 = vld [vmem:[#allocation4 + $0x8] sm:$0xff]
  %v6221 = vld [vmem:[#allocation4 + $0x10] sm:$0xff]
  %v6222 = vld [vmem:[#allocation4 + $0x18] sm:$0xff]
  %v6223 = vld [vmem:[#allocation4 + $0x20] sm:$0xff]
  %v6224 = vld [vmem:[#allocation4 + $0x28] sm:$0xff]
  %v6225 = vld [vmem:[#allocation4 + $0x30] sm:$0xff]
  %v6226 = vld [vmem:[#allocation4 + $0x38] sm:$0xff]
  %v6227 = vld [vmem:[#allocation4 + $0x40] sm:$0xff]
  %v6228 = vld [vmem:[#allocation4 + $0x48] sm:$0xff]
  %v6229 = vld [vmem:[#allocation4 + $0x50] sm:$0xff]
  %v6230 = vld [vmem:[#allocation4 + $0x58] sm:$0xff]
  %v6231 = vld [vmem:[%s1873] sm:$0xff]
  %v6232 = vld [vmem:[%s1873 + $0x8] sm:$0xf]
  %v6233 = vld [vmem:[%s1873 + $0xc] sm:$0xff]
  %v6234 = vld [vmem:[%s1873 + $0x14] sm:$0xf]
  %v6235 = vld [vmem:[%s1873 + $0x18] sm:$0xff]
  %v6236 = vld [vmem:[%s1873 + $0x20] sm:$0xf]
  %v6237 = vld [vmem:[%s1873 + $0x24] sm:$0xff]
  %v6238 = vld [vmem:[%s1873 + $0x2c] sm:$0xf]
  %v6239 = vld [vmem:[%s1882] sm:$0xff]
  %v6240 = vld [vmem:[%s1882 + $0x8] sm:$0xff]
  %v6241 = vld [vmem:[%s1882 + $0x10] sm:$0xff]
  %v6242 = vld [vmem:[%s1882 + $0x18] sm:$0xff]
  %v6243 = vpack.c.bf16 %v6222, %v6219
  %v6244 = vpack.c.bf16 %v6223, %v6220
  %v6245 = vpack.c.bf16 %v6224, %v6221
  %v6246 = vpack.c.bf16 %v6228, %v6225
  %v6247 = vpack.c.bf16 %v6229, %v6226
  %v6248 = vpack.c.bf16 %v6230, %v6227
  %6255 = vrot.lane.b32.xlu0 %v6243, 19
  %v6256 = vpop.permute.xlu0 %6255
  %6257 = vrot.lane.b32.xlu0 %v6244, 19
  %v6258 = vpop.permute.xlu0 %6257
  %6259 = vrot.lane.b32.xlu0 %v6245, 19
  %v6260 = vpop.permute.xlu0 %6259
  %6261 = vrot.lane.b32.xlu0 %v6246, 19
  %v6262 = vpop.permute.xlu0 %6261
  %6263 = vrot.lane.b32.xlu0 %v6247, 19
  %v6264 = vpop.permute.xlu0 %6263
  %6265 = vrot.lane.b32.xlu0 %v6248, 19
  %v6266 = vpop.permute.xlu0 %6265
  %v6267 = vsel %vm121, %v6256, %v6258
  %v6268 = vsel %vm121, %v6258, %v6260
  %v6269 = vsel %vm121, %v6262, %v6264
  %v6270 = vsel %vm121, %v6264, %v6266
  %6277 = vst.msk [vmem:[#allocation2] sm:$0xff] %vm132, %v6256
  %6278 = vst [vmem:[#allocation2 + $0x8] sm:$0xff] %v6267
  %6279 = vst.msk [vmem:[#allocation2 + $0x10] sm:$0xff] %vm135, %v6268
  %6280 = vst.msk [vmem:[#allocation2 + $0x18] sm:$0xff] %vm132, %v6262
  %6281 = vst [vmem:[#allocation2 + $0x20] sm:$0xff] %v6269
  %6282 = vst.msk [vmem:[#allocation2 + $0x28] sm:$0xff] %vm135, %v6270
  %v6283 = vld [vmem:[#allocation2] sm:$0xff]
  %v6284 = vld [vmem:[#allocation2 + $0x8] sm:$0xff]
  %v6285 = vld [vmem:[#allocation2 + $0x10] sm:$0xff]
  %v6286 = vld [vmem:[#allocation2 + $0x18] sm:$0xff]
  %v6287 = vld [vmem:[#allocation2 + $0x20] sm:$0xff]
  %v6288 = vld [vmem:[#allocation2 + $0x28] sm:$0xff]
  %6289 = vst [vmem:[#allocation3] sm:$0xff] %v6283
  %6290 = vst [vmem:[#allocation3 + $0x8] sm:$0xff] %v6284
  %6291 = vst.msk [vmem:[#allocation3 + $0x10] sm:$0xff] %vm62, %v6285
  %6292 = vst [vmem:[#allocation3 + $0x18] sm:$0xff] %v6286
  %6293 = vst [vmem:[#allocation3 + $0x20] sm:$0xff] %v6287
  %6294 = vst.msk [vmem:[#allocation3 + $0x28] sm:$0xff] %vm62, %v6288
  %v6295 = vld [vmem:[#allocation2] sm:$0xff]
  %v6296 = vld [vmem:[#allocation2 + $0x8] sm:$0xff]
  %v6297 = vld [vmem:[#allocation2 + $0x10] sm:$0xff]
  %v6298 = vld [vmem:[#allocation2 + $0x18] sm:$0xff]
  %v6299 = vld [vmem:[#allocation2 + $0x20] sm:$0xff]
  %v6300 = vld [vmem:[#allocation2 + $0x28] sm:$0xff]
  %6307 = vrot.lane.b32.xlu0 %v6295, 127
  %v6308 = vpop.permute.xlu0 %6307
  %6309 = vrot.lane.b32.xlu0 %v6296, 127
  %v6310 = vpop.permute.xlu0 %6309
  %6311 = vrot.lane.b32.xlu0 %v6297, 127
  %v6312 = vpop.permute.xlu0 %6311
  %6313 = vrot.lane.b32.xlu0 %v6298, 127
  %v6314 = vpop.permute.xlu0 %6313
  %6315 = vrot.lane.b32.xlu0 %v6299, 127
  %v6316 = vpop.permute.xlu0 %6315
  %6317 = vrot.lane.b32.xlu0 %v6300, 127
  %v6318 = vpop.permute.xlu0 %6317
  %v6319 = vsel %vm176, %v6308, %v6310
  %v6320 = vsel %vm176, %v6310, %v6312
  %v6321 = vsel %vm176, %v6314, %v6316
  %v6322 = vsel %vm176, %v6316, %v6318
  %6329 = vst [vmem:[#allocation3 + $0x30] sm:$0xff] %v6319
  %6330 = vst [vmem:[#allocation3 + $0x38] sm:$0xff] %v6320
  %6331 = vst.msk [vmem:[#allocation3 + $0x40] sm:$0xff] %vm62, %v6312
  %6332 = vst [vmem:[#allocation3 + $0x48] sm:$0xff] %v6321
  %6333 = vst [vmem:[#allocation3 + $0x50] sm:$0xff] %v6322
  %6334 = vst.msk [vmem:[#allocation3 + $0x58] sm:$0xff] %vm62, %v6318
  %v6335 = vld [vmem:[#allocation2] sm:$0xff]
  %v6336 = vld [vmem:[#allocation2 + $0x8] sm:$0xff]
  %v6337 = vld [vmem:[#allocation2 + $0x10] sm:$0xff]
  %v6338 = vld [vmem:[#allocation2 + $0x18] sm:$0xff]
  %v6339 = vld [vmem:[#allocation2 + $0x20] sm:$0xff]
  %v6340 = vld [vmem:[#allocation2 + $0x28] sm:$0xff]
  %6347 = vrot.lane.b32.xlu0 %v6335, 126
  %v6348 = vpop.permute.xlu0 %6347
  %6349 = vrot.lane.b32.xlu0 %v6336, 126
  %v6350 = vpop.permute.xlu0 %6349
  %6351 = vrot.lane.b32.xlu0 %v6337, 126
  %v6352 = vpop.permute.xlu0 %6351
  %6353 = vrot.lane.b32.xlu0 %v6338, 126
  %v6354 = vpop.permute.xlu0 %6353
  %6355 = vrot.lane.b32.xlu0 %v6339, 126
  %v6356 = vpop.permute.xlu0 %6355
  %6357 = vrot.lane.b32.xlu0 %v6340, 126
  %v6358 = vpop.permute.xlu0 %6357
  %v6359 = vsel %vm217, %v6348, %v6350
  %v6360 = vsel %vm217, %v6350, %v6352
  %v6361 = vsel %vm217, %v6354, %v6356
  %v6362 = vsel %vm217, %v6356, %v6358
  %6369 = vst [vmem:[#allocation3 + $0x60] sm:$0xff] %v6359
  %6370 = vst [vmem:[#allocation3 + $0x68] sm:$0xff] %v6360
  %6371 = vst.msk [vmem:[#allocation3 + $0x70] sm:$0xff] %vm62, %v6352
  %6372 = vst [vmem:[#allocation3 + $0x78] sm:$0xff] %v6361
  %6373 = vst [vmem:[#allocation3 + $0x80] sm:$0xff] %v6362
  %6374 = vst.msk [vmem:[#allocation3 + $0x88] sm:$0xff] %vm62, %v6358
  %v6375 = vld [vmem:[#allocation2] sm:$0xff]
  %v6376 = vld [vmem:[#allocation2 + $0x8] sm:$0xff]
  %v6377 = vld [vmem:[#allocation2 + $0x10] sm:$0xff]
  %v6378 = vld [vmem:[#allocation2 + $0x18] sm:$0xff]
  %v6379 = vld [vmem:[#allocation2 + $0x20] sm:$0xff]
  %v6380 = vld [vmem:[#allocation2 + $0x28] sm:$0xff]
  %6387 = vrot.lane.b32.xlu0 %v6375, 110
  %v6388 = vpop.permute.xlu0 %6387
  %6389 = vrot.lane.b32.xlu0 %v6376, 110
  %v6390 = vpop.permute.xlu0 %6389
  %6391 = vrot.lane.b32.xlu0 %v6377, 110
  %v6392 = vpop.permute.xlu0 %6391
  %6393 = vrot.lane.b32.xlu0 %v6378, 110
  %v6394 = vpop.permute.xlu0 %6393
  %6395 = vrot.lane.b32.xlu0 %v6379, 110
  %v6396 = vpop.permute.xlu0 %6395
  %6397 = vrot.lane.b32.xlu0 %v6380, 110
  %v6398 = vpop.permute.xlu0 %6397
  %v6399 = vsel %vm258, %v6388, %v6390
  %v6400 = vsel %vm258, %v6390, %v6392
  %v6401 = vsel %vm258, %v6394, %v6396
  %v6402 = vsel %vm258, %v6396, %v6398
  %6409 = vst [vmem:[#allocation3 + $0x90] sm:$0xff] %v6399
  %6410 = vst [vmem:[#allocation3 + $0x98] sm:$0xff] %v6400
  %6411 = vst.msk [vmem:[#allocation3 + $0xa0] sm:$0xff] %vm62, %v6392
  %6412 = vst [vmem:[#allocation3 + $0xa8] sm:$0xff] %v6401
  %6413 = vst [vmem:[#allocation3 + $0xb0] sm:$0xff] %v6402
  %6414 = vst.msk [vmem:[#allocation3 + $0xb8] sm:$0xff] %vm62, %v6398
  %v6415 = vld [vmem:[#allocation2] sm:$0xff]
  %v6416 = vld [vmem:[#allocation2 + $0x8] sm:$0xff]
  %v6417 = vld [vmem:[#allocation2 + $0x10] sm:$0xff]
  %v6418 = vld [vmem:[#allocation2 + $0x18] sm:$0xff]
  %v6419 = vld [vmem:[#allocation2 + $0x20] sm:$0xff]
  %v6420 = vld [vmem:[#allocation2 + $0x28] sm:$0xff]
  %6427 = vrot.lane.b32.xlu0 %v6415, 109
  %v6428 = vpop.permute.xlu0 %6427
  %6429 = vrot.lane.b32.xlu0 %v6416, 109
  %v6430 = vpop.permute.xlu0 %6429
  %6431 = vrot.lane.b32.xlu0 %v6417, 109
  %v6432 = vpop.permute.xlu0 %6431
  %6433 = vrot.lane.b32.xlu0 %v6418, 109
  %v6434 = vpop.permute.xlu0 %6433
  %6435 = vrot.lane.b32.xlu0 %v6419, 109
  %v6436 = vpop.permute.xlu0 %6435
  %6437 = vrot.lane.b32.xlu0 %v6420, 109
  %v6438 = vpop.permute.xlu0 %6437
  %v6439 = vsel %vm299, %v6428, %v6430
  %v6440 = vsel %vm299, %v6430, %v6432
  %v6441 = vsel %vm299, %v6434, %v6436
  %v6442 = vsel %vm299, %v6436, %v6438
  %6449 = vst [vmem:[#allocation3 + $0xc0] sm:$0xff] %v6439
  %6450 = vst [vmem:[#allocation3 + $0xc8] sm:$0xff] %v6440
  %6451 = vst.msk [vmem:[#allocation3 + $0xd0] sm:$0xff] %vm62, %v6432
  %6452 = vst [vmem:[#allocation3 + $0xd8] sm:$0xff] %v6441
  %6453 = vst [vmem:[#allocation3 + $0xe0] sm:$0xff] %v6442
  %6454 = vst.msk [vmem:[#allocation3 + $0xe8] sm:$0xff] %vm62, %v6438
  %v6455 = vld [vmem:[#allocation2] sm:$0xff]
  %v6456 = vld [vmem:[#allocation2 + $0x8] sm:$0xff]
  %v6457 = vld [vmem:[#allocation2 + $0x10] sm:$0xff]
  %v6458 = vld [vmem:[#allocation2 + $0x18] sm:$0xff]
  %v6459 = vld [vmem:[#allocation2 + $0x20] sm:$0xff]
  %v6460 = vld [vmem:[#allocation2 + $0x28] sm:$0xff]
  %6467 = vrot.lane.b32.xlu0 %v6455, 108
  %v6468 = vpop.permute.xlu0 %6467
  %6469 = vrot.lane.b32.xlu0 %v6456, 108
  %v6470 = vpop.permute.xlu0 %6469
  %6471 = vrot.lane.b32.xlu0 %v6457, 108
  %v6472 = vpop.permute.xlu0 %6471
  %6473 = vrot.lane.b32.xlu0 %v6458, 108
  %v6474 = vpop.permute.xlu0 %6473
  %6475 = vrot.lane.b32.xlu0 %v6459, 108
  %v6476 = vpop.permute.xlu0 %6475
  %6477 = vrot.lane.b32.xlu0 %v6460, 108
  %v6478 = vpop.permute.xlu0 %6477
  %v6479 = vsel %vm340, %v6468, %v6470
  %v6480 = vsel %vm340, %v6470, %v6472
  %v6481 = vsel %vm340, %v6474, %v6476
  %v6482 = vsel %vm340, %v6476, %v6478
  %6489 = vst [vmem:[#allocation3 + $0xf0] sm:$0xff] %v6479
  %6490 = vst [vmem:[#allocation3 + $0xf8] sm:$0xff] %v6480
  %6491 = vst.msk [vmem:[#allocation3 + $0x100] sm:$0xff] %vm62, %v6472
  %6492 = vst [vmem:[#allocation3 + $0x108] sm:$0xff] %v6481
  %6493 = vst [vmem:[#allocation3 + $0x110] sm:$0xff] %v6482
  %6494 = vst.msk [vmem:[#allocation3 + $0x118] sm:$0xff] %vm62, %v6478
  %v6495 = vld [vmem:[#allocation2] sm:$0xff]
  %v6496 = vld [vmem:[#allocation2 + $0x8] sm:$0xff]
  %v6497 = vld [vmem:[#allocation2 + $0x10] sm:$0xff]
  %v6498 = vld [vmem:[#allocation2 + $0x18] sm:$0xff]
  %v6499 = vld [vmem:[#allocation2 + $0x20] sm:$0xff]
  %v6500 = vld [vmem:[#allocation2 + $0x28] sm:$0xff]
  %6507 = vrot.lane.b32.xlu0 %v6495, 92
  %v6508 = vpop.permute.xlu0 %6507
  %6509 = vrot.lane.b32.xlu0 %v6496, 92
  %v6510 = vpop.permute.xlu0 %6509
  %6511 = vrot.lane.b32.xlu0 %v6497, 92
  %v6512 = vpop.permute.xlu0 %6511
  %6513 = vrot.lane.b32.xlu0 %v6498, 92
  %v6514 = vpop.permute.xlu0 %6513
  %6515 = vrot.lane.b32.xlu0 %v6499, 92
  %v6516 = vpop.permute.xlu0 %6515
  %6517 = vrot.lane.b32.xlu0 %v6500, 92
  %v6518 = vpop.permute.xlu0 %6517
  %v6519 = vsel %vm381, %v6508, %v6510
  %v6520 = vsel %vm381, %v6510, %v6512
  %v6521 = vsel %vm381, %v6514, %v6516
  %v6522 = vsel %vm381, %v6516, %v6518
  %6529 = vst [vmem:[#allocation3 + $0x120] sm:$0xff] %v6519
  %6530 = vst [vmem:[#allocation3 + $0x128] sm:$0xff] %v6520
  %6531 = vst.msk [vmem:[#allocation3 + $0x130] sm:$0xff] %vm62, %v6512
  %6532 = vst [vmem:[#allocation3 + $0x138] sm:$0xff] %v6521
  %6533 = vst [vmem:[#allocation3 + $0x140] sm:$0xff] %v6522
  %6534 = vst.msk [vmem:[#allocation3 + $0x148] sm:$0xff] %vm62, %v6518
  %v6535 = vld [vmem:[#allocation2] sm:$0xff]
  %v6536 = vld [vmem:[#allocation2 + $0x8] sm:$0xff]
  %v6537 = vld [vmem:[#allocation2 + $0x10] sm:$0xff]
  %v6538 = vld [vmem:[#allocation2 + $0x18] sm:$0xff]
  %v6539 = vld [vmem:[#allocation2 + $0x20] sm:$0xff]
  %v6540 = vld [vmem:[#allocation2 + $0x28] sm:$0xff]
  %6547 = vrot.lane.b32.xlu0 %v6535, 91
  %v6548 = vpop.permute.xlu0 %6547
  %6549 = vrot.lane.b32.xlu0 %v6536, 91
  %v6550 = vpop.permute.xlu0 %6549
  %6551 = vrot.lane.b32.xlu0 %v6537, 91
  %v6552 = vpop.permute.xlu0 %6551
  %6553 = vrot.lane.b32.xlu0 %v6538, 91
  %v6554 = vpop.permute.xlu0 %6553
  %6555 = vrot.lane.b32.xlu0 %v6539, 91
  %v6556 = vpop.permute.xlu0 %6555
  %6557 = vrot.lane.b32.xlu0 %v6540, 91
  %v6558 = vpop.permute.xlu0 %6557
  %v6559 = vsel %vm422, %v6548, %v6550
  %v6560 = vsel %vm422, %v6550, %v6552
  %v6561 = vsel %vm422, %v6554, %v6556
  %v6562 = vsel %vm422, %v6556, %v6558
  %6569 = vst [vmem:[#allocation3 + $0x150] sm:$0xff] %v6559
  %6570 = vst [vmem:[#allocation3 + $0x158] sm:$0xff] %v6560
  %6571 = vst.msk [vmem:[#allocation3 + $0x160] sm:$0xff] %vm62, %v6552
  %6572 = vst [vmem:[#allocation3 + $0x168] sm:$0xff] %v6561
  %6573 = vst [vmem:[#allocation3 + $0x170] sm:$0xff] %v6562
  %6574 = vst.msk [vmem:[#allocation3 + $0x178] sm:$0xff] %vm62, %v6558
  %v6575 = vld [vmem:[#allocation2] sm:$0xff]
  %v6576 = vld [vmem:[#allocation2 + $0x8] sm:$0xff]
  %v6577 = vld [vmem:[#allocation2 + $0x10] sm:$0xff]
  %v6578 = vld [vmem:[#allocation2 + $0x18] sm:$0xff]
  %v6579 = vld [vmem:[#allocation2 + $0x20] sm:$0xff]
  %v6580 = vld [vmem:[#allocation2 + $0x28] sm:$0xff]
  %6587 = vrot.lane.b32.xlu0 %v6575, 90
  %v6588 = vpop.permute.xlu0 %6587
  %6589 = vrot.lane.b32.xlu0 %v6576, 90
  %v6590 = vpop.permute.xlu0 %6589
  %6591 = vrot.lane.b32.xlu0 %v6577, 90
  %v6592 = vpop.permute.xlu0 %6591
  %6593 = vrot.lane.b32.xlu0 %v6578, 90
  %v6594 = vpop.permute.xlu0 %6593
  %6595 = vrot.lane.b32.xlu0 %v6579, 90
  %v6596 = vpop.permute.xlu0 %6595
  %6597 = vrot.lane.b32.xlu0 %v6580, 90
  %v6598 = vpop.permute.xlu0 %6597
  %v6599 = vsel %vm463, %v6588, %v6590
  %v6600 = vsel %vm463, %v6590, %v6592
  %v6601 = vsel %vm463, %v6594, %v6596
  %v6602 = vsel %vm463, %v6596, %v6598
  %6609 = vst [vmem:[#allocation3 + $0x180] sm:$0xff] %v6599
  %6610 = vst [vmem:[#allocation3 + $0x188] sm:$0xff] %v6600
  %6611 = vst.msk [vmem:[#allocation3 + $0x190] sm:$0xff] %vm62, %v6592
  %6612 = vst [vmem:[#allocation3 + $0x198] sm:$0xff] %v6601
  %6613 = vst [vmem:[#allocation3 + $0x1a0] sm:$0xff] %v6602
  %6614 = vst.msk [vmem:[#allocation3 + $0x1a8] sm:$0xff] %vm62, %v6598
  %v6615 = vld [vmem:[#allocation3] sm:$0xff]
  %v6616 = vld [vmem:[#allocation3 + $0x8] sm:$0xff]
  %v6617 = vld [vmem:[#allocation3 + $0x10] sm:$0xff]
  %v6618 = vld [vmem:[#allocation3 + $0x18] sm:$0xff]
  %v6619 = vld [vmem:[#allocation3 + $0x20] sm:$0xff]
  %v6620 = vld [vmem:[#allocation3 + $0x28] sm:$0xff]
  %v6621 = vld [vmem:[#allocation3 + $0x30] sm:$0xff]
  %v6622 = vld [vmem:[#allocation3 + $0x38] sm:$0xff]
  %v6623 = vld [vmem:[#allocation3 + $0x40] sm:$0xff]
  %v6624 = vld [vmem:[#allocation3 + $0x48] sm:$0xff]
  %v6625 = vld [vmem:[#allocation3 + $0x50] sm:$0xff]
  %v6626 = vld [vmem:[#allocation3 + $0x58] sm:$0xff]
  %v6627 = vld [vmem:[#allocation3 + $0x60] sm:$0xff]
  %v6628 = vld [vmem:[#allocation3 + $0x68] sm:$0xff]
  %v6629 = vld [vmem:[#allocation3 + $0x70] sm:$0xff]
  %v6630 = vld [vmem:[#allocation3 + $0x78] sm:$0xff]
  %v6631 = vld [vmem:[#allocation3 + $0x80] sm:$0xff]
  %v6632 = vld [vmem:[#allocation3 + $0x88] sm:$0xff]
  %v6633 = vld [vmem:[#allocation3 + $0x90] sm:$0xff]
  %v6634 = vld [vmem:[#allocation3 + $0x98] sm:$0xff]
  %v6635 = vld [vmem:[#allocation3 + $0xa0] sm:$0xff]
  %v6636 = vld [vmem:[#allocation3 + $0xa8] sm:$0xff]
  %v6637 = vld [vmem:[#allocation3 + $0xb0] sm:$0xff]
  %v6638 = vld [vmem:[#allocation3 + $0xb8] sm:$0xff]
  %v6639 = vld [vmem:[#allocation3 + $0xc0] sm:$0xff]
  %v6640 = vld [vmem:[#allocation3 + $0xc8] sm:$0xff]
  %v6641 = vld [vmem:[#allocation3 + $0xd0] sm:$0xff]
  %v6642 = vld [vmem:[#allocation3 + $0xd8] sm:$0xff]
  %v6643 = vld [vmem:[#allocation3 + $0xe0] sm:$0xff]
  %v6644 = vld [vmem:[#allocation3 + $0xe8] sm:$0xff]
  %v6645 = vld [vmem:[#allocation3 + $0xf0] sm:$0xff]
  %v6646 = vld [vmem:[#allocation3 + $0xf8] sm:$0xff]
  %v6647 = vld [vmem:[#allocation3 + $0x100] sm:$0xff]
  %v6648 = vld [vmem:[#allocation3 + $0x108] sm:$0xff]
  %v6649 = vld [vmem:[#allocation3 + $0x110] sm:$0xff]
  %v6650 = vld [vmem:[#allocation3 + $0x118] sm:$0xff]
  %v6651 = vld [vmem:[#allocation3 + $0x120] sm:$0xff]
  %v6652 = vld [vmem:[#allocation3 + $0x128] sm:$0xff]
  %v6653 = vld [vmem:[#allocation3 + $0x130] sm:$0xff]
  %v6654 = vld [vmem:[#allocation3 + $0x138] sm:$0xff]
  %v6655 = vld [vmem:[#allocation3 + $0x140] sm:$0xff]
  %v6656 = vld [vmem:[#allocation3 + $0x148] sm:$0xff]
  %v6657 = vld [vmem:[#allocation3 + $0x150] sm:$0xff]
  %v6658 = vld [vmem:[#allocation3 + $0x158] sm:$0xff]
  %v6659 = vld [vmem:[#allocation3 + $0x160] sm:$0xff]
  %v6660 = vld [vmem:[#allocation3 + $0x168] sm:$0xff]
  %v6661 = vld [vmem:[#allocation3 + $0x170] sm:$0xff]
  %v6662 = vld [vmem:[#allocation3 + $0x178] sm:$0xff]
  %v6663 = vld [vmem:[#allocation3 + $0x180] sm:$0xff]
  %v6664 = vld [vmem:[#allocation3 + $0x188] sm:$0xff]
  %v6665 = vld [vmem:[#allocation3 + $0x190] sm:$0xff]
  %v6666 = vld [vmem:[#allocation3 + $0x198] sm:$0xff]
  %v6667 = vld [vmem:[#allocation3 + $0x1a0] sm:$0xff]
  %v6668 = vld [vmem:[#allocation3 + $0x1a8] sm:$0xff]
  %6670 = vset.pattern.permute.xlu0 0
  %6671 = vperm.xlu0 %6670, %v6239
  %v6672 = vpop.permute.xlu0 %6671
  %6675 = vset.pattern.permute.xlu0 0
  %6676 = vperm.xlu0 %6675, %v6240
  %v6677 = vpop.permute.xlu0 %6676
  %6680 = vset.pattern.permute.xlu0 0
  %6681 = vperm.xlu0 %6680, %v6241
  %v6682 = vpop.permute.xlu0 %6681
  %6685 = vset.pattern.permute.xlu0 0
  %6686 = vperm.xlu0 %6685, %v6242
  %v6687 = vpop.permute.xlu0 %6686
  %v6697 = vunpack.c.l.b16 %v6231
  %v6698 = vunpack.c.h.b16 %v6231
  %v6699 = vunpack.c.l.b16 %v6232
  %v6700 = vunpack.c.l.b16 %v6233
  %v6701 = vunpack.c.h.b16 %v6233
  %v6702 = vunpack.c.l.b16 %v6234
  %v6703 = vunpack.c.l.b16 %v6235
  %v6704 = vunpack.c.h.b16 %v6235
  %v6705 = vunpack.c.l.b16 %v6236
  %v6706 = vunpack.c.l.b16 %v6237
  %v6707 = vunpack.c.h.b16 %v6237
  %v6708 = vunpack.c.l.b16 %v6238
  %v6709 = vpack.c.b16 %v6700, %v6697
  %v6710 = vpack.c.b16 %v6701, %v6698
  %v6711 = vpack.c.b16 %v6702, %v6699
  %v6712 = vpack.c.b16 %v6706, %v6703
  %v6713 = vpack.c.b16 %v6707, %v6704
  %v6714 = vpack.c.b16 %v6708, %v6705
  %v6720 = vsel %vm584, %v6711, 0
  %v6723 = vsel %vm584, %v6714, 0
  %6725 = vmatprep.subr.bf16.mxu0 %v6616
  %6726 = vmatpush1.bf16.msra.mxu0 %v6615
  %6727 = vmatprep.subr.bf16.mxu0 %v6619
  %6728 = vmatpush1.bf16.msra.mxu0 %v6618
  %6729 = vmatprep.subr.bf16.mxu0 %v6622
  %6730 = vmatpush1.bf16.msra.mxu0 %v6621
  %6731 = vmatprep.subr.bf16.mxu0 %v6625
  %6732 = vmatpush1.bf16.msra.mxu0 %v6624
  %6733 = vmatprep.subr.bf16.mxu0 %v6628
  %6734 = vmatpush1.bf16.msra.mxu0 %v6627
  %6735 = vmatprep.subr.bf16.mxu0 %v6631
  %6736 = vmatpush1.bf16.msra.mxu0 %v6630
  %6737 = vmatprep.subr.bf16.mxu0 %v6634
  %6738 = vmatpush1.bf16.msra.mxu0 %v6633
  %6739 = vmatprep.subr.bf16.mxu0 %v6637
  %6740 = vmatpush1.bf16.msra.mxu0 %v6636
  %6741 = vmatprep.subr.bf16.mxu0 %v6640
  %6742 = vmatpush1.bf16.msra.mxu0 %v6639
  %6743 = vmatprep.subr.bf16.mxu0 %v6643
  %6744 = vmatpush1.bf16.msra.mxu0 %v6642
  %6745 = vmatprep.subr.bf16.mxu0 %v6646
  %6746 = vmatpush1.bf16.msra.mxu0 %v6645
  %6747 = vmatprep.subr.bf16.mxu0 %v6649
  %6748 = vmatpush1.bf16.msra.mxu0 %v6648
  %6749 = vmatprep.subr.bf16.mxu0 %v6652
  %6750 = vmatpush1.bf16.msra.mxu0 %v6651
  %6751 = vmatprep.subr.bf16.mxu0 %v6655
  %6752 = vmatpush1.bf16.msra.mxu0 %v6654
  %6753 = vmatprep.subr.bf16.mxu0 %v6658
  %6754 = vmatpush1.bf16.msra.mxu0 %v6657
  %6755 = vmatprep.subr.bf16.mxu0 %v6661
  %6756 = vmatpush1.bf16.msra.mxu0 %v6660
  %6757 = vmatprep.mubr.bf16.mxu0 %v6710
  %6758 = vmatmul.mubr.bf16.gmra.mrb[0].mxu0 %v6709
  %v6759 = vpop.f32.mrb[0].mxu0
  %v6760 = vadd.f32 %v6672, %v6759
  %v6761 = vpop.f32.mrb[0].mxu0
  %v6762 = vadd.f32 %v6672, %v6761
  %v6763 = vpop.f32.mrb[0].mxu0
  %v6764 = vadd.f32 %v6677, %v6763
  %v6765 = vpop.f32.mrb[0].mxu0
  %v6766 = vadd.f32 %v6677, %v6765
  %6767 = vmatprep.mubr.bf16.mxu0 %v6713
  %6768 = vmatmul.mubr.bf16.gmra.mrb[0].mxu0 %v6712
  %v6769 = vpop.f32.mrb[0].mxu0
  %v6770 = vadd.f32 %v6682, %v6769
  %v6771 = vpop.f32.mrb[0].mxu0
  %v6772 = vadd.f32 %v6682, %v6771
  %v6773 = vpop.f32.mrb[0].mxu0
  %v6774 = vadd.f32 %v6687, %v6773
  %v6775 = vpop.f32.mrb[0].mxu0
  %v6776 = vadd.f32 %v6687, %v6775
  %6777 = vdwg.mxu0
  %6778 = vmatprep.subr.bf16.mxu0 %v6664
  %6779 = vmatpush1.bf16.msra.mxu0 %v6663
  %6780 = vmatprep.subr.bf16.mxu0 %v6667
  %6781 = vmatpush1.bf16.msra.mxu0 %v6666
  %6782 = vmatprep.subr.bf16.mxu0 0
  %6783 = vmatpush1.bf16.msra.mxu0 0
  %6784 = vmatprep.subr.bf16.mxu0 0
  %6785 = vmatpush1.bf16.msra.mxu0 0
  %6786 = vmatprep.subr.bf16.mxu0 0
  %6787 = vmatpush1.bf16.msra.mxu0 0
  %6788 = vmatprep.subr.bf16.mxu0 0
  %6789 = vmatpush1.bf16.msra.mxu0 0
  %6790 = vmatprep.subr.bf16.mxu0 0
  %6791 = vmatpush1.bf16.msra.mxu0 0
  %6792 = vmatprep.subr.bf16.mxu0 0
  %6793 = vmatpush1.bf16.msra.mxu0 0
  %6794 = vmatprep.subr.bf16.mxu0 0
  %6795 = vmatpush1.bf16.msra.mxu0 0
  %6796 = vmatprep.subr.bf16.mxu0 0
  %6797 = vmatpush1.bf16.msra.mxu0 0
  %6798 = vmatprep.subr.bf16.mxu0 0
  %6799 = vmatpush1.bf16.msra.mxu0 0
  %6800 = vmatprep.subr.bf16.mxu0 0
  %6801 = vmatpush1.bf16.msra.mxu0 0
  %6802 = vmatprep.subr.bf16.mxu0 0
  %6803 = vmatpush1.bf16.msra.mxu0 0
  %6804 = vmatprep.subr.bf16.mxu0 0
  %6805 = vmatpush1.bf16.msra.mxu0 0
  %6806 = vmatprep.subr.bf16.mxu0 0
  %6807 = vmatpush1.bf16.msra.mxu0 0
  %6808 = vmatprep.subr.bf16.mxu0 0
  %6809 = vmatpush1.bf16.msra.mxu0 0
  %6810 = vmatprep.mubr.bf16.mxu0 0
  %6811 = vmatmul.mubr.bf16.gmra.mrb[0].mxu0 %v6720
  %v6812 = vpop.f32.mrb[0].mxu0
  %v6813 = vadd.f32 %v6760, %v6812
  %v6814 = vpop.f32.mrb[0].mxu0
  %v6815 = vadd.f32 %v6762, %v6814
  %v6816 = vpop.f32.mrb[0].mxu0
  %v6817 = vadd.f32 %v6764, %v6816
  %v6818 = vpop.f32.mrb[0].mxu0
  %v6819 = vadd.f32 %v6766, %v6818
  %6820 = vmatprep.mubr.bf16.mxu0 0
  %6821 = vmatmul.mubr.bf16.gmra.mrb[0].mxu0 %v6723
  %v6822 = vpop.f32.mrb[0].mxu0
  %v6823 = vadd.f32 %v6770, %v6822
  %v6824 = vpop.f32.mrb[0].mxu0
  %v6825 = vadd.f32 %v6772, %v6824
  %v6826 = vpop.f32.mrb[0].mxu0
  %v6827 = vadd.f32 %v6774, %v6826
  %v6828 = vpop.f32.mrb[0].mxu0
  %v6829 = vadd.f32 %v6776, %v6828
  %6830 = vdwg.mxu0
  %6831 = vmatprep.subr.bf16.mxu0 0
  %6832 = vmatpush1.bf16.msra.mxu0 %v6617
  %6833 = vmatprep.subr.bf16.mxu0 0
  %6834 = vmatpush1.bf16.msra.mxu0 %v6620
  %6835 = vmatprep.subr.bf16.mxu0 0
  %6836 = vmatpush1.bf16.msra.mxu0 %v6623
  %6837 = vmatprep.subr.bf16.mxu0 0
  %6838 = vmatpush1.bf16.msra.mxu0 %v6626
  %6839 = vmatprep.subr.bf16.mxu0 0
  %6840 = vmatpush1.bf16.msra.mxu0 %v6629
  %6841 = vmatprep.subr.bf16.mxu0 0
  %6842 = vmatpush1.bf16.msra.mxu0 %v6632
  %6843 = vmatprep.subr.bf16.mxu0 0
  %6844 = vmatpush1.bf16.msra.mxu0 %v6635
  %6845 = vmatprep.subr.bf16.mxu0 0
  %6846 = vmatpush1.bf16.msra.mxu0 %v6638
  %6847 = vmatprep.subr.bf16.mxu0 0
  %6848 = vmatpush1.bf16.msra.mxu0 %v6641
  %6849 = vmatprep.subr.bf16.mxu0 0
  %6850 = vmatpush1.bf16.msra.mxu0 %v6644
  %6851 = vmatprep.subr.bf16.mxu0 0
  %6852 = vmatpush1.bf16.msra.mxu0 %v6647
  %6853 = vmatprep.subr.bf16.mxu0 0
  %6854 = vmatpush1.bf16.msra.mxu0 %v6650
  %6855 = vmatprep.subr.bf16.mxu0 0
  %6856 = vmatpush1.bf16.msra.mxu0 %v6653
  %6857 = vmatprep.subr.bf16.mxu0 0
  %6858 = vmatpush1.bf16.msra.mxu0 %v6656
  %6859 = vmatprep.subr.bf16.mxu0 0
  %6860 = vmatpush1.bf16.msra.mxu0 %v6659
  %6861 = vmatprep.subr.bf16.mxu0 0
  %6862 = vmatpush1.bf16.msra.mxu0 %v6662
  %6863 = vmatprep.mubr.bf16.mxu0 %v6710
  %6864 = vmatmul.mubr.bf16.gmra.mrb[0].mxu0 %v6709
  %v6865 = vpop.f32.mrb[0].mxu0
  %v6866 = vadd.f32 %v6672, %v6865
  %v6867 = vpop.f32.mrb[0].mxu0
  %v6868 = vpop.f32.mrb[0].mxu0
  %v6869 = vadd.f32 %v6677, %v6868
  %v6870 = vpop.f32.mrb[0].mxu0
  %6871 = vmatprep.mubr.bf16.mxu0 %v6713
  %6872 = vmatmul.mubr.bf16.gmra.mrb[0].mxu0 %v6712
  %v6873 = vpop.f32.mrb[0].mxu0
  %v6874 = vadd.f32 %v6682, %v6873
  %v6875 = vpop.f32.mrb[0].mxu0
  %v6876 = vpop.f32.mrb[0].mxu0
  %v6877 = vadd.f32 %v6687, %v6876
  %v6878 = vpop.f32.mrb[0].mxu0
  %6879 = vdwg.mxu0
  %6880 = vmatprep.subr.bf16.mxu0 0
  %6881 = vmatpush1.bf16.msra.mxu0 %v6665
  %6882 = vmatprep.subr.bf16.mxu0 0
  %6883 = vmatpush1.bf16.msra.mxu0 %v6668
  %6884 = vmatprep.subr.bf16.mxu0 0
  %6885 = vmatpush1.bf16.msra.mxu0 0
  %6886 = vmatprep.subr.bf16.mxu0 0
  %6887 = vmatpush1.bf16.msra.mxu0 0
  %6888 = vmatprep.subr.bf16.mxu0 0
  %6889 = vmatpush1.bf16.msra.mxu0 0
  %6890 = vmatprep.subr.bf16.mxu0 0
  %6891 = vmatpush1.bf16.msra.mxu0 0
  %6892 = vmatprep.subr.bf16.mxu0 0
  %6893 = vmatpush1.bf16.msra.mxu0 0
  %6894 = vmatprep.subr.bf16.mxu0 0
  %6895 = vmatpush1.bf16.msra.mxu0 0
  %6896 = vmatprep.subr.bf16.mxu0 0
  %6897 = vmatpush1.bf16.msra.mxu0 0
  %6898 = vmatprep.subr.bf16.mxu0 0
  %6899 = vmatpush1.bf16.msra.mxu0 0
  %6900 = vmatprep.subr.bf16.mxu0 0
  %6901 = vmatpush1.bf16.msra.mxu0 0
  %6902 = vmatprep.subr.bf16.mxu0 0
  %6903 = vmatpush1.bf16.msra.mxu0 0
  %6904 = vmatprep.subr.bf16.mxu0 0
  %6905 = vmatpush1.bf16.msra.mxu0 0
  %6906 = vmatprep.subr.bf16.mxu0 0
  %6907 = vmatpush1.bf16.msra.mxu0 0
  %6908 = vmatprep.subr.bf16.mxu0 0
  %6909 = vmatpush1.bf16.msra.mxu0 0
  %6910 = vmatprep.subr.bf16.mxu0 0
  %6911 = vmatpush1.bf16.msra.mxu0 0
  %6912 = vmatprep.mubr.bf16.mxu0 0
  %6913 = vmatmul.mubr.bf16.gmra.mrb[0].mxu0 %v6720
  %v6914 = vpop.f32.mrb[0].mxu0
  %v6915 = vadd.f32 %v6866, %v6914
  %v6916 = vpop.f32.mrb[0].mxu0
  %v6917 = vpop.f32.mrb[0].mxu0
  %v6918 = vadd.f32 %v6869, %v6917
  %v6919 = vpop.f32.mrb[0].mxu0
  %6920 = vmatprep.mubr.bf16.mxu0 0
  %6921 = vmatmul.mubr.bf16.gmra.mrb[0].mxu0 %v6723
  %v6922 = vpop.f32.mrb[0].mxu0
  %v6923 = vadd.f32 %v6874, %v6922
  %v6924 = vpop.f32.mrb[0].mxu0
  %v6925 = vpop.f32.mrb[0].mxu0
  %v6926 = vadd.f32 %v6877, %v6925
  %v6927 = vpop.f32.mrb[0].mxu0
  %6928 = vdwg.mxu0
  %v6929 = vld [vmem:[%s11] sm:$0x7]
  %v6931 = vlaneseq
  %v6932 = vshrl.u32 %v6931, 7
  %v6933 = vsub.s32 0, %v6932
  %v6934 = vrot.slane %v6929, %v6933
  %v6935 = vlaneseq
  %v6936 = vshrl.u32 %v6935, 7
  %v6937 = vsub.s32 1, %v6936
  %v6938 = vrot.slane %v6929, %v6937
  %v6939 = vlaneseq
  %v6940 = vshrl.u32 %v6939, 7
  %v6941 = vsub.s32 2, %v6940
  %v6942 = vrot.slane %v6929, %v6941
  %v6946 = vmul.f32 %v6813, %v6934
  %v6947 = vmul.f32 %v6815, %v6938
  %v6948 = vmul.f32 %v6915, %v6942
  %v6949 = vmul.f32 %v6817, %v6934
  %v6950 = vmul.f32 %v6819, %v6938
  %v6951 = vmul.f32 %v6918, %v6942
  %v6952 = vmul.f32 %v6823, %v6934
  %v6953 = vmul.f32 %v6825, %v6938
  %v6954 = vmul.f32 %v6923, %v6942
  %v6955 = vmul.f32 %v6827, %v6934
  %v6956 = vmul.f32 %v6829, %v6938
  %v6957 = vmul.f32 %v6926, %v6942
  %v6958 = vmax.f32 %v6946, 0.0
  %v6959 = vmax.f32 %v6947, 0.0
  %v6960 = vmax.f32 %v6948, 0.0
  %v6961 = vmax.f32 %v6949, 0.0
  %v6962 = vmax.f32 %v6950, 0.0
  %v6963 = vmax.f32 %v6951, 0.0
  %v6964 = vmax.f32 %v6952, 0.0
  %v6965 = vmax.f32 %v6953, 0.0
  %v6966 = vmax.f32 %v6954, 0.0
  %v6967 = vmax.f32 %v6955, 0.0
  %v6968 = vmax.f32 %v6956, 0.0
  %v6969 = vmax.f32 %v6957, 0.0
  %v6970 = vld [vmem:[%s2614] sm:$0xff]
  %v6971 = vld [vmem:[%s2614 + $0x8] sm:$0xf]
  %v6972 = vld [vmem:[%s2614 + $0xc] sm:$0xff]
  %v6973 = vld [vmem:[%s2614 + $0x14] sm:$0xf]
  %v6974 = vld [vmem:[%s2614 + $0x18] sm:$0xff]
  %v6975 = vld [vmem:[%s2614 + $0x20] sm:$0xf]
  %v6976 = vld [vmem:[%s2614 + $0x24] sm:$0xff]
  %v6977 = vld [vmem:[%s2614 + $0x2c] sm:$0xf]
  %v6978 = vld [vmem:[%s2623] sm:$0xff]
  %v6979 = vld [vmem:[%s2623 + $0x8] sm:$0xff]
  %v6980 = vld [vmem:[%s2623 + $0x10] sm:$0xff]
  %v6981 = vld [vmem:[%s2623 + $0x18] sm:$0xff]
  %v6982 = vpack.c.bf16 %v6961, %v6958
  %v6983 = vpack.c.bf16 %v6962, %v6959
  %v6984 = vpack.c.bf16 %v6963, %v6960
  %v6985 = vpack.c.bf16 %v6967, %v6964
  %v6986 = vpack.c.bf16 %v6968, %v6965
  %v6987 = vpack.c.bf16 %v6969, %v6966
  %6994 = vrot.lane.b32.xlu0 %v6982, 19
  %v6995 = vpop.permute.xlu0 %6994
  %6996 = vrot.lane.b32.xlu0 %v6983, 19
  %v6997 = vpop.permute.xlu0 %6996
  %6998 = vrot.lane.b32.xlu0 %v6984, 19
  %v6999 = vpop.permute.xlu0 %6998
  %7000 = vrot.lane.b32.xlu0 %v6985, 19
  %v7001 = vpop.permute.xlu0 %7000
  %7002 = vrot.lane.b32.xlu0 %v6986, 19
  %v7003 = vpop.permute.xlu0 %7002
  %7004 = vrot.lane.b32.xlu0 %v6987, 19
  %v7005 = vpop.permute.xlu0 %7004
  %v7006 = vsel %vm121, %v6995, %v6997
  %v7007 = vsel %vm121, %v6997, %v6999
  %v7008 = vsel %vm121, %v7001, %v7003
  %v7009 = vsel %vm121, %v7003, %v7005
  %7016 = vst.msk [vmem:[#allocation2] sm:$0xff] %vm132, %v6995
  %7017 = vst [vmem:[#allocation2 + $0x8] sm:$0xff] %v7006
  %7018 = vst.msk [vmem:[#allocation2 + $0x10] sm:$0xff] %vm135, %v7007
  %7019 = vst.msk [vmem:[#allocation2 + $0x18] sm:$0xff] %vm132, %v7001
  %7020 = vst [vmem:[#allocation2 + $0x20] sm:$0xff] %v7008
  %7021 = vst.msk [vmem:[#allocation2 + $0x28] sm:$0xff] %vm135, %v7009
  %v7022 = vld [vmem:[#allocation2] sm:$0xff]
  %v7023 = vld [vmem:[#allocation2 + $0x8] sm:$0xff]
  %v7024 = vld [vmem:[#allocation2 + $0x10] sm:$0xff]
  %v7025 = vld [vmem:[#allocation2 + $0x18] sm:$0xff]
  %v7026 = vld [vmem:[#allocation2 + $0x20] sm:$0xff]
  %v7027 = vld [vmem:[#allocation2 + $0x28] sm:$0xff]
  %7028 = vst [vmem:[#allocation3] sm:$0xff] %v7022
  %7029 = vst [vmem:[#allocation3 + $0x8] sm:$0xff] %v7023
  %7030 = vst.msk [vmem:[#allocation3 + $0x10] sm:$0xff] %vm62, %v7024
  %7031 = vst [vmem:[#allocation3 + $0x18] sm:$0xff] %v7025
  %7032 = vst [vmem:[#allocation3 + $0x20] sm:$0xff] %v7026
  %7033 = vst.msk [vmem:[#allocation3 + $0x28] sm:$0xff] %vm62, %v7027
  %v7034 = vld [vmem:[#allocation2] sm:$0xff]
  %v7035 = vld [vmem:[#allocation2 + $0x8] sm:$0xff]
  %v7036 = vld [vmem:[#allocation2 + $0x10] sm:$0xff]
  %v7037 = vld [vmem:[#allocation2 + $0x18] sm:$0xff]
  %v7038 = vld [vmem:[#allocation2 + $0x20] sm:$0xff]
  %v7039 = vld [vmem:[#allocation2 + $0x28] sm:$0xff]
  %7046 = vrot.lane.b32.xlu0 %v7034, 127
  %v7047 = vpop.permute.xlu0 %7046
  %7048 = vrot.lane.b32.xlu0 %v7035, 127
  %v7049 = vpop.permute.xlu0 %7048
  %7050 = vrot.lane.b32.xlu0 %v7036, 127
  %v7051 = vpop.permute.xlu0 %7050
  %7052 = vrot.lane.b32.xlu0 %v7037, 127
  %v7053 = vpop.permute.xlu0 %7052
  %7054 = vrot.lane.b32.xlu0 %v7038, 127
  %v7055 = vpop.permute.xlu0 %7054
  %7056 = vrot.lane.b32.xlu0 %v7039, 127
  %v7057 = vpop.permute.xlu0 %7056
  %v7058 = vsel %vm176, %v7047, %v7049
  %v7059 = vsel %vm176, %v7049, %v7051
  %v7060 = vsel %vm176, %v7053, %v7055
  %v7061 = vsel %vm176, %v7055, %v7057
  %7068 = vst [vmem:[#allocation3 + $0x30] sm:$0xff] %v7058
  %7069 = vst [vmem:[#allocation3 + $0x38] sm:$0xff] %v7059
  %7070 = vst.msk [vmem:[#allocation3 + $0x40] sm:$0xff] %vm62, %v7051
  %7071 = vst [vmem:[#allocation3 + $0x48] sm:$0xff] %v7060
  %7072 = vst [vmem:[#allocation3 + $0x50] sm:$0xff] %v7061
  %7073 = vst.msk [vmem:[#allocation3 + $0x58] sm:$0xff] %vm62, %v7057
  %v7074 = vld [vmem:[#allocation2] sm:$0xff]
  %v7075 = vld [vmem:[#allocation2 + $0x8] sm:$0xff]
  %v7076 = vld [vmem:[#allocation2 + $0x10] sm:$0xff]
  %v7077 = vld [vmem:[#allocation2 + $0x18] sm:$0xff]
  %v7078 = vld [vmem:[#allocation2 + $0x20] sm:$0xff]
  %v7079 = vld [vmem:[#allocation2 + $0x28] sm:$0xff]
  %7086 = vrot.lane.b32.xlu0 %v7074, 126
  %v7087 = vpop.permute.xlu0 %7086
  %7088 = vrot.lane.b32.xlu0 %v7075, 126
  %v7089 = vpop.permute.xlu0 %7088
  %7090 = vrot.lane.b32.xlu0 %v7076, 126
  %v7091 = vpop.permute.xlu0 %7090
  %7092 = vrot.lane.b32.xlu0 %v7077, 126
  %v7093 = vpop.permute.xlu0 %7092
  %7094 = vrot.lane.b32.xlu0 %v7078, 126
  %v7095 = vpop.permute.xlu0 %7094
  %7096 = vrot.lane.b32.xlu0 %v7079, 126
  %v7097 = vpop.permute.xlu0 %7096
  %v7098 = vsel %vm217, %v7087, %v7089
  %v7099 = vsel %vm217, %v7089, %v7091
  %v7100 = vsel %vm217, %v7093, %v7095
  %v7101 = vsel %vm217, %v7095, %v7097
  %7108 = vst [vmem:[#allocation3 + $0x60] sm:$0xff] %v7098
  %7109 = vst [vmem:[#allocation3 + $0x68] sm:$0xff] %v7099
  %7110 = vst.msk [vmem:[#allocation3 + $0x70] sm:$0xff] %vm62, %v7091
  %7111 = vst [vmem:[#allocation3 + $0x78] sm:$0xff] %v7100
  %7112 = vst [vmem:[#allocation3 + $0x80] sm:$0xff] %v7101
  %7113 = vst.msk [vmem:[#allocation3 + $0x88] sm:$0xff] %vm62, %v7097
  %v7114 = vld [vmem:[#allocation2] sm:$0xff]
  %v7115 = vld [vmem:[#allocation2 + $0x8] sm:$0xff]
  %v7116 = vld [vmem:[#allocation2 + $0x10] sm:$0xff]
  %v7117 = vld [vmem:[#allocation2 + $0x18] sm:$0xff]
  %v7118 = vld [vmem:[#allocation2 + $0x20] sm:$0xff]
  %v7119 = vld [vmem:[#allocation2 + $0x28] sm:$0xff]
  %7126 = vrot.lane.b32.xlu0 %v7114, 110
  %v7127 = vpop.permute.xlu0 %7126
  %7128 = vrot.lane.b32.xlu0 %v7115, 110
  %v7129 = vpop.permute.xlu0 %7128
  %7130 = vrot.lane.b32.xlu0 %v7116, 110
  %v7131 = vpop.permute.xlu0 %7130
  %7132 = vrot.lane.b32.xlu0 %v7117, 110
  %v7133 = vpop.permute.xlu0 %7132
  %7134 = vrot.lane.b32.xlu0 %v7118, 110
  %v7135 = vpop.permute.xlu0 %7134
  %7136 = vrot.lane.b32.xlu0 %v7119, 110
  %v7137 = vpop.permute.xlu0 %7136
  %v7138 = vsel %vm258, %v7127, %v7129
  %v7139 = vsel %vm258, %v7129, %v7131
  %v7140 = vsel %vm258, %v7133, %v7135
  %v7141 = vsel %vm258, %v7135, %v7137
  %7148 = vst [vmem:[#allocation3 + $0x90] sm:$0xff] %v7138
  %7149 = vst [vmem:[#allocation3 + $0x98] sm:$0xff] %v7139
  %7150 = vst.msk [vmem:[#allocation3 + $0xa0] sm:$0xff] %vm62, %v7131
  %7151 = vst [vmem:[#allocation3 + $0xa8] sm:$0xff] %v7140
  %7152 = vst [vmem:[#allocation3 + $0xb0] sm:$0xff] %v7141
  %7153 = vst.msk [vmem:[#allocation3 + $0xb8] sm:$0xff] %vm62, %v7137
  %v7154 = vld [vmem:[#allocation2] sm:$0xff]
  %v7155 = vld [vmem:[#allocation2 + $0x8] sm:$0xff]
  %v7156 = vld [vmem:[#allocation2 + $0x10] sm:$0xff]
  %v7157 = vld [vmem:[#allocation2 + $0x18] sm:$0xff]
  %v7158 = vld [vmem:[#allocation2 + $0x20] sm:$0xff]
  %v7159 = vld [vmem:[#allocation2 + $0x28] sm:$0xff]
  %7166 = vrot.lane.b32.xlu0 %v7154, 109
  %v7167 = vpop.permute.xlu0 %7166
  %7168 = vrot.lane.b32.xlu0 %v7155, 109
  %v7169 = vpop.permute.xlu0 %7168
  %7170 = vrot.lane.b32.xlu0 %v7156, 109
  %v7171 = vpop.permute.xlu0 %7170
  %7172 = vrot.lane.b32.xlu0 %v7157, 109
  %v7173 = vpop.permute.xlu0 %7172
  %7174 = vrot.lane.b32.xlu0 %v7158, 109
  %v7175 = vpop.permute.xlu0 %7174
  %7176 = vrot.lane.b32.xlu0 %v7159, 109
  %v7177 = vpop.permute.xlu0 %7176
  %v7178 = vsel %vm299, %v7167, %v7169
  %v7179 = vsel %vm299, %v7169, %v7171
  %v7180 = vsel %vm299, %v7173, %v7175
  %v7181 = vsel %vm299, %v7175, %v7177
  %7188 = vst [vmem:[#allocation3 + $0xc0] sm:$0xff] %v7178
  %7189 = vst [vmem:[#allocation3 + $0xc8] sm:$0xff] %v7179
  %7190 = vst.msk [vmem:[#allocation3 + $0xd0] sm:$0xff] %vm62, %v7171
  %7191 = vst [vmem:[#allocation3 + $0xd8] sm:$0xff] %v7180
  %7192 = vst [vmem:[#allocation3 + $0xe0] sm:$0xff] %v7181
  %7193 = vst.msk [vmem:[#allocation3 + $0xe8] sm:$0xff] %vm62, %v7177
  %v7194 = vld [vmem:[#allocation2] sm:$0xff]
  %v7195 = vld [vmem:[#allocation2 + $0x8] sm:$0xff]
  %v7196 = vld [vmem:[#allocation2 + $0x10] sm:$0xff]
  %v7197 = vld [vmem:[#allocation2 + $0x18] sm:$0xff]
  %v7198 = vld [vmem:[#allocation2 + $0x20] sm:$0xff]
  %v7199 = vld [vmem:[#allocation2 + $0x28] sm:$0xff]
  %7206 = vrot.lane.b32.xlu0 %v7194, 108
  %v7207 = vpop.permute.xlu0 %7206
  %7208 = vrot.lane.b32.xlu0 %v7195, 108
  %v7209 = vpop.permute.xlu0 %7208
  %7210 = vrot.lane.b32.xlu0 %v7196, 108
  %v7211 = vpop.permute.xlu0 %7210
  %7212 = vrot.lane.b32.xlu0 %v7197, 108
  %v7213 = vpop.permute.xlu0 %7212
  %7214 = vrot.lane.b32.xlu0 %v7198, 108
  %v7215 = vpop.permute.xlu0 %7214
  %7216 = vrot.lane.b32.xlu0 %v7199, 108
  %v7217 = vpop.permute.xlu0 %7216
  %v7218 = vsel %vm340, %v7207, %v7209
  %v7219 = vsel %vm340, %v7209, %v7211
  %v7220 = vsel %vm340, %v7213, %v7215
  %v7221 = vsel %vm340, %v7215, %v7217
  %7228 = vst [vmem:[#allocation3 + $0xf0] sm:$0xff] %v7218
  %7229 = vst [vmem:[#allocation3 + $0xf8] sm:$0xff] %v7219
  %7230 = vst.msk [vmem:[#allocation3 + $0x100] sm:$0xff] %vm62, %v7211
  %7231 = vst [vmem:[#allocation3 + $0x108] sm:$0xff] %v7220
  %7232 = vst [vmem:[#allocation3 + $0x110] sm:$0xff] %v7221
  %7233 = vst.msk [vmem:[#allocation3 + $0x118] sm:$0xff] %vm62, %v7217
  %v7234 = vld [vmem:[#allocation2] sm:$0xff]
  %v7235 = vld [vmem:[#allocation2 + $0x8] sm:$0xff]
  %v7236 = vld [vmem:[#allocation2 + $0x10] sm:$0xff]
  %v7237 = vld [vmem:[#allocation2 + $0x18] sm:$0xff]
  %v7238 = vld [vmem:[#allocation2 + $0x20] sm:$0xff]
  %v7239 = vld [vmem:[#allocation2 + $0x28] sm:$0xff]
  %7246 = vrot.lane.b32.xlu0 %v7234, 92
  %v7247 = vpop.permute.xlu0 %7246
  %7248 = vrot.lane.b32.xlu0 %v7235, 92
  %v7249 = vpop.permute.xlu0 %7248
  %7250 = vrot.lane.b32.xlu0 %v7236, 92
  %v7251 = vpop.permute.xlu0 %7250
  %7252 = vrot.lane.b32.xlu0 %v7237, 92
  %v7253 = vpop.permute.xlu0 %7252
  %7254 = vrot.lane.b32.xlu0 %v7238, 92
  %v7255 = vpop.permute.xlu0 %7254
  %7256 = vrot.lane.b32.xlu0 %v7239, 92
  %v7257 = vpop.permute.xlu0 %7256
  %v7258 = vsel %vm381, %v7247, %v7249
  %v7259 = vsel %vm381, %v7249, %v7251
  %v7260 = vsel %vm381, %v7253, %v7255
  %v7261 = vsel %vm381, %v7255, %v7257
  %7268 = vst [vmem:[#allocation3 + $0x120] sm:$0xff] %v7258
  %7269 = vst [vmem:[#allocation3 + $0x128] sm:$0xff] %v7259
  %7270 = vst.msk [vmem:[#allocation3 + $0x130] sm:$0xff] %vm62, %v7251
  %7271 = vst [vmem:[#allocation3 + $0x138] sm:$0xff] %v7260
  %7272 = vst [vmem:[#allocation3 + $0x140] sm:$0xff] %v7261
  %7273 = vst.msk [vmem:[#allocation3 + $0x148] sm:$0xff] %vm62, %v7257
  %v7274 = vld [vmem:[#allocation2] sm:$0xff]
  %v7275 = vld [vmem:[#allocation2 + $0x8] sm:$0xff]
  %v7276 = vld [vmem:[#allocation2 + $0x10] sm:$0xff]
  %v7277 = vld [vmem:[#allocation2 + $0x18] sm:$0xff]
  %v7278 = vld [vmem:[#allocation2 + $0x20] sm:$0xff]
  %v7279 = vld [vmem:[#allocation2 + $0x28] sm:$0xff]
  %7286 = vrot.lane.b32.xlu0 %v7274, 91
  %v7287 = vpop.permute.xlu0 %7286
  %7288 = vrot.lane.b32.xlu0 %v7275, 91
  %v7289 = vpop.permute.xlu0 %7288
  %7290 = vrot.lane.b32.xlu0 %v7276, 91
  %v7291 = vpop.permute.xlu0 %7290
  %7292 = vrot.lane.b32.xlu0 %v7277, 91
  %v7293 = vpop.permute.xlu0 %7292
  %7294 = vrot.lane.b32.xlu0 %v7278, 91
  %v7295 = vpop.permute.xlu0 %7294
  %7296 = vrot.lane.b32.xlu0 %v7279, 91
  %v7297 = vpop.permute.xlu0 %7296
  %v7298 = vsel %vm422, %v7287, %v7289
  %v7299 = vsel %vm422, %v7289, %v7291
  %v7300 = vsel %vm422, %v7293, %v7295
  %v7301 = vsel %vm422, %v7295, %v7297
  %7308 = vst [vmem:[#allocation3 + $0x150] sm:$0xff] %v7298
  %7309 = vst [vmem:[#allocation3 + $0x158] sm:$0xff] %v7299
  %7310 = vst.msk [vmem:[#allocation3 + $0x160] sm:$0xff] %vm62, %v7291
  %7311 = vst [vmem:[#allocation3 + $0x168] sm:$0xff] %v7300
  %7312 = vst [vmem:[#allocation3 + $0x170] sm:$0xff] %v7301
  %7313 = vst.msk [vmem:[#allocation3 + $0x178] sm:$0xff] %vm62, %v7297
  %v7314 = vld [vmem:[#allocation2] sm:$0xff]
  %v7315 = vld [vmem:[#allocation2 + $0x8] sm:$0xff]
  %v7316 = vld [vmem:[#allocation2 + $0x10] sm:$0xff]
  %v7317 = vld [vmem:[#allocation2 + $0x18] sm:$0xff]
  %v7318 = vld [vmem:[#allocation2 + $0x20] sm:$0xff]
  %v7319 = vld [vmem:[#allocation2 + $0x28] sm:$0xff]
  %7326 = vrot.lane.b32.xlu0 %v7314, 90
  %v7327 = vpop.permute.xlu0 %7326
  %7328 = vrot.lane.b32.xlu0 %v7315, 90
  %v7329 = vpop.permute.xlu0 %7328
  %7330 = vrot.lane.b32.xlu0 %v7316, 90
  %v7331 = vpop.permute.xlu0 %7330
  %7332 = vrot.lane.b32.xlu0 %v7317, 90
  %v7333 = vpop.permute.xlu0 %7332
  %7334 = vrot.lane.b32.xlu0 %v7318, 90
  %v7335 = vpop.permute.xlu0 %7334
  %7336 = vrot.lane.b32.xlu0 %v7319, 90
  %v7337 = vpop.permute.xlu0 %7336
  %v7338 = vsel %vm463, %v7327, %v7329
  %v7339 = vsel %vm463, %v7329, %v7331
  %v7340 = vsel %vm463, %v7333, %v7335
  %v7341 = vsel %vm463, %v7335, %v7337
  %7348 = vst [vmem:[#allocation3 + $0x180] sm:$0xff] %v7338
  %7349 = vst [vmem:[#allocation3 + $0x188] sm:$0xff] %v7339
  %7350 = vst.msk [vmem:[#allocation3 + $0x190] sm:$0xff] %vm62, %v7331
  %7351 = vst [vmem:[#allocation3 + $0x198] sm:$0xff] %v7340
  %7352 = vst [vmem:[#allocation3 + $0x1a0] sm:$0xff] %v7341
  %7353 = vst.msk [vmem:[#allocation3 + $0x1a8] sm:$0xff] %vm62, %v7337
  %v7354 = vld [vmem:[#allocation3] sm:$0xff]
  %v7355 = vld [vmem:[#allocation3 + $0x8] sm:$0xff]
  %v7356 = vld [vmem:[#allocation3 + $0x10] sm:$0xff]
  %v7357 = vld [vmem:[#allocation3 + $0x18] sm:$0xff]
  %v7358 = vld [vmem:[#allocation3 + $0x20] sm:$0xff]
  %v7359 = vld [vmem:[#allocation3 + $0x28] sm:$0xff]
  %v7360 = vld [vmem:[#allocation3 + $0x30] sm:$0xff]
  %v7361 = vld [vmem:[#allocation3 + $0x38] sm:$0xff]
  %v7362 = vld [vmem:[#allocation3 + $0x40] sm:$0xff]
  %v7363 = vld [vmem:[#allocation3 + $0x48] sm:$0xff]
  %v7364 = vld [vmem:[#allocation3 + $0x50] sm:$0xff]
  %v7365 = vld [vmem:[#allocation3 + $0x58] sm:$0xff]
  %v7366 = vld [vmem:[#allocation3 + $0x60] sm:$0xff]
  %v7367 = vld [vmem:[#allocation3 + $0x68] sm:$0xff]
  %v7368 = vld [vmem:[#allocation3 + $0x70] sm:$0xff]
  %v7369 = vld [vmem:[#allocation3 + $0x78] sm:$0xff]
  %v7370 = vld [vmem:[#allocation3 + $0x80] sm:$0xff]
  %v7371 = vld [vmem:[#allocation3 + $0x88] sm:$0xff]
  %v7372 = vld [vmem:[#allocation3 + $0x90] sm:$0xff]
  %v7373 = vld [vmem:[#allocation3 + $0x98] sm:$0xff]
  %v7374 = vld [vmem:[#allocation3 + $0xa0] sm:$0xff]
  %v7375 = vld [vmem:[#allocation3 + $0xa8] sm:$0xff]
  %v7376 = vld [vmem:[#allocation3 + $0xb0] sm:$0xff]
  %v7377 = vld [vmem:[#allocation3 + $0xb8] sm:$0xff]
  %v7378 = vld [vmem:[#allocation3 + $0xc0] sm:$0xff]
  %v7379 = vld [vmem:[#allocation3 + $0xc8] sm:$0xff]
  %v7380 = vld [vmem:[#allocation3 + $0xd0] sm:$0xff]
  %v7381 = vld [vmem:[#allocation3 + $0xd8] sm:$0xff]
  %v7382 = vld [vmem:[#allocation3 + $0xe0] sm:$0xff]
  %v7383 = vld [vmem:[#allocation3 + $0xe8] sm:$0xff]
  %v7384 = vld [vmem:[#allocation3 + $0xf0] sm:$0xff]
  %v7385 = vld [vmem:[#allocation3 + $0xf8] sm:$0xff]
  %v7386 = vld [vmem:[#allocation3 + $0x100] sm:$0xff]
  %v7387 = vld [vmem:[#allocation3 + $0x108] sm:$0xff]
  %v7388 = vld [vmem:[#allocation3 + $0x110] sm:$0xff]
  %v7389 = vld [vmem:[#allocation3 + $0x118] sm:$0xff]
  %v7390 = vld [vmem:[#allocation3 + $0x120] sm:$0xff]
  %v7391 = vld [vmem:[#allocation3 + $0x128] sm:$0xff]
  %v7392 = vld [vmem:[#allocation3 + $0x130] sm:$0xff]
  %v7393 = vld [vmem:[#allocation3 + $0x138] sm:$0xff]
  %v7394 = vld [vmem:[#allocation3 + $0x140] sm:$0xff]
  %v7395 = vld [vmem:[#allocation3 + $0x148] sm:$0xff]
  %v7396 = vld [vmem:[#allocation3 + $0x150] sm:$0xff]
  %v7397 = vld [vmem:[#allocation3 + $0x158] sm:$0xff]
  %v7398 = vld [vmem:[#allocation3 + $0x160] sm:$0xff]
  %v7399 = vld [vmem:[#allocation3 + $0x168] sm:$0xff]
  %v7400 = vld [vmem:[#allocation3 + $0x170] sm:$0xff]
  %v7401 = vld [vmem:[#allocation3 + $0x178] sm:$0xff]
  %v7402 = vld [vmem:[#allocation3 + $0x180] sm:$0xff]
  %v7403 = vld [vmem:[#allocation3 + $0x188] sm:$0xff]
  %v7404 = vld [vmem:[#allocation3 + $0x190] sm:$0xff]
  %v7405 = vld [vmem:[#allocation3 + $0x198] sm:$0xff]
  %v7406 = vld [vmem:[#allocation3 + $0x1a0] sm:$0xff]
  %v7407 = vld [vmem:[#allocation3 + $0x1a8] sm:$0xff]
  %7409 = vset.pattern.permute.xlu0 0
  %7410 = vperm.xlu0 %7409, %v6978
  %v7411 = vpop.permute.xlu0 %7410
  %7414 = vset.pattern.permute.xlu0 0
  %7415 = vperm.xlu0 %7414, %v6979
  %v7416 = vpop.permute.xlu0 %7415
  %7419 = vset.pattern.permute.xlu0 0
  %7420 = vperm.xlu0 %7419, %v6980
  %v7421 = vpop.permute.xlu0 %7420
  %7424 = vset.pattern.permute.xlu0 0
  %7425 = vperm.xlu0 %7424, %v6981
  %v7426 = vpop.permute.xlu0 %7425
  %v7436 = vunpack.c.l.b16 %v6970
  %v7437 = vunpack.c.h.b16 %v6970
  %v7438 = vunpack.c.l.b16 %v6971
  %v7439 = vunpack.c.l.b16 %v6972
  %v7440 = vunpack.c.h.b16 %v6972
  %v7441 = vunpack.c.l.b16 %v6973
  %v7442 = vunpack.c.l.b16 %v6974
  %v7443 = vunpack.c.h.b16 %v6974
  %v7444 = vunpack.c.l.b16 %v6975
  %v7445 = vunpack.c.l.b16 %v6976
  %v7446 = vunpack.c.h.b16 %v6976
  %v7447 = vunpack.c.l.b16 %v6977
  %v7448 = vpack.c.b16 %v7439, %v7436
  %v7449 = vpack.c.b16 %v7440, %v7437
  %v7450 = vpack.c.b16 %v7441, %v7438
  %v7451 = vpack.c.b16 %v7445, %v7442
  %v7452 = vpack.c.b16 %v7446, %v7443
  %v7453 = vpack.c.b16 %v7447, %v7444
  %v7459 = vsel %vm584, %v7450, 0
  %v7462 = vsel %vm584, %v7453, 0
  %7464 = vmatprep.subr.bf16.mxu0 %v7355
  %7465 = vmatpush1.bf16.msra.mxu0 %v7354
  %7466 = vmatprep.subr.bf16.mxu0 %v7358
  %7467 = vmatpush1.bf16.msra.mxu0 %v7357
  %7468 = vmatprep.subr.bf16.mxu0 %v7361
  %7469 = vmatpush1.bf16.msra.mxu0 %v7360
  %7470 = vmatprep.subr.bf16.mxu0 %v7364
  %7471 = vmatpush1.bf16.msra.mxu0 %v7363
  %7472 = vmatprep.subr.bf16.mxu0 %v7367
  %7473 = vmatpush1.bf16.msra.mxu0 %v7366
  %7474 = vmatprep.subr.bf16.mxu0 %v7370
  %7475 = vmatpush1.bf16.msra.mxu0 %v7369
  %7476 = vmatprep.subr.bf16.mxu0 %v7373
  %7477 = vmatpush1.bf16.msra.mxu0 %v7372
  %7478 = vmatprep.subr.bf16.mxu0 %v7376
  %7479 = vmatpush1.bf16.msra.mxu0 %v7375
  %7480 = vmatprep.subr.bf16.mxu0 %v7379
  %7481 = vmatpush1.bf16.msra.mxu0 %v7378
  %7482 = vmatprep.subr.bf16.mxu0 %v7382
  %7483 = vmatpush1.bf16.msra.mxu0 %v7381
  %7484 = vmatprep.subr.bf16.mxu0 %v7385
  %7485 = vmatpush1.bf16.msra.mxu0 %v7384
  %7486 = vmatprep.subr.bf16.mxu0 %v7388
  %7487 = vmatpush1.bf16.msra.mxu0 %v7387
  %7488 = vmatprep.subr.bf16.mxu0 %v7391
  %7489 = vmatpush1.bf16.msra.mxu0 %v7390
  %7490 = vmatprep.subr.bf16.mxu0 %v7394
  %7491 = vmatpush1.bf16.msra.mxu0 %v7393
  %7492 = vmatprep.subr.bf16.mxu0 %v7397
  %7493 = vmatpush1.bf16.msra.mxu0 %v7396
  %7494 = vmatprep.subr.bf16.mxu0 %v7400
  %7495 = vmatpush1.bf16.msra.mxu0 %v7399
  %7496 = vmatprep.mubr.bf16.mxu0 %v7449
  %7497 = vmatmul.mubr.bf16.gmra.mrb[0].mxu0 %v7448
  %v7498 = vpop.f32.mrb[0].mxu0
  %v7499 = vadd.f32 %v7411, %v7498
  %v7500 = vpop.f32.mrb[0].mxu0
  %v7501 = vadd.f32 %v7411, %v7500
  %v7502 = vpop.f32.mrb[0].mxu0
  %v7503 = vadd.f32 %v7416, %v7502
  %v7504 = vpop.f32.mrb[0].mxu0
  %v7505 = vadd.f32 %v7416, %v7504
  %7506 = vmatprep.mubr.bf16.mxu0 %v7452
  %7507 = vmatmul.mubr.bf16.gmra.mrb[0].mxu0 %v7451
  %v7508 = vpop.f32.mrb[0].mxu0
  %v7509 = vadd.f32 %v7421, %v7508
  %v7510 = vpop.f32.mrb[0].mxu0
  %v7511 = vadd.f32 %v7421, %v7510
  %v7512 = vpop.f32.mrb[0].mxu0
  %v7513 = vadd.f32 %v7426, %v7512
  %v7514 = vpop.f32.mrb[0].mxu0
  %v7515 = vadd.f32 %v7426, %v7514
  %7516 = vdwg.mxu0
  %7517 = vmatprep.subr.bf16.mxu0 %v7403
  %7518 = vmatpush1.bf16.msra.mxu0 %v7402
  %7519 = vmatprep.subr.bf16.mxu0 %v7406
  %7520 = vmatpush1.bf16.msra.mxu0 %v7405
  %7521 = vmatprep.subr.bf16.mxu0 0
  %7522 = vmatpush1.bf16.msra.mxu0 0
  %7523 = vmatprep.subr.bf16.mxu0 0
  %7524 = vmatpush1.bf16.msra.mxu0 0
  %7525 = vmatprep.subr.bf16.mxu0 0
  %7526 = vmatpush1.bf16.msra.mxu0 0
  %7527 = vmatprep.subr.bf16.mxu0 0
  %7528 = vmatpush1.bf16.msra.mxu0 0
  %7529 = vmatprep.subr.bf16.mxu0 0
  %7530 = vmatpush1.bf16.msra.mxu0 0
  %7531 = vmatprep.subr.bf16.mxu0 0
  %7532 = vmatpush1.bf16.msra.mxu0 0
  %7533 = vmatprep.subr.bf16.mxu0 0
  %7534 = vmatpush1.bf16.msra.mxu0 0
  %7535 = vmatprep.subr.bf16.mxu0 0
  %7536 = vmatpush1.bf16.msra.mxu0 0
  %7537 = vmatprep.subr.bf16.mxu0 0
  %7538 = vmatpush1.bf16.msra.mxu0 0
  %7539 = vmatprep.subr.bf16.mxu0 0
  %7540 = vmatpush1.bf16.msra.mxu0 0
  %7541 = vmatprep.subr.bf16.mxu0 0
  %7542 = vmatpush1.bf16.msra.mxu0 0
  %7543 = vmatprep.subr.bf16.mxu0 0
  %7544 = vmatpush1.bf16.msra.mxu0 0
  %7545 = vmatprep.subr.bf16.mxu0 0
  %7546 = vmatpush1.bf16.msra.mxu0 0
  %7547 = vmatprep.subr.bf16.mxu0 0
  %7548 = vmatpush1.bf16.msra.mxu0 0
  %7549 = vmatprep.mubr.bf16.mxu0 0
  %7550 = vmatmul.mubr.bf16.gmra.mrb[0].mxu0 %v7459
  %v7551 = vpop.f32.mrb[0].mxu0
  %v7552 = vadd.f32 %v7499, %v7551
  %v7553 = vpop.f32.mrb[0].mxu0
  %v7554 = vadd.f32 %v7501, %v7553
  %v7555 = vpop.f32.mrb[0].mxu0
  %v7556 = vadd.f32 %v7503, %v7555
  %v7557 = vpop.f32.mrb[0].mxu0
  %v7558 = vadd.f32 %v7505, %v7557
  %7559 = vmatprep.mubr.bf16.mxu0 0
  %7560 = vmatmul.mubr.bf16.gmra.mrb[0].mxu0 %v7462
  %v7561 = vpop.f32.mrb[0].mxu0
  %v7562 = vadd.f32 %v7509, %v7561
  %v7563 = vpop.f32.mrb[0].mxu0
  %v7564 = vadd.f32 %v7511, %v7563
  %v7565 = vpop.f32.mrb[0].mxu0
  %v7566 = vadd.f32 %v7513, %v7565
  %v7567 = vpop.f32.mrb[0].mxu0
  %v7568 = vadd.f32 %v7515, %v7567
  %7569 = vdwg.mxu0
  %7570 = vmatprep.subr.bf16.mxu0 0
  %7571 = vmatpush1.bf16.msra.mxu0 %v7356
  %7572 = vmatprep.subr.bf16.mxu0 0
  %7573 = vmatpush1.bf16.msra.mxu0 %v7359
  %7574 = vmatprep.subr.bf16.mxu0 0
  %7575 = vmatpush1.bf16.msra.mxu0 %v7362
  %7576 = vmatprep.subr.bf16.mxu0 0
  %7577 = vmatpush1.bf16.msra.mxu0 %v7365
  %7578 = vmatprep.subr.bf16.mxu0 0
  %7579 = vmatpush1.bf16.msra.mxu0 %v7368
  %7580 = vmatprep.subr.bf16.mxu0 0
  %7581 = vmatpush1.bf16.msra.mxu0 %v7371
  %7582 = vmatprep.subr.bf16.mxu0 0
  %7583 = vmatpush1.bf16.msra.mxu0 %v7374
  %7584 = vmatprep.subr.bf16.mxu0 0
  %7585 = vmatpush1.bf16.msra.mxu0 %v7377
  %7586 = vmatprep.subr.bf16.mxu0 0
  %7587 = vmatpush1.bf16.msra.mxu0 %v7380
  %7588 = vmatprep.subr.bf16.mxu0 0
  %7589 = vmatpush1.bf16.msra.mxu0 %v7383
  %7590 = vmatprep.subr.bf16.mxu0 0
  %7591 = vmatpush1.bf16.msra.mxu0 %v7386
  %7592 = vmatprep.subr.bf16.mxu0 0
  %7593 = vmatpush1.bf16.msra.mxu0 %v7389
  %7594 = vmatprep.subr.bf16.mxu0 0
  %7595 = vmatpush1.bf16.msra.mxu0 %v7392
  %7596 = vmatprep.subr.bf16.mxu0 0
  %7597 = vmatpush1.bf16.msra.mxu0 %v7395
  %7598 = vmatprep.subr.bf16.mxu0 0
  %7599 = vmatpush1.bf16.msra.mxu0 %v7398
  %7600 = vmatprep.subr.bf16.mxu0 0
  %7601 = vmatpush1.bf16.msra.mxu0 %v7401
  %7602 = vmatprep.mubr.bf16.mxu0 %v7449
  %7603 = vmatmul.mubr.bf16.gmra.mrb[0].mxu0 %v7448
  %v7604 = vpop.f32.mrb[0].mxu0
  %v7605 = vadd.f32 %v7411, %v7604
  %v7606 = vpop.f32.mrb[0].mxu0
  %v7607 = vpop.f32.mrb[0].mxu0
  %v7608 = vadd.f32 %v7416, %v7607
  %v7609 = vpop.f32.mrb[0].mxu0
  %7610 = vmatprep.mubr.bf16.mxu0 %v7452
  %7611 = vmatmul.mubr.bf16.gmra.mrb[0].mxu0 %v7451
  %v7612 = vpop.f32.mrb[0].mxu0
  %v7613 = vadd.f32 %v7421, %v7612
  %v7614 = vpop.f32.mrb[0].mxu0
  %v7615 = vpop.f32.mrb[0].mxu0
  %v7616 = vadd.f32 %v7426, %v7615
  %v7617 = vpop.f32.mrb[0].mxu0
  %7618 = vdwg.mxu0
  %7619 = vmatprep.subr.bf16.mxu0 0
  %7620 = vmatpush1.bf16.msra.mxu0 %v7404
  %7621 = vmatprep.subr.bf16.mxu0 0
  %7622 = vmatpush1.bf16.msra.mxu0 %v7407
  %7623 = vmatprep.subr.bf16.mxu0 0
  %7624 = vmatpush1.bf16.msra.mxu0 0
  %7625 = vmatprep.subr.bf16.mxu0 0
  %7626 = vmatpush1.bf16.msra.mxu0 0
  %7627 = vmatprep.subr.bf16.mxu0 0
  %7628 = vmatpush1.bf16.msra.mxu0 0
  %7629 = vmatprep.subr.bf16.mxu0 0
  %7630 = vmatpush1.bf16.msra.mxu0 0
  %7631 = vmatprep.subr.bf16.mxu0 0
  %7632 = vmatpush1.bf16.msra.mxu0 0
  %7633 = vmatprep.subr.bf16.mxu0 0
  %7634 = vmatpush1.bf16.msra.mxu0 0
  %7635 = vmatprep.subr.bf16.mxu0 0
  %7636 = vmatpush1.bf16.msra.mxu0 0
  %7637 = vmatprep.subr.bf16.mxu0 0
  %7638 = vmatpush1.bf16.msra.mxu0 0
  %7639 = vmatprep.subr.bf16.mxu0 0
  %7640 = vmatpush1.bf16.msra.mxu0 0
  %7641 = vmatprep.subr.bf16.mxu0 0
  %7642 = vmatpush1.bf16.msra.mxu0 0
  %7643 = vmatprep.subr.bf16.mxu0 0
  %7644 = vmatpush1.bf16.msra.mxu0 0
  %7645 = vmatprep.subr.bf16.mxu0 0
  %7646 = vmatpush1.bf16.msra.mxu0 0
  %7647 = vmatprep.subr.bf16.mxu0 0
  %7648 = vmatpush1.bf16.msra.mxu0 0
  %7649 = vmatprep.subr.bf16.mxu0 0
  %7650 = vmatpush1.bf16.msra.mxu0 0
  %7651 = vmatprep.mubr.bf16.mxu0 0
  %7652 = vmatmul.mubr.bf16.gmra.mrb[0].mxu0 %v7459
  %v7653 = vpop.f32.mrb[0].mxu0
  %v7654 = vadd.f32 %v7605, %v7653
  %v7655 = vpop.f32.mrb[0].mxu0
  %v7656 = vpop.f32.mrb[0].mxu0
  %v7657 = vadd.f32 %v7608, %v7656
  %v7658 = vpop.f32.mrb[0].mxu0
  %7659 = vmatprep.mubr.bf16.mxu0 0
  %7660 = vmatmul.mubr.bf16.gmra.mrb[0].mxu0 %v7462
  %v7661 = vpop.f32.mrb[0].mxu0
  %v7662 = vadd.f32 %v7613, %v7661
  %v7663 = vpop.f32.mrb[0].mxu0
  %v7664 = vpop.f32.mrb[0].mxu0
  %v7665 = vadd.f32 %v7616, %v7664
  %v7666 = vpop.f32.mrb[0].mxu0
  %7667 = vdwg.mxu0
  %v7668 = vld [vmem:[%s11] sm:$0x7]
  %v7670 = vlaneseq
  %v7671 = vshrl.u32 %v7670, 7
  %v7672 = vsub.s32 0, %v7671
  %v7673 = vrot.slane %v7668, %v7672
  %v7674 = vlaneseq
  %v7675 = vshrl.u32 %v7674, 7
  %v7676 = vsub.s32 1, %v7675
  %v7677 = vrot.slane %v7668, %v7676
  %v7678 = vlaneseq
  %v7679 = vshrl.u32 %v7678, 7
  %v7680 = vsub.s32 2, %v7679
  %v7681 = vrot.slane %v7668, %v7680
  %v7685 = vmul.f32 %v7552, %v7673
  %v7686 = vmul.f32 %v7554, %v7677
  %v7687 = vmul.f32 %v7654, %v7681
  %v7688 = vmul.f32 %v7556, %v7673
  %v7689 = vmul.f32 %v7558, %v7677
  %v7690 = vmul.f32 %v7657, %v7681
  %v7691 = vmul.f32 %v7562, %v7673
  %v7692 = vmul.f32 %v7564, %v7677
  %v7693 = vmul.f32 %v7662, %v7681
  %v7694 = vmul.f32 %v7566, %v7673
  %v7695 = vmul.f32 %v7568, %v7677
  %v7696 = vmul.f32 %v7665, %v7681
  %v7697 = vadd.f32 %v7685, %v7686
  %v7698 = vsel %vm62, %v7687, 0.0
  %v7699 = vadd.f32 %v7697, %v7698
  %7700 = vadd.xlane.f32.xlu0 %v7699
  %v7701 = vpop.xlane.xlu0 %7700
  %v7702 = vadd.f32 %v7688, %v7689
  %v7703 = vsel %vm62, %v7690, 0.0
  %v7704 = vadd.f32 %v7702, %v7703
  %7705 = vadd.xlane.f32.xlu0 %v7704
  %v7706 = vpop.xlane.xlu0 %7705
  %v7707 = vadd.f32 %v7691, %v7692
  %v7708 = vsel %vm62, %v7693, 0.0
  %v7709 = vadd.f32 %v7707, %v7708
  %7710 = vadd.xlane.f32.xlu0 %v7709
  %v7711 = vpop.xlane.xlu0 %7710
  %v7712 = vadd.f32 %v7694, %v7695
  %v7713 = vsel %vm62, %v7696, 0.0
  %v7714 = vadd.f32 %v7712, %v7713
  %7715 = vadd.xlane.f32.xlu0 %v7714
  %v7716 = vpop.xlane.xlu0 %7715
  %v7717 = vmul.f32 %v7701, 0.00390625
  %v7718 = vmul.f32 %v7706, 0.00390625
  %v7719 = vmul.f32 %v7711, 0.00390625
  %v7720 = vmul.f32 %v7716, 0.00390625
  %v7721 = vld [vmem:[%s3367] sm:$0xff]
  %v7722 = vld [vmem:[%s3369] sm:$0xff]
  %v7724 = vsel %vm584, %v7721, 0
  %7726 = vmatprep.subr.mxu0 0.0
  %7727 = vmatpush1.msra.mxu0 %v7717
  %7728 = vmatprep.subr.mxu0 0.0
  %7729 = vmatpush1.msra.mxu0 %v7718
  %7730 = vmatprep.subr.mxu0 0.0
  %7731 = vmatpush1.msra.mxu0 %v7719
  %7732 = vmatprep.subr.mxu0 0.0
  %7733 = vmatpush1.msra.mxu0 %v7720
  %7734 = vmatprep.subr.mxu0 0.0
  %7735 = vmatpush1.msra.mxu0 0.0
  %7736 = vmatprep.subr.mxu0 0.0
  %7737 = vmatpush1.msra.mxu0 0.0
  %7738 = vmatprep.subr.mxu0 0.0
  %7739 = vmatpush1.msra.mxu0 0.0
  %7740 = vmatprep.subr.mxu0 0.0
  %7741 = vmatpush1.msra.mxu0 0.0
  %7742 = vmatprep.subr.mxu0 0.0
  %7743 = vmatpush1.msra.mxu0 0.0
  %7744 = vmatprep.subr.mxu0 0.0
  %7745 = vmatpush1.msra.mxu0 0.0
  %7746 = vmatprep.subr.mxu0 0.0
  %7747 = vmatpush1.msra.mxu0 0.0
  %7748 = vmatprep.subr.mxu0 0.0
  %7749 = vmatpush1.msra.mxu0 0.0
  %7750 = vmatprep.subr.mxu0 0.0
  %7751 = vmatpush1.msra.mxu0 0.0
  %7752 = vmatprep.subr.mxu0 0.0
  %7753 = vmatpush1.msra.mxu0 0.0
  %7754 = vmatprep.subr.mxu0 0.0
  %7755 = vmatpush1.msra.mxu0 0.0
  %7756 = vmatprep.subr.mxu0 0.0
  %7757 = vmatpush1.msra.mxu0 0.0
  %7758 = vmatprep.subr.mxu0 0.0
  %7759 = vmatpush1.msra.mxu0 0.0
  %7760 = vmatprep.subr.mxu0 0.0
  %7761 = vmatpush1.msra.mxu0 0.0
  %7762 = vmatprep.subr.mxu0 0.0
  %7763 = vmatpush1.msra.mxu0 0.0
  %7764 = vmatprep.subr.mxu0 0.0
  %7765 = vmatpush1.msra.mxu0 0.0
  %7766 = vmatprep.subr.mxu0 0.0
  %7767 = vmatpush1.msra.mxu0 0.0
  %7768 = vmatprep.subr.mxu0 0.0
  %7769 = vmatpush1.msra.mxu0 0.0
  %7770 = vmatprep.subr.mxu0 0.0
  %7771 = vmatpush1.msra.mxu0 0.0
  %7772 = vmatprep.subr.mxu0 0.0
  %7773 = vmatpush1.msra.mxu0 0.0
  %7774 = vmatprep.subr.mxu0 0.0
  %7775 = vmatpush1.msra.mxu0 0.0
  %7776 = vmatprep.subr.mxu0 0.0
  %7777 = vmatpush1.msra.mxu0 0.0
  %7778 = vmatprep.subr.mxu0 0.0
  %7779 = vmatpush1.msra.mxu0 0.0
  %7780 = vmatprep.subr.mxu0 0.0
  %7781 = vmatpush1.msra.mxu0 0.0
  %7782 = vmatprep.subr.mxu0 0.0
  %7783 = vmatpush1.msra.mxu0 0.0
  %7784 = vmatprep.subr.mxu0 0.0
  %7785 = vmatpush1.msra.mxu0 0.0
  %7786 = vmatprep.subr.mxu0 0.0
  %7787 = vmatpush1.msra.mxu0 0.0
  %7788 = vmatprep.subr.mxu0 0.0
  %7789 = vmatpush1.msra.mxu0 0.0
  %7790 = vmatprep.mubr.f32.mxu0 0.0
  %7791 = vmatmul.mubr.f32.gmra.mrb[0].mxu0 %v7724
  %v7792 = vpop.f32.mrb[0].mxu0
  %v7793 = vadd.f32 %v7722, %v7792
  %v7794 = vpop.f32.mrb[0].mxu0
  %7795 = vdwg.mxu0
  %v7796 = vmax.f32 %v7793, 0.0
  %v7797 = vld [vmem:[%s3445] sm:$0xff]
  %v7798 = vld [vmem:[%s3445 + $0x8] sm:$0xff]
  %v7799 = vld [vmem:[%s3445 + $0x10] sm:$0xff]
  %v7800 = vld [vmem:[%s3445 + $0x18] sm:$0xff]
  %v7801 = vld [vmem:[%s3450] sm:$0xff]
  %v7802 = vld [vmem:[%s3450 + $0x8] sm:$0xff]
  %v7803 = vld [vmem:[%s3450 + $0x10] sm:$0xff]
  %v7804 = vld [vmem:[%s3450 + $0x18] sm:$0xff]
  %v7806 = vsel %vm1671, %v7797, 0
  %v7809 = vsel %vm1671, %v7798, 0
  %v7812 = vsel %vm1671, %v7799, 0
  %v7815 = vsel %vm1671, %v7800, 0
  %7817 = vmatprep.subr.mxu0 0.0
  %7818 = vmatpush1.msra.mxu0 %v7796
  %7819 = vmatprep.subr.mxu0 0.0
  %7820 = vmatpush1.msra.mxu0 0.0
  %7821 = vmatprep.subr.mxu0 0.0
  %7822 = vmatpush1.msra.mxu0 0.0
  %7823 = vmatprep.subr.mxu0 0.0
  %7824 = vmatpush1.msra.mxu0 0.0
  %7825 = vmatprep.subr.mxu0 0.0
  %7826 = vmatpush1.msra.mxu0 0.0
  %7827 = vmatprep.subr.mxu0 0.0
  %7828 = vmatpush1.msra.mxu0 0.0
  %7829 = vmatprep.subr.mxu0 0.0
  %7830 = vmatpush1.msra.mxu0 0.0
  %7831 = vmatprep.subr.mxu0 0.0
  %7832 = vmatpush1.msra.mxu0 0.0
  %7833 = vmatprep.subr.mxu0 0.0
  %7834 = vmatpush1.msra.mxu0 0.0
  %7835 = vmatprep.subr.mxu0 0.0
  %7836 = vmatpush1.msra.mxu0 0.0
  %7837 = vmatprep.subr.mxu0 0.0
  %7838 = vmatpush1.msra.mxu0 0.0
  %7839 = vmatprep.subr.mxu0 0.0
  %7840 = vmatpush1.msra.mxu0 0.0
  %7841 = vmatprep.subr.mxu0 0.0
  %7842 = vmatpush1.msra.mxu0 0.0
  %7843 = vmatprep.subr.mxu0 0.0
  %7844 = vmatpush1.msra.mxu0 0.0
  %7845 = vmatprep.subr.mxu0 0.0
  %7846 = vmatpush1.msra.mxu0 0.0
  %7847 = vmatprep.subr.mxu0 0.0
  %7848 = vmatpush1.msra.mxu0 0.0
  %7849 = vmatprep.subr.mxu0 0.0
  %7850 = vmatpush1.msra.mxu0 0.0
  %7851 = vmatprep.subr.mxu0 0.0
  %7852 = vmatpush1.msra.mxu0 0.0
  %7853 = vmatprep.subr.mxu0 0.0
  %7854 = vmatpush1.msra.mxu0 0.0
  %7855 = vmatprep.subr.mxu0 0.0
  %7856 = vmatpush1.msra.mxu0 0.0
  %7857 = vmatprep.subr.mxu0 0.0
  %7858 = vmatpush1.msra.mxu0 0.0
  %7859 = vmatprep.subr.mxu0 0.0
  %7860 = vmatpush1.msra.mxu0 0.0
  %7861 = vmatprep.subr.mxu0 0.0
  %7862 = vmatpush1.msra.mxu0 0.0
  %7863 = vmatprep.subr.mxu0 0.0
  %7864 = vmatpush1.msra.mxu0 0.0
  %7865 = vmatprep.subr.mxu0 0.0
  %7866 = vmatpush1.msra.mxu0 0.0
  %7867 = vmatprep.subr.mxu0 0.0
  %7868 = vmatpush1.msra.mxu0 0.0
  %7869 = vmatprep.subr.mxu0 0.0
  %7870 = vmatpush1.msra.mxu0 0.0
  %7871 = vmatprep.subr.mxu0 0.0
  %7872 = vmatpush1.msra.mxu0 0.0
  %7873 = vmatprep.subr.mxu0 0.0
  %7874 = vmatpush1.msra.mxu0 0.0
  %7875 = vmatprep.subr.mxu0 0.0
  %7876 = vmatpush1.msra.mxu0 0.0
  %7877 = vmatprep.subr.mxu0 0.0
  %7878 = vmatpush1.msra.mxu0 0.0
  %7879 = vmatprep.subr.mxu0 0.0
  %7880 = vmatpush1.msra.mxu0 0.0
  %7881 = vmatprep.mubr.f32.mxu0 0.0
  %7882 = vmatmul.mubr.f32.gmra.mrb[0].mxu0 %v7806
  %v7883 = vpop.f32.mrb[0].mxu0
  %v7884 = vadd.f32 %v7801, %v7883
  %v7885 = vpop.f32.mrb[0].mxu0
  %7886 = vmatprep.mubr.f32.mxu0 0.0
  %7887 = vmatmul.mubr.f32.gmra.mrb[0].mxu0 %v7809
  %v7888 = vpop.f32.mrb[0].mxu0
  %v7889 = vadd.f32 %v7802, %v7888
  %v7890 = vpop.f32.mrb[0].mxu0
  %7891 = vmatprep.mubr.f32.mxu0 0.0
  %7892 = vmatmul.mubr.f32.gmra.mrb[0].mxu0 %v7812
  %v7893 = vpop.f32.mrb[0].mxu0
  %v7894 = vadd.f32 %v7803, %v7893
  %v7895 = vpop.f32.mrb[0].mxu0
  %7896 = vmatprep.mubr.f32.mxu0 0.0
  %7897 = vmatmul.mubr.f32.gmra.mrb[0].mxu0 %v7815
  %v7898 = vpop.f32.mrb[0].mxu0
  %v7899 = vadd.f32 %v7804, %v7898
  %v7900 = vpop.f32.mrb[0].mxu0
  %7901 = vdwg.mxu0
  %v7902 = vxor.u32 %v7884, 2147483648
  %v7903 = vxor.u32 %v7889, 2147483648
  %v7904 = vxor.u32 %v7894, 2147483648
  %v7905 = vxor.u32 %v7899, 2147483648
  %v7906 = vmul.f32 %v7902, 1.442695
  %v7907 = vpow.pop %v7906
  %v7908 = vmul.f32 %v7903, 1.442695
  %v7909 = vpow.pop %v7908
  %v7910 = vmul.f32 %v7904, 1.442695
  %v7911 = vpow.pop %v7910
  %v7912 = vmul.f32 %v7905, 1.442695
  %v7913 = vpow.pop %v7912
  %v7914 = vadd.f32 %v7907, 1.0
  %v7915 = vadd.f32 %v7909, 1.0
  %v7916 = vadd.f32 %v7911, 1.0
  %v7917 = vadd.f32 %v7913, 1.0
  %v7918 = vrcp.pop %v7914
  %v7919 = vmul.f32 1.0, %v7918
  %v7920 = vrcp.pop %v7915
  %v7921 = vmul.f32 1.0, %v7920
  %v7922 = vrcp.pop %v7916
  %v7923 = vmul.f32 1.0, %v7922
  %v7924 = vrcp.pop %v7917
  %v7925 = vmul.f32 1.0, %v7924
  %v7926 = vld [vmem:[#allocation4] sm:$0xff]
  %v7927 = vld [vmem:[#allocation4 + $0x8] sm:$0xff]
  %v7928 = vld [vmem:[#allocation4 + $0x10] sm:$0xff]
  %v7929 = vld [vmem:[#allocation4 + $0x18] sm:$0xff]
  %v7930 = vld [vmem:[#allocation4 + $0x20] sm:$0xff]
  %v7931 = vld [vmem:[#allocation4 + $0x28] sm:$0xff]
  %v7932 = vld [vmem:[#allocation4 + $0x30] sm:$0xff]
  %v7933 = vld [vmem:[#allocation4 + $0x38] sm:$0xff]
  %v7934 = vld [vmem:[#allocation4 + $0x40] sm:$0xff]
  %v7935 = vld [vmem:[#allocation4 + $0x48] sm:$0xff]
  %v7936 = vld [vmem:[#allocation4 + $0x50] sm:$0xff]
  %v7937 = vld [vmem:[#allocation4 + $0x58] sm:$0xff]
  %7939 = vset.pattern.permute.xlu0 0
  %7940 = vperm.xlu0 %7939, %v7919
  %v7941 = vpop.permute.xlu0 %7940
  %7944 = vset.pattern.permute.xlu0 0
  %7945 = vperm.xlu0 %7944, %v7921
  %v7946 = vpop.permute.xlu0 %7945
  %7949 = vset.pattern.permute.xlu0 0
  %7950 = vperm.xlu0 %7949, %v7923
  %v7951 = vpop.permute.xlu0 %7950
  %7954 = vset.pattern.permute.xlu0 0
  %7955 = vperm.xlu0 %7954, %v7925
  %v7956 = vpop.permute.xlu0 %7955
  %v7958 = vmul.f32 %v7685, %v7941
  %v7959 = vmul.f32 %v7686, %v7941
  %v7960 = vmul.f32 %v7687, %v7941
  %v7961 = vmul.f32 %v7688, %v7946
  %v7962 = vmul.f32 %v7689, %v7946
  %v7963 = vmul.f32 %v7690, %v7946
  %v7964 = vmul.f32 %v7691, %v7951
  %v7965 = vmul.f32 %v7692, %v7951
  %v7966 = vmul.f32 %v7693, %v7951
  %v7967 = vmul.f32 %v7694, %v7956
  %v7968 = vmul.f32 %v7695, %v7956
  %v7969 = vmul.f32 %v7696, %v7956
  %v7970 = vadd.f32 %v7926, %v7958
  %v7971 = vadd.f32 %v7927, %v7959
  %v7972 = vadd.f32 %v7928, %v7960
  %v7973 = vadd.f32 %v7929, %v7961
  %v7974 = vadd.f32 %v7930, %v7962
  %v7975 = vadd.f32 %v7931, %v7963
  %v7976 = vadd.f32 %v7932, %v7964
  %v7977 = vadd.f32 %v7933, %v7965
  %v7978 = vadd.f32 %v7934, %v7966
  %v7979 = vadd.f32 %v7935, %v7967
  %v7980 = vadd.f32 %v7936, %v7968
  %v7981 = vadd.f32 %v7937, %v7969
  %7982 = vst [vmem:[#allocation4] sm:$0xff] %v7970
  %7983 = vst [vmem:[#allocation4 + $0x8] sm:$0xff] %v7971
  %7984 = vst.msk [vmem:[#allocation4 + $0x10] sm:$0xff] %vm62, %v7972
  %7985 = vst [vmem:[#allocation4 + $0x18] sm:$0xff] %v7973
  %7986 = vst [vmem:[#allocation4 + $0x20] sm:$0xff] %v7974
  %7987 = vst.msk [vmem:[#allocation4 + $0x28] sm:$0xff] %vm62, %v7975
  %7988 = vst [vmem:[#allocation4 + $0x30] sm:$0xff] %v7976
  %7989 = vst [vmem:[#allocation4 + $0x38] sm:$0xff] %v7977
  %7990 = vst.msk [vmem:[#allocation4 + $0x40] sm:$0xff] %vm62, %v7978
  %7991 = vst [vmem:[#allocation4 + $0x48] sm:$0xff] %v7979
  %7992 = vst [vmem:[#allocation4 + $0x50] sm:$0xff] %v7980
  %7993 = vst.msk [vmem:[#allocation4 + $0x58] sm:$0xff] %vm62, %v7981
  %v7994 = vld [vmem:[#allocation4] sm:$0xff]
  %v7995 = vld [vmem:[#allocation4 + $0x8] sm:$0xff]
  %v7996 = vld [vmem:[#allocation4 + $0x10] sm:$0xff]
  %v7997 = vld [vmem:[#allocation4 + $0x18] sm:$0xff]
  %v7998 = vld [vmem:[#allocation4 + $0x20] sm:$0xff]
  %v7999 = vld [vmem:[#allocation4 + $0x28] sm:$0xff]
  %v8000 = vld [vmem:[#allocation4 + $0x30] sm:$0xff]
  %v8001 = vld [vmem:[#allocation4 + $0x38] sm:$0xff]
  %v8002 = vld [vmem:[#allocation4 + $0x40] sm:$0xff]
  %v8003 = vld [vmem:[#allocation4 + $0x48] sm:$0xff]
  %v8004 = vld [vmem:[#allocation4 + $0x50] sm:$0xff]
  %v8005 = vld [vmem:[#allocation4 + $0x58] sm:$0xff]
  %v8006 = vld [vmem:[%s9] sm:$0xff]
  %v8007 = vld [vmem:[%s9 + $0x8] sm:$0xf]
  %v8008 = vld [vmem:[%s9 + $0xc] sm:$0xff]
  %v8009 = vld [vmem:[%s9 + $0x14] sm:$0xf]
  %v8010 = vld [vmem:[%s9 + $0x18] sm:$0xff]
  %v8011 = vld [vmem:[%s9 + $0x20] sm:$0xf]
  %v8012 = vld [vmem:[%s9 + $0x24] sm:$0xff]
  %v8013 = vld [vmem:[%s9 + $0x2c] sm:$0xf]
  %v8014 = vld [vmem:[%s10] sm:$0xff]
  %v8015 = vld [vmem:[%s10 + $0x8] sm:$0xff]
  %v8016 = vld [vmem:[%s10 + $0x10] sm:$0xff]
  %v8017 = vld [vmem:[%s10 + $0x18] sm:$0xff]
  %v8018 = vpack.c.bf16 %v7997, %v7994
  %v8019 = vpack.c.bf16 %v7998, %v7995
  %v8020 = vpack.c.bf16 %v7999, %v7996
  %v8021 = vpack.c.bf16 %v8003, %v8000
  %v8022 = vpack.c.bf16 %v8004, %v8001
  %v8023 = vpack.c.bf16 %v8005, %v8002
  %8030 = vrot.lane.b32.xlu0 %v8018, 19
  %v8031 = vpop.permute.xlu0 %8030
  %8032 = vrot.lane.b32.xlu0 %v8019, 19
  %v8033 = vpop.permute.xlu0 %8032
  %8034 = vrot.lane.b32.xlu0 %v8020, 19
  %v8035 = vpop.permute.xlu0 %8034
  %8036 = vrot.lane.b32.xlu0 %v8021, 19
  %v8037 = vpop.permute.xlu0 %8036
  %8038 = vrot.lane.b32.xlu0 %v8022, 19
  %v8039 = vpop.permute.xlu0 %8038
  %8040 = vrot.lane.b32.xlu0 %v8023, 19
  %v8041 = vpop.permute.xlu0 %8040
  %v8042 = vsel %vm121, %v8031, %v8033
  %v8043 = vsel %vm121, %v8033, %v8035
  %v8044 = vsel %vm121, %v8037, %v8039
  %v8045 = vsel %vm121, %v8039, %v8041
  %8052 = vst.msk [vmem:[#allocation2] sm:$0xff] %vm132, %v8031
  %8053 = vst [vmem:[#allocation2 + $0x8] sm:$0xff] %v8042
  %8054 = vst.msk [vmem:[#allocation2 + $0x10] sm:$0xff] %vm135, %v8043
  %8055 = vst.msk [vmem:[#allocation2 + $0x18] sm:$0xff] %vm132, %v8037
  %8056 = vst [vmem:[#allocation2 + $0x20] sm:$0xff] %v8044
  %8057 = vst.msk [vmem:[#allocation2 + $0x28] sm:$0xff] %vm135, %v8045
  %v8058 = vld [vmem:[#allocation2] sm:$0xff]
  %v8059 = vld [vmem:[#allocation2 + $0x8] sm:$0xff]
  %v8060 = vld [vmem:[#allocation2 + $0x10] sm:$0xff]
  %v8061 = vld [vmem:[#allocation2 + $0x18] sm:$0xff]
  %v8062 = vld [vmem:[#allocation2 + $0x20] sm:$0xff]
  %v8063 = vld [vmem:[#allocation2 + $0x28] sm:$0xff]
  %8064 = vst [vmem:[#allocation3] sm:$0xff] %v8058
  %8065 = vst [vmem:[#allocation3 + $0x8] sm:$0xff] %v8059
  %8066 = vst.msk [vmem:[#allocation3 + $0x10] sm:$0xff] %vm62, %v8060
  %8067 = vst [vmem:[#allocation3 + $0x18] sm:$0xff] %v8061
  %8068 = vst [vmem:[#allocation3 + $0x20] sm:$0xff] %v8062
  %8069 = vst.msk [vmem:[#allocation3 + $0x28] sm:$0xff] %vm62, %v8063
  %v8070 = vld [vmem:[#allocation2] sm:$0xff]
  %v8071 = vld [vmem:[#allocation2 + $0x8] sm:$0xff]
  %v8072 = vld [vmem:[#allocation2 + $0x10] sm:$0xff]
  %v8073 = vld [vmem:[#allocation2 + $0x18] sm:$0xff]
  %v8074 = vld [vmem:[#allocation2 + $0x20] sm:$0xff]
  %v8075 = vld [vmem:[#allocation2 + $0x28] sm:$0xff]
  %8082 = vrot.lane.b32.xlu0 %v8070, 127
  %v8083 = vpop.permute.xlu0 %8082
  %8084 = vrot.lane.b32.xlu0 %v8071, 127
  %v8085 = vpop.permute.xlu0 %8084
  %8086 = vrot.lane.b32.xlu0 %v8072, 127
  %v8087 = vpop.permute.xlu0 %8086
  %8088 = vrot.lane.b32.xlu0 %v8073, 127
  %v8089 = vpop.permute.xlu0 %8088
  %8090 = vrot.lane.b32.xlu0 %v8074, 127
  %v8091 = vpop.permute.xlu0 %8090
  %8092 = vrot.lane.b32.xlu0 %v8075, 127
  %v8093 = vpop.permute.xlu0 %8092
  %v8094 = vsel %vm176, %v8083, %v8085
  %v8095 = vsel %vm176, %v8085, %v8087
  %v8096 = vsel %vm176, %v8089, %v8091
  %v8097 = vsel %vm176, %v8091, %v8093
  %8104 = vst [vmem:[#allocation3 + $0x30] sm:$0xff] %v8094
  %8105 = vst [vmem:[#allocation3 + $0x38] sm:$0xff] %v8095
  %8106 = vst.msk [vmem:[#allocation3 + $0x40] sm:$0xff] %vm62, %v8087
  %8107 = vst [vmem:[#allocation3 + $0x48] sm:$0xff] %v8096
  %8108 = vst [vmem:[#allocation3 + $0x50] sm:$0xff] %v8097
  %8109 = vst.msk [vmem:[#allocation3 + $0x58] sm:$0xff] %vm62, %v8093
  %v8110 = vld [vmem:[#allocation2] sm:$0xff]
  %v8111 = vld [vmem:[#allocation2 + $0x8] sm:$0xff]
  %v8112 = vld [vmem:[#allocation2 + $0x10] sm:$0xff]
  %v8113 = vld [vmem:[#allocation2 + $0x18] sm:$0xff]
  %v8114 = vld [vmem:[#allocation2 + $0x20] sm:$0xff]
  %v8115 = vld [vmem:[#allocation2 + $0x28] sm:$0xff]
  %8122 = vrot.lane.b32.xlu0 %v8110, 126
  %v8123 = vpop.permute.xlu0 %8122
  %8124 = vrot.lane.b32.xlu0 %v8111, 126
  %v8125 = vpop.permute.xlu0 %8124
  %8126 = vrot.lane.b32.xlu0 %v8112, 126
  %v8127 = vpop.permute.xlu0 %8126
  %8128 = vrot.lane.b32.xlu0 %v8113, 126
  %v8129 = vpop.permute.xlu0 %8128
  %8130 = vrot.lane.b32.xlu0 %v8114, 126
  %v8131 = vpop.permute.xlu0 %8130
  %8132 = vrot.lane.b32.xlu0 %v8115, 126
  %v8133 = vpop.permute.xlu0 %8132
  %v8134 = vsel %vm217, %v8123, %v8125
  %v8135 = vsel %vm217, %v8125, %v8127
  %v8136 = vsel %vm217, %v8129, %v8131
  %v8137 = vsel %vm217, %v8131, %v8133
  %8144 = vst [vmem:[#allocation3 + $0x60] sm:$0xff] %v8134
  %8145 = vst [vmem:[#allocation3 + $0x68] sm:$0xff] %v8135
  %8146 = vst.msk [vmem:[#allocation3 + $0x70] sm:$0xff] %vm62, %v8127
  %8147 = vst [vmem:[#allocation3 + $0x78] sm:$0xff] %v8136
  %8148 = vst [vmem:[#allocation3 + $0x80] sm:$0xff] %v8137
  %8149 = vst.msk [vmem:[#allocation3 + $0x88] sm:$0xff] %vm62, %v8133
  %v8150 = vld [vmem:[#allocation2] sm:$0xff]
  %v8151 = vld [vmem:[#allocation2 + $0x8] sm:$0xff]
  %v8152 = vld [vmem:[#allocation2 + $0x10] sm:$0xff]
  %v8153 = vld [vmem:[#allocation2 + $0x18] sm:$0xff]
  %v8154 = vld [vmem:[#allocation2 + $0x20] sm:$0xff]
  %v8155 = vld [vmem:[#allocation2 + $0x28] sm:$0xff]
  %8162 = vrot.lane.b32.xlu0 %v8150, 110
  %v8163 = vpop.permute.xlu0 %8162
  %8164 = vrot.lane.b32.xlu0 %v8151, 110
  %v8165 = vpop.permute.xlu0 %8164
  %8166 = vrot.lane.b32.xlu0 %v8152, 110
  %v8167 = vpop.permute.xlu0 %8166
  %8168 = vrot.lane.b32.xlu0 %v8153, 110
  %v8169 = vpop.permute.xlu0 %8168
  %8170 = vrot.lane.b32.xlu0 %v8154, 110
  %v8171 = vpop.permute.xlu0 %8170
  %8172 = vrot.lane.b32.xlu0 %v8155, 110
  %v8173 = vpop.permute.xlu0 %8172
  %v8174 = vsel %vm258, %v8163, %v8165
  %v8175 = vsel %vm258, %v8165, %v8167
  %v8176 = vsel %vm258, %v8169, %v8171
  %v8177 = vsel %vm258, %v8171, %v8173
  %8184 = vst [vmem:[#allocation3 + $0x90] sm:$0xff] %v8174
  %8185 = vst [vmem:[#allocation3 + $0x98] sm:$0xff] %v8175
  %8186 = vst.msk [vmem:[#allocation3 + $0xa0] sm:$0xff] %vm62, %v8167
  %8187 = vst [vmem:[#allocation3 + $0xa8] sm:$0xff] %v8176
  %8188 = vst [vmem:[#allocation3 + $0xb0] sm:$0xff] %v8177
  %8189 = vst.msk [vmem:[#allocation3 + $0xb8] sm:$0xff] %vm62, %v8173
  %v8190 = vld [vmem:[#allocation2] sm:$0xff]
  %v8191 = vld [vmem:[#allocation2 + $0x8] sm:$0xff]
  %v8192 = vld [vmem:[#allocation2 + $0x10] sm:$0xff]
  %v8193 = vld [vmem:[#allocation2 + $0x18] sm:$0xff]
  %v8194 = vld [vmem:[#allocation2 + $0x20] sm:$0xff]
  %v8195 = vld [vmem:[#allocation2 + $0x28] sm:$0xff]
  %8202 = vrot.lane.b32.xlu0 %v8190, 109
  %v8203 = vpop.permute.xlu0 %8202
  %8204 = vrot.lane.b32.xlu0 %v8191, 109
  %v8205 = vpop.permute.xlu0 %8204
  %8206 = vrot.lane.b32.xlu0 %v8192, 109
  %v8207 = vpop.permute.xlu0 %8206
  %8208 = vrot.lane.b32.xlu0 %v8193, 109
  %v8209 = vpop.permute.xlu0 %8208
  %8210 = vrot.lane.b32.xlu0 %v8194, 109
  %v8211 = vpop.permute.xlu0 %8210
  %8212 = vrot.lane.b32.xlu0 %v8195, 109
  %v8213 = vpop.permute.xlu0 %8212
  %v8214 = vsel %vm299, %v8203, %v8205
  %v8215 = vsel %vm299, %v8205, %v8207
  %v8216 = vsel %vm299, %v8209, %v8211
  %v8217 = vsel %vm299, %v8211, %v8213
  %8224 = vst [vmem:[#allocation3 + $0xc0] sm:$0xff] %v8214
  %8225 = vst [vmem:[#allocation3 + $0xc8] sm:$0xff] %v8215
  %8226 = vst.msk [vmem:[#allocation3 + $0xd0] sm:$0xff] %vm62, %v8207
  %8227 = vst [vmem:[#allocation3 + $0xd8] sm:$0xff] %v8216
  %8228 = vst [vmem:[#allocation3 + $0xe0] sm:$0xff] %v8217
  %8229 = vst.msk [vmem:[#allocation3 + $0xe8] sm:$0xff] %vm62, %v8213
  %v8230 = vld [vmem:[#allocation2] sm:$0xff]
  %v8231 = vld [vmem:[#allocation2 + $0x8] sm:$0xff]
  %v8232 = vld [vmem:[#allocation2 + $0x10] sm:$0xff]
  %v8233 = vld [vmem:[#allocation2 + $0x18] sm:$0xff]
  %v8234 = vld [vmem:[#allocation2 + $0x20] sm:$0xff]
  %v8235 = vld [vmem:[#allocation2 + $0x28] sm:$0xff]
  %8242 = vrot.lane.b32.xlu0 %v8230, 108
  %v8243 = vpop.permute.xlu0 %8242
  %8244 = vrot.lane.b32.xlu0 %v8231, 108
  %v8245 = vpop.permute.xlu0 %8244
  %8246 = vrot.lane.b32.xlu0 %v8232, 108
  %v8247 = vpop.permute.xlu0 %8246
  %8248 = vrot.lane.b32.xlu0 %v8233, 108
  %v8249 = vpop.permute.xlu0 %8248
  %8250 = vrot.lane.b32.xlu0 %v8234, 108
  %v8251 = vpop.permute.xlu0 %8250
  %8252 = vrot.lane.b32.xlu0 %v8235, 108
  %v8253 = vpop.permute.xlu0 %8252
  %v8254 = vsel %vm340, %v8243, %v8245
  %v8255 = vsel %vm340, %v8245, %v8247
  %v8256 = vsel %vm340, %v8249, %v8251
  %v8257 = vsel %vm340, %v8251, %v8253
  %8264 = vst [vmem:[#allocation3 + $0xf0] sm:$0xff] %v8254
  %8265 = vst [vmem:[#allocation3 + $0xf8] sm:$0xff] %v8255
  %8266 = vst.msk [vmem:[#allocation3 + $0x100] sm:$0xff] %vm62, %v8247
  %8267 = vst [vmem:[#allocation3 + $0x108] sm:$0xff] %v8256
  %8268 = vst [vmem:[#allocation3 + $0x110] sm:$0xff] %v8257
  %8269 = vst.msk [vmem:[#allocation3 + $0x118] sm:$0xff] %vm62, %v8253
  %v8270 = vld [vmem:[#allocation2] sm:$0xff]
  %v8271 = vld [vmem:[#allocation2 + $0x8] sm:$0xff]
  %v8272 = vld [vmem:[#allocation2 + $0x10] sm:$0xff]
  %v8273 = vld [vmem:[#allocation2 + $0x18] sm:$0xff]
  %v8274 = vld [vmem:[#allocation2 + $0x20] sm:$0xff]
  %v8275 = vld [vmem:[#allocation2 + $0x28] sm:$0xff]
  %8282 = vrot.lane.b32.xlu0 %v8270, 92
  %v8283 = vpop.permute.xlu0 %8282
  %8284 = vrot.lane.b32.xlu0 %v8271, 92
  %v8285 = vpop.permute.xlu0 %8284
  %8286 = vrot.lane.b32.xlu0 %v8272, 92
  %v8287 = vpop.permute.xlu0 %8286
  %8288 = vrot.lane.b32.xlu0 %v8273, 92
  %v8289 = vpop.permute.xlu0 %8288
  %8290 = vrot.lane.b32.xlu0 %v8274, 92
  %v8291 = vpop.permute.xlu0 %8290
  %8292 = vrot.lane.b32.xlu0 %v8275, 92
  %v8293 = vpop.permute.xlu0 %8292
  %v8294 = vsel %vm381, %v8283, %v8285
  %v8295 = vsel %vm381, %v8285, %v8287
  %v8296 = vsel %vm381, %v8289, %v8291
  %v8297 = vsel %vm381, %v8291, %v8293
  %8304 = vst [vmem:[#allocation3 + $0x120] sm:$0xff] %v8294
  %8305 = vst [vmem:[#allocation3 + $0x128] sm:$0xff] %v8295
  %8306 = vst.msk [vmem:[#allocation3 + $0x130] sm:$0xff] %vm62, %v8287
  %8307 = vst [vmem:[#allocation3 + $0x138] sm:$0xff] %v8296
  %8308 = vst [vmem:[#allocation3 + $0x140] sm:$0xff] %v8297
  %8309 = vst.msk [vmem:[#allocation3 + $0x148] sm:$0xff] %vm62, %v8293
  %v8310 = vld [vmem:[#allocation2] sm:$0xff]
  %v8311 = vld [vmem:[#allocation2 + $0x8] sm:$0xff]
  %v8312 = vld [vmem:[#allocation2 + $0x10] sm:$0xff]
  %v8313 = vld [vmem:[#allocation2 + $0x18] sm:$0xff]
  %v8314 = vld [vmem:[#allocation2 + $0x20] sm:$0xff]
  %v8315 = vld [vmem:[#allocation2 + $0x28] sm:$0xff]
  %8322 = vrot.lane.b32.xlu0 %v8310, 91
  %v8323 = vpop.permute.xlu0 %8322
  %8324 = vrot.lane.b32.xlu0 %v8311, 91
  %v8325 = vpop.permute.xlu0 %8324
  %8326 = vrot.lane.b32.xlu0 %v8312, 91
  %v8327 = vpop.permute.xlu0 %8326
  %8328 = vrot.lane.b32.xlu0 %v8313, 91
  %v8329 = vpop.permute.xlu0 %8328
  %8330 = vrot.lane.b32.xlu0 %v8314, 91
  %v8331 = vpop.permute.xlu0 %8330
  %8332 = vrot.lane.b32.xlu0 %v8315, 91
  %v8333 = vpop.permute.xlu0 %8332
  %v8334 = vsel %vm422, %v8323, %v8325
  %v8335 = vsel %vm422, %v8325, %v8327
  %v8336 = vsel %vm422, %v8329, %v8331
  %v8337 = vsel %vm422, %v8331, %v8333
  %8344 = vst [vmem:[#allocation3 + $0x150] sm:$0xff] %v8334
  %8345 = vst [vmem:[#allocation3 + $0x158] sm:$0xff] %v8335
  %8346 = vst.msk [vmem:[#allocation3 + $0x160] sm:$0xff] %vm62, %v8327
  %8347 = vst [vmem:[#allocation3 + $0x168] sm:$0xff] %v8336
  %8348 = vst [vmem:[#allocation3 + $0x170] sm:$0xff] %v8337
  %8349 = vst.msk [vmem:[#allocation3 + $0x178] sm:$0xff] %vm62, %v8333
  %v8350 = vld [vmem:[#allocation2] sm:$0xff]
  %v8351 = vld [vmem:[#allocation2 + $0x8] sm:$0xff]
  %v8352 = vld [vmem:[#allocation2 + $0x10] sm:$0xff]
  %v8353 = vld [vmem:[#allocation2 + $0x18] sm:$0xff]
  %v8354 = vld [vmem:[#allocation2 + $0x20] sm:$0xff]
  %v8355 = vld [vmem:[#allocation2 + $0x28] sm:$0xff]
  %8362 = vrot.lane.b32.xlu0 %v8350, 90
  %v8363 = vpop.permute.xlu0 %8362
  %8364 = vrot.lane.b32.xlu0 %v8351, 90
  %v8365 = vpop.permute.xlu0 %8364
  %8366 = vrot.lane.b32.xlu0 %v8352, 90
  %v8367 = vpop.permute.xlu0 %8366
  %8368 = vrot.lane.b32.xlu0 %v8353, 90
  %v8369 = vpop.permute.xlu0 %8368
  %8370 = vrot.lane.b32.xlu0 %v8354, 90
  %v8371 = vpop.permute.xlu0 %8370
  %8372 = vrot.lane.b32.xlu0 %v8355, 90
  %v8373 = vpop.permute.xlu0 %8372
  %v8374 = vsel %vm463, %v8363, %v8365
  %v8375 = vsel %vm463, %v8365, %v8367
  %v8376 = vsel %vm463, %v8369, %v8371
  %v8377 = vsel %vm463, %v8371, %v8373
  %8384 = vst [vmem:[#allocation3 + $0x180] sm:$0xff] %v8374
  %8385 = vst [vmem:[#allocation3 + $0x188] sm:$0xff] %v8375
  %8386 = vst.msk [vmem:[#allocation3 + $0x190] sm:$0xff] %vm62, %v8367
  %8387 = vst [vmem:[#allocation3 + $0x198] sm:$0xff] %v8376
  %8388 = vst [vmem:[#allocation3 + $0x1a0] sm:$0xff] %v8377
  %8389 = vst.msk [vmem:[#allocation3 + $0x1a8] sm:$0xff] %vm62, %v8373
  %v8390 = vld [vmem:[#allocation3] sm:$0xff]
  %v8391 = vld [vmem:[#allocation3 + $0x8] sm:$0xff]
  %v8392 = vld [vmem:[#allocation3 + $0x10] sm:$0xff]
  %v8393 = vld [vmem:[#allocation3 + $0x18] sm:$0xff]
  %v8394 = vld [vmem:[#allocation3 + $0x20] sm:$0xff]
  %v8395 = vld [vmem:[#allocation3 + $0x28] sm:$0xff]
  %v8396 = vld [vmem:[#allocation3 + $0x30] sm:$0xff]
  %v8397 = vld [vmem:[#allocation3 + $0x38] sm:$0xff]
  %v8398 = vld [vmem:[#allocation3 + $0x40] sm:$0xff]
  %v8399 = vld [vmem:[#allocation3 + $0x48] sm:$0xff]
  %v8400 = vld [vmem:[#allocation3 + $0x50] sm:$0xff]
  %v8401 = vld [vmem:[#allocation3 + $0x58] sm:$0xff]
  %v8402 = vld [vmem:[#allocation3 + $0x60] sm:$0xff]
  %v8403 = vld [vmem:[#allocation3 + $0x68] sm:$0xff]
  %v8404 = vld [vmem:[#allocation3 + $0x70] sm:$0xff]
  %v8405 = vld [vmem:[#allocation3 + $0x78] sm:$0xff]
  %v8406 = vld [vmem:[#allocation3 + $0x80] sm:$0xff]
  %v8407 = vld [vmem:[#allocation3 + $0x88] sm:$0xff]
  %v8408 = vld [vmem:[#allocation3 + $0x90] sm:$0xff]
  %v8409 = vld [vmem:[#allocation3 + $0x98] sm:$0xff]
  %v8410 = vld [vmem:[#allocation3 + $0xa0] sm:$0xff]
  %v8411 = vld [vmem:[#allocation3 + $0xa8] sm:$0xff]
  %v8412 = vld [vmem:[#allocation3 + $0xb0] sm:$0xff]
  %v8413 = vld [vmem:[#allocation3 + $0xb8] sm:$0xff]
  %v8414 = vld [vmem:[#allocation3 + $0xc0] sm:$0xff]
  %v8415 = vld [vmem:[#allocation3 + $0xc8] sm:$0xff]
  %v8416 = vld [vmem:[#allocation3 + $0xd0] sm:$0xff]
  %v8417 = vld [vmem:[#allocation3 + $0xd8] sm:$0xff]
  %v8418 = vld [vmem:[#allocation3 + $0xe0] sm:$0xff]
  %v8419 = vld [vmem:[#allocation3 + $0xe8] sm:$0xff]
  %v8420 = vld [vmem:[#allocation3 + $0xf0] sm:$0xff]
  %v8421 = vld [vmem:[#allocation3 + $0xf8] sm:$0xff]
  %v8422 = vld [vmem:[#allocation3 + $0x100] sm:$0xff]
  %v8423 = vld [vmem:[#allocation3 + $0x108] sm:$0xff]
  %v8424 = vld [vmem:[#allocation3 + $0x110] sm:$0xff]
  %v8425 = vld [vmem:[#allocation3 + $0x118] sm:$0xff]
  %v8426 = vld [vmem:[#allocation3 + $0x120] sm:$0xff]
  %v8427 = vld [vmem:[#allocation3 + $0x128] sm:$0xff]
  %v8428 = vld [vmem:[#allocation3 + $0x130] sm:$0xff]
  %v8429 = vld [vmem:[#allocation3 + $0x138] sm:$0xff]
  %v8430 = vld [vmem:[#allocation3 + $0x140] sm:$0xff]
  %v8431 = vld [vmem:[#allocation3 + $0x148] sm:$0xff]
  %v8432 = vld [vmem:[#allocation3 + $0x150] sm:$0xff]
  %v8433 = vld [vmem:[#allocation3 + $0x158] sm:$0xff]
  %v8434 = vld [vmem:[#allocation3 + $0x160] sm:$0xff]
  %v8435 = vld [vmem:[#allocation3 + $0x168] sm:$0xff]
  %v8436 = vld [vmem:[#allocation3 + $0x170] sm:$0xff]
  %v8437 = vld [vmem:[#allocation3 + $0x178] sm:$0xff]
  %v8438 = vld [vmem:[#allocation3 + $0x180] sm:$0xff]
  %v8439 = vld [vmem:[#allocation3 + $0x188] sm:$0xff]
  %v8440 = vld [vmem:[#allocation3 + $0x190] sm:$0xff]
  %v8441 = vld [vmem:[#allocation3 + $0x198] sm:$0xff]
  %v8442 = vld [vmem:[#allocation3 + $0x1a0] sm:$0xff]
  %v8443 = vld [vmem:[#allocation3 + $0x1a8] sm:$0xff]
  %8445 = vset.pattern.permute.xlu0 0
  %8446 = vperm.xlu0 %8445, %v8014
  %v8447 = vpop.permute.xlu0 %8446
  %8450 = vset.pattern.permute.xlu0 0
  %8451 = vperm.xlu0 %8450, %v8015
  %v8452 = vpop.permute.xlu0 %8451
  %8455 = vset.pattern.permute.xlu0 0
  %8456 = vperm.xlu0 %8455, %v8016
  %v8457 = vpop.permute.xlu0 %8456
  %8460 = vset.pattern.permute.xlu0 0
  %8461 = vperm.xlu0 %8460, %v8017
  %v8462 = vpop.permute.xlu0 %8461
  %v8472 = vunpack.c.l.b16 %v8006
  %v8473 = vunpack.c.h.b16 %v8006
  %v8474 = vunpack.c.l.b16 %v8007
  %v8475 = vunpack.c.l.b16 %v8008
  %v8476 = vunpack.c.h.b16 %v8008
  %v8477 = vunpack.c.l.b16 %v8009
  %v8478 = vunpack.c.l.b16 %v8010
  %v8479 = vunpack.c.h.b16 %v8010
  %v8480 = vunpack.c.l.b16 %v8011
  %v8481 = vunpack.c.l.b16 %v8012
  %v8482 = vunpack.c.h.b16 %v8012
  %v8483 = vunpack.c.l.b16 %v8013
  %v8484 = vpack.c.b16 %v8475, %v8472
  %v8485 = vpack.c.b16 %v8476, %v8473
  %v8486 = vpack.c.b16 %v8477, %v8474
  %v8487 = vpack.c.b16 %v8481, %v8478
  %v8488 = vpack.c.b16 %v8482, %v8479
  %v8489 = vpack.c.b16 %v8483, %v8480
  %v8495 = vsel %vm584, %v8486, 0
  %v8498 = vsel %vm584, %v8489, 0
  %8500 = vmatprep.subr.bf16.mxu0 %v8391
  %8501 = vmatpush1.bf16.msra.mxu0 %v8390
  %8502 = vmatprep.subr.bf16.mxu0 %v8394
  %8503 = vmatpush1.bf16.msra.mxu0 %v8393
  %8504 = vmatprep.subr.bf16.mxu0 %v8397
  %8505 = vmatpush1.bf16.msra.mxu0 %v8396
  %8506 = vmatprep.subr.bf16.mxu0 %v8400
  %8507 = vmatpush1.bf16.msra.mxu0 %v8399
  %8508 = vmatprep.subr.bf16.mxu0 %v8403
  %8509 = vmatpush1.bf16.msra.mxu0 %v8402
  %8510 = vmatprep.subr.bf16.mxu0 %v8406
  %8511 = vmatpush1.bf16.msra.mxu0 %v8405
  %8512 = vmatprep.subr.bf16.mxu0 %v8409
  %8513 = vmatpush1.bf16.msra.mxu0 %v8408
  %8514 = vmatprep.subr.bf16.mxu0 %v8412
  %8515 = vmatpush1.bf16.msra.mxu0 %v8411
  %8516 = vmatprep.subr.bf16.mxu0 %v8415
  %8517 = vmatpush1.bf16.msra.mxu0 %v8414
  %8518 = vmatprep.subr.bf16.mxu0 %v8418
  %8519 = vmatpush1.bf16.msra.mxu0 %v8417
  %8520 = vmatprep.subr.bf16.mxu0 %v8421
  %8521 = vmatpush1.bf16.msra.mxu0 %v8420
  %8522 = vmatprep.subr.bf16.mxu0 %v8424
  %8523 = vmatpush1.bf16.msra.mxu0 %v8423
  %8524 = vmatprep.subr.bf16.mxu0 %v8427
  %8525 = vmatpush1.bf16.msra.mxu0 %v8426
  %8526 = vmatprep.subr.bf16.mxu0 %v8430
  %8527 = vmatpush1.bf16.msra.mxu0 %v8429
  %8528 = vmatprep.subr.bf16.mxu0 %v8433
  %8529 = vmatpush1.bf16.msra.mxu0 %v8432
  %8530 = vmatprep.subr.bf16.mxu0 %v8436
  %8531 = vmatpush1.bf16.msra.mxu0 %v8435
  %8532 = vmatprep.mubr.bf16.mxu0 %v8485
  %8533 = vmatmul.mubr.bf16.gmra.mrb[0].mxu0 %v8484
  %v8534 = vpop.f32.mrb[0].mxu0
  %v8535 = vadd.f32 %v8447, %v8534
  %v8536 = vpop.f32.mrb[0].mxu0
  %v8537 = vadd.f32 %v8447, %v8536
  %v8538 = vpop.f32.mrb[0].mxu0
  %v8539 = vadd.f32 %v8452, %v8538
  %v8540 = vpop.f32.mrb[0].mxu0
  %v8541 = vadd.f32 %v8452, %v8540
  %8542 = vmatprep.mubr.bf16.mxu0 %v8488
  %8543 = vmatmul.mubr.bf16.gmra.mrb[0].mxu0 %v8487
  %v8544 = vpop.f32.mrb[0].mxu0
  %v8545 = vadd.f32 %v8457, %v8544
  %v8546 = vpop.f32.mrb[0].mxu0
  %v8547 = vadd.f32 %v8457, %v8546
  %v8548 = vpop.f32.mrb[0].mxu0
  %v8549 = vadd.f32 %v8462, %v8548
  %v8550 = vpop.f32.mrb[0].mxu0
  %v8551 = vadd.f32 %v8462, %v8550
  %8552 = vdwg.mxu0
  %8553 = vmatprep.subr.bf16.mxu0 %v8439
  %8554 = vmatpush1.bf16.msra.mxu0 %v8438
  %8555 = vmatprep.subr.bf16.mxu0 %v8442
  %8556 = vmatpush1.bf16.msra.mxu0 %v8441
  %8557 = vmatprep.subr.bf16.mxu0 0
  %8558 = vmatpush1.bf16.msra.mxu0 0
  %8559 = vmatprep.subr.bf16.mxu0 0
  %8560 = vmatpush1.bf16.msra.mxu0 0
  %8561 = vmatprep.subr.bf16.mxu0 0
  %8562 = vmatpush1.bf16.msra.mxu0 0
  %8563 = vmatprep.subr.bf16.mxu0 0
  %8564 = vmatpush1.bf16.msra.mxu0 0
  %8565 = vmatprep.subr.bf16.mxu0 0
  %8566 = vmatpush1.bf16.msra.mxu0 0
  %8567 = vmatprep.subr.bf16.mxu0 0
  %8568 = vmatpush1.bf16.msra.mxu0 0
  %8569 = vmatprep.subr.bf16.mxu0 0
  %8570 = vmatpush1.bf16.msra.mxu0 0
  %8571 = vmatprep.subr.bf16.mxu0 0
  %8572 = vmatpush1.bf16.msra.mxu0 0
  %8573 = vmatprep.subr.bf16.mxu0 0
  %8574 = vmatpush1.bf16.msra.mxu0 0
  %8575 = vmatprep.subr.bf16.mxu0 0
  %8576 = vmatpush1.bf16.msra.mxu0 0
  %8577 = vmatprep.subr.bf16.mxu0 0
  %8578 = vmatpush1.bf16.msra.mxu0 0
  %8579 = vmatprep.subr.bf16.mxu0 0
  %8580 = vmatpush1.bf16.msra.mxu0 0
  %8581 = vmatprep.subr.bf16.mxu0 0
  %8582 = vmatpush1.bf16.msra.mxu0 0
  %8583 = vmatprep.subr.bf16.mxu0 0
  %8584 = vmatpush1.bf16.msra.mxu0 0
  %8585 = vmatprep.mubr.bf16.mxu0 0
  %8586 = vmatmul.mubr.bf16.gmra.mrb[0].mxu0 %v8495
  %v8587 = vpop.f32.mrb[0].mxu0
  %v8588 = vadd.f32 %v8535, %v8587
  %v8589 = vpop.f32.mrb[0].mxu0
  %v8590 = vadd.f32 %v8537, %v8589
  %v8591 = vpop.f32.mrb[0].mxu0
  %v8592 = vadd.f32 %v8539, %v8591
  %v8593 = vpop.f32.mrb[0].mxu0
  %v8594 = vadd.f32 %v8541, %v8593
  %8595 = vmatprep.mubr.bf16.mxu0 0
  %8596 = vmatmul.mubr.bf16.gmra.mrb[0].mxu0 %v8498
  %v8597 = vpop.f32.mrb[0].mxu0
  %v8598 = vadd.f32 %v8545, %v8597
  %v8599 = vpop.f32.mrb[0].mxu0
  %v8600 = vadd.f32 %v8547, %v8599
  %v8601 = vpop.f32.mrb[0].mxu0
  %v8602 = vadd.f32 %v8549, %v8601
  %v8603 = vpop.f32.mrb[0].mxu0
  %v8604 = vadd.f32 %v8551, %v8603
  %8605 = vdwg.mxu0
  %8606 = vmatprep.subr.bf16.mxu0 0
  %8607 = vmatpush1.bf16.msra.mxu0 %v8392
  %8608 = vmatprep.subr.bf16.mxu0 0
  %8609 = vmatpush1.bf16.msra.mxu0 %v8395
  %8610 = vmatprep.subr.bf16.mxu0 0
  %8611 = vmatpush1.bf16.msra.mxu0 %v8398
  %8612 = vmatprep.subr.bf16.mxu0 0
  %8613 = vmatpush1.bf16.msra.mxu0 %v8401
  %8614 = vmatprep.subr.bf16.mxu0 0
  %8615 = vmatpush1.bf16.msra.mxu0 %v8404
  %8616 = vmatprep.subr.bf16.mxu0 0
  %8617 = vmatpush1.bf16.msra.mxu0 %v8407
  %8618 = vmatprep.subr.bf16.mxu0 0
  %8619 = vmatpush1.bf16.msra.mxu0 %v8410
  %8620 = vmatprep.subr.bf16.mxu0 0
  %8621 = vmatpush1.bf16.msra.mxu0 %v8413
  %8622 = vmatprep.subr.bf16.mxu0 0
  %8623 = vmatpush1.bf16.msra.mxu0 %v8416
  %8624 = vmatprep.subr.bf16.mxu0 0
  %8625 = vmatpush1.bf16.msra.mxu0 %v8419
  %8626 = vmatprep.subr.bf16.mxu0 0
  %8627 = vmatpush1.bf16.msra.mxu0 %v8422
  %8628 = vmatprep.subr.bf16.mxu0 0
  %8629 = vmatpush1.bf16.msra.mxu0 %v8425
  %8630 = vmatprep.subr.bf16.mxu0 0
  %8631 = vmatpush1.bf16.msra.mxu0 %v8428
  %8632 = vmatprep.subr.bf16.mxu0 0
  %8633 = vmatpush1.bf16.msra.mxu0 %v8431
  %8634 = vmatprep.subr.bf16.mxu0 0
  %8635 = vmatpush1.bf16.msra.mxu0 %v8434
  %8636 = vmatprep.subr.bf16.mxu0 0
  %8637 = vmatpush1.bf16.msra.mxu0 %v8437
  %8638 = vmatprep.mubr.bf16.mxu0 %v8485
  %8639 = vmatmul.mubr.bf16.gmra.mrb[0].mxu0 %v8484
  %v8640 = vpop.f32.mrb[0].mxu0
  %v8641 = vadd.f32 %v8447, %v8640
  %v8642 = vpop.f32.mrb[0].mxu0
  %v8643 = vpop.f32.mrb[0].mxu0
  %v8644 = vadd.f32 %v8452, %v8643
  %v8645 = vpop.f32.mrb[0].mxu0
  %8646 = vmatprep.mubr.bf16.mxu0 %v8488
  %8647 = vmatmul.mubr.bf16.gmra.mrb[0].mxu0 %v8487
  %v8648 = vpop.f32.mrb[0].mxu0
  %v8649 = vadd.f32 %v8457, %v8648
  %v8650 = vpop.f32.mrb[0].mxu0
  %v8651 = vpop.f32.mrb[0].mxu0
  %v8652 = vadd.f32 %v8462, %v8651
  %v8653 = vpop.f32.mrb[0].mxu0
  %8654 = vdwg.mxu0
  %8655 = vmatprep.subr.bf16.mxu0 0
  %8656 = vmatpush1.bf16.msra.mxu0 %v8440
  %8657 = vmatprep.subr.bf16.mxu0 0
  %8658 = vmatpush1.bf16.msra.mxu0 %v8443
  %8659 = vmatprep.subr.bf16.mxu0 0
  %8660 = vmatpush1.bf16.msra.mxu0 0
  %8661 = vmatprep.subr.bf16.mxu0 0
  %8662 = vmatpush1.bf16.msra.mxu0 0
  %8663 = vmatprep.subr.bf16.mxu0 0
  %8664 = vmatpush1.bf16.msra.mxu0 0
  %8665 = vmatprep.subr.bf16.mxu0 0
  %8666 = vmatpush1.bf16.msra.mxu0 0
  %8667 = vmatprep.subr.bf16.mxu0 0
  %8668 = vmatpush1.bf16.msra.mxu0 0
  %8669 = vmatprep.subr.bf16.mxu0 0
  %8670 = vmatpush1.bf16.msra.mxu0 0
  %8671 = vmatprep.subr.bf16.mxu0 0
  %8672 = vmatpush1.bf16.msra.mxu0 0
  %8673 = vmatprep.subr.bf16.mxu0 0
  %8674 = vmatpush1.bf16.msra.mxu0 0
  %8675 = vmatprep.subr.bf16.mxu0 0
  %8676 = vmatpush1.bf16.msra.mxu0 0
  %8677 = vmatprep.subr.bf16.mxu0 0
  %8678 = vmatpush1.bf16.msra.mxu0 0
  %8679 = vmatprep.subr.bf16.mxu0 0
  %8680 = vmatpush1.bf16.msra.mxu0 0
  %8681 = vmatprep.subr.bf16.mxu0 0
  %8682 = vmatpush1.bf16.msra.mxu0 0
  %8683 = vmatprep.subr.bf16.mxu0 0
  %8684 = vmatpush1.bf16.msra.mxu0 0
  %8685 = vmatprep.subr.bf16.mxu0 0
  %8686 = vmatpush1.bf16.msra.mxu0 0
  %8687 = vmatprep.mubr.bf16.mxu0 0
  %8688 = vmatmul.mubr.bf16.gmra.mrb[0].mxu0 %v8495
  %v8689 = vpop.f32.mrb[0].mxu0
  %v8690 = vadd.f32 %v8641, %v8689
  %v8691 = vpop.f32.mrb[0].mxu0
  %v8692 = vpop.f32.mrb[0].mxu0
  %v8693 = vadd.f32 %v8644, %v8692
  %v8694 = vpop.f32.mrb[0].mxu0
  %8695 = vmatprep.mubr.bf16.mxu0 0
  %8696 = vmatmul.mubr.bf16.gmra.mrb[0].mxu0 %v8498
  %v8697 = vpop.f32.mrb[0].mxu0
  %v8698 = vadd.f32 %v8649, %v8697
  %v8699 = vpop.f32.mrb[0].mxu0
  %v8700 = vpop.f32.mrb[0].mxu0
  %v8701 = vadd.f32 %v8652, %v8700
  %v8702 = vpop.f32.mrb[0].mxu0
  %8703 = vdwg.mxu0
  %v8704 = vld [vmem:[%s11] sm:$0x7]
  %v8706 = vlaneseq
  %v8707 = vshrl.u32 %v8706, 7
  %v8708 = vsub.s32 0, %v8707
  %v8709 = vrot.slane %v8704, %v8708
  %v8710 = vlaneseq
  %v8711 = vshrl.u32 %v8710, 7
  %v8712 = vsub.s32 1, %v8711
  %v8713 = vrot.slane %v8704, %v8712
  %v8714 = vlaneseq
  %v8715 = vshrl.u32 %v8714, 7
  %v8716 = vsub.s32 2, %v8715
  %v8717 = vrot.slane %v8704, %v8716
  %v8721 = vmul.f32 %v8588, %v8709
  %v8722 = vmul.f32 %v8590, %v8713
  %v8723 = vmul.f32 %v8690, %v8717
  %v8724 = vmul.f32 %v8592, %v8709
  %v8725 = vmul.f32 %v8594, %v8713
  %v8726 = vmul.f32 %v8693, %v8717
  %v8727 = vmul.f32 %v8598, %v8709
  %v8728 = vmul.f32 %v8600, %v8713
  %v8729 = vmul.f32 %v8698, %v8717
  %v8730 = vmul.f32 %v8602, %v8709
  %v8731 = vmul.f32 %v8604, %v8713
  %v8732 = vmul.f32 %v8701, %v8717
  %v8733 = vld [vmem:[%s4419] sm:$0xff]
  %v8734 = vld [vmem:[%s4419 + $0x8] sm:$0xff]
  %v8735 = vld [vmem:[%s4419 + $0x10] sm:$0xff]
  %v8736 = vld [vmem:[%s4419 + $0x18] sm:$0xff]
  %v8737 = vld [vmem:[%s4419 + $0x20] sm:$0xff]
  %v8738 = vld [vmem:[%s4419 + $0x28] sm:$0xff]
  %v8739 = vld [vmem:[%s4419 + $0x30] sm:$0xff]
  %v8740 = vld [vmem:[%s4419 + $0x38] sm:$0xff]
  %v8741 = vld [vmem:[%s4419 + $0x40] sm:$0xff]
  %v8742 = vld [vmem:[%s4419 + $0x48] sm:$0xff]
  %v8743 = vld [vmem:[%s4419 + $0x50] sm:$0xff]
  %v8744 = vld [vmem:[%s4419 + $0x58] sm:$0xff]
  %v8745 = vadd.f32 %v8721, %v8733
  %v8746 = vadd.f32 %v8722, %v8734
  %v8747 = vadd.f32 %v8723, %v8735
  %v8748 = vadd.f32 %v8724, %v8736
  %v8749 = vadd.f32 %v8725, %v8737
  %v8750 = vadd.f32 %v8726, %v8738
  %v8751 = vadd.f32 %v8727, %v8739
  %v8752 = vadd.f32 %v8728, %v8740
  %v8753 = vadd.f32 %v8729, %v8741
  %v8754 = vadd.f32 %v8730, %v8742
  %v8755 = vadd.f32 %v8731, %v8743
  %v8756 = vadd.f32 %v8732, %v8744
  %s8757 = scalar_lea.vmem %s12, 96
  %8758 = vst [vmem:[%s8757] sm:$0xff] %v8745
  %8759 = vst [vmem:[%s8757 + $0x8] sm:$0xff] %v8746
  %8760 = vst.msk [vmem:[%s8757 + $0x10] sm:$0xff] %vm62, %v8747
  %8761 = vst [vmem:[%s8757 + $0x18] sm:$0xff] %v8748
  %8762 = vst [vmem:[%s8757 + $0x20] sm:$0xff] %v8749
  %8763 = vst.msk [vmem:[%s8757 + $0x28] sm:$0xff] %vm62, %v8750
  %8764 = vst [vmem:[%s8757 + $0x30] sm:$0xff] %v8751
  %8765 = vst [vmem:[%s8757 + $0x38] sm:$0xff] %v8752
  %8766 = vst.msk [vmem:[%s8757 + $0x40] sm:$0xff] %vm62, %v8753
  %8767 = vst [vmem:[%s8757 + $0x48] sm:$0xff] %v8754
  %8768 = vst [vmem:[%s8757 + $0x50] sm:$0xff] %v8755
  %8769 = vst.msk [vmem:[%s8757 + $0x58] sm:$0xff] %vm62, %v8756
  // Predicated region
  $region50: #{residual_group_pallas.1} parent=0 // pred_check
    _
  $region51: #{residual_group_pallas.1} parent=0 // pred_check_branch
    %8771 = sbr.rel (0) target = $region53
  $region52: #{residual_group_pallas.1} parent=0 // pred_region
    _
  $region53: #{residual_group_pallas.1} parent=0 // pred_fallthru
    _
  // Predicated region
  $region54: #{residual_group_pallas.1} parent=0 // pred_check
    _
  $region55: #{residual_group_pallas.1} parent=0 // pred_check_branch
    %8773 = sbr.rel (0) target = $region57
  $region56: #{residual_group_pallas.1} parent=0 // pred_region
    _
  $region57: #{residual_group_pallas.1} parent=0 // pred_fallthru
    _

</llo_original>
